<compile_context>
chip_gen: v7x
topology: tpu7x:2x2x1
jax: 0.10.0
libtpu: 0.0.40
codegen_flags: <defaults>
</compile_context>

<pallas_src>
import math

import jax
import jax.numpy as jnp
from jax.experimental import pallas as pl
from jax.experimental.pallas import tpu as pltpu


# --------------------------------------------------------------------------------------
# One GRU cell update (PyTorch gate order r | z | n). gx = x@W_ih + b_ih (precomputed).
# --------------------------------------------------------------------------------------
def _gru_step(gx, h, w_hh, b_hh, H):
    # TODO(synk): for production shapes keep w_hh MXU-stationary across the unrolled
    # chunk via pltpu.matmul_push_rhs / matmul_acc_lhs / matmul_pop instead of a fresh
    # jnp.dot per step; kept as jnp.dot here for robustness.
    gh = jnp.dot(h, w_hh, preferred_element_type=jnp.float32) + b_hh
    rz = jax.nn.sigmoid(gx[:, :2 * H] + gh[:, :2 * H])     # fused r/z sigmoid
    r = rz[:, :H]
    z = rz[:, H:]
    n = jnp.tanh(gx[:, 2 * H:] + r * gh[:, 2 * H:])
    return (1.0 - z) * n + z * h


# --------------------------------------------------------------------------------------
# Kernel A: whole sequence in one grid step (nc == 1). Fully fused projection +
# interleaved bidirectional recurrence + lane-dense combined output.
# --------------------------------------------------------------------------------------
def _bigru_fused_kernel(x_ref, wih_ref, bih_ref, whh_ref, bhh_ref, out_ref):
    # x_ref: (T*B, E); wih: (2, E, 3H); bih/bhh: (2, 1, 3H); whh: (2, H, 3H)
    # out_ref: (T, B, 2H) -- forward half = lanes [0:H], backward half = lanes [H:2H]
    T, B, _ = out_ref.shape
    H = whh_ref.shape[1]

    x = x_ref[...]
    # Time-parallel input projection for both directions: two big MXU matmuls, all in
    # VMEM (no HBM gx intermediate).
    gx_f = jnp.dot(x, wih_ref[0], preferred_element_type=jnp.float32) + bih_ref[0]
    gx_b = jnp.dot(x, wih_ref[1], preferred_element_type=jnp.float32) + bih_ref[1]

    w_hh_f, b_hh_f = whh_ref[0], bhh_ref[0]
    w_hh_b, b_hh_b = whh_ref[1], bhh_ref[1]

    hf = jnp.zeros((B, H), jnp.float32)
    hb = jnp.zeros((B, H), jnp.float32)

    # Fully unrolled, statically indexed recurrence. The forward and backward chains
    # are independent, so placing both in the same unrolled step lets the scheduler
    # interleave their matmul/EUP latency chains (the big single-TensorCore win).
    for s in range(T):
        sr = T - 1 - s
        hf = _gru_step(gx_f[s * B:(s + 1) * B], hf, w_hh_f, b_hh_f, H)
        hb = _gru_step(gx_b[sr * B:(sr + 1) * B], hb, w_hh_b, b_hh_b, H)
        out_ref[s, :, :H] = hf
        out_ref[sr, :, H:] = hb


# --------------------------------------------------------------------------------------
# Kernel B: chunked recurrence for long sequences (grid = (nc,), nc > 1). Forward
# chain walks time blocks 0..nc-1 while the backward chain walks nc-1..0; both chains
# are still interleaved inside one body, hidden states carried in VMEM scratch.
# --------------------------------------------------------------------------------------
def _bigru_chunk_kernel(xf_ref, xb_ref, wih_ref, bih_ref, whh_ref, bhh_ref,
                        outf_ref, outb_ref, hf_scr, hb_scr):
    c = pl.program_id(0)
    TT, B, H = outf_ref.shape

    @pl.when(c == 0)
    def _():
        hf_scr[...] = jnp.zeros_like(hf_scr)
        hb_scr[...] = jnp.zeros_like(hb_scr)

    gx_f = jnp.dot(xf_ref[...], wih_ref[0], preferred_element_type=jnp.float32) + bih_ref[0]
    gx_b = jnp.dot(xb_ref[...], wih_ref[1], preferred_element_type=jnp.float32) + bih_ref[1]

    w_hh_f, b_hh_f = whh_ref[0], bhh_ref[0]
    w_hh_b, b_hh_b = whh_ref[1], bhh_ref[1]

    hf = hf_scr[...]
    hb = hb_scr[...]
    for s in range(TT):
        sr = TT - 1 - s
        hf = _gru_step(gx_f[s * B:(s + 1) * B], hf, w_hh_f, b_hh_f, H)
        hb = _gru_step(gx_b[sr * B:(sr + 1) * B], hb, w_hh_b, b_hh_b, H)
        outf_ref[s] = hf
        outb_ref[sr] = hb
    hf_scr[...] = hf
    hb_scr[...] = hb


# --------------------------------------------------------------------------------------
# Wrapper
# --------------------------------------------------------------------------------------
def encoder_forward(x, params, *, time_chunk=32):
    """x: (T, B, E) float32 (time-major). Returns (output (T, B, 2H), h_n (2, B, H))."""
    T, B, E = x.shape
    H = params["w_hh"].shape[-1] // 3
    H3 = 3 * H

    # Largest divisor of T that is <= time_chunk: few, fat grid steps (per-grid-step
    # overhead is ~0.35 us and the recurrence is latency bound). Demo (T=16) -> TT=T.
    TT = 1
    for cand in range(1, min(T, time_chunk) + 1):
        if T % cand == 0:
            TT = cand
    nc = T // TT
    if nc > 1 and (TT * B) % 8 != 0:
        TT, nc = T, 1                       # keep chunked x blocks sublane aligned

    x2 = x.reshape(T * B, E)                # contiguous -> free reshape
    w_ih, b_ih = params["w_ih"], params["b_ih"]
    w_hh, b_hh = params["w_hh"], params["b_hh"]

    # NOTE: for production (E, H) sizes, cast weights/activations to bf16 (keep f32
    # accumulation), put pipeline_mode=pl.Buffered(1) on the constant-index weight
    # specs and set vmem_limit_bytes here (matters for v7x's 64 MiB VMEM); unnecessary
    # at demo sizes, so kept f32 / defaults for bit-tight correctness checking.
    cparams = pltpu.CompilerParams(dimension_semantics=("arbitrary",))

    weight_specs = [
        pl.BlockSpec((2, E, H3), lambda c: (0, 0, 0)),   # w_ih (both directions)
        pl.BlockSpec((2, 1, H3), lambda c: (0, 0, 0)),   # b_ih
        pl.BlockSpec((2, H, H3), lambda c: (0, 0, 0)),   # w_hh
        pl.BlockSpec((2, 1, H3), lambda c: (0, 0, 0)),   # b_hh
    ]

    if nc == 1:
        # Whole sequence in a single grid step: fused projection + recurrence,
        # lane-dense combined (T, B, 2H) output, no HBM intermediates, no concatenate.
        output = pl.pallas_call(
            _bigru_fused_kernel,
            grid=(1,),
            in_specs=[pl.BlockSpec((T * B, E), lambda c: (0, 0))] + weight_specs,
            out_specs=pl.BlockSpec((T, B, 2 * H), lambda c: (0, 0, 0)),
            out_shape=jax.ShapeDtypeStruct((T, B, 2 * H), jnp.float32),
            compiler_params=cparams,
        )(x2, w_ih, b_ih, w_hh, b_hh)
        h_n = jnp.stack([output[T - 1, :, :H], output[0, :, H:]], axis=0)
    else:
        # Chunked path for long sequences. x is read once per direction (fine since
        # E << 6H); weights have constant index maps so they stay resident in VMEM.
        out_f, out_b = pl.pallas_call(
            _bigru_chunk_kernel,
            grid=(nc,),
            in_specs=[
                pl.BlockSpec((TT * B, E), lambda c: (c, 0)),             # fwd x chunk
                pl.BlockSpec((TT * B, E), lambda c: (nc - 1 - c, 0)),    # bwd x chunk
            ] + weight_specs,
            out_specs=[
                pl.BlockSpec((TT, B, H), lambda c: (c, 0, 0)),
                pl.BlockSpec((TT, B, H), lambda c: (nc - 1 - c, 0, 0)),
            ],
            out_shape=[
                jax.ShapeDtypeStruct((T, B, H), jnp.float32),
                jax.ShapeDtypeStruct((T, B, H), jnp.float32),
            ],
            scratch_shapes=[pltpu.VMEM((B, H), jnp.float32),
                            pltpu.VMEM((B, H), jnp.float32)],
            compiler_params=cparams,
        )(x2, x2, w_ih, b_ih, w_hh, b_hh)
        # TODO(synk): this concatenate costs one extra HBM pass; a lane-dense combined
        # write with interleaved directions would need the full output resident in VMEM.
        output = jnp.concatenate([out_f, out_b], axis=-1)
        h_n = jnp.stack([out_f[T - 1], out_b[0]], axis=0)

    return output, h_n


# --------------------------------------------------------------------------------------
# Parameters (PyTorch GRU-style init), packed over the direction axis
# --------------------------------------------------------------------------------------
def init_params(key, embedding_dim, hidden_size):
    """U(-1/sqrt(H), 1/sqrt(H)) init, like PyTorch. Weights stored transposed and packed
    over direction (0 = forward, 1 = backward):
      w_ih: (2, E, 3H), w_hh: (2, H, 3H), b_ih / b_hh: (2, 1, 3H). Gate order: r, z, n."""
    E, H = embedding_dim, hidden_size
    k = 1.0 / math.sqrt(H)
    ks = jax.random.split(key, 4)
    u = lambda kk, shape: jax.random.uniform(kk, shape, jnp.float32, -k, k)
    return {
        "w_ih": u(ks[0], (2, E, 3 * H)),
        "w_hh": u(ks[1], (2, H, 3 * H)),
        "b_ih": u(ks[2], (2, 1, 3 * H)),
        "b_hh": u(ks[3], (2, 1, 3 * H)),
    }


# --------------------------------------------------------------------------------------
# Pure-JAX reference (lax.scan) for correctness checking
# --------------------------------------------------------------------------------------
def _reference_bigru(x, params):
    T, B, E = x.shape
    H = params["w_hh"].shape[-1] // 3
    hi = jax.lax.Precision.HIGHEST

    def make_step(wi, wh, bi, bh):
        def step(h, xt):
            gx = jnp.dot(xt, wi, precision=hi) + bi
            gh = jnp.dot(h, wh, precision=hi) + bh
            r = jax.nn.sigmoid(gx[:, :H] + gh[:, :H])
            z = jax.nn.sigmoid(gx[:, H:2 * H] + gh[:, H:2 * H])
            n = jnp.tanh(gx[:, 2 * H:] + r * gh[:, 2 * H:])
            h_new = (1.0 - z) * n + z * h
            return h_new, h_new
        return step

    p = params
    h0 = jnp.zeros((B, H), jnp.float32)
    hf, out_f = jax.lax.scan(
        make_step(p["w_ih"][0], p["w_hh"][0], p["b_ih"][0], p["b_hh"][0]), h0, x)
    hb, out_b_rev = jax.lax.scan(
        make_step(p["w_ih"][1], p["w_hh"][1], p["b_ih"][1], p["b_hh"][1]), h0, x[::-1])
    out_b = out_b_rev[::-1]
    return jnp.concatenate([out_f, out_b], axis=-1), jnp.stack([hf, hb], axis=0)


if __name__ == "__main__":
    key = jax.random.PRNGKey(0)
    kx, kp, kx2, kp2 = jax.random.split(key, 4)

    # ---- Test 1: demo shapes, single-chunk fully fused path (nc == 1) -------------
    seq_len, batch, embedding_dim, hidden_size = 16, 8, 32, 128
    x = jax.random.normal(kx, (seq_len, batch, embedding_dim), jnp.float32)
    params = init_params(kp, embedding_dim, hidden_size)

    output, h_n = jax.jit(encoder_forward)(x, params)
    jax.block_until_ready((output, h_n))

    ref_out, ref_hn = _reference_bigru(x, params)
    assert output.shape == (seq_len, batch, 2 * hidden_size)
    assert h_n.shape == (2, batch, hidden_size)
    assert jnp.allclose(output, ref_out, atol=2e-3, rtol=2e-3)
    assert jnp.allclose(h_n, ref_hn, atol=2e-3, rtol=2e-3)

    # ---- Test 2: longer sequence exercising the chunked path (nc > 1) -------------
    seq_len2 = 64
    x_long = jax.random.normal(kx2, (seq_len2, batch, embedding_dim), jnp.float32)
    params2 = init_params(kp2, embedding_dim, hidden_size)

    out2, hn2 = jax.jit(lambda a, p: encoder_forward(a, p, time_chunk=16))(x_long, params2)
    jax.block_until_ready((out2, hn2))

    ref_out2, ref_hn2 = _reference_bigru(x_long, params2)
    assert jnp.allclose(out2, ref_out2, atol=2e-3, rtol=2e-3)
    assert jnp.allclose(hn2, ref_hn2, atol=2e-3, rtol=2e-3)

    print("KERNEL_OK")
</pallas_src>

<mosaic_0001>
module attributes {stable_mosaic.version = 11 : i64} {
  func.func @_bigru_fused_kernel(%arg0: i32, %arg1: memref<128x32xf32, #tpu.memory_space<vmem>>, %arg2: memref<2x32x384xf32, #tpu.memory_space<vmem>>, %arg3: memref<2x1x384xf32, #tpu.memory_space<vmem>>, %arg4: memref<2x128x384xf32, #tpu.memory_space<vmem>>, %arg5: memref<2x1x384xf32, #tpu.memory_space<vmem>>, %arg6: memref<16x8x256xf32, #tpu.memory_space<vmem>>) attributes {dimension_semantics = [#tpu.dimension_semantics<arbitrary>], iteration_bounds = array<i64: 1>, scalar_prefetch = 0 : i64, scratch_operands = 0 : i64, tpu.core_type = #tpu.core_type<tc>, window_params = [{pipeline_mode = #tpu.pipeline_mode<synchronous>, transform_indices = @transform_0, window_bounds = array<i64: 128, 32>}, {pipeline_mode = #tpu.pipeline_mode<synchronous>, transform_indices = @transform_1, window_bounds = array<i64: 2, 32, 384>}, {pipeline_mode = #tpu.pipeline_mode<synchronous>, transform_indices = @transform_2, window_bounds = array<i64: 2, 1, 384>}, {pipeline_mode = #tpu.pipeline_mode<synchronous>, transform_indices = @transform_3, window_bounds = array<i64: 2, 128, 384>}, {pipeline_mode = #tpu.pipeline_mode<synchronous>, transform_indices = @transform_4, window_bounds = array<i64: 2, 1, 384>}, {pipeline_mode = #tpu.pipeline_mode<synchronous>, transform_indices = @transform_5, window_bounds = array<i64: 16, 8, 256>}]} {
    %c0 = arith.constant 0 : index
    %c0_0 = arith.constant 0 : index
    %0 = vector.load %arg1[%c0, %c0_0] : memref<128x32xf32, #tpu.memory_space<vmem>>, vector<128x32xf32>
    %c0_1 = arith.constant 0 : index
    %c0_2 = arith.constant 0 : index
    %c0_3 = arith.constant 0 : index
    %1 = vector.load %arg2[%c0_1, %c0_2, %c0_3] : memref<2x32x384xf32, #tpu.memory_space<vmem>>, vector<1x32x384xf32>
    %2 = vector.shape_cast %1 : vector<1x32x384xf32> to vector<32x384xf32>
    %cst = arith.constant dense<0.000000e+00> : vector<128x384xf32>
    %3 = tpu.matmul %0, %2, %cst {dimension_numbers = #tpu.dot_dimension_numbers<[1], [0], [0], [1], [0, 0, 1, 1], [], []>} : vector<128x32xf32>, vector<32x384xf32>, vector<128x384xf32> -> vector<128x384xf32>
    %c0_4 = arith.constant 0 : index
    %c0_5 = arith.constant 0 : index
    %c0_6 = arith.constant 0 : index
    %4 = vector.load %arg3[%c0_4, %c0_5, %c0_6] : memref<2x1x384xf32, #tpu.memory_space<vmem>>, vector<1x1x384xf32>
    %5 = vector.shape_cast %4 : vector<1x1x384xf32> to vector<1x384xf32>
    %6 = vector.broadcast %5 : vector<1x384xf32> to vector<128x384xf32>
    %7 = arith.addf %3, %6 : vector<128x384xf32>
    %c1 = arith.constant 1 : index
    %c0_7 = arith.constant 0 : index
    %c0_8 = arith.constant 0 : index
    %8 = vector.load %arg2[%c1, %c0_7, %c0_8] : memref<2x32x384xf32, #tpu.memory_space<vmem>>, vector<1x32x384xf32>
    %9 = vector.shape_cast %8 : vector<1x32x384xf32> to vector<32x384xf32>
    %cst_9 = arith.constant dense<0.000000e+00> : vector<128x384xf32>
    %10 = tpu.matmul %0, %9, %cst_9 {dimension_numbers = #tpu.dot_dimension_numbers<[1], [0], [0], [1], [0, 0, 1, 1], [], []>} : vector<128x32xf32>, vector<32x384xf32>, vector<128x384xf32> -> vector<128x384xf32>
    %c1_10 = arith.constant 1 : index
    %c0_11 = arith.constant 0 : index
    %c0_12 = arith.constant 0 : index
    %11 = vector.load %arg3[%c1_10, %c0_11, %c0_12] : memref<2x1x384xf32, #tpu.memory_space<vmem>>, vector<1x1x384xf32>
    %12 = vector.shape_cast %11 : vector<1x1x384xf32> to vector<1x384xf32>
    %13 = vector.broadcast %12 : vector<1x384xf32> to vector<128x384xf32>
    %14 = arith.addf %10, %13 : vector<128x384xf32>
    %c0_13 = arith.constant 0 : index
    %c0_14 = arith.constant 0 : index
    %c0_15 = arith.constant 0 : index
    %15 = vector.load %arg4[%c0_13, %c0_14, %c0_15] : memref<2x128x384xf32, #tpu.memory_space<vmem>>, vector<1x128x384xf32>
    %16 = vector.shape_cast %15 : vector<1x128x384xf32> to vector<128x384xf32>
    %c0_16 = arith.constant 0 : index
    %c0_17 = arith.constant 0 : index
    %c0_18 = arith.constant 0 : index
    %17 = vector.load %arg5[%c0_16, %c0_17, %c0_18] : memref<2x1x384xf32, #tpu.memory_space<vmem>>, vector<1x1x384xf32>
    %18 = vector.shape_cast %17 : vector<1x1x384xf32> to vector<1x384xf32>
    %c1_19 = arith.constant 1 : index
    %c0_20 = arith.constant 0 : index
    %c0_21 = arith.constant 0 : index
    %19 = vector.load %arg4[%c1_19, %c0_20, %c0_21] : memref<2x128x384xf32, #tpu.memory_space<vmem>>, vector<1x128x384xf32>
    %20 = vector.shape_cast %19 : vector<1x128x384xf32> to vector<128x384xf32>
    %c1_22 = arith.constant 1 : index
    %c0_23 = arith.constant 0 : index
    %c0_24 = arith.constant 0 : index
    %21 = vector.load %arg5[%c1_22, %c0_23, %c0_24] : memref<2x1x384xf32, #tpu.memory_space<vmem>>, vector<1x1x384xf32>
    %22 = vector.shape_cast %21 : vector<1x1x384xf32> to vector<1x384xf32>
    %cst_25 = arith.constant 0.000000e+00 : f32
    %23 = vector.broadcast %cst_25 : f32 to vector<8x128xf32>
    %cst_26 = arith.constant 0.000000e+00 : f32
    %24 = vector.broadcast %cst_26 : f32 to vector<8x128xf32>
    %25 = vector.extract_strided_slice %7 {offsets = [0, 0], sizes = [8, 384], strides = [1, 1]} : vector<128x384xf32> to vector<8x384xf32>
    %cst_27 = arith.constant dense<0.000000e+00> : vector<8x384xf32>
    %26 = tpu.matmul %23, %16, %cst_27 {dimension_numbers = #tpu.dot_dimension_numbers<[1], [0], [0], [1], [0, 0, 1, 1], [], []>} : vector<8x128xf32>, vector<128x384xf32>, vector<8x384xf32> -> vector<8x384xf32>
    %27 = vector.broadcast %18 : vector<1x384xf32> to vector<8x384xf32>
    %28 = arith.addf %26, %27 : vector<8x384xf32>
    %29 = vector.extract_strided_slice %25 {offsets = [0, 0], sizes = [8, 256], strides = [1, 1]} : vector<8x384xf32> to vector<8x256xf32>
    %30 = vector.extract_strided_slice %28 {offsets = [0, 0], sizes = [8, 256], strides = [1, 1]} : vector<8x384xf32> to vector<8x256xf32>
    %31 = arith.addf %29, %30 : vector<8x256xf32>
    %32 = arith.negf %31 : vector<8x256xf32>
    %33 = math.exp %32 : vector<8x256xf32>
    %cst_28 = arith.constant 1.000000e+00 : f32
    %34 = vector.broadcast %cst_28 : f32 to vector<8x256xf32>
    %35 = arith.addf %34, %33 : vector<8x256xf32>
    %36 = arith.divf %34, %35 : vector<8x256xf32>
    %37 = vector.extract_strided_slice %36 {offsets = [0, 0], sizes = [8, 128], strides = [1, 1]} : vector<8x256xf32> to vector<8x128xf32>
    %38 = vector.extract_strided_slice %36 {offsets = [0, 128], sizes = [8, 128], strides = [1, 1]} : vector<8x256xf32> to vector<8x128xf32>
    %39 = vector.extract_strided_slice %25 {offsets = [0, 256], sizes = [8, 128], strides = [1, 1]} : vector<8x384xf32> to vector<8x128xf32>
    %40 = vector.extract_strided_slice %28 {offsets = [0, 256], sizes = [8, 128], strides = [1, 1]} : vector<8x384xf32> to vector<8x128xf32>
    %41 = arith.mulf %37, %40 : vector<8x128xf32>
    %42 = arith.addf %39, %41 : vector<8x128xf32>
    %43 = math.tanh %42 : vector<8x128xf32>
    %cst_29 = arith.constant 1.000000e+00 : f32
    %44 = vector.broadcast %cst_29 : f32 to vector<8x128xf32>
    %45 = arith.subf %44, %38 : vector<8x128xf32>
    %46 = arith.mulf %45, %43 : vector<8x128xf32>
    %47 = arith.mulf %38, %23 : vector<8x128xf32>
    %48 = arith.addf %46, %47 : vector<8x128xf32>
    %49 = vector.extract_strided_slice %14 {offsets = [120, 0], sizes = [8, 384], strides = [1, 1]} : vector<128x384xf32> to vector<8x384xf32>
    %cst_30 = arith.constant dense<0.000000e+00> : vector<8x384xf32>
    %50 = tpu.matmul %24, %20, %cst_30 {dimension_numbers = #tpu.dot_dimension_numbers<[1], [0], [0], [1], [0, 0, 1, 1], [], []>} : vector<8x128xf32>, vector<128x384xf32>, vector<8x384xf32> -> vector<8x384xf32>
    %51 = vector.broadcast %22 : vector<1x384xf32> to vector<8x384xf32>
    %52 = arith.addf %50, %51 : vector<8x384xf32>
    %53 = vector.extract_strided_slice %49 {offsets = [0, 0], sizes = [8, 256], strides = [1, 1]} : vector<8x384xf32> to vector<8x256xf32>
    %54 = vector.extract_strided_slice %52 {offsets = [0, 0], sizes = [8, 256], strides = [1, 1]} : vector<8x384xf32> to vector<8x256xf32>
    %55 = arith.addf %53, %54 : vector<8x256xf32>
    %56 = arith.negf %55 : vector<8x256xf32>
    %57 = math.exp %56 : vector<8x256xf32>
    %cst_31 = arith.constant 1.000000e+00 : f32
    %58 = vector.broadcast %cst_31 : f32 to vector<8x256xf32>
    %59 = arith.addf %58, %57 : vector<8x256xf32>
    %60 = arith.divf %58, %59 : vector<8x256xf32>
    %61 = vector.extract_strided_slice %60 {offsets = [0, 0], sizes = [8, 128], strides = [1, 1]} : vector<8x256xf32> to vector<8x128xf32>
    %62 = vector.extract_strided_slice %60 {offsets = [0, 128], sizes = [8, 128], strides = [1, 1]} : vector<8x256xf32> to vector<8x128xf32>
    %63 = vector.extract_strided_slice %49 {offsets = [0, 256], sizes = [8, 128], strides = [1, 1]} : vector<8x384xf32> to vector<8x128xf32>
    %64 = vector.extract_strided_slice %52 {offsets = [0, 256], sizes = [8, 128], strides = [1, 1]} : vector<8x384xf32> to vector<8x128xf32>
    %65 = arith.mulf %61, %64 : vector<8x128xf32>
    %66 = arith.addf %63, %65 : vector<8x128xf32>
    %67 = math.tanh %66 : vector<8x128xf32>
    %cst_32 = arith.constant 1.000000e+00 : f32
    %68 = vector.broadcast %cst_32 : f32 to vector<8x128xf32>
    %69 = arith.subf %68, %62 : vector<8x128xf32>
    %70 = arith.mulf %69, %67 : vector<8x128xf32>
    %71 = arith.mulf %62, %24 : vector<8x128xf32>
    %72 = arith.addf %70, %71 : vector<8x128xf32>
    %c0_33 = arith.constant 0 : index
    %c0_34 = arith.constant 0 : index
    %c0_35 = arith.constant 0 : index
    %73 = vector.load %arg6[%c0_33, %c0_34, %c0_35] : memref<16x8x256xf32, #tpu.memory_space<vmem>>, vector<1x8x128xf32>
    %74 = vector.shape_cast %73 : vector<1x8x128xf32> to vector<8x128xf32>
    %75 = vector.shape_cast %48 : vector<8x128xf32> to vector<1x8x128xf32>
    tpu.vector_store %arg6[%c0_33, %c0_34, %c0_35], %75 {strides = array<i32>} : memref<16x8x256xf32, #tpu.memory_space<vmem>>, vector<1x8x128xf32>,
    %c15 = arith.constant 15 : index
    %c0_36 = arith.constant 0 : index
    %c128 = arith.constant 128 : index
    %76 = vector.load %arg6[%c15, %c0_36, %c128] : memref<16x8x256xf32, #tpu.memory_space<vmem>>, vector<1x8x128xf32>
    %77 = vector.shape_cast %76 : vector<1x8x128xf32> to vector<8x128xf32>
    %78 = vector.shape_cast %72 : vector<8x128xf32> to vector<1x8x128xf32>
    tpu.vector_store %arg6[%c15, %c0_36, %c128], %78 {strides = array<i32>} : memref<16x8x256xf32, #tpu.memory_space<vmem>>, vector<1x8x128xf32>,
    %79 = vector.extract_strided_slice %7 {offsets = [8, 0], sizes = [8, 384], strides = [1, 1]} : vector<128x384xf32> to vector<8x384xf32>
    %cst_37 = arith.constant dense<0.000000e+00> : vector<8x384xf32>
    %80 = tpu.matmul %48, %16, %cst_37 {dimension_numbers = #tpu.dot_dimension_numbers<[1], [0], [0], [1], [0, 0, 1, 1], [], []>} : vector<8x128xf32>, vector<128x384xf32>, vector<8x384xf32> -> vector<8x384xf32>
    %81 = vector.broadcast %18 : vector<1x384xf32> to vector<8x384xf32>
    %82 = arith.addf %80, %81 : vector<8x384xf32>
    %83 = vector.extract_strided_slice %79 {offsets = [0, 0], sizes = [8, 256], strides = [1, 1]} : vector<8x384xf32> to vector<8x256xf32>
    %84 = vector.extract_strided_slice %82 {offsets = [0, 0], sizes = [8, 256], strides = [1, 1]} : vector<8x384xf32> to vector<8x256xf32>
    %85 = arith.addf %83, %84 : vector<8x256xf32>
    %86 = arith.negf %85 : vector<8x256xf32>
    %87 = math.exp %86 : vector<8x256xf32>
    %cst_38 = arith.constant 1.000000e+00 : f32
    %88 = vector.broadcast %cst_38 : f32 to vector<8x256xf32>
    %89 = arith.addf %88, %87 : vector<8x256xf32>
    %90 = arith.divf %88, %89 : vector<8x256xf32>
    %91 = vector.extract_strided_slice %90 {offsets = [0, 0], sizes = [8, 128], strides = [1, 1]} : vector<8x256xf32> to vector<8x128xf32>
    %92 = vector.extract_strided_slice %90 {offsets = [0, 128], sizes = [8, 128], strides = [1, 1]} : vector<8x256xf32> to vector<8x128xf32>
    %93 = vector.extract_strided_slice %79 {offsets = [0, 256], sizes = [8, 128], strides = [1, 1]} : vector<8x384xf32> to vector<8x128xf32>
    %94 = vector.extract_strided_slice %82 {offsets = [0, 256], sizes = [8, 128], strides = [1, 1]} : vector<8x384xf32> to vector<8x128xf32>
    %95 = arith.mulf %91, %94 : vector<8x128xf32>
    %96 = arith.addf %93, %95 : vector<8x128xf32>
    %97 = math.tanh %96 : vector<8x128xf32>
    %cst_39 = arith.constant 1.000000e+00 : f32
    %98 = vector.broadcast %cst_39 : f32 to vector<8x128xf32>
    %99 = arith.subf %98, %92 : vector<8x128xf32>
    %100 = arith.mulf %99, %97 : vector<8x128xf32>
    %101 = arith.mulf %92, %48 : vector<8x128xf32>
    %102 = arith.addf %100, %101 : vector<8x128xf32>
    %103 = vector.extract_strided_slice %14 {offsets = [112, 0], sizes = [8, 384], strides = [1, 1]} : vector<128x384xf32> to vector<8x384xf32>
    %cst_40 = arith.constant dense<0.000000e+00> : vector<8x384xf32>
    %104 = tpu.matmul %72, %20, %cst_40 {dimension_numbers = #tpu.dot_dimension_numbers<[1], [0], [0], [1], [0, 0, 1, 1], [], []>} : vector<8x128xf32>, vector<128x384xf32>, vector<8x384xf32> -> vector<8x384xf32>
    %105 = vector.broadcast %22 : vector<1x384xf32> to vector<8x384xf32>
    %106 = arith.addf %104, %105 : vector<8x384xf32>
    %107 = vector.extract_strided_slice %103 {offsets = [0, 0], sizes = [8, 256], strides = [1, 1]} : vector<8x384xf32> to vector<8x256xf32>
    %108 = vector.extract_strided_slice %106 {offsets = [0, 0], sizes = [8, 256], strides = [1, 1]} : vector<8x384xf32> to vector<8x256xf32>
    %109 = arith.addf %107, %108 : vector<8x256xf32>
    %110 = arith.negf %109 : vector<8x256xf32>
    %111 = math.exp %110 : vector<8x256xf32>
    %cst_41 = arith.constant 1.000000e+00 : f32
    %112 = vector.broadcast %cst_41 : f32 to vector<8x256xf32>
    %113 = arith.addf %112, %111 : vector<8x256xf32>
    %114 = arith.divf %112, %113 : vector<8x256xf32>
    %115 = vector.extract_strided_slice %114 {offsets = [0, 0], sizes = [8, 128], strides = [1, 1]} : vector<8x256xf32> to vector<8x128xf32>
    %116 = vector.extract_strided_slice %114 {offsets = [0, 128], sizes = [8, 128], strides = [1, 1]} : vector<8x256xf32> to vector<8x128xf32>
    %117 = vector.extract_strided_slice %103 {offsets = [0, 256], sizes = [8, 128], strides = [1, 1]} : vector<8x384xf32> to vector<8x128xf32>
    %118 = vector.extract_strided_slice %106 {offsets = [0, 256], sizes = [8, 128], strides = [1, 1]} : vector<8x384xf32> to vector<8x128xf32>
    %119 = arith.mulf %115, %118 : vector<8x128xf32>
    %120 = arith.addf %117, %119 : vector<8x128xf32>
    %121 = math.tanh %120 : vector<8x128xf32>
    %cst_42 = arith.constant 1.000000e+00 : f32
    %122 = vector.broadcast %cst_42 : f32 to vector<8x128xf32>
    %123 = arith.subf %122, %116 : vector<8x128xf32>
    %124 = arith.mulf %123, %121 : vector<8x128xf32>
    %125 = arith.mulf %116, %72 : vector<8x128xf32>
    %126 = arith.addf %124, %125 : vector<8x128xf32>
    %c1_43 = arith.constant 1 : index
    %c0_44 = arith.constant 0 : index
    %c0_45 = arith.constant 0 : index
    %127 = vector.load %arg6[%c1_43, %c0_44, %c0_45] : memref<16x8x256xf32, #tpu.memory_space<vmem>>, vector<1x8x128xf32>
    %128 = vector.shape_cast %127 : vector<1x8x128xf32> to vector<8x128xf32>
    %129 = vector.shape_cast %102 : vector<8x128xf32> to vector<1x8x128xf32>
    tpu.vector_store %arg6[%c1_43, %c0_44, %c0_45], %129 {strides = array<i32>} : memref<16x8x256xf32, #tpu.memory_space<vmem>>, vector<1x8x128xf32>,
    %c14 = arith.constant 14 : index
    %c0_46 = arith.constant 0 : index
    %c128_47 = arith.constant 128 : index
    %130 = vector.load %arg6[%c14, %c0_46, %c128_47] : memref<16x8x256xf32, #tpu.memory_space<vmem>>, vector<1x8x128xf32>
    %131 = vector.shape_cast %130 : vector<1x8x128xf32> to vector<8x128xf32>
    %132 = vector.shape_cast %126 : vector<8x128xf32> to vector<1x8x128xf32>
    tpu.vector_store %arg6[%c14, %c0_46, %c128_47], %132 {strides = array<i32>} : memref<16x8x256xf32, #tpu.memory_space<vmem>>, vector<1x8x128xf32>,
    %133 = vector.extract_strided_slice %7 {offsets = [16, 0], sizes = [8, 384], strides = [1, 1]} : vector<128x384xf32> to vector<8x384xf32>
    %cst_48 = arith.constant dense<0.000000e+00> : vector<8x384xf32>
    %134 = tpu.matmul %102, %16, %cst_48 {dimension_numbers = #tpu.dot_dimension_numbers<[1], [0], [0], [1], [0, 0, 1, 1], [], []>} : vector<8x128xf32>, vector<128x384xf32>, vector<8x384xf32> -> vector<8x384xf32>
    %135 = vector.broadcast %18 : vector<1x384xf32> to vector<8x384xf32>
    %136 = arith.addf %134, %135 : vector<8x384xf32>
    %137 = vector.extract_strided_slice %133 {offsets = [0, 0], sizes = [8, 256], strides = [1, 1]} : vector<8x384xf32> to vector<8x256xf32>
    %138 = vector.extract_strided_slice %136 {offsets = [0, 0], sizes = [8, 256], strides = [1, 1]} : vector<8x384xf32> to vector<8x256xf32>
    %139 = arith.addf %137, %138 : vector<8x256xf32>
    %140 = arith.negf %139 : vector<8x256xf32>
    %141 = math.exp %140 : vector<8x256xf32>
    %cst_49 = arith.constant 1.000000e+00 : f32
    %142 = vector.broadcast %cst_49 : f32 to vector<8x256xf32>
    %143 = arith.addf %142, %141 : vector<8x256xf32>
    %144 = arith.divf %142, %143 : vector<8x256xf32>
    %145 = vector.extract_strided_slice %144 {offsets = [0, 0], sizes = [8, 128], strides = [1, 1]} : vector<8x256xf32> to vector<8x128xf32>
    %146 = vector.extract_strided_slice %144 {offsets = [0, 128], sizes = [8, 128], strides = [1, 1]} : vector<8x256xf32> to vector<8x128xf32>
    %147 = vector.extract_strided_slice %133 {offsets = [0, 256], sizes = [8, 128], strides = [1, 1]} : vector<8x384xf32> to vector<8x128xf32>
    %148 = vector.extract_strided_slice %136 {offsets = [0, 256], sizes = [8, 128], strides = [1, 1]} : vector<8x384xf32> to vector<8x128xf32>
    %149 = arith.mulf %145, %148 : vector<8x128xf32>
    %150 = arith.addf %147, %149 : vector<8x128xf32>
    %151 = math.tanh %150 : vector<8x128xf32>
    %cst_50 = arith.constant 1.000000e+00 : f32
    %152 = vector.broadcast %cst_50 : f32 to vector<8x128xf32>
    %153 = arith.subf %152, %146 : vector<8x128xf32>
    %154 = arith.mulf %153, %151 : vector<8x128xf32>
    %155 = arith.mulf %146, %102 : vector<8x128xf32>
    %156 = arith.addf %154, %155 : vector<8x128xf32>
    %157 = vector.extract_strided_slice %14 {offsets = [104, 0], sizes = [8, 384], strides = [1, 1]} : vector<128x384xf32> to vector<8x384xf32>
    %cst_51 = arith.constant dense<0.000000e+00> : vector<8x384xf32>
    %158 = tpu.matmul %126, %20, %cst_51 {dimension_numbers = #tpu.dot_dimension_numbers<[1], [0], [0], [1], [0, 0, 1, 1], [], []>} : vector<8x128xf32>, vector<128x384xf32>, vector<8x384xf32> -> vector<8x384xf32>
    %159 = vector.broadcast %22 : vector<1x384xf32> to vector<8x384xf32>
    %160 = arith.addf %158, %159 : vector<8x384xf32>
    %161 = vector.extract_strided_slice %157 {offsets = [0, 0], sizes = [8, 256], strides = [1, 1]} : vector<8x384xf32> to vector<8x256xf32>
    %162 = vector.extract_strided_slice %160 {offsets = [0, 0], sizes = [8, 256], strides = [1, 1]} : vector<8x384xf32> to vector<8x256xf32>
    %163 = arith.addf %161, %162 : vector<8x256xf32>
    %164 = arith.negf %163 : vector<8x256xf32>
    %165 = math.exp %164 : vector<8x256xf32>
    %cst_52 = arith.constant 1.000000e+00 : f32
    %166 = vector.broadcast %cst_52 : f32 to vector<8x256xf32>
    %167 = arith.addf %166, %165 : vector<8x256xf32>
    %168 = arith.divf %166, %167 : vector<8x256xf32>
    %169 = vector.extract_strided_slice %168 {offsets = [0, 0], sizes = [8, 128], strides = [1, 1]} : vector<8x256xf32> to vector<8x128xf32>
    %170 = vector.extract_strided_slice %168 {offsets = [0, 128], sizes = [8, 128], strides = [1, 1]} : vector<8x256xf32> to vector<8x128xf32>
    %171 = vector.extract_strided_slice %157 {offsets = [0, 256], sizes = [8, 128], strides = [1, 1]} : vector<8x384xf32> to vector<8x128xf32>
    %172 = vector.extract_strided_slice %160 {offsets = [0, 256], sizes = [8, 128], strides = [1, 1]} : vector<8x384xf32> to vector<8x128xf32>
    %173 = arith.mulf %169, %172 : vector<8x128xf32>
    %174 = arith.addf %171, %173 : vector<8x128xf32>
    %175 = math.tanh %174 : vector<8x128xf32>
    %cst_53 = arith.constant 1.000000e+00 : f32
    %176 = vector.broadcast %cst_53 : f32 to vector<8x128xf32>
    %177 = arith.subf %176, %170 : vector<8x128xf32>
    %178 = arith.mulf %177, %175 : vector<8x128xf32>
    %179 = arith.mulf %170, %126 : vector<8x128xf32>
    %180 = arith.addf %178, %179 : vector<8x128xf32>
    %c2 = arith.constant 2 : index
    %c0_54 = arith.constant 0 : index
    %c0_55 = arith.constant 0 : index
    %181 = vector.load %arg6[%c2, %c0_54, %c0_55] : memref<16x8x256xf32, #tpu.memory_space<vmem>>, vector<1x8x128xf32>
    %182 = vector.shape_cast %181 : vector<1x8x128xf32> to vector<8x128xf32>
    %183 = vector.shape_cast %156 : vector<8x128xf32> to vector<1x8x128xf32>
    tpu.vector_store %arg6[%c2, %c0_54, %c0_55], %183 {strides = array<i32>} : memref<16x8x256xf32, #tpu.memory_space<vmem>>, vector<1x8x128xf32>,
    %c13 = arith.constant 13 : index
    %c0_56 = arith.constant 0 : index
    %c128_57 = arith.constant 128 : index
    %184 = vector.load %arg6[%c13, %c0_56, %c128_57] : memref<16x8x256xf32, #tpu.memory_space<vmem>>, vector<1x8x128xf32>
    %185 = vector.shape_cast %184 : vector<1x8x128xf32> to vector<8x128xf32>
    %186 = vector.shape_cast %180 : vector<8x128xf32> to vector<1x8x128xf32>
    tpu.vector_store %arg6[%c13, %c0_56, %c128_57], %186 {strides = array<i32>} : memref<16x8x256xf32, #tpu.memory_space<vmem>>, vector<1x8x128xf32>,
    %187 = vector.extract_strided_slice %7 {offsets = [24, 0], sizes = [8, 384], strides = [1, 1]} : vector<128x384xf32> to vector<8x384xf32>
    %cst_58 = arith.constant dense<0.000000e+00> : vector<8x384xf32>
    %188 = tpu.matmul %156, %16, %cst_58 {dimension_numbers = #tpu.dot_dimension_numbers<[1], [0], [0], [1], [0, 0, 1, 1], [], []>} : vector<8x128xf32>, vector<128x384xf32>, vector<8x384xf32> -> vector<8x384xf32>
    %189 = vector.broadcast %18 : vector<1x384xf32> to vector<8x384xf32>
    %190 = arith.addf %188, %189 : vector<8x384xf32>
    %191 = vector.extract_strided_slice %187 {offsets = [0, 0], sizes = [8, 256], strides = [1, 1]} : vector<8x384xf32> to vector<8x256xf32>
    %192 = vector.extract_strided_slice %190 {offsets = [0, 0], sizes = [8, 256], strides = [1, 1]} : vector<8x384xf32> to vector<8x256xf32>
    %193 = arith.addf %191, %192 : vector<8x256xf32>
    %194 = arith.negf %193 : vector<8x256xf32>
    %195 = math.exp %194 : vector<8x256xf32>
    %cst_59 = arith.constant 1.000000e+00 : f32
    %196 = vector.broadcast %cst_59 : f32 to vector<8x256xf32>
    %197 = arith.addf %196, %195 : vector<8x256xf32>
    %198 = arith.divf %196, %197 : vector<8x256xf32>
    %199 = vector.extract_strided_slice %198 {offsets = [0, 0], sizes = [8, 128], strides = [1, 1]} : vector<8x256xf32> to vector<8x128xf32>
    %200 = vector.extract_strided_slice %198 {offsets = [0, 128], sizes = [8, 128], strides = [1, 1]} : vector<8x256xf32> to vector<8x128xf32>
    %201 = vector.extract_strided_slice %187 {offsets = [0, 256], sizes = [8, 128], strides = [1, 1]} : vector<8x384xf32> to vector<8x128xf32>
    %202 = vector.extract_strided_slice %190 {offsets = [0, 256], sizes = [8, 128], strides = [1, 1]} : vector<8x384xf32> to vector<8x128xf32>
    %203 = arith.mulf %199, %202 : vector<8x128xf32>
    %204 = arith.addf %201, %203 : vector<8x128xf32>
    %205 = math.tanh %204 : vector<8x128xf32>
    %cst_60 = arith.constant 1.000000e+00 : f32
    %206 = vector.broadcast %cst_60 : f32 to vector<8x128xf32>
    %207 = arith.subf %206, %200 : vector<8x128xf32>
    %208 = arith.mulf %207, %205 : vector<8x128xf32>
    %209 = arith.mulf %200, %156 : vector<8x128xf32>
    %210 = arith.addf %208, %209 : vector<8x128xf32>
    %211 = vector.extract_strided_slice %14 {offsets = [96, 0], sizes = [8, 384], strides = [1, 1]} : vector<128x384xf32> to vector<8x384xf32>
    %cst_61 = arith.constant dense<0.000000e+00> : vector<8x384xf32>
    %212 = tpu.matmul %180, %20, %cst_61 {dimension_numbers = #tpu.dot_dimension_numbers<[1], [0], [0], [1], [0, 0, 1, 1], [], []>} : vector<8x128xf32>, vector<128x384xf32>, vector<8x384xf32> -> vector<8x384xf32>
    %213 = vector.broadcast %22 : vector<1x384xf32> to vector<8x384xf32>
    %214 = arith.addf %212, %213 : vector<8x384xf32>
    %215 = vector.extract_strided_slice %211 {offsets = [0, 0], sizes = [8, 256], strides = [1, 1]} : vector<8x384xf32> to vector<8x256xf32>
    %216 = vector.extract_strided_slice %214 {offsets = [0, 0], sizes = [8, 256], strides = [1, 1]} : vector<8x384xf32> to vector<8x256xf32>
    %217 = arith.addf %215, %216 : vector<8x256xf32>
    %218 = arith.negf %217 : vector<8x256xf32>
    %219 = math.exp %218 : vector<8x256xf32>
    %cst_62 = arith.constant 1.000000e+00 : f32
    %220 = vector.broadcast %cst_62 : f32 to vector<8x256xf32>
    %221 = arith.addf %220, %219 : vector<8x256xf32>
    %222 = arith.divf %220, %221 : vector<8x256xf32>
    %223 = vector.extract_strided_slice %222 {offsets = [0, 0], sizes = [8, 128], strides = [1, 1]} : vector<8x256xf32> to vector<8x128xf32>
    %224 = vector.extract_strided_slice %222 {offsets = [0, 128], sizes = [8, 128], strides = [1, 1]} : vector<8x256xf32> to vector<8x128xf32>
    %225 = vector.extract_strided_slice %211 {offsets = [0, 256], sizes = [8, 128], strides = [1, 1]} : vector<8x384xf32> to vector<8x128xf32>
    %226 = vector.extract_strided_slice %214 {offsets = [0, 256], sizes = [8, 128], strides = [1, 1]} : vector<8x384xf32> to vector<8x128xf32>
    %227 = arith.mulf %223, %226 : vector<8x128xf32>
    %228 = arith.addf %225, %227 : vector<8x128xf32>
    %229 = math.tanh %228 : vector<8x128xf32>
    %cst_63 = arith.constant 1.000000e+00 : f32
    %230 = vector.broadcast %cst_63 : f32 to vector<8x128xf32>
    %231 = arith.subf %230, %224 : vector<8x128xf32>
    %232 = arith.mulf %231, %229 : vector<8x128xf32>
    %233 = arith.mulf %224, %180 : vector<8x128xf32>
    %234 = arith.addf %232, %233 : vector<8x128xf32>
    %c3 = arith.constant 3 : index
    %c0_64 = arith.constant 0 : index
    %c0_65 = arith.constant 0 : index
    %235 = vector.load %arg6[%c3, %c0_64, %c0_65] : memref<16x8x256xf32, #tpu.memory_space<vmem>>, vector<1x8x128xf32>
    %236 = vector.shape_cast %235 : vector<1x8x128xf32> to vector<8x128xf32>
    %237 = vector.shape_cast %210 : vector<8x128xf32> to vector<1x8x128xf32>
    tpu.vector_store %arg6[%c3, %c0_64, %c0_65], %237 {strides = array<i32>} : memref<16x8x256xf32, #tpu.memory_space<vmem>>, vector<1x8x128xf32>,
    %c12 = arith.constant 12 : index
    %c0_66 = arith.constant 0 : index
    %c128_67 = arith.constant 128 : index
    %238 = vector.load %arg6[%c12, %c0_66, %c128_67] : memref<16x8x256xf32, #tpu.memory_space<vmem>>, vector<1x8x128xf32>
    %239 = vector.shape_cast %238 : vector<1x8x128xf32> to vector<8x128xf32>
    %240 = vector.shape_cast %234 : vector<8x128xf32> to vector<1x8x128xf32>
    tpu.vector_store %arg6[%c12, %c0_66, %c128_67], %240 {strides = array<i32>} : memref<16x8x256xf32, #tpu.memory_space<vmem>>, vector<1x8x128xf32>,
    %241 = vector.extract_strided_slice %7 {offsets = [32, 0], sizes = [8, 384], strides = [1, 1]} : vector<128x384xf32> to vector<8x384xf32>
    %cst_68 = arith.constant dense<0.000000e+00> : vector<8x384xf32>
    %242 = tpu.matmul %210, %16, %cst_68 {dimension_numbers = #tpu.dot_dimension_numbers<[1], [0], [0], [1], [0, 0, 1, 1], [], []>} : vector<8x128xf32>, vector<128x384xf32>, vector<8x384xf32> -> vector<8x384xf32>
    %243 = vector.broadcast %18 : vector<1x384xf32> to vector<8x384xf32>
    %244 = arith.addf %242, %243 : vector<8x384xf32>
    %245 = vector.extract_strided_slice %241 {offsets = [0, 0], sizes = [8, 256], strides = [1, 1]} : vector<8x384xf32> to vector<8x256xf32>
    %246 = vector.extract_strided_slice %244 {offsets = [0, 0], sizes = [8, 256], strides = [1, 1]} : vector<8x384xf32> to vector<8x256xf32>
    %247 = arith.addf %245, %246 : vector<8x256xf32>
    %248 = arith.negf %247 : vector<8x256xf32>
    %249 = math.exp %248 : vector<8x256xf32>
    %cst_69 = arith.constant 1.000000e+00 : f32
    %250 = vector.broadcast %cst_69 : f32 to vector<8x256xf32>
    %251 = arith.addf %250, %249 : vector<8x256xf32>
    %252 = arith.divf %250, %251 : vector<8x256xf32>
    %253 = vector.extract_strided_slice %252 {offsets = [0, 0], sizes = [8, 128], strides = [1, 1]} : vector<8x256xf32> to vector<8x128xf32>
    %254 = vector.extract_strided_slice %252 {offsets = [0, 128], sizes = [8, 128], strides = [1, 1]} : vector<8x256xf32> to vector<8x128xf32>
    %255 = vector.extract_strided_slice %241 {offsets = [0, 256], sizes = [8, 128], strides = [1, 1]} : vector<8x384xf32> to vector<8x128xf32>
    %256 = vector.extract_strided_slice %244 {offsets = [0, 256], sizes = [8, 128], strides = [1, 1]} : vector<8x384xf32> to vector<8x128xf32>
    %257 = arith.mulf %253, %256 : vector<8x128xf32>
    %258 = arith.addf %255, %257 : vector<8x128xf32>
    %259 = math.tanh %258 : vector<8x128xf32>
    %cst_70 = arith.constant 1.000000e+00 : f32
    %260 = vector.broadcast %cst_70 : f32 to vector<8x128xf32>
    %261 = arith.subf %260, %254 : vector<8x128xf32>
    %262 = arith.mulf %261, %259 : vector<8x128xf32>
    %263 = arith.mulf %254, %210 : vector<8x128xf32>
    %264 = arith.addf %262, %263 : vector<8x128xf32>
    %265 = vector.extract_strided_slice %14 {offsets = [88, 0], sizes = [8, 384], strides = [1, 1]} : vector<128x384xf32> to vector<8x384xf32>
    %cst_71 = arith.constant dense<0.000000e+00> : vector<8x384xf32>
    %266 = tpu.matmul %234, %20, %cst_71 {dimension_numbers = #tpu.dot_dimension_numbers<[1], [0], [0], [1], [0, 0, 1, 1], [], []>} : vector<8x128xf32>, vector<128x384xf32>, vector<8x384xf32> -> vector<8x384xf32>
    %267 = vector.broadcast %22 : vector<1x384xf32> to vector<8x384xf32>
    %268 = arith.addf %266, %267 : vector<8x384xf32>
    %269 = vector.extract_strided_slice %265 {offsets = [0, 0], sizes = [8, 256], strides = [1, 1]} : vector<8x384xf32> to vector<8x256xf32>
    %270 = vector.extract_strided_slice %268 {offsets = [0, 0], sizes = [8, 256], strides = [1, 1]} : vector<8x384xf32> to vector<8x256xf32>
    %271 = arith.addf %269, %270 : vector<8x256xf32>
    %272 = arith.negf %271 : vector<8x256xf32>
    %273 = math.exp %272 : vector<8x256xf32>
    %cst_72 = arith.constant 1.000000e+00 : f32
    %274 = vector.broadcast %cst_72 : f32 to vector<8x256xf32>
    %275 = arith.addf %274, %273 : vector<8x256xf32>
    %276 = arith.divf %274, %275 : vector<8x256xf32>
    %277 = vector.extract_strided_slice %276 {offsets = [0, 0], sizes = [8, 128], strides = [1, 1]} : vector<8x256xf32> to vector<8x128xf32>
    %278 = vector.extract_strided_slice %276 {offsets = [0, 128], sizes = [8, 128], strides = [1, 1]} : vector<8x256xf32> to vector<8x128xf32>
    %279 = vector.extract_strided_slice %265 {offsets = [0, 256], sizes = [8, 128], strides = [1, 1]} : vector<8x384xf32> to vector<8x128xf32>
    %280 = vector.extract_strided_slice %268 {offsets = [0, 256], sizes = [8, 128], strides = [1, 1]} : vector<8x384xf32> to vector<8x128xf32>
    %281 = arith.mulf %277, %280 : vector<8x128xf32>
    %282 = arith.addf %279, %281 : vector<8x128xf32>
    %283 = math.tanh %282 : vector<8x128xf32>
    %cst_73 = arith.constant 1.000000e+00 : f32
    %284 = vector.broadcast %cst_73 : f32 to vector<8x128xf32>
    %285 = arith.subf %284, %278 : vector<8x128xf32>
    %286 = arith.mulf %285, %283 : vector<8x128xf32>
    %287 = arith.mulf %278, %234 : vector<8x128xf32>
    %288 = arith.addf %286, %287 : vector<8x128xf32>
    %c4 = arith.constant 4 : index
    %c0_74 = arith.constant 0 : index
    %c0_75 = arith.constant 0 : index
    %289 = vector.load %arg6[%c4, %c0_74, %c0_75] : memref<16x8x256xf32, #tpu.memory_space<vmem>>, vector<1x8x128xf32>
    %290 = vector.shape_cast %289 : vector<1x8x128xf32> to vector<8x128xf32>
    %291 = vector.shape_cast %264 : vector<8x128xf32> to vector<1x8x128xf32>
    tpu.vector_store %arg6[%c4, %c0_74, %c0_75], %291 {strides = array<i32>} : memref<16x8x256xf32, #tpu.memory_space<vmem>>, vector<1x8x128xf32>,
    %c11 = arith.constant 11 : index
    %c0_76 = arith.constant 0 : index
    %c128_77 = arith.constant 128 : index
    %292 = vector.load %arg6[%c11, %c0_76, %c128_77] : memref<16x8x256xf32, #tpu.memory_space<vmem>>, vector<1x8x128xf32>
    %293 = vector.shape_cast %292 : vector<1x8x128xf32> to vector<8x128xf32>
    %294 = vector.shape_cast %288 : vector<8x128xf32> to vector<1x8x128xf32>
    tpu.vector_store %arg6[%c11, %c0_76, %c128_77], %294 {strides = array<i32>} : memref<16x8x256xf32, #tpu.memory_space<vmem>>, vector<1x8x128xf32>,
    %295 = vector.extract_strided_slice %7 {offsets = [40, 0], sizes = [8, 384], strides = [1, 1]} : vector<128x384xf32> to vector<8x384xf32>
    %cst_78 = arith.constant dense<0.000000e+00> : vector<8x384xf32>
    %296 = tpu.matmul %264, %16, %cst_78 {dimension_numbers = #tpu.dot_dimension_numbers<[1], [0], [0], [1], [0, 0, 1, 1], [], []>} : vector<8x128xf32>, vector<128x384xf32>, vector<8x384xf32> -> vector<8x384xf32>
    %297 = vector.broadcast %18 : vector<1x384xf32> to vector<8x384xf32>
    %298 = arith.addf %296, %297 : vector<8x384xf32>
    %299 = vector.extract_strided_slice %295 {offsets = [0, 0], sizes = [8, 256], strides = [1, 1]} : vector<8x384xf32> to vector<8x256xf32>
    %300 = vector.extract_strided_slice %298 {offsets = [0, 0], sizes = [8, 256], strides = [1, 1]} : vector<8x384xf32> to vector<8x256xf32>
    %301 = arith.addf %299, %300 : vector<8x256xf32>
    %302 = arith.negf %301 : vector<8x256xf32>
    %303 = math.exp %302 : vector<8x256xf32>
    %cst_79 = arith.constant 1.000000e+00 : f32
    %304 = vector.broadcast %cst_79 : f32 to vector<8x256xf32>
    %305 = arith.addf %304, %303 : vector<8x256xf32>
    %306 = arith.divf %304, %305 : vector<8x256xf32>
    %307 = vector.extract_strided_slice %306 {offsets = [0, 0], sizes = [8, 128], strides = [1, 1]} : vector<8x256xf32> to vector<8x128xf32>
    %308 = vector.extract_strided_slice %306 {offsets = [0, 128], sizes = [8, 128], strides = [1, 1]} : vector<8x256xf32> to vector<8x128xf32>
    %309 = vector.extract_strided_slice %295 {offsets = [0, 256], sizes = [8, 128], strides = [1, 1]} : vector<8x384xf32> to vector<8x128xf32>
    %310 = vector.extract_strided_slice %298 {offsets = [0, 256], sizes = [8, 128], strides = [1, 1]} : vector<8x384xf32> to vector<8x128xf32>
    %311 = arith.mulf %307, %310 : vector<8x128xf32>
    %312 = arith.addf %309, %311 : vector<8x128xf32>
    %313 = math.tanh %312 : vector<8x128xf32>
    %cst_80 = arith.constant 1.000000e+00 : f32
    %314 = vector.broadcast %cst_80 : f32 to vector<8x128xf32>
    %315 = arith.subf %314, %308 : vector<8x128xf32>
    %316 = arith.mulf %315, %313 : vector<8x128xf32>
    %317 = arith.mulf %308, %264 : vector<8x128xf32>
    %318 = arith.addf %316, %317 : vector<8x128xf32>
    %319 = vector.extract_strided_slice %14 {offsets = [80, 0], sizes = [8, 384], strides = [1, 1]} : vector<128x384xf32> to vector<8x384xf32>
    %cst_81 = arith.constant dense<0.000000e+00> : vector<8x384xf32>
    %320 = tpu.matmul %288, %20, %cst_81 {dimension_numbers = #tpu.dot_dimension_numbers<[1], [0], [0], [1], [0, 0, 1, 1], [], []>} : vector<8x128xf32>, vector<128x384xf32>, vector<8x384xf32> -> vector<8x384xf32>
    %321 = vector.broadcast %22 : vector<1x384xf32> to vector<8x384xf32>
    %322 = arith.addf %320, %321 : vector<8x384xf32>
    %323 = vector.extract_strided_slice %319 {offsets = [0, 0], sizes = [8, 256], strides = [1, 1]} : vector<8x384xf32> to vector<8x256xf32>
    %324 = vector.extract_strided_slice %322 {offsets = [0, 0], sizes = [8, 256], strides = [1, 1]} : vector<8x384xf32> to vector<8x256xf32>
    %325 = arith.addf %323, %324 : vector<8x256xf32>
    %326 = arith.negf %325 : vector<8x256xf32>
    %327 = math.exp %326 : vector<8x256xf32>
    %cst_82 = arith.constant 1.000000e+00 : f32
    %328 = vector.broadcast %cst_82 : f32 to vector<8x256xf32>
    %329 = arith.addf %328, %327 : vector<8x256xf32>
    %330 = arith.divf %328, %329 : vector<8x256xf32>
    %331 = vector.extract_strided_slice %330 {offsets = [0, 0], sizes = [8, 128], strides = [1, 1]} : vector<8x256xf32> to vector<8x128xf32>
    %332 = vector.extract_strided_slice %330 {offsets = [0, 128], sizes = [8, 128], strides = [1, 1]} : vector<8x256xf32> to vector<8x128xf32>
    %333 = vector.extract_strided_slice %319 {offsets = [0, 256], sizes = [8, 128], strides = [1, 1]} : vector<8x384xf32> to vector<8x128xf32>
    %334 = vector.extract_strided_slice %322 {offsets = [0, 256], sizes = [8, 128], strides = [1, 1]} : vector<8x384xf32> to vector<8x128xf32>
    %335 = arith.mulf %331, %334 : vector<8x128xf32>
    %336 = arith.addf %333, %335 : vector<8x128xf32>
    %337 = math.tanh %336 : vector<8x128xf32>
    %cst_83 = arith.constant 1.000000e+00 : f32
    %338 = vector.broadcast %cst_83 : f32 to vector<8x128xf32>
    %339 = arith.subf %338, %332 : vector<8x128xf32>
    %340 = arith.mulf %339, %337 : vector<8x128xf32>
    %341 = arith.mulf %332, %288 : vector<8x128xf32>
    %342 = arith.addf %340, %341 : vector<8x128xf32>
    %c5 = arith.constant 5 : index
    %c0_84 = arith.constant 0 : index
    %c0_85 = arith.constant 0 : index
    %343 = vector.load %arg6[%c5, %c0_84, %c0_85] : memref<16x8x256xf32, #tpu.memory_space<vmem>>, vector<1x8x128xf32>
    %344 = vector.shape_cast %343 : vector<1x8x128xf32> to vector<8x128xf32>
    %345 = vector.shape_cast %318 : vector<8x128xf32> to vector<1x8x128xf32>
    tpu.vector_store %arg6[%c5, %c0_84, %c0_85], %345 {strides = array<i32>} : memref<16x8x256xf32, #tpu.memory_space<vmem>>, vector<1x8x128xf32>,
    %c10 = arith.constant 10 : index
    %c0_86 = arith.constant 0 : index
    %c128_87 = arith.constant 128 : index
    %346 = vector.load %arg6[%c10, %c0_86, %c128_87] : memref<16x8x256xf32, #tpu.memory_space<vmem>>, vector<1x8x128xf32>
    %347 = vector.shape_cast %346 : vector<1x8x128xf32> to vector<8x128xf32>
    %348 = vector.shape_cast %342 : vector<8x128xf32> to vector<1x8x128xf32>
    tpu.vector_store %arg6[%c10, %c0_86, %c128_87], %348 {strides = array<i32>} : memref<16x8x256xf32, #tpu.memory_space<vmem>>, vector<1x8x128xf32>,
    %349 = vector.extract_strided_slice %7 {offsets = [48, 0], sizes = [8, 384], strides = [1, 1]} : vector<128x384xf32> to vector<8x384xf32>
    %cst_88 = arith.constant dense<0.000000e+00> : vector<8x384xf32>
    %350 = tpu.matmul %318, %16, %cst_88 {dimension_numbers = #tpu.dot_dimension_numbers<[1], [0], [0], [1], [0, 0, 1, 1], [], []>} : vector<8x128xf32>, vector<128x384xf32>, vector<8x384xf32> -> vector<8x384xf32>
    %351 = vector.broadcast %18 : vector<1x384xf32> to vector<8x384xf32>
    %352 = arith.addf %350, %351 : vector<8x384xf32>
    %353 = vector.extract_strided_slice %349 {offsets = [0, 0], sizes = [8, 256], strides = [1, 1]} : vector<8x384xf32> to vector<8x256xf32>
    %354 = vector.extract_strided_slice %352 {offsets = [0, 0], sizes = [8, 256], strides = [1, 1]} : vector<8x384xf32> to vector<8x256xf32>
    %355 = arith.addf %353, %354 : vector<8x256xf32>
    %356 = arith.negf %355 : vector<8x256xf32>
    %357 = math.exp %356 : vector<8x256xf32>
    %cst_89 = arith.constant 1.000000e+00 : f32
    %358 = vector.broadcast %cst_89 : f32 to vector<8x256xf32>
    %359 = arith.addf %358, %357 : vector<8x256xf32>
    %360 = arith.divf %358, %359 : vector<8x256xf32>
    %361 = vector.extract_strided_slice %360 {offsets = [0, 0], sizes = [8, 128], strides = [1, 1]} : vector<8x256xf32> to vector<8x128xf32>
    %362 = vector.extract_strided_slice %360 {offsets = [0, 128], sizes = [8, 128], strides = [1, 1]} : vector<8x256xf32> to vector<8x128xf32>
    %363 = vector.extract_strided_slice %349 {offsets = [0, 256], sizes = [8, 128], strides = [1, 1]} : vector<8x384xf32> to vector<8x128xf32>
    %364 = vector.extract_strided_slice %352 {offsets = [0, 256], sizes = [8, 128], strides = [1, 1]} : vector<8x384xf32> to vector<8x128xf32>
    %365 = arith.mulf %361, %364 : vector<8x128xf32>
    %366 = arith.addf %363, %365 : vector<8x128xf32>
    %367 = math.tanh %366 : vector<8x128xf32>
    %cst_90 = arith.constant 1.000000e+00 : f32
    %368 = vector.broadcast %cst_90 : f32 to vector<8x128xf32>
    %369 = arith.subf %368, %362 : vector<8x128xf32>
    %370 = arith.mulf %369, %367 : vector<8x128xf32>
    %371 = arith.mulf %362, %318 : vector<8x128xf32>
    %372 = arith.addf %370, %371 : vector<8x128xf32>
    %373 = vector.extract_strided_slice %14 {offsets = [72, 0], sizes = [8, 384], strides = [1, 1]} : vector<128x384xf32> to vector<8x384xf32>
    %cst_91 = arith.constant dense<0.000000e+00> : vector<8x384xf32>
    %374 = tpu.matmul %342, %20, %cst_91 {dimension_numbers = #tpu.dot_dimension_numbers<[1], [0], [0], [1], [0, 0, 1, 1], [], []>} : vector<8x128xf32>, vector<128x384xf32>, vector<8x384xf32> -> vector<8x384xf32>
    %375 = vector.broadcast %22 : vector<1x384xf32> to vector<8x384xf32>
    %376 = arith.addf %374, %375 : vector<8x384xf32>
    %377 = vector.extract_strided_slice %373 {offsets = [0, 0], sizes = [8, 256], strides = [1, 1]} : vector<8x384xf32> to vector<8x256xf32>
    %378 = vector.extract_strided_slice %376 {offsets = [0, 0], sizes = [8, 256], strides = [1, 1]} : vector<8x384xf32> to vector<8x256xf32>
    %379 = arith.addf %377, %378 : vector<8x256xf32>
    %380 = arith.negf %379 : vector<8x256xf32>
    %381 = math.exp %380 : vector<8x256xf32>
    %cst_92 = arith.constant 1.000000e+00 : f32
    %382 = vector.broadcast %cst_92 : f32 to vector<8x256xf32>
    %383 = arith.addf %382, %381 : vector<8x256xf32>
    %384 = arith.divf %382, %383 : vector<8x256xf32>
    %385 = vector.extract_strided_slice %384 {offsets = [0, 0], sizes = [8, 128], strides = [1, 1]} : vector<8x256xf32> to vector<8x128xf32>
    %386 = vector.extract_strided_slice %384 {offsets = [0, 128], sizes = [8, 128], strides = [1, 1]} : vector<8x256xf32> to vector<8x128xf32>
    %387 = vector.extract_strided_slice %373 {offsets = [0, 256], sizes = [8, 128], strides = [1, 1]} : vector<8x384xf32> to vector<8x128xf32>
    %388 = vector.extract_strided_slice %376 {offsets = [0, 256], sizes = [8, 128], strides = [1, 1]} : vector<8x384xf32> to vector<8x128xf32>
    %389 = arith.mulf %385, %388 : vector<8x128xf32>
    %390 = arith.addf %387, %389 : vector<8x128xf32>
    %391 = math.tanh %390 : vector<8x128xf32>
    %cst_93 = arith.constant 1.000000e+00 : f32
    %392 = vector.broadcast %cst_93 : f32 to vector<8x128xf32>
    %393 = arith.subf %392, %386 : vector<8x128xf32>
    %394 = arith.mulf %393, %391 : vector<8x128xf32>
    %395 = arith.mulf %386, %342 : vector<8x128xf32>
    %396 = arith.addf %394, %395 : vector<8x128xf32>
    %c6 = arith.constant 6 : index
    %c0_94 = arith.constant 0 : index
    %c0_95 = arith.constant 0 : index
    %397 = vector.load %arg6[%c6, %c0_94, %c0_95] : memref<16x8x256xf32, #tpu.memory_space<vmem>>, vector<1x8x128xf32>
    %398 = vector.shape_cast %397 : vector<1x8x128xf32> to vector<8x128xf32>
    %399 = vector.shape_cast %372 : vector<8x128xf32> to vector<1x8x128xf32>
    tpu.vector_store %arg6[%c6, %c0_94, %c0_95], %399 {strides = array<i32>} : memref<16x8x256xf32, #tpu.memory_space<vmem>>, vector<1x8x128xf32>,
    %c9 = arith.constant 9 : index
    %c0_96 = arith.constant 0 : index
    %c128_97 = arith.constant 128 : index
    %400 = vector.load %arg6[%c9, %c0_96, %c128_97] : memref<16x8x256xf32, #tpu.memory_space<vmem>>, vector<1x8x128xf32>
    %401 = vector.shape_cast %400 : vector<1x8x128xf32> to vector<8x128xf32>
    %402 = vector.shape_cast %396 : vector<8x128xf32> to vector<1x8x128xf32>
    tpu.vector_store %arg6[%c9, %c0_96, %c128_97], %402 {strides = array<i32>} : memref<16x8x256xf32, #tpu.memory_space<vmem>>, vector<1x8x128xf32>,
    %403 = vector.extract_strided_slice %7 {offsets = [56, 0], sizes = [8, 384], strides = [1, 1]} : vector<128x384xf32> to vector<8x384xf32>
    %cst_98 = arith.constant dense<0.000000e+00> : vector<8x384xf32>
    %404 = tpu.matmul %372, %16, %cst_98 {dimension_numbers = #tpu.dot_dimension_numbers<[1], [0], [0], [1], [0, 0, 1, 1], [], []>} : vector<8x128xf32>, vector<128x384xf32>, vector<8x384xf32> -> vector<8x384xf32>
    %405 = vector.broadcast %18 : vector<1x384xf32> to vector<8x384xf32>
    %406 = arith.addf %404, %405 : vector<8x384xf32>
    %407 = vector.extract_strided_slice %403 {offsets = [0, 0], sizes = [8, 256], strides = [1, 1]} : vector<8x384xf32> to vector<8x256xf32>
    %408 = vector.extract_strided_slice %406 {offsets = [0, 0], sizes = [8, 256], strides = [1, 1]} : vector<8x384xf32> to vector<8x256xf32>
    %409 = arith.addf %407, %408 : vector<8x256xf32>
    %410 = arith.negf %409 : vector<8x256xf32>
    %411 = math.exp %410 : vector<8x256xf32>
    %cst_99 = arith.constant 1.000000e+00 : f32
    %412 = vector.broadcast %cst_99 : f32 to vector<8x256xf32>
    %413 = arith.addf %412, %411 : vector<8x256xf32>
    %414 = arith.divf %412, %413 : vector<8x256xf32>
    %415 = vector.extract_strided_slice %414 {offsets = [0, 0], sizes = [8, 128], strides = [1, 1]} : vector<8x256xf32> to vector<8x128xf32>
    %416 = vector.extract_strided_slice %414 {offsets = [0, 128], sizes = [8, 128], strides = [1, 1]} : vector<8x256xf32> to vector<8x128xf32>
    %417 = vector.extract_strided_slice %403 {offsets = [0, 256], sizes = [8, 128], strides = [1, 1]} : vector<8x384xf32> to vector<8x128xf32>
    %418 = vector.extract_strided_slice %406 {offsets = [0, 256], sizes = [8, 128], strides = [1, 1]} : vector<8x384xf32> to vector<8x128xf32>
    %419 = arith.mulf %415, %418 : vector<8x128xf32>
    %420 = arith.addf %417, %419 : vector<8x128xf32>
    %421 = math.tanh %420 : vector<8x128xf32>
    %cst_100 = arith.constant 1.000000e+00 : f32
    %422 = vector.broadcast %cst_100 : f32 to vector<8x128xf32>
    %423 = arith.subf %422, %416 : vector<8x128xf32>
    %424 = arith.mulf %423, %421 : vector<8x128xf32>
    %425 = arith.mulf %416, %372 : vector<8x128xf32>
    %426 = arith.addf %424, %425 : vector<8x128xf32>
    %427 = vector.extract_strided_slice %14 {offsets = [64, 0], sizes = [8, 384], strides = [1, 1]} : vector<128x384xf32> to vector<8x384xf32>
    %cst_101 = arith.constant dense<0.000000e+00> : vector<8x384xf32>
    %428 = tpu.matmul %396, %20, %cst_101 {dimension_numbers = #tpu.dot_dimension_numbers<[1], [0], [0], [1], [0, 0, 1, 1], [], []>} : vector<8x128xf32>, vector<128x384xf32>, vector<8x384xf32> -> vector<8x384xf32>
    %429 = vector.broadcast %22 : vector<1x384xf32> to vector<8x384xf32>
    %430 = arith.addf %428, %429 : vector<8x384xf32>
    %431 = vector.extract_strided_slice %427 {offsets = [0, 0], sizes = [8, 256], strides = [1, 1]} : vector<8x384xf32> to vector<8x256xf32>
    %432 = vector.extract_strided_slice %430 {offsets = [0, 0], sizes = [8, 256], strides = [1, 1]} : vector<8x384xf32> to vector<8x256xf32>
    %433 = arith.addf %431, %432 : vector<8x256xf32>
    %434 = arith.negf %433 : vector<8x256xf32>
    %435 = math.exp %434 : vector<8x256xf32>
    %cst_102 = arith.constant 1.000000e+00 : f32
    %436 = vector.broadcast %cst_102 : f32 to vector<8x256xf32>
    %437 = arith.addf %436, %435 : vector<8x256xf32>
    %438 = arith.divf %436, %437 : vector<8x256xf32>
    %439 = vector.extract_strided_slice %438 {offsets = [0, 0], sizes = [8, 128], strides = [1, 1]} : vector<8x256xf32> to vector<8x128xf32>
    %440 = vector.extract_strided_slice %438 {offsets = [0, 128], sizes = [8, 128], strides = [1, 1]} : vector<8x256xf32> to vector<8x128xf32>
    %441 = vector.extract_strided_slice %427 {offsets = [0, 256], sizes = [8, 128], strides = [1, 1]} : vector<8x384xf32> to vector<8x128xf32>
    %442 = vector.extract_strided_slice %430 {offsets = [0, 256], sizes = [8, 128], strides = [1, 1]} : vector<8x384xf32> to vector<8x128xf32>
    %443 = arith.mulf %439, %442 : vector<8x128xf32>
    %444 = arith.addf %441, %443 : vector<8x128xf32>
    %445 = math.tanh %444 : vector<8x128xf32>
    %cst_103 = arith.constant 1.000000e+00 : f32
    %446 = vector.broadcast %cst_103 : f32 to vector<8x128xf32>
    %447 = arith.subf %446, %440 : vector<8x128xf32>
    %448 = arith.mulf %447, %445 : vector<8x128xf32>
    %449 = arith.mulf %440, %396 : vector<8x128xf32>
    %450 = arith.addf %448, %449 : vector<8x128xf32>
    %c7 = arith.constant 7 : index
    %c0_104 = arith.constant 0 : index
    %c0_105 = arith.constant 0 : index
    %451 = vector.load %arg6[%c7, %c0_104, %c0_105] : memref<16x8x256xf32, #tpu.memory_space<vmem>>, vector<1x8x128xf32>
    %452 = vector.shape_cast %451 : vector<1x8x128xf32> to vector<8x128xf32>
    %453 = vector.shape_cast %426 : vector<8x128xf32> to vector<1x8x128xf32>
    tpu.vector_store %arg6[%c7, %c0_104, %c0_105], %453 {strides = array<i32>} : memref<16x8x256xf32, #tpu.memory_space<vmem>>, vector<1x8x128xf32>,
    %c8 = arith.constant 8 : index
    %c0_106 = arith.constant 0 : index
    %c128_107 = arith.constant 128 : index
    %454 = vector.load %arg6[%c8, %c0_106, %c128_107] : memref<16x8x256xf32, #tpu.memory_space<vmem>>, vector<1x8x128xf32>
    %455 = vector.shape_cast %454 : vector<1x8x128xf32> to vector<8x128xf32>
    %456 = vector.shape_cast %450 : vector<8x128xf32> to vector<1x8x128xf32>
    tpu.vector_store %arg6[%c8, %c0_106, %c128_107], %456 {strides = array<i32>} : memref<16x8x256xf32, #tpu.memory_space<vmem>>, vector<1x8x128xf32>,
    %457 = vector.extract_strided_slice %7 {offsets = [64, 0], sizes = [8, 384], strides = [1, 1]} : vector<128x384xf32> to vector<8x384xf32>
    %cst_108 = arith.constant dense<0.000000e+00> : vector<8x384xf32>
    %458 = tpu.matmul %426, %16, %cst_108 {dimension_numbers = #tpu.dot_dimension_numbers<[1], [0], [0], [1], [0, 0, 1, 1], [], []>} : vector<8x128xf32>, vector<128x384xf32>, vector<8x384xf32> -> vector<8x384xf32>
    %459 = vector.broadcast %18 : vector<1x384xf32> to vector<8x384xf32>
    %460 = arith.addf %458, %459 : vector<8x384xf32>
    %461 = vector.extract_strided_slice %457 {offsets = [0, 0], sizes = [8, 256], strides = [1, 1]} : vector<8x384xf32> to vector<8x256xf32>
    %462 = vector.extract_strided_slice %460 {offsets = [0, 0], sizes = [8, 256], strides = [1, 1]} : vector<8x384xf32> to vector<8x256xf32>
    %463 = arith.addf %461, %462 : vector<8x256xf32>
    %464 = arith.negf %463 : vector<8x256xf32>
    %465 = math.exp %464 : vector<8x256xf32>
    %cst_109 = arith.constant 1.000000e+00 : f32
    %466 = vector.broadcast %cst_109 : f32 to vector<8x256xf32>
    %467 = arith.addf %466, %465 : vector<8x256xf32>
    %468 = arith.divf %466, %467 : vector<8x256xf32>
    %469 = vector.extract_strided_slice %468 {offsets = [0, 0], sizes = [8, 128], strides = [1, 1]} : vector<8x256xf32> to vector<8x128xf32>
    %470 = vector.extract_strided_slice %468 {offsets = [0, 128], sizes = [8, 128], strides = [1, 1]} : vector<8x256xf32> to vector<8x128xf32>
    %471 = vector.extract_strided_slice %457 {offsets = [0, 256], sizes = [8, 128], strides = [1, 1]} : vector<8x384xf32> to vector<8x128xf32>
    %472 = vector.extract_strided_slice %460 {offsets = [0, 256], sizes = [8, 128], strides = [1, 1]} : vector<8x384xf32> to vector<8x128xf32>
    %473 = arith.mulf %469, %472 : vector<8x128xf32>
    %474 = arith.addf %471, %473 : vector<8x128xf32>
    %475 = math.tanh %474 : vector<8x128xf32>
    %cst_110 = arith.constant 1.000000e+00 : f32
    %476 = vector.broadcast %cst_110 : f32 to vector<8x128xf32>
    %477 = arith.subf %476, %470 : vector<8x128xf32>
    %478 = arith.mulf %477, %475 : vector<8x128xf32>
    %479 = arith.mulf %470, %426 : vector<8x128xf32>
    %480 = arith.addf %478, %479 : vector<8x128xf32>
    %481 = vector.extract_strided_slice %14 {offsets = [56, 0], sizes = [8, 384], strides = [1, 1]} : vector<128x384xf32> to vector<8x384xf32>
    %cst_111 = arith.constant dense<0.000000e+00> : vector<8x384xf32>
    %482 = tpu.matmul %450, %20, %cst_111 {dimension_numbers = #tpu.dot_dimension_numbers<[1], [0], [0], [1], [0, 0, 1, 1], [], []>} : vector<8x128xf32>, vector<128x384xf32>, vector<8x384xf32> -> vector<8x384xf32>
    %483 = vector.broadcast %22 : vector<1x384xf32> to vector<8x384xf32>
    %484 = arith.addf %482, %483 : vector<8x384xf32>
    %485 = vector.extract_strided_slice %481 {offsets = [0, 0], sizes = [8, 256], strides = [1, 1]} : vector<8x384xf32> to vector<8x256xf32>
    %486 = vector.extract_strided_slice %484 {offsets = [0, 0], sizes = [8, 256], strides = [1, 1]} : vector<8x384xf32> to vector<8x256xf32>
    %487 = arith.addf %485, %486 : vector<8x256xf32>
    %488 = arith.negf %487 : vector<8x256xf32>
    %489 = math.exp %488 : vector<8x256xf32>
    %cst_112 = arith.constant 1.000000e+00 : f32
    %490 = vector.broadcast %cst_112 : f32 to vector<8x256xf32>
    %491 = arith.addf %490, %489 : vector<8x256xf32>
    %492 = arith.divf %490, %491 : vector<8x256xf32>
    %493 = vector.extract_strided_slice %492 {offsets = [0, 0], sizes = [8, 128], strides = [1, 1]} : vector<8x256xf32> to vector<8x128xf32>
    %494 = vector.extract_strided_slice %492 {offsets = [0, 128], sizes = [8, 128], strides = [1, 1]} : vector<8x256xf32> to vector<8x128xf32>
    %495 = vector.extract_strided_slice %481 {offsets = [0, 256], sizes = [8, 128], strides = [1, 1]} : vector<8x384xf32> to vector<8x128xf32>
    %496 = vector.extract_strided_slice %484 {offsets = [0, 256], sizes = [8, 128], strides = [1, 1]} : vector<8x384xf32> to vector<8x128xf32>
    %497 = arith.mulf %493, %496 : vector<8x128xf32>
    %498 = arith.addf %495, %497 : vector<8x128xf32>
    %499 = math.tanh %498 : vector<8x128xf32>
    %cst_113 = arith.constant 1.000000e+00 : f32
    %500 = vector.broadcast %cst_113 : f32 to vector<8x128xf32>
    %501 = arith.subf %500, %494 : vector<8x128xf32>
    %502 = arith.mulf %501, %499 : vector<8x128xf32>
    %503 = arith.mulf %494, %450 : vector<8x128xf32>
    %504 = arith.addf %502, %503 : vector<8x128xf32>
    %c8_114 = arith.constant 8 : index
    %c0_115 = arith.constant 0 : index
    %c0_116 = arith.constant 0 : index
    %505 = vector.load %arg6[%c8_114, %c0_115, %c0_116] : memref<16x8x256xf32, #tpu.memory_space<vmem>>, vector<1x8x128xf32>
    %506 = vector.shape_cast %505 : vector<1x8x128xf32> to vector<8x128xf32>
    %507 = vector.shape_cast %480 : vector<8x128xf32> to vector<1x8x128xf32>
    tpu.vector_store %arg6[%c8_114, %c0_115, %c0_116], %507 {strides = array<i32>} : memref<16x8x256xf32, #tpu.memory_space<vmem>>, vector<1x8x128xf32>,
    %c7_117 = arith.constant 7 : index
    %c0_118 = arith.constant 0 : index
    %c128_119 = arith.constant 128 : index
    %508 = vector.load %arg6[%c7_117, %c0_118, %c128_119] : memref<16x8x256xf32, #tpu.memory_space<vmem>>, vector<1x8x128xf32>
    %509 = vector.shape_cast %508 : vector<1x8x128xf32> to vector<8x128xf32>
    %510 = vector.shape_cast %504 : vector<8x128xf32> to vector<1x8x128xf32>
    tpu.vector_store %arg6[%c7_117, %c0_118, %c128_119], %510 {strides = array<i32>} : memref<16x8x256xf32, #tpu.memory_space<vmem>>, vector<1x8x128xf32>,
    %511 = vector.extract_strided_slice %7 {offsets = [72, 0], sizes = [8, 384], strides = [1, 1]} : vector<128x384xf32> to vector<8x384xf32>
    %cst_120 = arith.constant dense<0.000000e+00> : vector<8x384xf32>
    %512 = tpu.matmul %480, %16, %cst_120 {dimension_numbers = #tpu.dot_dimension_numbers<[1], [0], [0], [1], [0, 0, 1, 1], [], []>} : vector<8x128xf32>, vector<128x384xf32>, vector<8x384xf32> -> vector<8x384xf32>
    %513 = vector.broadcast %18 : vector<1x384xf32> to vector<8x384xf32>
    %514 = arith.addf %512, %513 : vector<8x384xf32>
    %515 = vector.extract_strided_slice %511 {offsets = [0, 0], sizes = [8, 256], strides = [1, 1]} : vector<8x384xf32> to vector<8x256xf32>
    %516 = vector.extract_strided_slice %514 {offsets = [0, 0], sizes = [8, 256], strides = [1, 1]} : vector<8x384xf32> to vector<8x256xf32>
    %517 = arith.addf %515, %516 : vector<8x256xf32>
    %518 = arith.negf %517 : vector<8x256xf32>
    %519 = math.exp %518 : vector<8x256xf32>
    %cst_121 = arith.constant 1.000000e+00 : f32
    %520 = vector.broadcast %cst_121 : f32 to vector<8x256xf32>
    %521 = arith.addf %520, %519 : vector<8x256xf32>
    %522 = arith.divf %520, %521 : vector<8x256xf32>
    %523 = vector.extract_strided_slice %522 {offsets = [0, 0], sizes = [8, 128], strides = [1, 1]} : vector<8x256xf32> to vector<8x128xf32>
    %524 = vector.extract_strided_slice %522 {offsets = [0, 128], sizes = [8, 128], strides = [1, 1]} : vector<8x256xf32> to vector<8x128xf32>
    %525 = vector.extract_strided_slice %511 {offsets = [0, 256], sizes = [8, 128], strides = [1, 1]} : vector<8x384xf32> to vector<8x128xf32>
    %526 = vector.extract_strided_slice %514 {offsets = [0, 256], sizes = [8, 128], strides = [1, 1]} : vector<8x384xf32> to vector<8x128xf32>
    %527 = arith.mulf %523, %526 : vector<8x128xf32>
    %528 = arith.addf %525, %527 : vector<8x128xf32>
    %529 = math.tanh %528 : vector<8x128xf32>
    %cst_122 = arith.constant 1.000000e+00 : f32
    %530 = vector.broadcast %cst_122 : f32 to vector<8x128xf32>
    %531 = arith.subf %530, %524 : vector<8x128xf32>
    %532 = arith.mulf %531, %529 : vector<8x128xf32>
    %533 = arith.mulf %524, %480 : vector<8x128xf32>
    %534 = arith.addf %532, %533 : vector<8x128xf32>
    %535 = vector.extract_strided_slice %14 {offsets = [48, 0], sizes = [8, 384], strides = [1, 1]} : vector<128x384xf32> to vector<8x384xf32>
    %cst_123 = arith.constant dense<0.000000e+00> : vector<8x384xf32>
    %536 = tpu.matmul %504, %20, %cst_123 {dimension_numbers = #tpu.dot_dimension_numbers<[1], [0], [0], [1], [0, 0, 1, 1], [], []>} : vector<8x128xf32>, vector<128x384xf32>, vector<8x384xf32> -> vector<8x384xf32>
    %537 = vector.broadcast %22 : vector<1x384xf32> to vector<8x384xf32>
    %538 = arith.addf %536, %537 : vector<8x384xf32>
    %539 = vector.extract_strided_slice %535 {offsets = [0, 0], sizes = [8, 256], strides = [1, 1]} : vector<8x384xf32> to vector<8x256xf32>
    %540 = vector.extract_strided_slice %538 {offsets = [0, 0], sizes = [8, 256], strides = [1, 1]} : vector<8x384xf32> to vector<8x256xf32>
    %541 = arith.addf %539, %540 : vector<8x256xf32>
    %542 = arith.negf %541 : vector<8x256xf32>
    %543 = math.exp %542 : vector<8x256xf32>
    %cst_124 = arith.constant 1.000000e+00 : f32
    %544 = vector.broadcast %cst_124 : f32 to vector<8x256xf32>
    %545 = arith.addf %544, %543 : vector<8x256xf32>
    %546 = arith.divf %544, %545 : vector<8x256xf32>
    %547 = vector.extract_strided_slice %546 {offsets = [0, 0], sizes = [8, 128], strides = [1, 1]} : vector<8x256xf32> to vector<8x128xf32>
    %548 = vector.extract_strided_slice %546 {offsets = [0, 128], sizes = [8, 128], strides = [1, 1]} : vector<8x256xf32> to vector<8x128xf32>
    %549 = vector.extract_strided_slice %535 {offsets = [0, 256], sizes = [8, 128], strides = [1, 1]} : vector<8x384xf32> to vector<8x128xf32>
    %550 = vector.extract_strided_slice %538 {offsets = [0, 256], sizes = [8, 128], strides = [1, 1]} : vector<8x384xf32> to vector<8x128xf32>
    %551 = arith.mulf %547, %550 : vector<8x128xf32>
    %552 = arith.addf %549, %551 : vector<8x128xf32>
    %553 = math.tanh %552 : vector<8x128xf32>
    %cst_125 = arith.constant 1.000000e+00 : f32
    %554 = vector.broadcast %cst_125 : f32 to vector<8x128xf32>
    %555 = arith.subf %554, %548 : vector<8x128xf32>
    %556 = arith.mulf %555, %553 : vector<8x128xf32>
    %557 = arith.mulf %548, %504 : vector<8x128xf32>
    %558 = arith.addf %556, %557 : vector<8x128xf32>
    %c9_126 = arith.constant 9 : index
    %c0_127 = arith.constant 0 : index
    %c0_128 = arith.constant 0 : index
    %559 = vector.load %arg6[%c9_126, %c0_127, %c0_128] : memref<16x8x256xf32, #tpu.memory_space<vmem>>, vector<1x8x128xf32>
    %560 = vector.shape_cast %559 : vector<1x8x128xf32> to vector<8x128xf32>
    %561 = vector.shape_cast %534 : vector<8x128xf32> to vector<1x8x128xf32>
    tpu.vector_store %arg6[%c9_126, %c0_127, %c0_128], %561 {strides = array<i32>} : memref<16x8x256xf32, #tpu.memory_space<vmem>>, vector<1x8x128xf32>,
    %c6_129 = arith.constant 6 : index
    %c0_130 = arith.constant 0 : index
    %c128_131 = arith.constant 128 : index
    %562 = vector.load %arg6[%c6_129, %c0_130, %c128_131] : memref<16x8x256xf32, #tpu.memory_space<vmem>>, vector<1x8x128xf32>
    %563 = vector.shape_cast %562 : vector<1x8x128xf32> to vector<8x128xf32>
    %564 = vector.shape_cast %558 : vector<8x128xf32> to vector<1x8x128xf32>
    tpu.vector_store %arg6[%c6_129, %c0_130, %c128_131], %564 {strides = array<i32>} : memref<16x8x256xf32, #tpu.memory_space<vmem>>, vector<1x8x128xf32>,
    %565 = vector.extract_strided_slice %7 {offsets = [80, 0], sizes = [8, 384], strides = [1, 1]} : vector<128x384xf32> to vector<8x384xf32>
    %cst_132 = arith.constant dense<0.000000e+00> : vector<8x384xf32>
    %566 = tpu.matmul %534, %16, %cst_132 {dimension_numbers = #tpu.dot_dimension_numbers<[1], [0], [0], [1], [0, 0, 1, 1], [], []>} : vector<8x128xf32>, vector<128x384xf32>, vector<8x384xf32> -> vector<8x384xf32>
    %567 = vector.broadcast %18 : vector<1x384xf32> to vector<8x384xf32>
    %568 = arith.addf %566, %567 : vector<8x384xf32>
    %569 = vector.extract_strided_slice %565 {offsets = [0, 0], sizes = [8, 256], strides = [1, 1]} : vector<8x384xf32> to vector<8x256xf32>
    %570 = vector.extract_strided_slice %568 {offsets = [0, 0], sizes = [8, 256], strides = [1, 1]} : vector<8x384xf32> to vector<8x256xf32>
    %571 = arith.addf %569, %570 : vector<8x256xf32>
    %572 = arith.negf %571 : vector<8x256xf32>
    %573 = math.exp %572 : vector<8x256xf32>
    %cst_133 = arith.constant 1.000000e+00 : f32
    %574 = vector.broadcast %cst_133 : f32 to vector<8x256xf32>
    %575 = arith.addf %574, %573 : vector<8x256xf32>
    %576 = arith.divf %574, %575 : vector<8x256xf32>
    %577 = vector.extract_strided_slice %576 {offsets = [0, 0], sizes = [8, 128], strides = [1, 1]} : vector<8x256xf32> to vector<8x128xf32>
    %578 = vector.extract_strided_slice %576 {offsets = [0, 128], sizes = [8, 128], strides = [1, 1]} : vector<8x256xf32> to vector<8x128xf32>
    %579 = vector.extract_strided_slice %565 {offsets = [0, 256], sizes = [8, 128], strides = [1, 1]} : vector<8x384xf32> to vector<8x128xf32>
    %580 = vector.extract_strided_slice %568 {offsets = [0, 256], sizes = [8, 128], strides = [1, 1]} : vector<8x384xf32> to vector<8x128xf32>
    %581 = arith.mulf %577, %580 : vector<8x128xf32>
    %582 = arith.addf %579, %581 : vector<8x128xf32>
    %583 = math.tanh %582 : vector<8x128xf32>
    %cst_134 = arith.constant 1.000000e+00 : f32
    %584 = vector.broadcast %cst_134 : f32 to vector<8x128xf32>
    %585 = arith.subf %584, %578 : vector<8x128xf32>
    %586 = arith.mulf %585, %583 : vector<8x128xf32>
    %587 = arith.mulf %578, %534 : vector<8x128xf32>
    %588 = arith.addf %586, %587 : vector<8x128xf32>
    %589 = vector.extract_strided_slice %14 {offsets = [40, 0], sizes = [8, 384], strides = [1, 1]} : vector<128x384xf32> to vector<8x384xf32>
    %cst_135 = arith.constant dense<0.000000e+00> : vector<8x384xf32>
    %590 = tpu.matmul %558, %20, %cst_135 {dimension_numbers = #tpu.dot_dimension_numbers<[1], [0], [0], [1], [0, 0, 1, 1], [], []>} : vector<8x128xf32>, vector<128x384xf32>, vector<8x384xf32> -> vector<8x384xf32>
    %591 = vector.broadcast %22 : vector<1x384xf32> to vector<8x384xf32>
    %592 = arith.addf %590, %591 : vector<8x384xf32>
    %593 = vector.extract_strided_slice %589 {offsets = [0, 0], sizes = [8, 256], strides = [1, 1]} : vector<8x384xf32> to vector<8x256xf32>
    %594 = vector.extract_strided_slice %592 {offsets = [0, 0], sizes = [8, 256], strides = [1, 1]} : vector<8x384xf32> to vector<8x256xf32>
    %595 = arith.addf %593, %594 : vector<8x256xf32>
    %596 = arith.negf %595 : vector<8x256xf32>
    %597 = math.exp %596 : vector<8x256xf32>
    %cst_136 = arith.constant 1.000000e+00 : f32
    %598 = vector.broadcast %cst_136 : f32 to vector<8x256xf32>
    %599 = arith.addf %598, %597 : vector<8x256xf32>
    %600 = arith.divf %598, %599 : vector<8x256xf32>
    %601 = vector.extract_strided_slice %600 {offsets = [0, 0], sizes = [8, 128], strides = [1, 1]} : vector<8x256xf32> to vector<8x128xf32>
    %602 = vector.extract_strided_slice %600 {offsets = [0, 128], sizes = [8, 128], strides = [1, 1]} : vector<8x256xf32> to vector<8x128xf32>
    %603 = vector.extract_strided_slice %589 {offsets = [0, 256], sizes = [8, 128], strides = [1, 1]} : vector<8x384xf32> to vector<8x128xf32>
    %604 = vector.extract_strided_slice %592 {offsets = [0, 256], sizes = [8, 128], strides = [1, 1]} : vector<8x384xf32> to vector<8x128xf32>
    %605 = arith.mulf %601, %604 : vector<8x128xf32>
    %606 = arith.addf %603, %605 : vector<8x128xf32>
    %607 = math.tanh %606 : vector<8x128xf32>
    %cst_137 = arith.constant 1.000000e+00 : f32
    %608 = vector.broadcast %cst_137 : f32 to vector<8x128xf32>
    %609 = arith.subf %608, %602 : vector<8x128xf32>
    %610 = arith.mulf %609, %607 : vector<8x128xf32>
    %611 = arith.mulf %602, %558 : vector<8x128xf32>
    %612 = arith.addf %610, %611 : vector<8x128xf32>
    %c10_138 = arith.constant 10 : index
    %c0_139 = arith.constant 0 : index
    %c0_140 = arith.constant 0 : index
    %613 = vector.load %arg6[%c10_138, %c0_139, %c0_140] : memref<16x8x256xf32, #tpu.memory_space<vmem>>, vector<1x8x128xf32>
    %614 = vector.shape_cast %613 : vector<1x8x128xf32> to vector<8x128xf32>
    %615 = vector.shape_cast %588 : vector<8x128xf32> to vector<1x8x128xf32>
    tpu.vector_store %arg6[%c10_138, %c0_139, %c0_140], %615 {strides = array<i32>} : memref<16x8x256xf32, #tpu.memory_space<vmem>>, vector<1x8x128xf32>,
    %c5_141 = arith.constant 5 : index
    %c0_142 = arith.constant 0 : index
    %c128_143 = arith.constant 128 : index
    %616 = vector.load %arg6[%c5_141, %c0_142, %c128_143] : memref<16x8x256xf32, #tpu.memory_space<vmem>>, vector<1x8x128xf32>
    %617 = vector.shape_cast %616 : vector<1x8x128xf32> to vector<8x128xf32>
    %618 = vector.shape_cast %612 : vector<8x128xf32> to vector<1x8x128xf32>
    tpu.vector_store %arg6[%c5_141, %c0_142, %c128_143], %618 {strides = array<i32>} : memref<16x8x256xf32, #tpu.memory_space<vmem>>, vector<1x8x128xf32>,
    %619 = vector.extract_strided_slice %7 {offsets = [88, 0], sizes = [8, 384], strides = [1, 1]} : vector<128x384xf32> to vector<8x384xf32>
    %cst_144 = arith.constant dense<0.000000e+00> : vector<8x384xf32>
    %620 = tpu.matmul %588, %16, %cst_144 {dimension_numbers = #tpu.dot_dimension_numbers<[1], [0], [0], [1], [0, 0, 1, 1], [], []>} : vector<8x128xf32>, vector<128x384xf32>, vector<8x384xf32> -> vector<8x384xf32>
    %621 = vector.broadcast %18 : vector<1x384xf32> to vector<8x384xf32>
    %622 = arith.addf %620, %621 : vector<8x384xf32>
    %623 = vector.extract_strided_slice %619 {offsets = [0, 0], sizes = [8, 256], strides = [1, 1]} : vector<8x384xf32> to vector<8x256xf32>
    %624 = vector.extract_strided_slice %622 {offsets = [0, 0], sizes = [8, 256], strides = [1, 1]} : vector<8x384xf32> to vector<8x256xf32>
    %625 = arith.addf %623, %624 : vector<8x256xf32>
    %626 = arith.negf %625 : vector<8x256xf32>
    %627 = math.exp %626 : vector<8x256xf32>
    %cst_145 = arith.constant 1.000000e+00 : f32
    %628 = vector.broadcast %cst_145 : f32 to vector<8x256xf32>
    %629 = arith.addf %628, %627 : vector<8x256xf32>
    %630 = arith.divf %628, %629 : vector<8x256xf32>
    %631 = vector.extract_strided_slice %630 {offsets = [0, 0], sizes = [8, 128], strides = [1, 1]} : vector<8x256xf32> to vector<8x128xf32>
    %632 = vector.extract_strided_slice %630 {offsets = [0, 128], sizes = [8, 128], strides = [1, 1]} : vector<8x256xf32> to vector<8x128xf32>
    %633 = vector.extract_strided_slice %619 {offsets = [0, 256], sizes = [8, 128], strides = [1, 1]} : vector<8x384xf32> to vector<8x128xf32>
    %634 = vector.extract_strided_slice %622 {offsets = [0, 256], sizes = [8, 128], strides = [1, 1]} : vector<8x384xf32> to vector<8x128xf32>
    %635 = arith.mulf %631, %634 : vector<8x128xf32>
    %636 = arith.addf %633, %635 : vector<8x128xf32>
    %637 = math.tanh %636 : vector<8x128xf32>
    %cst_146 = arith.constant 1.000000e+00 : f32
    %638 = vector.broadcast %cst_146 : f32 to vector<8x128xf32>
    %639 = arith.subf %638, %632 : vector<8x128xf32>
    %640 = arith.mulf %639, %637 : vector<8x128xf32>
    %641 = arith.mulf %632, %588 : vector<8x128xf32>
    %642 = arith.addf %640, %641 : vector<8x128xf32>
    %643 = vector.extract_strided_slice %14 {offsets = [32, 0], sizes = [8, 384], strides = [1, 1]} : vector<128x384xf32> to vector<8x384xf32>
    %cst_147 = arith.constant dense<0.000000e+00> : vector<8x384xf32>
    %644 = tpu.matmul %612, %20, %cst_147 {dimension_numbers = #tpu.dot_dimension_numbers<[1], [0], [0], [1], [0, 0, 1, 1], [], []>} : vector<8x128xf32>, vector<128x384xf32>, vector<8x384xf32> -> vector<8x384xf32>
    %645 = vector.broadcast %22 : vector<1x384xf32> to vector<8x384xf32>
    %646 = arith.addf %644, %645 : vector<8x384xf32>
    %647 = vector.extract_strided_slice %643 {offsets = [0, 0], sizes = [8, 256], strides = [1, 1]} : vector<8x384xf32> to vector<8x256xf32>
    %648 = vector.extract_strided_slice %646 {offsets = [0, 0], sizes = [8, 256], strides = [1, 1]} : vector<8x384xf32> to vector<8x256xf32>
    %649 = arith.addf %647, %648 : vector<8x256xf32>
    %650 = arith.negf %649 : vector<8x256xf32>
    %651 = math.exp %650 : vector<8x256xf32>
    %cst_148 = arith.constant 1.000000e+00 : f32
    %652 = vector.broadcast %cst_148 : f32 to vector<8x256xf32>
    %653 = arith.addf %652, %651 : vector<8x256xf32>
    %654 = arith.divf %652, %653 : vector<8x256xf32>
    %655 = vector.extract_strided_slice %654 {offsets = [0, 0], sizes = [8, 128], strides = [1, 1]} : vector<8x256xf32> to vector<8x128xf32>
    %656 = vector.extract_strided_slice %654 {offsets = [0, 128], sizes = [8, 128], strides = [1, 1]} : vector<8x256xf32> to vector<8x128xf32>
    %657 = vector.extract_strided_slice %643 {offsets = [0, 256], sizes = [8, 128], strides = [1, 1]} : vector<8x384xf32> to vector<8x128xf32>
    %658 = vector.extract_strided_slice %646 {offsets = [0, 256], sizes = [8, 128], strides = [1, 1]} : vector<8x384xf32> to vector<8x128xf32>
    %659 = arith.mulf %655, %658 : vector<8x128xf32>
    %660 = arith.addf %657, %659 : vector<8x128xf32>
    %661 = math.tanh %660 : vector<8x128xf32>
    %cst_149 = arith.constant 1.000000e+00 : f32
    %662 = vector.broadcast %cst_149 : f32 to vector<8x128xf32>
    %663 = arith.subf %662, %656 : vector<8x128xf32>
    %664 = arith.mulf %663, %661 : vector<8x128xf32>
    %665 = arith.mulf %656, %612 : vector<8x128xf32>
    %666 = arith.addf %664, %665 : vector<8x128xf32>
    %c11_150 = arith.constant 11 : index
    %c0_151 = arith.constant 0 : index
    %c0_152 = arith.constant 0 : index
    %667 = vector.load %arg6[%c11_150, %c0_151, %c0_152] : memref<16x8x256xf32, #tpu.memory_space<vmem>>, vector<1x8x128xf32>
    %668 = vector.shape_cast %667 : vector<1x8x128xf32> to vector<8x128xf32>
    %669 = vector.shape_cast %642 : vector<8x128xf32> to vector<1x8x128xf32>
    tpu.vector_store %arg6[%c11_150, %c0_151, %c0_152], %669 {strides = array<i32>} : memref<16x8x256xf32, #tpu.memory_space<vmem>>, vector<1x8x128xf32>,
    %c4_153 = arith.constant 4 : index
    %c0_154 = arith.constant 0 : index
    %c128_155 = arith.constant 128 : index
    %670 = vector.load %arg6[%c4_153, %c0_154, %c128_155] : memref<16x8x256xf32, #tpu.memory_space<vmem>>, vector<1x8x128xf32>
    %671 = vector.shape_cast %670 : vector<1x8x128xf32> to vector<8x128xf32>
    %672 = vector.shape_cast %666 : vector<8x128xf32> to vector<1x8x128xf32>
    tpu.vector_store %arg6[%c4_153, %c0_154, %c128_155], %672 {strides = array<i32>} : memref<16x8x256xf32, #tpu.memory_space<vmem>>, vector<1x8x128xf32>,
    %673 = vector.extract_strided_slice %7 {offsets = [96, 0], sizes = [8, 384], strides = [1, 1]} : vector<128x384xf32> to vector<8x384xf32>
    %cst_156 = arith.constant dense<0.000000e+00> : vector<8x384xf32>
    %674 = tpu.matmul %642, %16, %cst_156 {dimension_numbers = #tpu.dot_dimension_numbers<[1], [0], [0], [1], [0, 0, 1, 1], [], []>} : vector<8x128xf32>, vector<128x384xf32>, vector<8x384xf32> -> vector<8x384xf32>
    %675 = vector.broadcast %18 : vector<1x384xf32> to vector<8x384xf32>
    %676 = arith.addf %674, %675 : vector<8x384xf32>
    %677 = vector.extract_strided_slice %673 {offsets = [0, 0], sizes = [8, 256], strides = [1, 1]} : vector<8x384xf32> to vector<8x256xf32>
    %678 = vector.extract_strided_slice %676 {offsets = [0, 0], sizes = [8, 256], strides = [1, 1]} : vector<8x384xf32> to vector<8x256xf32>
    %679 = arith.addf %677, %678 : vector<8x256xf32>
    %680 = arith.negf %679 : vector<8x256xf32>
    %681 = math.exp %680 : vector<8x256xf32>
    %cst_157 = arith.constant 1.000000e+00 : f32
    %682 = vector.broadcast %cst_157 : f32 to vector<8x256xf32>
    %683 = arith.addf %682, %681 : vector<8x256xf32>
    %684 = arith.divf %682, %683 : vector<8x256xf32>
    %685 = vector.extract_strided_slice %684 {offsets = [0, 0], sizes = [8, 128], strides = [1, 1]} : vector<8x256xf32> to vector<8x128xf32>
    %686 = vector.extract_strided_slice %684 {offsets = [0, 128], sizes = [8, 128], strides = [1, 1]} : vector<8x256xf32> to vector<8x128xf32>
    %687 = vector.extract_strided_slice %673 {offsets = [0, 256], sizes = [8, 128], strides = [1, 1]} : vector<8x384xf32> to vector<8x128xf32>
    %688 = vector.extract_strided_slice %676 {offsets = [0, 256], sizes = [8, 128], strides = [1, 1]} : vector<8x384xf32> to vector<8x128xf32>
    %689 = arith.mulf %685, %688 : vector<8x128xf32>
    %690 = arith.addf %687, %689 : vector<8x128xf32>
    %691 = math.tanh %690 : vector<8x128xf32>
    %cst_158 = arith.constant 1.000000e+00 : f32
    %692 = vector.broadcast %cst_158 : f32 to vector<8x128xf32>
    %693 = arith.subf %692, %686 : vector<8x128xf32>
    %694 = arith.mulf %693, %691 : vector<8x128xf32>
    %695 = arith.mulf %686, %642 : vector<8x128xf32>
    %696 = arith.addf %694, %695 : vector<8x128xf32>
    %697 = vector.extract_strided_slice %14 {offsets = [24, 0], sizes = [8, 384], strides = [1, 1]} : vector<128x384xf32> to vector<8x384xf32>
    %cst_159 = arith.constant dense<0.000000e+00> : vector<8x384xf32>
    %698 = tpu.matmul %666, %20, %cst_159 {dimension_numbers = #tpu.dot_dimension_numbers<[1], [0], [0], [1], [0, 0, 1, 1], [], []>} : vector<8x128xf32>, vector<128x384xf32>, vector<8x384xf32> -> vector<8x384xf32>
    %699 = vector.broadcast %22 : vector<1x384xf32> to vector<8x384xf32>
    %700 = arith.addf %698, %699 : vector<8x384xf32>
    %701 = vector.extract_strided_slice %697 {offsets = [0, 0], sizes = [8, 256], strides = [1, 1]} : vector<8x384xf32> to vector<8x256xf32>
    %702 = vector.extract_strided_slice %700 {offsets = [0, 0], sizes = [8, 256], strides = [1, 1]} : vector<8x384xf32> to vector<8x256xf32>
    %703 = arith.addf %701, %702 : vector<8x256xf32>
    %704 = arith.negf %703 : vector<8x256xf32>
    %705 = math.exp %704 : vector<8x256xf32>
    %cst_160 = arith.constant 1.000000e+00 : f32
    %706 = vector.broadcast %cst_160 : f32 to vector<8x256xf32>
    %707 = arith.addf %706, %705 : vector<8x256xf32>
    %708 = arith.divf %706, %707 : vector<8x256xf32>
    %709 = vector.extract_strided_slice %708 {offsets = [0, 0], sizes = [8, 128], strides = [1, 1]} : vector<8x256xf32> to vector<8x128xf32>
    %710 = vector.extract_strided_slice %708 {offsets = [0, 128], sizes = [8, 128], strides = [1, 1]} : vector<8x256xf32> to vector<8x128xf32>
    %711 = vector.extract_strided_slice %697 {offsets = [0, 256], sizes = [8, 128], strides = [1, 1]} : vector<8x384xf32> to vector<8x128xf32>
    %712 = vector.extract_strided_slice %700 {offsets = [0, 256], sizes = [8, 128], strides = [1, 1]} : vector<8x384xf32> to vector<8x128xf32>
    %713 = arith.mulf %709, %712 : vector<8x128xf32>
    %714 = arith.addf %711, %713 : vector<8x128xf32>
    %715 = math.tanh %714 : vector<8x128xf32>
    %cst_161 = arith.constant 1.000000e+00 : f32
    %716 = vector.broadcast %cst_161 : f32 to vector<8x128xf32>
    %717 = arith.subf %716, %710 : vector<8x128xf32>
    %718 = arith.mulf %717, %715 : vector<8x128xf32>
    %719 = arith.mulf %710, %666 : vector<8x128xf32>
    %720 = arith.addf %718, %719 : vector<8x128xf32>
    %c12_162 = arith.constant 12 : index
    %c0_163 = arith.constant 0 : index
    %c0_164 = arith.constant 0 : index
    %721 = vector.load %arg6[%c12_162, %c0_163, %c0_164] : memref<16x8x256xf32, #tpu.memory_space<vmem>>, vector<1x8x128xf32>
    %722 = vector.shape_cast %721 : vector<1x8x128xf32> to vector<8x128xf32>
    %723 = vector.shape_cast %696 : vector<8x128xf32> to vector<1x8x128xf32>
    tpu.vector_store %arg6[%c12_162, %c0_163, %c0_164], %723 {strides = array<i32>} : memref<16x8x256xf32, #tpu.memory_space<vmem>>, vector<1x8x128xf32>,
    %c3_165 = arith.constant 3 : index
    %c0_166 = arith.constant 0 : index
    %c128_167 = arith.constant 128 : index
    %724 = vector.load %arg6[%c3_165, %c0_166, %c128_167] : memref<16x8x256xf32, #tpu.memory_space<vmem>>, vector<1x8x128xf32>
    %725 = vector.shape_cast %724 : vector<1x8x128xf32> to vector<8x128xf32>
    %726 = vector.shape_cast %720 : vector<8x128xf32> to vector<1x8x128xf32>
    tpu.vector_store %arg6[%c3_165, %c0_166, %c128_167], %726 {strides = array<i32>} : memref<16x8x256xf32, #tpu.memory_space<vmem>>, vector<1x8x128xf32>,
    %727 = vector.extract_strided_slice %7 {offsets = [104, 0], sizes = [8, 384], strides = [1, 1]} : vector<128x384xf32> to vector<8x384xf32>
    %cst_168 = arith.constant dense<0.000000e+00> : vector<8x384xf32>
    %728 = tpu.matmul %696, %16, %cst_168 {dimension_numbers = #tpu.dot_dimension_numbers<[1], [0], [0], [1], [0, 0, 1, 1], [], []>} : vector<8x128xf32>, vector<128x384xf32>, vector<8x384xf32> -> vector<8x384xf32>
    %729 = vector.broadcast %18 : vector<1x384xf32> to vector<8x384xf32>
    %730 = arith.addf %728, %729 : vector<8x384xf32>
    %731 = vector.extract_strided_slice %727 {offsets = [0, 0], sizes = [8, 256], strides = [1, 1]} : vector<8x384xf32> to vector<8x256xf32>
    %732 = vector.extract_strided_slice %730 {offsets = [0, 0], sizes = [8, 256], strides = [1, 1]} : vector<8x384xf32> to vector<8x256xf32>
    %733 = arith.addf %731, %732 : vector<8x256xf32>
    %734 = arith.negf %733 : vector<8x256xf32>
    %735 = math.exp %734 : vector<8x256xf32>
    %cst_169 = arith.constant 1.000000e+00 : f32
    %736 = vector.broadcast %cst_169 : f32 to vector<8x256xf32>
    %737 = arith.addf %736, %735 : vector<8x256xf32>
    %738 = arith.divf %736, %737 : vector<8x256xf32>
    %739 = vector.extract_strided_slice %738 {offsets = [0, 0], sizes = [8, 128], strides = [1, 1]} : vector<8x256xf32> to vector<8x128xf32>
    %740 = vector.extract_strided_slice %738 {offsets = [0, 128], sizes = [8, 128], strides = [1, 1]} : vector<8x256xf32> to vector<8x128xf32>
    %741 = vector.extract_strided_slice %727 {offsets = [0, 256], sizes = [8, 128], strides = [1, 1]} : vector<8x384xf32> to vector<8x128xf32>
    %742 = vector.extract_strided_slice %730 {offsets = [0, 256], sizes = [8, 128], strides = [1, 1]} : vector<8x384xf32> to vector<8x128xf32>
    %743 = arith.mulf %739, %742 : vector<8x128xf32>
    %744 = arith.addf %741, %743 : vector<8x128xf32>
    %745 = math.tanh %744 : vector<8x128xf32>
    %cst_170 = arith.constant 1.000000e+00 : f32
    %746 = vector.broadcast %cst_170 : f32 to vector<8x128xf32>
    %747 = arith.subf %746, %740 : vector<8x128xf32>
    %748 = arith.mulf %747, %745 : vector<8x128xf32>
    %749 = arith.mulf %740, %696 : vector<8x128xf32>
    %750 = arith.addf %748, %749 : vector<8x128xf32>
    %751 = vector.extract_strided_slice %14 {offsets = [16, 0], sizes = [8, 384], strides = [1, 1]} : vector<128x384xf32> to vector<8x384xf32>
    %cst_171 = arith.constant dense<0.000000e+00> : vector<8x384xf32>
    %752 = tpu.matmul %720, %20, %cst_171 {dimension_numbers = #tpu.dot_dimension_numbers<[1], [0], [0], [1], [0, 0, 1, 1], [], []>} : vector<8x128xf32>, vector<128x384xf32>, vector<8x384xf32> -> vector<8x384xf32>
    %753 = vector.broadcast %22 : vector<1x384xf32> to vector<8x384xf32>
    %754 = arith.addf %752, %753 : vector<8x384xf32>
    %755 = vector.extract_strided_slice %751 {offsets = [0, 0], sizes = [8, 256], strides = [1, 1]} : vector<8x384xf32> to vector<8x256xf32>
    %756 = vector.extract_strided_slice %754 {offsets = [0, 0], sizes = [8, 256], strides = [1, 1]} : vector<8x384xf32> to vector<8x256xf32>
    %757 = arith.addf %755, %756 : vector<8x256xf32>
    %758 = arith.negf %757 : vector<8x256xf32>
    %759 = math.exp %758 : vector<8x256xf32>
    %cst_172 = arith.constant 1.000000e+00 : f32
    %760 = vector.broadcast %cst_172 : f32 to vector<8x256xf32>
    %761 = arith.addf %760, %759 : vector<8x256xf32>
    %762 = arith.divf %760, %761 : vector<8x256xf32>
    %763 = vector.extract_strided_slice %762 {offsets = [0, 0], sizes = [8, 128], strides = [1, 1]} : vector<8x256xf32> to vector<8x128xf32>
    %764 = vector.extract_strided_slice %762 {offsets = [0, 128], sizes = [8, 128], strides = [1, 1]} : vector<8x256xf32> to vector<8x128xf32>
    %765 = vector.extract_strided_slice %751 {offsets = [0, 256], sizes = [8, 128], strides = [1, 1]} : vector<8x384xf32> to vector<8x128xf32>
    %766 = vector.extract_strided_slice %754 {offsets = [0, 256], sizes = [8, 128], strides = [1, 1]} : vector<8x384xf32> to vector<8x128xf32>
    %767 = arith.mulf %763, %766 : vector<8x128xf32>
    %768 = arith.addf %765, %767 : vector<8x128xf32>
    %769 = math.tanh %768 : vector<8x128xf32>
    %cst_173 = arith.constant 1.000000e+00 : f32
    %770 = vector.broadcast %cst_173 : f32 to vector<8x128xf32>
    %771 = arith.subf %770, %764 : vector<8x128xf32>
    %772 = arith.mulf %771, %769 : vector<8x128xf32>
    %773 = arith.mulf %764, %720 : vector<8x128xf32>
    %774 = arith.addf %772, %773 : vector<8x128xf32>
    %c13_174 = arith.constant 13 : index
    %c0_175 = arith.constant 0 : index
    %c0_176 = arith.constant 0 : index
    %775 = vector.load %arg6[%c13_174, %c0_175, %c0_176] : memref<16x8x256xf32, #tpu.memory_space<vmem>>, vector<1x8x128xf32>
    %776 = vector.shape_cast %775 : vector<1x8x128xf32> to vector<8x128xf32>
    %777 = vector.shape_cast %750 : vector<8x128xf32> to vector<1x8x128xf32>
    tpu.vector_store %arg6[%c13_174, %c0_175, %c0_176], %777 {strides = array<i32>} : memref<16x8x256xf32, #tpu.memory_space<vmem>>, vector<1x8x128xf32>,
    %c2_177 = arith.constant 2 : index
    %c0_178 = arith.constant 0 : index
    %c128_179 = arith.constant 128 : index
    %778 = vector.load %arg6[%c2_177, %c0_178, %c128_179] : memref<16x8x256xf32, #tpu.memory_space<vmem>>, vector<1x8x128xf32>
    %779 = vector.shape_cast %778 : vector<1x8x128xf32> to vector<8x128xf32>
    %780 = vector.shape_cast %774 : vector<8x128xf32> to vector<1x8x128xf32>
    tpu.vector_store %arg6[%c2_177, %c0_178, %c128_179], %780 {strides = array<i32>} : memref<16x8x256xf32, #tpu.memory_space<vmem>>, vector<1x8x128xf32>,
    %781 = vector.extract_strided_slice %7 {offsets = [112, 0], sizes = [8, 384], strides = [1, 1]} : vector<128x384xf32> to vector<8x384xf32>
    %cst_180 = arith.constant dense<0.000000e+00> : vector<8x384xf32>
    %782 = tpu.matmul %750, %16, %cst_180 {dimension_numbers = #tpu.dot_dimension_numbers<[1], [0], [0], [1], [0, 0, 1, 1], [], []>} : vector<8x128xf32>, vector<128x384xf32>, vector<8x384xf32> -> vector<8x384xf32>
    %783 = vector.broadcast %18 : vector<1x384xf32> to vector<8x384xf32>
    %784 = arith.addf %782, %783 : vector<8x384xf32>
    %785 = vector.extract_strided_slice %781 {offsets = [0, 0], sizes = [8, 256], strides = [1, 1]} : vector<8x384xf32> to vector<8x256xf32>
    %786 = vector.extract_strided_slice %784 {offsets = [0, 0], sizes = [8, 256], strides = [1, 1]} : vector<8x384xf32> to vector<8x256xf32>
    %787 = arith.addf %785, %786 : vector<8x256xf32>
    %788 = arith.negf %787 : vector<8x256xf32>
    %789 = math.exp %788 : vector<8x256xf32>
    %cst_181 = arith.constant 1.000000e+00 : f32
    %790 = vector.broadcast %cst_181 : f32 to vector<8x256xf32>
    %791 = arith.addf %790, %789 : vector<8x256xf32>
    %792 = arith.divf %790, %791 : vector<8x256xf32>
    %793 = vector.extract_strided_slice %792 {offsets = [0, 0], sizes = [8, 128], strides = [1, 1]} : vector<8x256xf32> to vector<8x128xf32>
    %794 = vector.extract_strided_slice %792 {offsets = [0, 128], sizes = [8, 128], strides = [1, 1]} : vector<8x256xf32> to vector<8x128xf32>
    %795 = vector.extract_strided_slice %781 {offsets = [0, 256], sizes = [8, 128], strides = [1, 1]} : vector<8x384xf32> to vector<8x128xf32>
    %796 = vector.extract_strided_slice %784 {offsets = [0, 256], sizes = [8, 128], strides = [1, 1]} : vector<8x384xf32> to vector<8x128xf32>
    %797 = arith.mulf %793, %796 : vector<8x128xf32>
    %798 = arith.addf %795, %797 : vector<8x128xf32>
    %799 = math.tanh %798 : vector<8x128xf32>
    %cst_182 = arith.constant 1.000000e+00 : f32
    %800 = vector.broadcast %cst_182 : f32 to vector<8x128xf32>
    %801 = arith.subf %800, %794 : vector<8x128xf32>
    %802 = arith.mulf %801, %799 : vector<8x128xf32>
    %803 = arith.mulf %794, %750 : vector<8x128xf32>
    %804 = arith.addf %802, %803 : vector<8x128xf32>
    %805 = vector.extract_strided_slice %14 {offsets = [8, 0], sizes = [8, 384], strides = [1, 1]} : vector<128x384xf32> to vector<8x384xf32>
    %cst_183 = arith.constant dense<0.000000e+00> : vector<8x384xf32>
    %806 = tpu.matmul %774, %20, %cst_183 {dimension_numbers = #tpu.dot_dimension_numbers<[1], [0], [0], [1], [0, 0, 1, 1], [], []>} : vector<8x128xf32>, vector<128x384xf32>, vector<8x384xf32> -> vector<8x384xf32>
    %807 = vector.broadcast %22 : vector<1x384xf32> to vector<8x384xf32>
    %808 = arith.addf %806, %807 : vector<8x384xf32>
    %809 = vector.extract_strided_slice %805 {offsets = [0, 0], sizes = [8, 256], strides = [1, 1]} : vector<8x384xf32> to vector<8x256xf32>
    %810 = vector.extract_strided_slice %808 {offsets = [0, 0], sizes = [8, 256], strides = [1, 1]} : vector<8x384xf32> to vector<8x256xf32>
    %811 = arith.addf %809, %810 : vector<8x256xf32>
    %812 = arith.negf %811 : vector<8x256xf32>
    %813 = math.exp %812 : vector<8x256xf32>
    %cst_184 = arith.constant 1.000000e+00 : f32
    %814 = vector.broadcast %cst_184 : f32 to vector<8x256xf32>
    %815 = arith.addf %814, %813 : vector<8x256xf32>
    %816 = arith.divf %814, %815 : vector<8x256xf32>
    %817 = vector.extract_strided_slice %816 {offsets = [0, 0], sizes = [8, 128], strides = [1, 1]} : vector<8x256xf32> to vector<8x128xf32>
    %818 = vector.extract_strided_slice %816 {offsets = [0, 128], sizes = [8, 128], strides = [1, 1]} : vector<8x256xf32> to vector<8x128xf32>
    %819 = vector.extract_strided_slice %805 {offsets = [0, 256], sizes = [8, 128], strides = [1, 1]} : vector<8x384xf32> to vector<8x128xf32>
    %820 = vector.extract_strided_slice %808 {offsets = [0, 256], sizes = [8, 128], strides = [1, 1]} : vector<8x384xf32> to vector<8x128xf32>
    %821 = arith.mulf %817, %820 : vector<8x128xf32>
    %822 = arith.addf %819, %821 : vector<8x128xf32>
    %823 = math.tanh %822 : vector<8x128xf32>
    %cst_185 = arith.constant 1.000000e+00 : f32
    %824 = vector.broadcast %cst_185 : f32 to vector<8x128xf32>
    %825 = arith.subf %824, %818 : vector<8x128xf32>
    %826 = arith.mulf %825, %823 : vector<8x128xf32>
    %827 = arith.mulf %818, %774 : vector<8x128xf32>
    %828 = arith.addf %826, %827 : vector<8x128xf32>
    %c14_186 = arith.constant 14 : index
    %c0_187 = arith.constant 0 : index
    %c0_188 = arith.constant 0 : index
    %829 = vector.load %arg6[%c14_186, %c0_187, %c0_188] : memref<16x8x256xf32, #tpu.memory_space<vmem>>, vector<1x8x128xf32>
    %830 = vector.shape_cast %829 : vector<1x8x128xf32> to vector<8x128xf32>
    %831 = vector.shape_cast %804 : vector<8x128xf32> to vector<1x8x128xf32>
    tpu.vector_store %arg6[%c14_186, %c0_187, %c0_188], %831 {strides = array<i32>} : memref<16x8x256xf32, #tpu.memory_space<vmem>>, vector<1x8x128xf32>,
    %c1_189 = arith.constant 1 : index
    %c0_190 = arith.constant 0 : index
    %c128_191 = arith.constant 128 : index
    %832 = vector.load %arg6[%c1_189, %c0_190, %c128_191] : memref<16x8x256xf32, #tpu.memory_space<vmem>>, vector<1x8x128xf32>
    %833 = vector.shape_cast %832 : vector<1x8x128xf32> to vector<8x128xf32>
    %834 = vector.shape_cast %828 : vector<8x128xf32> to vector<1x8x128xf32>
    tpu.vector_store %arg6[%c1_189, %c0_190, %c128_191], %834 {strides = array<i32>} : memref<16x8x256xf32, #tpu.memory_space<vmem>>, vector<1x8x128xf32>,
    %835 = vector.extract_strided_slice %7 {offsets = [120, 0], sizes = [8, 384], strides = [1, 1]} : vector<128x384xf32> to vector<8x384xf32>
    %cst_192 = arith.constant dense<0.000000e+00> : vector<8x384xf32>
    %836 = tpu.matmul %804, %16, %cst_192 {dimension_numbers = #tpu.dot_dimension_numbers<[1], [0], [0], [1], [0, 0, 1, 1], [], []>} : vector<8x128xf32>, vector<128x384xf32>, vector<8x384xf32> -> vector<8x384xf32>
    %837 = vector.broadcast %18 : vector<1x384xf32> to vector<8x384xf32>
    %838 = arith.addf %836, %837 : vector<8x384xf32>
    %839 = vector.extract_strided_slice %835 {offsets = [0, 0], sizes = [8, 256], strides = [1, 1]} : vector<8x384xf32> to vector<8x256xf32>
    %840 = vector.extract_strided_slice %838 {offsets = [0, 0], sizes = [8, 256], strides = [1, 1]} : vector<8x384xf32> to vector<8x256xf32>
    %841 = arith.addf %839, %840 : vector<8x256xf32>
    %842 = arith.negf %841 : vector<8x256xf32>
    %843 = math.exp %842 : vector<8x256xf32>
    %cst_193 = arith.constant 1.000000e+00 : f32
    %844 = vector.broadcast %cst_193 : f32 to vector<8x256xf32>
    %845 = arith.addf %844, %843 : vector<8x256xf32>
    %846 = arith.divf %844, %845 : vector<8x256xf32>
    %847 = vector.extract_strided_slice %846 {offsets = [0, 0], sizes = [8, 128], strides = [1, 1]} : vector<8x256xf32> to vector<8x128xf32>
    %848 = vector.extract_strided_slice %846 {offsets = [0, 128], sizes = [8, 128], strides = [1, 1]} : vector<8x256xf32> to vector<8x128xf32>
    %849 = vector.extract_strided_slice %835 {offsets = [0, 256], sizes = [8, 128], strides = [1, 1]} : vector<8x384xf32> to vector<8x128xf32>
    %850 = vector.extract_strided_slice %838 {offsets = [0, 256], sizes = [8, 128], strides = [1, 1]} : vector<8x384xf32> to vector<8x128xf32>
    %851 = arith.mulf %847, %850 : vector<8x128xf32>
    %852 = arith.addf %849, %851 : vector<8x128xf32>
    %853 = math.tanh %852 : vector<8x128xf32>
    %cst_194 = arith.constant 1.000000e+00 : f32
    %854 = vector.broadcast %cst_194 : f32 to vector<8x128xf32>
    %855 = arith.subf %854, %848 : vector<8x128xf32>
    %856 = arith.mulf %855, %853 : vector<8x128xf32>
    %857 = arith.mulf %848, %804 : vector<8x128xf32>
    %858 = arith.addf %856, %857 : vector<8x128xf32>
    %859 = vector.extract_strided_slice %14 {offsets = [0, 0], sizes = [8, 384], strides = [1, 1]} : vector<128x384xf32> to vector<8x384xf32>
    %cst_195 = arith.constant dense<0.000000e+00> : vector<8x384xf32>
    %860 = tpu.matmul %828, %20, %cst_195 {dimension_numbers = #tpu.dot_dimension_numbers<[1], [0], [0], [1], [0, 0, 1, 1], [], []>} : vector<8x128xf32>, vector<128x384xf32>, vector<8x384xf32> -> vector<8x384xf32>
    %861 = vector.broadcast %22 : vector<1x384xf32> to vector<8x384xf32>
    %862 = arith.addf %860, %861 : vector<8x384xf32>
    %863 = vector.extract_strided_slice %859 {offsets = [0, 0], sizes = [8, 256], strides = [1, 1]} : vector<8x384xf32> to vector<8x256xf32>
    %864 = vector.extract_strided_slice %862 {offsets = [0, 0], sizes = [8, 256], strides = [1, 1]} : vector<8x384xf32> to vector<8x256xf32>
    %865 = arith.addf %863, %864 : vector<8x256xf32>
    %866 = arith.negf %865 : vector<8x256xf32>
    %867 = math.exp %866 : vector<8x256xf32>
    %cst_196 = arith.constant 1.000000e+00 : f32
    %868 = vector.broadcast %cst_196 : f32 to vector<8x256xf32>
    %869 = arith.addf %868, %867 : vector<8x256xf32>
    %870 = arith.divf %868, %869 : vector<8x256xf32>
    %871 = vector.extract_strided_slice %870 {offsets = [0, 0], sizes = [8, 128], strides = [1, 1]} : vector<8x256xf32> to vector<8x128xf32>
    %872 = vector.extract_strided_slice %870 {offsets = [0, 128], sizes = [8, 128], strides = [1, 1]} : vector<8x256xf32> to vector<8x128xf32>
    %873 = vector.extract_strided_slice %859 {offsets = [0, 256], sizes = [8, 128], strides = [1, 1]} : vector<8x384xf32> to vector<8x128xf32>
    %874 = vector.extract_strided_slice %862 {offsets = [0, 256], sizes = [8, 128], strides = [1, 1]} : vector<8x384xf32> to vector<8x128xf32>
    %875 = arith.mulf %871, %874 : vector<8x128xf32>
    %876 = arith.addf %873, %875 : vector<8x128xf32>
    %877 = math.tanh %876 : vector<8x128xf32>
    %cst_197 = arith.constant 1.000000e+00 : f32
    %878 = vector.broadcast %cst_197 : f32 to vector<8x128xf32>
    %879 = arith.subf %878, %872 : vector<8x128xf32>
    %880 = arith.mulf %879, %877 : vector<8x128xf32>
    %881 = arith.mulf %872, %828 : vector<8x128xf32>
    %882 = arith.addf %880, %881 : vector<8x128xf32>
    %c15_198 = arith.constant 15 : index
    %c0_199 = arith.constant 0 : index
    %c0_200 = arith.constant 0 : index
    %883 = vector.load %arg6[%c15_198, %c0_199, %c0_200] : memref<16x8x256xf32, #tpu.memory_space<vmem>>, vector<1x8x128xf32>
    %884 = vector.shape_cast %883 : vector<1x8x128xf32> to vector<8x128xf32>
    %885 = vector.shape_cast %858 : vector<8x128xf32> to vector<1x8x128xf32>
    tpu.vector_store %arg6[%c15_198, %c0_199, %c0_200], %885 {strides = array<i32>} : memref<16x8x256xf32, #tpu.memory_space<vmem>>, vector<1x8x128xf32>,
    %c0_201 = arith.constant 0 : index
    %c0_202 = arith.constant 0 : index
    %c128_203 = arith.constant 128 : index
    %886 = vector.load %arg6[%c0_201, %c0_202, %c128_203] : memref<16x8x256xf32, #tpu.memory_space<vmem>>, vector<1x8x128xf32>
    %887 = vector.shape_cast %886 : vector<1x8x128xf32> to vector<8x128xf32>
    %888 = vector.shape_cast %882 : vector<8x128xf32> to vector<1x8x128xf32>
    tpu.vector_store %arg6[%c0_201, %c0_202, %c128_203], %888 {strides = array<i32>} : memref<16x8x256xf32, #tpu.memory_space<vmem>>, vector<1x8x128xf32>,
    return
  }
  func.func @transform_0(%arg0: i32) -> (i32, i32) {
    %c0_i32 = arith.constant 0 : i32
    %c0_i32_0 = arith.constant 0 : i32
    %c0_i32_1 = arith.constant 0 : i32
    return %c0_i32, %c0_i32_0 : i32, i32
  }
  func.func @transform_1(%arg0: i32) -> (i32, i32, i32) {
    %c0_i32 = arith.constant 0 : i32
    %c0_i32_0 = arith.constant 0 : i32
    %c0_i32_1 = arith.constant 0 : i32
    %c0_i32_2 = arith.constant 0 : i32
    return %c0_i32, %c0_i32_0, %c0_i32_1 : i32, i32, i32
  }
  func.func @transform_2(%arg0: i32) -> (i32, i32, i32) {
    %c0_i32 = arith.constant 0 : i32
    %c0_i32_0 = arith.constant 0 : i32
    %c0_i32_1 = arith.constant 0 : i32
    %c0_i32_2 = arith.constant 0 : i32
    return %c0_i32, %c0_i32_0, %c0_i32_1 : i32, i32, i32
  }
  func.func @transform_3(%arg0: i32) -> (i32, i32, i32) {
    %c0_i32 = arith.constant 0 : i32
    %c0_i32_0 = arith.constant 0 : i32
    %c0_i32_1 = arith.constant 0 : i32
    %c0_i32_2 = arith.constant 0 : i32
    return %c0_i32, %c0_i32_0, %c0_i32_1 : i32, i32, i32
  }
  func.func @transform_4(%arg0: i32) -> (i32, i32, i32) {
    %c0_i32 = arith.constant 0 : i32
    %c0_i32_0 = arith.constant 0 : i32
    %c0_i32_1 = arith.constant 0 : i32
    %c0_i32_2 = arith.constant 0 : i32
    return %c0_i32, %c0_i32_0, %c0_i32_1 : i32, i32, i32
  }
  func.func @transform_5(%arg0: i32) -> (i32, i32, i32) {
    %c0_i32 = arith.constant 0 : i32
    %c0_i32_0 = arith.constant 0 : i32
    %c0_i32_1 = arith.constant 0 : i32
    %c0_i32_2 = arith.constant 0 : i32
    return %c0_i32, %c0_i32_0, %c0_i32_1 : i32, i32, i32
  }
}

</mosaic_0001>

<llo_original>
// kernel: encoder_forward.1
$region0: #{encoder_forward.1}
  #allocation0 [shape = 'u32[]', space=smem, size = 0x4, offset = 0x4, fixed_abs, tag = 'smem constant byte address 0x4 - core index']
  #allocation1 [shape = 'u32[144,128]{1,0:T(1,128)}', space=vmem, size = 0x12000, scoped, tag = 'internal scratch']
  %s0 = inlined_call_operand.hbm [shape: f32[128,32], index: 0, kind: input, shape index: {}]
  %s1 = inlined_call_operand.hbm [shape: f32[2,32,384], index: 1, kind: input, shape index: {}]
  %s2 = inlined_call_operand.vmem [shape: f32[2,1,384], index: 2, kind: input, shape index: {}]
  %s3 = inlined_call_operand.hbm [shape: f32[2,128,384], index: 3, kind: input, shape index: {}]
  %s4 = inlined_call_operand.hbm [shape: f32[2,1,384], index: 4, kind: input, shape index: {}]
  %s5 = inlined_call_operand.vmem [shape: f32[16,8,256], index: 5, kind: output, shape index: {}]
  %s6 = sld [smem:[#allocation0]]
  $region46: #{encoder_forward.1} parent=0
    _
  %s8 = ssub.s32 1, %s6
  %s9 = scalar_select 0, %s8, %s6
  $region1: #{encoder_forward.1} parent=0
    #allocation2 [shape = 'u8[65536]{0}', space=vmem, size = 0x10000, scoped, tag = 'input window, operand 0, single buffered']
    #allocation3 [shape = 's32[1]{0}', space=sflag, size = 0x4, scoped, tag = 'scoped memory for encoder_forward.1']
    #allocation4 [shape = 'u8[98304]{0}', space=vmem, size = 0x18000, scoped, tag = 'input window, operand 1, single buffered']
    #allocation5 [shape = 's32[1]{0}', space=sflag, size = 0x4, scoped, tag = 'scoped memory for encoder_forward.1']
    #allocation6 [shape = 'u8[393216]{0}', space=vmem, size = 0x60000, scoped, tag = 'input window, operand 3, single buffered']
    #allocation7 [shape = 'u8[3072]{0}', space=vmem, size = 0xc00, scoped, tag = 'input window, operand 4, single buffered']
    #allocation8 [shape = 's32[1]{0}', space=sflag, size = 0x4, scoped, tag = 'scoped memory for encoder_forward.1']
    %10 = vsyncpa [#allocation3], 0
    %11 = vsyncpa [#allocation5], 0
    %12 = vsyncpa [#allocation8], 0
    // Predicated region
    $region2: #{encoder_forward.1} parent=1 // pred_check
      _
    $region3: #{encoder_forward.1} parent=1 // pred_check_branch
      %14 = sbr.rel (0) target = $region5
    $region4: #{encoder_forward.1} parent=1 // pred_region
      %s16 = ssub.s32 2048, 2048
      %17 = vsyncadd [#allocation3], %s16
      %s18 = sshll.u32 [#allocation2], 4
      %s19 = int_to_ptr.vmem [resolvable:$true] %s18
      %24 = dma.hbm_to_vmem [thread:$0]  %s0, 2048, %s19, [#allocation3], 128, 128, 8
    $region5: #{encoder_forward.1} parent=1 // pred_fallthru
      _
    // Predicated region
    $region6: #{encoder_forward.1} parent=1 // pred_check
      _
    $region7: #{encoder_forward.1} parent=1 // pred_check_branch
      %26 = sbr.rel (0) target = $region9
    $region8: #{encoder_forward.1} parent=1 // pred_region
      %s28 = ssub.s32 3072, 3072
      %29 = vsyncadd [#allocation5], %s28
      %s30 = sshll.u32 [#allocation4], 4
      %s31 = int_to_ptr.vmem [resolvable:$true] %s30
      %36 = dma.hbm_to_vmem [thread:$0]  %s1, 3072, %s31, [#allocation5], 384, 384, 24
    $region9: #{encoder_forward.1} parent=1 // pred_fallthru
      _
    // Predicated region
    $region10: #{encoder_forward.1} parent=1 // pred_check
      _
    $region11: #{encoder_forward.1} parent=1 // pred_check_branch
      %38 = sbr.rel (0) target = $region13
    $region12: #{encoder_forward.1} parent=1 // pred_region
      _
    $region13: #{encoder_forward.1} parent=1 // pred_fallthru
      _
    // Predicated region
    $region14: #{encoder_forward.1} parent=1 // pred_check
      _
    $region15: #{encoder_forward.1} parent=1 // pred_check_branch
      %40 = sbr.rel (0) target = $region17
    $region16: #{encoder_forward.1} parent=1 // pred_region
      %s42 = ssub.s32 12288, 12288
      %43 = vsyncadd [#allocation5], %s42
      %s44 = sshll.u32 [#allocation6], 4
      %s45 = int_to_ptr.vmem [resolvable:$true] %s44
      %50 = dma.hbm_to_vmem [thread:$0]  %s3, 12288, %s45, [#allocation5], 384, 384, 24
    $region17: #{encoder_forward.1} parent=1 // pred_fallthru
      _
    // Predicated region
    $region18: #{encoder_forward.1} parent=1 // pred_check
      _
    $region19: #{encoder_forward.1} parent=1 // pred_check_branch
      %52 = sbr.rel (0) target = $region21
    $region20: #{encoder_forward.1} parent=1 // pred_region
      %s54 = ssub.s32 96, 96
      %55 = vsyncadd [#allocation8], %s54
      %s56 = sshll.u32 [#allocation7], 4
      %s57 = int_to_ptr.vmem [resolvable:$true] %s56
      %62 = dma.hbm_to_vmem [thread:$0]  %s4, 96, %s57, [#allocation8], 48, 48, 3
    $region21: #{encoder_forward.1} parent=1 // pred_fallthru
      _
    // Predicated region
    $region22: #{encoder_forward.1} parent=1 // pred_check
      _
    $region23: #{encoder_forward.1} parent=1 // pred_check_branch
      %64 = sbr.rel (0) target = $region25
    $region24: #{encoder_forward.1} parent=1 // pred_region
      %65 = dma.done [#allocation3], 2048
    $region25: #{encoder_forward.1} parent=1 // pred_fallthru
      _
    // Predicated region
    $region26: #{encoder_forward.1} parent=1 // pred_check
      _
    $region27: #{encoder_forward.1} parent=1 // pred_check_branch
      %67 = sbr.rel (0) target = $region29
    $region28: #{encoder_forward.1} parent=1 // pred_region
      %68 = dma.done [#allocation5], 3072
    $region29: #{encoder_forward.1} parent=1 // pred_fallthru
      _
    // Predicated region
    $region30: #{encoder_forward.1} parent=1 // pred_check
      _
    $region31: #{encoder_forward.1} parent=1 // pred_check_branch
      %70 = sbr.rel (0) target = $region33
    $region32: #{encoder_forward.1} parent=1 // pred_region
      %71 = dma.done [#allocation5], 12288
    $region33: #{encoder_forward.1} parent=1 // pred_fallthru
      _
    // Predicated region
    $region34: #{encoder_forward.1} parent=1 // pred_check
      _
    $region35: #{encoder_forward.1} parent=1 // pred_check_branch
      %73 = sbr.rel (0) target = $region37
    $region36: #{encoder_forward.1} parent=1 // pred_region
      %74 = dma.done [#allocation8], 96
    $region37: #{encoder_forward.1} parent=1 // pred_fallthru
      _
    %v75 = vld [vmem:[#allocation2] sm:$0xff]
    %v76 = vld [vmem:[#allocation2 + $0x8] sm:$0xff]
    %v77 = vld [vmem:[#allocation2 + $0x10] sm:$0xff]
    %v78 = vld [vmem:[#allocation2 + $0x18] sm:$0xff]
    %v79 = vld [vmem:[#allocation2 + $0x20] sm:$0xff]
    %v80 = vld [vmem:[#allocation2 + $0x28] sm:$0xff]
    %v81 = vld [vmem:[#allocation2 + $0x30] sm:$0xff]
    %v82 = vld [vmem:[#allocation2 + $0x38] sm:$0xff]
    %v83 = vld [vmem:[#allocation2 + $0x40] sm:$0xff]
    %v84 = vld [vmem:[#allocation2 + $0x48] sm:$0xff]
    %v85 = vld [vmem:[#allocation2 + $0x50] sm:$0xff]
    %v86 = vld [vmem:[#allocation2 + $0x58] sm:$0xff]
    %v87 = vld [vmem:[#allocation2 + $0x60] sm:$0xff]
    %v88 = vld [vmem:[#allocation2 + $0x68] sm:$0xff]
    %v89 = vld [vmem:[#allocation2 + $0x70] sm:$0xff]
    %v90 = vld [vmem:[#allocation2 + $0x78] sm:$0xff]
    %v91 = vld [vmem:[#allocation4] sm:$0xff]
    %v92 = vld [vmem:[#allocation4 + $0x8] sm:$0xff]
    %v93 = vld [vmem:[#allocation4 + $0x10] sm:$0xff]
    %v94 = vld [vmem:[#allocation4 + $0x18] sm:$0xff]
    %v95 = vld [vmem:[#allocation4 + $0x20] sm:$0xff]
    %v96 = vld [vmem:[#allocation4 + $0x28] sm:$0xff]
    %v97 = vld [vmem:[#allocation4 + $0x30] sm:$0xff]
    %v98 = vld [vmem:[#allocation4 + $0x38] sm:$0xff]
    %v99 = vld [vmem:[#allocation4 + $0x40] sm:$0xff]
    %v100 = vld [vmem:[#allocation4 + $0x48] sm:$0xff]
    %v101 = vld [vmem:[#allocation4 + $0x50] sm:$0xff]
    %v102 = vld [vmem:[#allocation4 + $0x58] sm:$0xff]
    %v103 = vld [vmem:[%s2] sm:$0x7]
    %v105 = vlaneseq
    %v106 = vshrl.u32 %v105, 7
    %v107 = vsub.s32 0, %v106
    %v108 = vrot.slane %v103, %v107
    %v109 = vlaneseq
    %v110 = vshrl.u32 %v109, 7
    %v111 = vsub.s32 1, %v110
    %v112 = vrot.slane %v103, %v111
    %v113 = vlaneseq
    %v114 = vshrl.u32 %v113, 7
    %v115 = vsub.s32 2, %v114
    %v116 = vrot.slane %v103, %v115
    %vm120 = vcmask 261120
    %v122 = vsel %vm120, %v75, 0
    %v125 = vsel %vm120, %v76, 0
    %v128 = vsel %vm120, %v77, 0
    %v131 = vsel %vm120, %v78, 0
    %v134 = vsel %vm120, %v79, 0
    %v137 = vsel %vm120, %v80, 0
    %v140 = vsel %vm120, %v81, 0
    %v143 = vsel %vm120, %v82, 0
    %v146 = vsel %vm120, %v83, 0
    %v149 = vsel %vm120, %v84, 0
    %v152 = vsel %vm120, %v85, 0
    %v155 = vsel %vm120, %v86, 0
    %v158 = vsel %vm120, %v87, 0
    %v161 = vsel %vm120, %v88, 0
    %v164 = vsel %vm120, %v89, 0
    %v167 = vsel %vm120, %v90, 0
    %169 = vmatprep.subr.mxu0 %v92
    %170 = vmatpush1.msra.mxu0 %v91
    %171 = vmatprep.subr.mxu0 %v95
    %172 = vmatpush1.msra.mxu0 %v94
    %173 = vmatprep.subr.mxu0 %v98
    %174 = vmatpush1.msra.mxu0 %v97
    %175 = vmatprep.subr.mxu0 %v101
    %176 = vmatpush1.msra.mxu0 %v100
    %177 = vmatprep.subr.mxu0 0.0
    %178 = vmatpush1.msra.mxu0 0.0
    %179 = vmatprep.subr.mxu0 0.0
    %180 = vmatpush1.msra.mxu0 0.0
    %181 = vmatprep.subr.mxu0 0.0
    %182 = vmatpush1.msra.mxu0 0.0
    %183 = vmatprep.subr.mxu0 0.0
    %184 = vmatpush1.msra.mxu0 0.0
    %185 = vmatprep.subr.mxu0 0.0
    %186 = vmatpush1.msra.mxu0 0.0
    %187 = vmatprep.subr.mxu0 0.0
    %188 = vmatpush1.msra.mxu0 0.0
    %189 = vmatprep.subr.mxu0 0.0
    %190 = vmatpush1.msra.mxu0 0.0
    %191 = vmatprep.subr.mxu0 0.0
    %192 = vmatpush1.msra.mxu0 0.0
    %193 = vmatprep.subr.mxu0 0.0
    %194 = vmatpush1.msra.mxu0 0.0
    %195 = vmatprep.subr.mxu0 0.0
    %196 = vmatpush1.msra.mxu0 0.0
    %197 = vmatprep.subr.mxu0 0.0
    %198 = vmatpush1.msra.mxu0 0.0
    %199 = vmatprep.subr.mxu0 0.0
    %200 = vmatpush1.msra.mxu0 0.0
    %201 = vmatprep.subr.mxu0 0.0
    %202 = vmatpush1.msra.mxu0 0.0
    %203 = vmatprep.subr.mxu0 0.0
    %204 = vmatpush1.msra.mxu0 0.0
    %205 = vmatprep.subr.mxu0 0.0
    %206 = vmatpush1.msra.mxu0 0.0
    %207 = vmatprep.subr.mxu0 0.0
    %208 = vmatpush1.msra.mxu0 0.0
    %209 = vmatprep.subr.mxu0 0.0
    %210 = vmatpush1.msra.mxu0 0.0
    %211 = vmatprep.subr.mxu0 0.0
    %212 = vmatpush1.msra.mxu0 0.0
    %213 = vmatprep.subr.mxu0 0.0
    %214 = vmatpush1.msra.mxu0 0.0
    %215 = vmatprep.subr.mxu0 0.0
    %216 = vmatpush1.msra.mxu0 0.0
    %217 = vmatprep.subr.mxu0 0.0
    %218 = vmatpush1.msra.mxu0 0.0
    %219 = vmatprep.subr.mxu0 0.0
    %220 = vmatpush1.msra.mxu0 0.0
    %221 = vmatprep.subr.mxu0 0.0
    %222 = vmatpush1.msra.mxu0 0.0
    %223 = vmatprep.subr.mxu0 0.0
    %224 = vmatpush1.msra.mxu0 0.0
    %225 = vmatprep.subr.mxu0 0.0
    %226 = vmatpush1.msra.mxu0 0.0
    %227 = vmatprep.subr.mxu0 0.0
    %228 = vmatpush1.msra.mxu0 0.0
    %229 = vmatprep.subr.mxu0 0.0
    %230 = vmatpush1.msra.mxu0 0.0
    %231 = vmatprep.subr.mxu0 0.0
    %232 = vmatpush1.msra.mxu0 0.0
    %233 = vmatprep.mubr.f32.mxu0 0.0
    %234 = vmatmul.mubr.f32.gmra.mrb[0].mxu0 %v122
    %v235 = vpop.f32.mrb[0].mxu0
    %v236 = vadd.f32 %v108, %v235
    %v237 = vpop.f32.mrb[0].mxu0
    %v238 = vadd.f32 %v112, %v237
    %239 = vmatprep.mubr.f32.mxu0 0.0
    %240 = vmatmul.mubr.f32.gmra.mrb[0].mxu0 %v125
    %v241 = vpop.f32.mrb[0].mxu0
    %v242 = vadd.f32 %v108, %v241
    %v243 = vpop.f32.mrb[0].mxu0
    %v244 = vadd.f32 %v112, %v243
    %245 = vmatprep.mubr.f32.mxu0 0.0
    %246 = vmatmul.mubr.f32.gmra.mrb[0].mxu0 %v128
    %v247 = vpop.f32.mrb[0].mxu0
    %v248 = vadd.f32 %v108, %v247
    %v249 = vpop.f32.mrb[0].mxu0
    %v250 = vadd.f32 %v112, %v249
    %251 = vmatprep.mubr.f32.mxu0 0.0
    %252 = vmatmul.mubr.f32.gmra.mrb[0].mxu0 %v131
    %v253 = vpop.f32.mrb[0].mxu0
    %v254 = vadd.f32 %v108, %v253
    %v255 = vpop.f32.mrb[0].mxu0
    %v256 = vadd.f32 %v112, %v255
    %257 = vmatprep.mubr.f32.mxu0 0.0
    %258 = vmatmul.mubr.f32.gmra.mrb[0].mxu0 %v134
    %v259 = vpop.f32.mrb[0].mxu0
    %v260 = vadd.f32 %v108, %v259
    %v261 = vpop.f32.mrb[0].mxu0
    %v262 = vadd.f32 %v112, %v261
    %263 = vmatprep.mubr.f32.mxu0 0.0
    %264 = vmatmul.mubr.f32.gmra.mrb[0].mxu0 %v137
    %v265 = vpop.f32.mrb[0].mxu0
    %v266 = vadd.f32 %v108, %v265
    %v267 = vpop.f32.mrb[0].mxu0
    %v268 = vadd.f32 %v112, %v267
    %269 = vmatprep.mubr.f32.mxu0 0.0
    %270 = vmatmul.mubr.f32.gmra.mrb[0].mxu0 %v140
    %v271 = vpop.f32.mrb[0].mxu0
    %v272 = vadd.f32 %v108, %v271
    %v273 = vpop.f32.mrb[0].mxu0
    %v274 = vadd.f32 %v112, %v273
    %275 = vmatprep.mubr.f32.mxu0 0.0
    %276 = vmatmul.mubr.f32.gmra.mrb[0].mxu0 %v143
    %v277 = vpop.f32.mrb[0].mxu0
    %v278 = vadd.f32 %v108, %v277
    %v279 = vpop.f32.mrb[0].mxu0
    %v280 = vadd.f32 %v112, %v279
    %281 = vmatprep.mubr.f32.mxu0 0.0
    %282 = vmatmul.mubr.f32.gmra.mrb[0].mxu0 %v146
    %v283 = vpop.f32.mrb[0].mxu0
    %v284 = vadd.f32 %v108, %v283
    %v285 = vpop.f32.mrb[0].mxu0
    %v286 = vadd.f32 %v112, %v285
    %287 = vmatprep.mubr.f32.mxu0 0.0
    %288 = vmatmul.mubr.f32.gmra.mrb[0].mxu0 %v149
    %v289 = vpop.f32.mrb[0].mxu0
    %v290 = vadd.f32 %v108, %v289
    %v291 = vpop.f32.mrb[0].mxu0
    %v292 = vadd.f32 %v112, %v291
    %293 = vmatprep.mubr.f32.mxu0 0.0
    %294 = vmatmul.mubr.f32.gmra.mrb[0].mxu0 %v152
    %v295 = vpop.f32.mrb[0].mxu0
    %v296 = vadd.f32 %v108, %v295
    %v297 = vpop.f32.mrb[0].mxu0
    %v298 = vadd.f32 %v112, %v297
    %299 = vmatprep.mubr.f32.mxu0 0.0
    %300 = vmatmul.mubr.f32.gmra.mrb[0].mxu0 %v155
    %v301 = vpop.f32.mrb[0].mxu0
    %v302 = vadd.f32 %v108, %v301
    %v303 = vpop.f32.mrb[0].mxu0
    %v304 = vadd.f32 %v112, %v303
    %305 = vmatprep.mubr.f32.mxu0 0.0
    %306 = vmatmul.mubr.f32.gmra.mrb[0].mxu0 %v158
    %v307 = vpop.f32.mrb[0].mxu0
    %v308 = vadd.f32 %v108, %v307
    %v309 = vpop.f32.mrb[0].mxu0
    %v310 = vadd.f32 %v112, %v309
    %311 = vmatprep.mubr.f32.mxu0 0.0
    %312 = vmatmul.mubr.f32.gmra.mrb[0].mxu0 %v161
    %v313 = vpop.f32.mrb[0].mxu0
    %v314 = vadd.f32 %v108, %v313
    %v315 = vpop.f32.mrb[0].mxu0
    %v316 = vadd.f32 %v112, %v315
    %317 = vmatprep.mubr.f32.mxu0 0.0
    %318 = vmatmul.mubr.f32.gmra.mrb[0].mxu0 %v164
    %v319 = vpop.f32.mrb[0].mxu0
    %v320 = vadd.f32 %v108, %v319
    %v321 = vpop.f32.mrb[0].mxu0
    %v322 = vadd.f32 %v112, %v321
    %323 = vmatprep.mubr.f32.mxu0 0.0
    %324 = vmatmul.mubr.f32.gmra.mrb[0].mxu0 %v167
    %v325 = vpop.f32.mrb[0].mxu0
    %v326 = vadd.f32 %v108, %v325
    %v327 = vpop.f32.mrb[0].mxu0
    %v328 = vadd.f32 %v112, %v327
    %329 = vdwg.mxu0
    %330 = vmatprep.subr.mxu0 0.0
    %331 = vmatpush1.msra.mxu0 %v93
    %332 = vmatprep.subr.mxu0 0.0
    %333 = vmatpush1.msra.mxu0 %v96
    %334 = vmatprep.subr.mxu0 0.0
    %335 = vmatpush1.msra.mxu0 %v99
    %336 = vmatprep.subr.mxu0 0.0
    %337 = vmatpush1.msra.mxu0 %v102
    %338 = vmatprep.subr.mxu0 0.0
    %339 = vmatpush1.msra.mxu0 0.0
    %340 = vmatprep.subr.mxu0 0.0
    %341 = vmatpush1.msra.mxu0 0.0
    %342 = vmatprep.subr.mxu0 0.0
    %343 = vmatpush1.msra.mxu0 0.0
    %344 = vmatprep.subr.mxu0 0.0
    %345 = vmatpush1.msra.mxu0 0.0
    %346 = vmatprep.subr.mxu0 0.0
    %347 = vmatpush1.msra.mxu0 0.0
    %348 = vmatprep.subr.mxu0 0.0
    %349 = vmatpush1.msra.mxu0 0.0
    %350 = vmatprep.subr.mxu0 0.0
    %351 = vmatpush1.msra.mxu0 0.0
    %352 = vmatprep.subr.mxu0 0.0
    %353 = vmatpush1.msra.mxu0 0.0
    %354 = vmatprep.subr.mxu0 0.0
    %355 = vmatpush1.msra.mxu0 0.0
    %356 = vmatprep.subr.mxu0 0.0
    %357 = vmatpush1.msra.mxu0 0.0
    %358 = vmatprep.subr.mxu0 0.0
    %359 = vmatpush1.msra.mxu0 0.0
    %360 = vmatprep.subr.mxu0 0.0
    %361 = vmatpush1.msra.mxu0 0.0
    %362 = vmatprep.subr.mxu0 0.0
    %363 = vmatpush1.msra.mxu0 0.0
    %364 = vmatprep.subr.mxu0 0.0
    %365 = vmatpush1.msra.mxu0 0.0
    %366 = vmatprep.subr.mxu0 0.0
    %367 = vmatpush1.msra.mxu0 0.0
    %368 = vmatprep.subr.mxu0 0.0
    %369 = vmatpush1.msra.mxu0 0.0
    %370 = vmatprep.subr.mxu0 0.0
    %371 = vmatpush1.msra.mxu0 0.0
    %372 = vmatprep.subr.mxu0 0.0
    %373 = vmatpush1.msra.mxu0 0.0
    %374 = vmatprep.subr.mxu0 0.0
    %375 = vmatpush1.msra.mxu0 0.0
    %376 = vmatprep.subr.mxu0 0.0
    %377 = vmatpush1.msra.mxu0 0.0
    %378 = vmatprep.subr.mxu0 0.0
    %379 = vmatpush1.msra.mxu0 0.0
    %380 = vmatprep.subr.mxu0 0.0
    %381 = vmatpush1.msra.mxu0 0.0
    %382 = vmatprep.subr.mxu0 0.0
    %383 = vmatpush1.msra.mxu0 0.0
    %384 = vmatprep.subr.mxu0 0.0
    %385 = vmatpush1.msra.mxu0 0.0
    %386 = vmatprep.subr.mxu0 0.0
    %387 = vmatpush1.msra.mxu0 0.0
    %388 = vmatprep.subr.mxu0 0.0
    %389 = vmatpush1.msra.mxu0 0.0
    %390 = vmatprep.subr.mxu0 0.0
    %391 = vmatpush1.msra.mxu0 0.0
    %392 = vmatprep.subr.mxu0 0.0
    %393 = vmatpush1.msra.mxu0 0.0
    %394 = vmatprep.mubr.f32.mxu0 0.0
    %395 = vmatmul.mubr.f32.gmra.mrb[0].mxu0 %v122
    %v396 = vpop.f32.mrb[0].mxu0
    %v397 = vadd.f32 %v116, %v396
    %v398 = vpop.f32.mrb[0].mxu0
    %399 = vmatprep.mubr.f32.mxu0 0.0
    %400 = vmatmul.mubr.f32.gmra.mrb[0].mxu0 %v125
    %v401 = vpop.f32.mrb[0].mxu0
    %v402 = vadd.f32 %v116, %v401
    %v403 = vpop.f32.mrb[0].mxu0
    %404 = vmatprep.mubr.f32.mxu0 0.0
    %405 = vmatmul.mubr.f32.gmra.mrb[0].mxu0 %v128
    %v406 = vpop.f32.mrb[0].mxu0
    %v407 = vadd.f32 %v116, %v406
    %v408 = vpop.f32.mrb[0].mxu0
    %409 = vmatprep.mubr.f32.mxu0 0.0
    %410 = vmatmul.mubr.f32.gmra.mrb[0].mxu0 %v131
    %v411 = vpop.f32.mrb[0].mxu0
    %v412 = vadd.f32 %v116, %v411
    %v413 = vpop.f32.mrb[0].mxu0
    %414 = vmatprep.mubr.f32.mxu0 0.0
    %415 = vmatmul.mubr.f32.gmra.mrb[0].mxu0 %v134
    %v416 = vpop.f32.mrb[0].mxu0
    %v417 = vadd.f32 %v116, %v416
    %v418 = vpop.f32.mrb[0].mxu0
    %419 = vmatprep.mubr.f32.mxu0 0.0
    %420 = vmatmul.mubr.f32.gmra.mrb[0].mxu0 %v137
    %v421 = vpop.f32.mrb[0].mxu0
    %v422 = vadd.f32 %v116, %v421
    %v423 = vpop.f32.mrb[0].mxu0
    %424 = vmatprep.mubr.f32.mxu0 0.0
    %425 = vmatmul.mubr.f32.gmra.mrb[0].mxu0 %v140
    %v426 = vpop.f32.mrb[0].mxu0
    %v427 = vadd.f32 %v116, %v426
    %v428 = vpop.f32.mrb[0].mxu0
    %429 = vmatprep.mubr.f32.mxu0 0.0
    %430 = vmatmul.mubr.f32.gmra.mrb[0].mxu0 %v143
    %v431 = vpop.f32.mrb[0].mxu0
    %v432 = vadd.f32 %v116, %v431
    %v433 = vpop.f32.mrb[0].mxu0
    %434 = vmatprep.mubr.f32.mxu0 0.0
    %435 = vmatmul.mubr.f32.gmra.mrb[0].mxu0 %v146
    %v436 = vpop.f32.mrb[0].mxu0
    %v437 = vadd.f32 %v116, %v436
    %v438 = vpop.f32.mrb[0].mxu0
    %439 = vmatprep.mubr.f32.mxu0 0.0
    %440 = vmatmul.mubr.f32.gmra.mrb[0].mxu0 %v149
    %v441 = vpop.f32.mrb[0].mxu0
    %v442 = vadd.f32 %v116, %v441
    %v443 = vpop.f32.mrb[0].mxu0
    %444 = vmatprep.mubr.f32.mxu0 0.0
    %445 = vmatmul.mubr.f32.gmra.mrb[0].mxu0 %v152
    %v446 = vpop.f32.mrb[0].mxu0
    %v447 = vadd.f32 %v116, %v446
    %v448 = vpop.f32.mrb[0].mxu0
    %449 = vmatprep.mubr.f32.mxu0 0.0
    %450 = vmatmul.mubr.f32.gmra.mrb[0].mxu0 %v155
    %v451 = vpop.f32.mrb[0].mxu0
    %v452 = vadd.f32 %v116, %v451
    %v453 = vpop.f32.mrb[0].mxu0
    %454 = vmatprep.mubr.f32.mxu0 0.0
    %455 = vmatmul.mubr.f32.gmra.mrb[0].mxu0 %v158
    %v456 = vpop.f32.mrb[0].mxu0
    %v457 = vadd.f32 %v116, %v456
    %v458 = vpop.f32.mrb[0].mxu0
    %459 = vmatprep.mubr.f32.mxu0 0.0
    %460 = vmatmul.mubr.f32.gmra.mrb[0].mxu0 %v161
    %v461 = vpop.f32.mrb[0].mxu0
    %v462 = vadd.f32 %v116, %v461
    %v463 = vpop.f32.mrb[0].mxu0
    %464 = vmatprep.mubr.f32.mxu0 0.0
    %465 = vmatmul.mubr.f32.gmra.mrb[0].mxu0 %v164
    %v466 = vpop.f32.mrb[0].mxu0
    %v467 = vadd.f32 %v116, %v466
    %v468 = vpop.f32.mrb[0].mxu0
    %469 = vmatprep.mubr.f32.mxu0 0.0
    %470 = vmatmul.mubr.f32.gmra.mrb[0].mxu0 %v167
    %v471 = vpop.f32.mrb[0].mxu0
    %v472 = vadd.f32 %v116, %v471
    %v473 = vpop.f32.mrb[0].mxu0
    %474 = vdwg.mxu0
    %s475 = scalar_lea.vmem [#allocation4], 96
    %v476 = vld [vmem:[%s475] sm:$0xff]
    %v477 = vld [vmem:[%s475 + $0x8] sm:$0xff]
    %v478 = vld [vmem:[%s475 + $0x10] sm:$0xff]
    %v479 = vld [vmem:[%s475 + $0x18] sm:$0xff]
    %v480 = vld [vmem:[%s475 + $0x20] sm:$0xff]
    %v481 = vld [vmem:[%s475 + $0x28] sm:$0xff]
    %v482 = vld [vmem:[%s475 + $0x30] sm:$0xff]
    %v483 = vld [vmem:[%s475 + $0x38] sm:$0xff]
    %v484 = vld [vmem:[%s475 + $0x40] sm:$0xff]
    %v485 = vld [vmem:[%s475 + $0x48] sm:$0xff]
    %v486 = vld [vmem:[%s475 + $0x50] sm:$0xff]
    %v487 = vld [vmem:[%s475 + $0x58] sm:$0xff]
    %s488 = scalar_lea.vmem %s2, 3
    %v489 = vld [vmem:[%s488] sm:$0x7]
    %v491 = vlaneseq
    %v492 = vshrl.u32 %v491, 7
    %v493 = vsub.s32 0, %v492
    %v494 = vrot.slane %v489, %v493
    %v495 = vlaneseq
    %v496 = vshrl.u32 %v495, 7
    %v497 = vsub.s32 1, %v496
    %v498 = vrot.slane %v489, %v497
    %v499 = vlaneseq
    %v500 = vshrl.u32 %v499, 7
    %v501 = vsub.s32 2, %v500
    %v502 = vrot.slane %v489, %v501
    %506 = vmatprep.subr.mxu0 %v477
    %507 = vmatpush1.msra.mxu0 %v476
    %508 = vmatprep.subr.mxu0 %v480
    %509 = vmatpush1.msra.mxu0 %v479
    %510 = vmatprep.subr.mxu0 %v483
    %511 = vmatpush1.msra.mxu0 %v482
    %512 = vmatprep.subr.mxu0 %v486
    %513 = vmatpush1.msra.mxu0 %v485
    %514 = vmatprep.subr.mxu0 0.0
    %515 = vmatpush1.msra.mxu0 0.0
    %516 = vmatprep.subr.mxu0 0.0
    %517 = vmatpush1.msra.mxu0 0.0
    %518 = vmatprep.subr.mxu0 0.0
    %519 = vmatpush1.msra.mxu0 0.0
    %520 = vmatprep.subr.mxu0 0.0
    %521 = vmatpush1.msra.mxu0 0.0
    %522 = vmatprep.subr.mxu0 0.0
    %523 = vmatpush1.msra.mxu0 0.0
    %524 = vmatprep.subr.mxu0 0.0
    %525 = vmatpush1.msra.mxu0 0.0
    %526 = vmatprep.subr.mxu0 0.0
    %527 = vmatpush1.msra.mxu0 0.0
    %528 = vmatprep.subr.mxu0 0.0
    %529 = vmatpush1.msra.mxu0 0.0
    %530 = vmatprep.subr.mxu0 0.0
    %531 = vmatpush1.msra.mxu0 0.0
    %532 = vmatprep.subr.mxu0 0.0
    %533 = vmatpush1.msra.mxu0 0.0
    %534 = vmatprep.subr.mxu0 0.0
    %535 = vmatpush1.msra.mxu0 0.0
    %536 = vmatprep.subr.mxu0 0.0
    %537 = vmatpush1.msra.mxu0 0.0
    %538 = vmatprep.subr.mxu0 0.0
    %539 = vmatpush1.msra.mxu0 0.0
    %540 = vmatprep.subr.mxu0 0.0
    %541 = vmatpush1.msra.mxu0 0.0
    %542 = vmatprep.subr.mxu0 0.0
    %543 = vmatpush1.msra.mxu0 0.0
    %544 = vmatprep.subr.mxu0 0.0
    %545 = vmatpush1.msra.mxu0 0.0
    %546 = vmatprep.subr.mxu0 0.0
    %547 = vmatpush1.msra.mxu0 0.0
    %548 = vmatprep.subr.mxu0 0.0
    %549 = vmatpush1.msra.mxu0 0.0
    %550 = vmatprep.subr.mxu0 0.0
    %551 = vmatpush1.msra.mxu0 0.0
    %552 = vmatprep.subr.mxu0 0.0
    %553 = vmatpush1.msra.mxu0 0.0
    %554 = vmatprep.subr.mxu0 0.0
    %555 = vmatpush1.msra.mxu0 0.0
    %556 = vmatprep.subr.mxu0 0.0
    %557 = vmatpush1.msra.mxu0 0.0
    %558 = vmatprep.subr.mxu0 0.0
    %559 = vmatpush1.msra.mxu0 0.0
    %560 = vmatprep.subr.mxu0 0.0
    %561 = vmatpush1.msra.mxu0 0.0
    %562 = vmatprep.subr.mxu0 0.0
    %563 = vmatpush1.msra.mxu0 0.0
    %564 = vmatprep.subr.mxu0 0.0
    %565 = vmatpush1.msra.mxu0 0.0
    %566 = vmatprep.subr.mxu0 0.0
    %567 = vmatpush1.msra.mxu0 0.0
    %568 = vmatprep.subr.mxu0 0.0
    %569 = vmatpush1.msra.mxu0 0.0
    %570 = vmatprep.mubr.f32.mxu0 0.0
    %571 = vmatmul.mubr.f32.gmra.mrb[0].mxu0 %v122
    %v572 = vpop.f32.mrb[0].mxu0
    %v573 = vadd.f32 %v494, %v572
    %v574 = vpop.f32.mrb[0].mxu0
    %v575 = vadd.f32 %v498, %v574
    %576 = vmatprep.mubr.f32.mxu0 0.0
    %577 = vmatmul.mubr.f32.gmra.mrb[0].mxu0 %v125
    %v578 = vpop.f32.mrb[0].mxu0
    %v579 = vadd.f32 %v494, %v578
    %v580 = vpop.f32.mrb[0].mxu0
    %v581 = vadd.f32 %v498, %v580
    %582 = vmatprep.mubr.f32.mxu0 0.0
    %583 = vmatmul.mubr.f32.gmra.mrb[0].mxu0 %v128
    %v584 = vpop.f32.mrb[0].mxu0
    %v585 = vadd.f32 %v494, %v584
    %v586 = vpop.f32.mrb[0].mxu0
    %v587 = vadd.f32 %v498, %v586
    %588 = vmatprep.mubr.f32.mxu0 0.0
    %589 = vmatmul.mubr.f32.gmra.mrb[0].mxu0 %v131
    %v590 = vpop.f32.mrb[0].mxu0
    %v591 = vadd.f32 %v494, %v590
    %v592 = vpop.f32.mrb[0].mxu0
    %v593 = vadd.f32 %v498, %v592
    %594 = vmatprep.mubr.f32.mxu0 0.0
    %595 = vmatmul.mubr.f32.gmra.mrb[0].mxu0 %v134
    %v596 = vpop.f32.mrb[0].mxu0
    %v597 = vadd.f32 %v494, %v596
    %v598 = vpop.f32.mrb[0].mxu0
    %v599 = vadd.f32 %v498, %v598
    %600 = vmatprep.mubr.f32.mxu0 0.0
    %601 = vmatmul.mubr.f32.gmra.mrb[0].mxu0 %v137
    %v602 = vpop.f32.mrb[0].mxu0
    %v603 = vadd.f32 %v494, %v602
    %v604 = vpop.f32.mrb[0].mxu0
    %v605 = vadd.f32 %v498, %v604
    %606 = vmatprep.mubr.f32.mxu0 0.0
    %607 = vmatmul.mubr.f32.gmra.mrb[0].mxu0 %v140
    %v608 = vpop.f32.mrb[0].mxu0
    %v609 = vadd.f32 %v494, %v608
    %v610 = vpop.f32.mrb[0].mxu0
    %v611 = vadd.f32 %v498, %v610
    %612 = vmatprep.mubr.f32.mxu0 0.0
    %613 = vmatmul.mubr.f32.gmra.mrb[0].mxu0 %v143
    %v614 = vpop.f32.mrb[0].mxu0
    %v615 = vadd.f32 %v494, %v614
    %v616 = vpop.f32.mrb[0].mxu0
    %v617 = vadd.f32 %v498, %v616
    %618 = vmatprep.mubr.f32.mxu0 0.0
    %619 = vmatmul.mubr.f32.gmra.mrb[0].mxu0 %v146
    %v620 = vpop.f32.mrb[0].mxu0
    %v621 = vadd.f32 %v494, %v620
    %v622 = vpop.f32.mrb[0].mxu0
    %v623 = vadd.f32 %v498, %v622
    %624 = vmatprep.mubr.f32.mxu0 0.0
    %625 = vmatmul.mubr.f32.gmra.mrb[0].mxu0 %v149
    %v626 = vpop.f32.mrb[0].mxu0
    %v627 = vadd.f32 %v494, %v626
    %v628 = vpop.f32.mrb[0].mxu0
    %v629 = vadd.f32 %v498, %v628
    %630 = vmatprep.mubr.f32.mxu0 0.0
    %631 = vmatmul.mubr.f32.gmra.mrb[0].mxu0 %v152
    %v632 = vpop.f32.mrb[0].mxu0
    %v633 = vadd.f32 %v494, %v632
    %v634 = vpop.f32.mrb[0].mxu0
    %v635 = vadd.f32 %v498, %v634
    %636 = vmatprep.mubr.f32.mxu0 0.0
    %637 = vmatmul.mubr.f32.gmra.mrb[0].mxu0 %v155
    %v638 = vpop.f32.mrb[0].mxu0
    %v639 = vadd.f32 %v494, %v638
    %v640 = vpop.f32.mrb[0].mxu0
    %v641 = vadd.f32 %v498, %v640
    %642 = vmatprep.mubr.f32.mxu0 0.0
    %643 = vmatmul.mubr.f32.gmra.mrb[0].mxu0 %v158
    %v644 = vpop.f32.mrb[0].mxu0
    %v645 = vadd.f32 %v494, %v644
    %v646 = vpop.f32.mrb[0].mxu0
    %v647 = vadd.f32 %v498, %v646
    %648 = vmatprep.mubr.f32.mxu0 0.0
    %649 = vmatmul.mubr.f32.gmra.mrb[0].mxu0 %v161
    %v650 = vpop.f32.mrb[0].mxu0
    %v651 = vadd.f32 %v494, %v650
    %v652 = vpop.f32.mrb[0].mxu0
    %v653 = vadd.f32 %v498, %v652
    %654 = vmatprep.mubr.f32.mxu0 0.0
    %655 = vmatmul.mubr.f32.gmra.mrb[0].mxu0 %v164
    %v656 = vpop.f32.mrb[0].mxu0
    %v657 = vadd.f32 %v494, %v656
    %v658 = vpop.f32.mrb[0].mxu0
    %v659 = vadd.f32 %v498, %v658
    %660 = vmatprep.mubr.f32.mxu0 0.0
    %661 = vmatmul.mubr.f32.gmra.mrb[0].mxu0 %v167
    %v662 = vpop.f32.mrb[0].mxu0
    %v663 = vadd.f32 %v494, %v662
    %v664 = vpop.f32.mrb[0].mxu0
    %v665 = vadd.f32 %v498, %v664
    %666 = vdwg.mxu0
    %667 = vmatprep.subr.mxu0 0.0
    %668 = vmatpush1.msra.mxu0 %v478
    %669 = vmatprep.subr.mxu0 0.0
    %670 = vmatpush1.msra.mxu0 %v481
    %671 = vmatprep.subr.mxu0 0.0
    %672 = vmatpush1.msra.mxu0 %v484
    %673 = vmatprep.subr.mxu0 0.0
    %674 = vmatpush1.msra.mxu0 %v487
    %675 = vmatprep.subr.mxu0 0.0
    %676 = vmatpush1.msra.mxu0 0.0
    %677 = vmatprep.subr.mxu0 0.0
    %678 = vmatpush1.msra.mxu0 0.0
    %679 = vmatprep.subr.mxu0 0.0
    %680 = vmatpush1.msra.mxu0 0.0
    %681 = vmatprep.subr.mxu0 0.0
    %682 = vmatpush1.msra.mxu0 0.0
    %683 = vmatprep.subr.mxu0 0.0
    %684 = vmatpush1.msra.mxu0 0.0
    %685 = vmatprep.subr.mxu0 0.0
    %686 = vmatpush1.msra.mxu0 0.0
    %687 = vmatprep.subr.mxu0 0.0
    %688 = vmatpush1.msra.mxu0 0.0
    %689 = vmatprep.subr.mxu0 0.0
    %690 = vmatpush1.msra.mxu0 0.0
    %691 = vmatprep.subr.mxu0 0.0
    %692 = vmatpush1.msra.mxu0 0.0
    %693 = vmatprep.subr.mxu0 0.0
    %694 = vmatpush1.msra.mxu0 0.0
    %695 = vmatprep.subr.mxu0 0.0
    %696 = vmatpush1.msra.mxu0 0.0
    %697 = vmatprep.subr.mxu0 0.0
    %698 = vmatpush1.msra.mxu0 0.0
    %699 = vmatprep.subr.mxu0 0.0
    %700 = vmatpush1.msra.mxu0 0.0
    %701 = vmatprep.subr.mxu0 0.0
    %702 = vmatpush1.msra.mxu0 0.0
    %703 = vmatprep.subr.mxu0 0.0
    %704 = vmatpush1.msra.mxu0 0.0
    %705 = vmatprep.subr.mxu0 0.0
    %706 = vmatpush1.msra.mxu0 0.0
    %707 = vmatprep.subr.mxu0 0.0
    %708 = vmatpush1.msra.mxu0 0.0
    %709 = vmatprep.subr.mxu0 0.0
    %710 = vmatpush1.msra.mxu0 0.0
    %711 = vmatprep.subr.mxu0 0.0
    %712 = vmatpush1.msra.mxu0 0.0
    %713 = vmatprep.subr.mxu0 0.0
    %714 = vmatpush1.msra.mxu0 0.0
    %715 = vmatprep.subr.mxu0 0.0
    %716 = vmatpush1.msra.mxu0 0.0
    %717 = vmatprep.subr.mxu0 0.0
    %718 = vmatpush1.msra.mxu0 0.0
    %719 = vmatprep.subr.mxu0 0.0
    %720 = vmatpush1.msra.mxu0 0.0
    %721 = vmatprep.subr.mxu0 0.0
    %722 = vmatpush1.msra.mxu0 0.0
    %723 = vmatprep.subr.mxu0 0.0
    %724 = vmatpush1.msra.mxu0 0.0
    %725 = vmatprep.subr.mxu0 0.0
    %726 = vmatpush1.msra.mxu0 0.0
    %727 = vmatprep.subr.mxu0 0.0
    %728 = vmatpush1.msra.mxu0 0.0
    %729 = vmatprep.subr.mxu0 0.0
    %730 = vmatpush1.msra.mxu0 0.0
    %731 = vmatprep.mubr.f32.mxu0 0.0
    %732 = vmatmul.mubr.f32.gmra.mrb[0].mxu0 %v122
    %v733 = vpop.f32.mrb[0].mxu0
    %v734 = vadd.f32 %v502, %v733
    %v735 = vpop.f32.mrb[0].mxu0
    %736 = vmatprep.mubr.f32.mxu0 0.0
    %737 = vmatmul.mubr.f32.gmra.mrb[0].mxu0 %v125
    %v738 = vpop.f32.mrb[0].mxu0
    %v739 = vadd.f32 %v502, %v738
    %v740 = vpop.f32.mrb[0].mxu0
    %741 = vmatprep.mubr.f32.mxu0 0.0
    %742 = vmatmul.mubr.f32.gmra.mrb[0].mxu0 %v128
    %v743 = vpop.f32.mrb[0].mxu0
    %v744 = vadd.f32 %v502, %v743
    %v745 = vpop.f32.mrb[0].mxu0
    %746 = vmatprep.mubr.f32.mxu0 0.0
    %747 = vmatmul.mubr.f32.gmra.mrb[0].mxu0 %v131
    %v748 = vpop.f32.mrb[0].mxu0
    %v749 = vadd.f32 %v502, %v748
    %v750 = vpop.f32.mrb[0].mxu0
    %751 = vmatprep.mubr.f32.mxu0 0.0
    %752 = vmatmul.mubr.f32.gmra.mrb[0].mxu0 %v134
    %v753 = vpop.f32.mrb[0].mxu0
    %v754 = vadd.f32 %v502, %v753
    %v755 = vpop.f32.mrb[0].mxu0
    %756 = vmatprep.mubr.f32.mxu0 0.0
    %757 = vmatmul.mubr.f32.gmra.mrb[0].mxu0 %v137
    %v758 = vpop.f32.mrb[0].mxu0
    %v759 = vadd.f32 %v502, %v758
    %v760 = vpop.f32.mrb[0].mxu0
    %761 = vmatprep.mubr.f32.mxu0 0.0
    %762 = vmatmul.mubr.f32.gmra.mrb[0].mxu0 %v140
    %v763 = vpop.f32.mrb[0].mxu0
    %v764 = vadd.f32 %v502, %v763
    %v765 = vpop.f32.mrb[0].mxu0
    %766 = vmatprep.mubr.f32.mxu0 0.0
    %767 = vmatmul.mubr.f32.gmra.mrb[0].mxu0 %v143
    %v768 = vpop.f32.mrb[0].mxu0
    %v769 = vadd.f32 %v502, %v768
    %v770 = vpop.f32.mrb[0].mxu0
    %771 = vmatprep.mubr.f32.mxu0 0.0
    %772 = vmatmul.mubr.f32.gmra.mrb[0].mxu0 %v146
    %v773 = vpop.f32.mrb[0].mxu0
    %v774 = vadd.f32 %v502, %v773
    %v775 = vpop.f32.mrb[0].mxu0
    %776 = vmatprep.mubr.f32.mxu0 0.0
    %777 = vmatmul.mubr.f32.gmra.mrb[0].mxu0 %v149
    %v778 = vpop.f32.mrb[0].mxu0
    %v779 = vadd.f32 %v502, %v778
    %v780 = vpop.f32.mrb[0].mxu0
    %781 = vmatprep.mubr.f32.mxu0 0.0
    %782 = vmatmul.mubr.f32.gmra.mrb[0].mxu0 %v152
    %v783 = vpop.f32.mrb[0].mxu0
    %v784 = vadd.f32 %v502, %v783
    %v785 = vpop.f32.mrb[0].mxu0
    %786 = vmatprep.mubr.f32.mxu0 0.0
    %787 = vmatmul.mubr.f32.gmra.mrb[0].mxu0 %v155
    %v788 = vpop.f32.mrb[0].mxu0
    %v789 = vadd.f32 %v502, %v788
    %v790 = vpop.f32.mrb[0].mxu0
    %791 = vmatprep.mubr.f32.mxu0 0.0
    %792 = vmatmul.mubr.f32.gmra.mrb[0].mxu0 %v158
    %v793 = vpop.f32.mrb[0].mxu0
    %v794 = vadd.f32 %v502, %v793
    %v795 = vpop.f32.mrb[0].mxu0
    %796 = vmatprep.mubr.f32.mxu0 0.0
    %797 = vmatmul.mubr.f32.gmra.mrb[0].mxu0 %v161
    %v798 = vpop.f32.mrb[0].mxu0
    %v799 = vadd.f32 %v502, %v798
    %v800 = vpop.f32.mrb[0].mxu0
    %801 = vmatprep.mubr.f32.mxu0 0.0
    %802 = vmatmul.mubr.f32.gmra.mrb[0].mxu0 %v164
    %v803 = vpop.f32.mrb[0].mxu0
    %v804 = vadd.f32 %v502, %v803
    %v805 = vpop.f32.mrb[0].mxu0
    %806 = vmatprep.mubr.f32.mxu0 0.0
    %807 = vmatmul.mubr.f32.gmra.mrb[0].mxu0 %v167
    %v808 = vpop.f32.mrb[0].mxu0
    %v809 = vadd.f32 %v502, %v808
    %v810 = vpop.f32.mrb[0].mxu0
    %811 = vdwg.mxu0
    %v812 = vld [vmem:[#allocation6] sm:$0xff]
    %v813 = vld [vmem:[#allocation6 + $0x8] sm:$0xff]
    %v814 = vld [vmem:[#allocation6 + $0x10] sm:$0xff]
    %v815 = vld [vmem:[#allocation6 + $0x18] sm:$0xff]
    %v816 = vld [vmem:[#allocation6 + $0x20] sm:$0xff]
    %v817 = vld [vmem:[#allocation6 + $0x28] sm:$0xff]
    %v818 = vld [vmem:[#allocation6 + $0x30] sm:$0xff]
    %v819 = vld [vmem:[#allocation6 + $0x38] sm:$0xff]
    %v820 = vld [vmem:[#allocation6 + $0x40] sm:$0xff]
    %v821 = vld [vmem:[#allocation6 + $0x48] sm:$0xff]
    %v822 = vld [vmem:[#allocation6 + $0x50] sm:$0xff]
    %v823 = vld [vmem:[#allocation6 + $0x58] sm:$0xff]
    %v824 = vld [vmem:[#allocation6 + $0x60] sm:$0xff]
    %v825 = vld [vmem:[#allocation6 + $0x68] sm:$0xff]
    %v826 = vld [vmem:[#allocation6 + $0x70] sm:$0xff]
    %v827 = vld [vmem:[#allocation6 + $0x78] sm:$0xff]
    %v828 = vld [vmem:[#allocation6 + $0x80] sm:$0xff]
    %v829 = vld [vmem:[#allocation6 + $0x88] sm:$0xff]
    %v830 = vld [vmem:[#allocation6 + $0x90] sm:$0xff]
    %v831 = vld [vmem:[#allocation6 + $0x98] sm:$0xff]
    %v832 = vld [vmem:[#allocation6 + $0xa0] sm:$0xff]
    %v833 = vld [vmem:[#allocation6 + $0xa8] sm:$0xff]
    %v834 = vld [vmem:[#allocation6 + $0xb0] sm:$0xff]
    %v835 = vld [vmem:[#allocation6 + $0xb8] sm:$0xff]
    %v836 = vld [vmem:[#allocation6 + $0xc0] sm:$0xff]
    %v837 = vld [vmem:[#allocation6 + $0xc8] sm:$0xff]
    %v838 = vld [vmem:[#allocation6 + $0xd0] sm:$0xff]
    %v839 = vld [vmem:[#allocation6 + $0xd8] sm:$0xff]
    %v840 = vld [vmem:[#allocation6 + $0xe0] sm:$0xff]
    %v841 = vld [vmem:[#allocation6 + $0xe8] sm:$0xff]
    %v842 = vld [vmem:[#allocation6 + $0xf0] sm:$0xff]
    %v843 = vld [vmem:[#allocation6 + $0xf8] sm:$0xff]
    %v844 = vld [vmem:[#allocation6 + $0x100] sm:$0xff]
    %v845 = vld [vmem:[#allocation6 + $0x108] sm:$0xff]
    %v846 = vld [vmem:[#allocation6 + $0x110] sm:$0xff]
    %v847 = vld [vmem:[#allocation6 + $0x118] sm:$0xff]
    %v848 = vld [vmem:[#allocation6 + $0x120] sm:$0xff]
    %v849 = vld [vmem:[#allocation6 + $0x128] sm:$0xff]
    %v850 = vld [vmem:[#allocation6 + $0x130] sm:$0xff]
    %v851 = vld [vmem:[#allocation6 + $0x138] sm:$0xff]
    %v852 = vld [vmem:[#allocation6 + $0x140] sm:$0xff]
    %v853 = vld [vmem:[#allocation6 + $0x148] sm:$0xff]
    %v854 = vld [vmem:[#allocation6 + $0x150] sm:$0xff]
    %v855 = vld [vmem:[#allocation6 + $0x158] sm:$0xff]
    %v856 = vld [vmem:[#allocation6 + $0x160] sm:$0xff]
    %v857 = vld [vmem:[#allocation6 + $0x168] sm:$0xff]
    %v858 = vld [vmem:[#allocation6 + $0x170] sm:$0xff]
    %v859 = vld [vmem:[#allocation6 + $0x178] sm:$0xff]
    %v860 = vld [vmem:[#allocation7] sm:$0x7]
    %s861 = scalar_lea.vmem [#allocation6], 384
    %v862 = vld [vmem:[%s861] sm:$0xff]
    %v863 = vld [vmem:[%s861 + $0x8] sm:$0xff]
    %v864 = vld [vmem:[%s861 + $0x10] sm:$0xff]
    %v865 = vld [vmem:[%s861 + $0x18] sm:$0xff]
    %v866 = vld [vmem:[%s861 + $0x20] sm:$0xff]
    %v867 = vld [vmem:[%s861 + $0x28] sm:$0xff]
    %v868 = vld [vmem:[%s861 + $0x30] sm:$0xff]
    %v869 = vld [vmem:[%s861 + $0x38] sm:$0xff]
    %v870 = vld [vmem:[%s861 + $0x40] sm:$0xff]
    %v871 = vld [vmem:[%s861 + $0x48] sm:$0xff]
    %v872 = vld [vmem:[%s861 + $0x50] sm:$0xff]
    %v873 = vld [vmem:[%s861 + $0x58] sm:$0xff]
    %v874 = vld [vmem:[%s861 + $0x60] sm:$0xff]
    %v875 = vld [vmem:[%s861 + $0x68] sm:$0xff]
    %v876 = vld [vmem:[%s861 + $0x70] sm:$0xff]
    %v877 = vld [vmem:[%s861 + $0x78] sm:$0xff]
    %v878 = vld [vmem:[%s861 + $0x80] sm:$0xff]
    %v879 = vld [vmem:[%s861 + $0x88] sm:$0xff]
    %v880 = vld [vmem:[%s861 + $0x90] sm:$0xff]
    %v881 = vld [vmem:[%s861 + $0x98] sm:$0xff]
    %v882 = vld [vmem:[%s861 + $0xa0] sm:$0xff]
    %v883 = vld [vmem:[%s861 + $0xa8] sm:$0xff]
    %v884 = vld [vmem:[%s861 + $0xb0] sm:$0xff]
    %v885 = vld [vmem:[%s861 + $0xb8] sm:$0xff]
    %v886 = vld [vmem:[%s861 + $0xc0] sm:$0xff]
    %v887 = vld [vmem:[%s861 + $0xc8] sm:$0xff]
    %v888 = vld [vmem:[%s861 + $0xd0] sm:$0xff]
    %v889 = vld [vmem:[%s861 + $0xd8] sm:$0xff]
    %v890 = vld [vmem:[%s861 + $0xe0] sm:$0xff]
    %v891 = vld [vmem:[%s861 + $0xe8] sm:$0xff]
    %v892 = vld [vmem:[%s861 + $0xf0] sm:$0xff]
    %v893 = vld [vmem:[%s861 + $0xf8] sm:$0xff]
    %v894 = vld [vmem:[%s861 + $0x100] sm:$0xff]
    %v895 = vld [vmem:[%s861 + $0x108] sm:$0xff]
    %v896 = vld [vmem:[%s861 + $0x110] sm:$0xff]
    %v897 = vld [vmem:[%s861 + $0x118] sm:$0xff]
    %v898 = vld [vmem:[%s861 + $0x120] sm:$0xff]
    %v899 = vld [vmem:[%s861 + $0x128] sm:$0xff]
    %v900 = vld [vmem:[%s861 + $0x130] sm:$0xff]
    %v901 = vld [vmem:[%s861 + $0x138] sm:$0xff]
    %v902 = vld [vmem:[%s861 + $0x140] sm:$0xff]
    %v903 = vld [vmem:[%s861 + $0x148] sm:$0xff]
    %v904 = vld [vmem:[%s861 + $0x150] sm:$0xff]
    %v905 = vld [vmem:[%s861 + $0x158] sm:$0xff]
    %v906 = vld [vmem:[%s861 + $0x160] sm:$0xff]
    %v907 = vld [vmem:[%s861 + $0x168] sm:$0xff]
    %v908 = vld [vmem:[%s861 + $0x170] sm:$0xff]
    %v909 = vld [vmem:[%s861 + $0x178] sm:$0xff]
    %s910 = scalar_lea.vmem [#allocation7], 3
    %v911 = vld [vmem:[%s910] sm:$0x7]
    %v913 = vlaneseq
    %v914 = vshrl.u32 %v913, 7
    %v915 = vsub.s32 0, %v914
    %v916 = vrot.slane %v860, %v915
    %v917 = vlaneseq
    %v918 = vshrl.u32 %v917, 7
    %v919 = vsub.s32 1, %v918
    %v920 = vrot.slane %v860, %v919
    %v921 = vlaneseq
    %v922 = vshrl.u32 %v921, 7
    %v923 = vsub.s32 2, %v922
    %v924 = vrot.slane %v860, %v923
    %928 = vmatprep.subr.mxu0 %v813
    %929 = vmatpush1.msra.mxu0 %v812
    %930 = vmatprep.subr.mxu0 %v816
    %931 = vmatpush1.msra.mxu0 %v815
    %932 = vmatprep.subr.mxu0 %v819
    %933 = vmatpush1.msra.mxu0 %v818
    %934 = vmatprep.subr.mxu0 %v822
    %935 = vmatpush1.msra.mxu0 %v821
    %936 = vmatprep.subr.mxu0 %v825
    %937 = vmatpush1.msra.mxu0 %v824
    %938 = vmatprep.subr.mxu0 %v828
    %939 = vmatpush1.msra.mxu0 %v827
    %940 = vmatprep.subr.mxu0 %v831
    %941 = vmatpush1.msra.mxu0 %v830
    %942 = vmatprep.subr.mxu0 %v834
    %943 = vmatpush1.msra.mxu0 %v833
    %944 = vmatprep.subr.mxu0 %v837
    %945 = vmatpush1.msra.mxu0 %v836
    %946 = vmatprep.subr.mxu0 %v840
    %947 = vmatpush1.msra.mxu0 %v839
    %948 = vmatprep.subr.mxu0 %v843
    %949 = vmatpush1.msra.mxu0 %v842
    %950 = vmatprep.subr.mxu0 %v846
    %951 = vmatpush1.msra.mxu0 %v845
    %952 = vmatprep.subr.mxu0 %v849
    %953 = vmatpush1.msra.mxu0 %v848
    %954 = vmatprep.subr.mxu0 %v852
    %955 = vmatpush1.msra.mxu0 %v851
    %956 = vmatprep.subr.mxu0 %v855
    %957 = vmatpush1.msra.mxu0 %v854
    %958 = vmatprep.subr.mxu0 %v858
    %959 = vmatpush1.msra.mxu0 %v857
    %960 = vmatprep.subr.mxu0 0.0
    %961 = vmatpush1.msra.mxu0 0.0
    %962 = vmatprep.subr.mxu0 0.0
    %963 = vmatpush1.msra.mxu0 0.0
    %964 = vmatprep.subr.mxu0 0.0
    %965 = vmatpush1.msra.mxu0 0.0
    %966 = vmatprep.subr.mxu0 0.0
    %967 = vmatpush1.msra.mxu0 0.0
    %968 = vmatprep.subr.mxu0 0.0
    %969 = vmatpush1.msra.mxu0 0.0
    %970 = vmatprep.subr.mxu0 0.0
    %971 = vmatpush1.msra.mxu0 0.0
    %972 = vmatprep.subr.mxu0 0.0
    %973 = vmatpush1.msra.mxu0 0.0
    %974 = vmatprep.subr.mxu0 0.0
    %975 = vmatpush1.msra.mxu0 0.0
    %976 = vmatprep.subr.mxu0 0.0
    %977 = vmatpush1.msra.mxu0 0.0
    %978 = vmatprep.subr.mxu0 0.0
    %979 = vmatpush1.msra.mxu0 0.0
    %980 = vmatprep.subr.mxu0 0.0
    %981 = vmatpush1.msra.mxu0 0.0
    %982 = vmatprep.subr.mxu0 0.0
    %983 = vmatpush1.msra.mxu0 0.0
    %984 = vmatprep.subr.mxu0 0.0
    %985 = vmatpush1.msra.mxu0 0.0
    %986 = vmatprep.subr.mxu0 0.0
    %987 = vmatpush1.msra.mxu0 0.0
    %988 = vmatprep.subr.mxu0 0.0
    %989 = vmatpush1.msra.mxu0 0.0
    %990 = vmatprep.subr.mxu0 0.0
    %991 = vmatpush1.msra.mxu0 0.0
    %992 = vmatprep.mubr.f32.mxu0 0.0
    %993 = vmatmul.mubr.f32.gmra.mrb[0].mxu0 0.0
    %v994 = vpop.f32.mrb[0].mxu0
    %v995 = vadd.f32 %v916, %v994
    %v996 = vpop.f32.mrb[0].mxu0
    %v997 = vadd.f32 %v920, %v996
    %998 = vdwg.mxu0
    %999 = vmatprep.subr.mxu0 0.0
    %1000 = vmatpush1.msra.mxu0 %v814
    %1001 = vmatprep.subr.mxu0 0.0
    %1002 = vmatpush1.msra.mxu0 %v817
    %1003 = vmatprep.subr.mxu0 0.0
    %1004 = vmatpush1.msra.mxu0 %v820
    %1005 = vmatprep.subr.mxu0 0.0
    %1006 = vmatpush1.msra.mxu0 %v823
    %1007 = vmatprep.subr.mxu0 0.0
    %1008 = vmatpush1.msra.mxu0 %v826
    %1009 = vmatprep.subr.mxu0 0.0
    %1010 = vmatpush1.msra.mxu0 %v829
    %1011 = vmatprep.subr.mxu0 0.0
    %1012 = vmatpush1.msra.mxu0 %v832
    %1013 = vmatprep.subr.mxu0 0.0
    %1014 = vmatpush1.msra.mxu0 %v835
    %1015 = vmatprep.subr.mxu0 0.0
    %1016 = vmatpush1.msra.mxu0 %v838
    %1017 = vmatprep.subr.mxu0 0.0
    %1018 = vmatpush1.msra.mxu0 %v841
    %1019 = vmatprep.subr.mxu0 0.0
    %1020 = vmatpush1.msra.mxu0 %v844
    %1021 = vmatprep.subr.mxu0 0.0
    %1022 = vmatpush1.msra.mxu0 %v847
    %1023 = vmatprep.subr.mxu0 0.0
    %1024 = vmatpush1.msra.mxu0 %v850
    %1025 = vmatprep.subr.mxu0 0.0
    %1026 = vmatpush1.msra.mxu0 %v853
    %1027 = vmatprep.subr.mxu0 0.0
    %1028 = vmatpush1.msra.mxu0 %v856
    %1029 = vmatprep.subr.mxu0 0.0
    %1030 = vmatpush1.msra.mxu0 %v859
    %1031 = vmatprep.subr.mxu0 0.0
    %1032 = vmatpush1.msra.mxu0 0.0
    %1033 = vmatprep.subr.mxu0 0.0
    %1034 = vmatpush1.msra.mxu0 0.0
    %1035 = vmatprep.subr.mxu0 0.0
    %1036 = vmatpush1.msra.mxu0 0.0
    %1037 = vmatprep.subr.mxu0 0.0
    %1038 = vmatpush1.msra.mxu0 0.0
    %1039 = vmatprep.subr.mxu0 0.0
    %1040 = vmatpush1.msra.mxu0 0.0
    %1041 = vmatprep.subr.mxu0 0.0
    %1042 = vmatpush1.msra.mxu0 0.0
    %1043 = vmatprep.subr.mxu0 0.0
    %1044 = vmatpush1.msra.mxu0 0.0
    %1045 = vmatprep.subr.mxu0 0.0
    %1046 = vmatpush1.msra.mxu0 0.0
    %1047 = vmatprep.subr.mxu0 0.0
    %1048 = vmatpush1.msra.mxu0 0.0
    %1049 = vmatprep.subr.mxu0 0.0
    %1050 = vmatpush1.msra.mxu0 0.0
    %1051 = vmatprep.subr.mxu0 0.0
    %1052 = vmatpush1.msra.mxu0 0.0
    %1053 = vmatprep.subr.mxu0 0.0
    %1054 = vmatpush1.msra.mxu0 0.0
    %1055 = vmatprep.subr.mxu0 0.0
    %1056 = vmatpush1.msra.mxu0 0.0
    %1057 = vmatprep.subr.mxu0 0.0
    %1058 = vmatpush1.msra.mxu0 0.0
    %1059 = vmatprep.subr.mxu0 0.0
    %1060 = vmatpush1.msra.mxu0 0.0
    %1061 = vmatprep.subr.mxu0 0.0
    %1062 = vmatpush1.msra.mxu0 0.0
    %1063 = vmatprep.mubr.f32.mxu0 0.0
    %1064 = vmatmul.mubr.f32.gmra.mrb[0].mxu0 0.0
    %v1065 = vpop.f32.mrb[0].mxu0
    %v1066 = vadd.f32 %v924, %v1065
    %v1067 = vpop.f32.mrb[0].mxu0
    %1068 = vdwg.mxu0
    %v1069 = vadd.f32 %v236, %v995
    %v1070 = vadd.f32 %v238, %v997
    %v1071 = vxor.u32 %v1069, 2147483648
    %v1072 = vxor.u32 %v1070, 2147483648
    %v1073 = vmul.f32 %v1071, 1.442695
    %v1074 = vpow.pop %v1073
    %v1075 = vmul.f32 %v1072, 1.442695
    %v1076 = vpow.pop %v1075
    %v1077 = vadd.f32 %v1074, 1.0
    %v1078 = vadd.f32 %v1076, 1.0
    %v1079 = vrcp.pop %v1077
    %v1080 = vmul.f32 1.0, %v1079
    %v1081 = vrcp.pop %v1078
    %v1082 = vmul.f32 1.0, %v1081
    %v1083 = vmul.f32 %v1080, %v1066
    %v1084 = vadd.f32 %v397, %v1083
    %v1085 = vtanh.pop %v1084
    %v1086 = vsub.f32 1.0, %v1082
    %v1087 = vmul.f32 %v1086, %v1085
    %v1088 = vmul.f32 %v1082, 0.0
    %v1089 = vadd.f32 %v1087, %v1088
    %v1091 = vlaneseq
    %v1092 = vshrl.u32 %v1091, 7
    %v1093 = vsub.s32 0, %v1092
    %v1094 = vrot.slane %v911, %v1093
    %v1095 = vlaneseq
    %v1096 = vshrl.u32 %v1095, 7
    %v1097 = vsub.s32 1, %v1096
    %v1098 = vrot.slane %v911, %v1097
    %v1099 = vlaneseq
    %v1100 = vshrl.u32 %v1099, 7
    %v1101 = vsub.s32 2, %v1100
    %v1102 = vrot.slane %v911, %v1101
    %1106 = vmatprep.subr.mxu0 %v863
    %1107 = vmatpush1.msra.mxu0 %v862
    %1108 = vmatprep.subr.mxu0 %v866
    %1109 = vmatpush1.msra.mxu0 %v865
    %1110 = vmatprep.subr.mxu0 %v869
    %1111 = vmatpush1.msra.mxu0 %v868
    %1112 = vmatprep.subr.mxu0 %v872
    %1113 = vmatpush1.msra.mxu0 %v871
    %1114 = vmatprep.subr.mxu0 %v875
    %1115 = vmatpush1.msra.mxu0 %v874
    %1116 = vmatprep.subr.mxu0 %v878
    %1117 = vmatpush1.msra.mxu0 %v877
    %1118 = vmatprep.subr.mxu0 %v881
    %1119 = vmatpush1.msra.mxu0 %v880
    %1120 = vmatprep.subr.mxu0 %v884
    %1121 = vmatpush1.msra.mxu0 %v883
    %1122 = vmatprep.subr.mxu0 %v887
    %1123 = vmatpush1.msra.mxu0 %v886
    %1124 = vmatprep.subr.mxu0 %v890
    %1125 = vmatpush1.msra.mxu0 %v889
    %1126 = vmatprep.subr.mxu0 %v893
    %1127 = vmatpush1.msra.mxu0 %v892
    %1128 = vmatprep.subr.mxu0 %v896
    %1129 = vmatpush1.msra.mxu0 %v895
    %1130 = vmatprep.subr.mxu0 %v899
    %1131 = vmatpush1.msra.mxu0 %v898
    %1132 = vmatprep.subr.mxu0 %v902
    %1133 = vmatpush1.msra.mxu0 %v901
    %1134 = vmatprep.subr.mxu0 %v905
    %1135 = vmatpush1.msra.mxu0 %v904
    %1136 = vmatprep.subr.mxu0 %v908
    %1137 = vmatpush1.msra.mxu0 %v907
    %1138 = vmatprep.subr.mxu0 0.0
    %1139 = vmatpush1.msra.mxu0 0.0
    %1140 = vmatprep.subr.mxu0 0.0
    %1141 = vmatpush1.msra.mxu0 0.0
    %1142 = vmatprep.subr.mxu0 0.0
    %1143 = vmatpush1.msra.mxu0 0.0
    %1144 = vmatprep.subr.mxu0 0.0
    %1145 = vmatpush1.msra.mxu0 0.0
    %1146 = vmatprep.subr.mxu0 0.0
    %1147 = vmatpush1.msra.mxu0 0.0
    %1148 = vmatprep.subr.mxu0 0.0
    %1149 = vmatpush1.msra.mxu0 0.0
    %1150 = vmatprep.subr.mxu0 0.0
    %1151 = vmatpush1.msra.mxu0 0.0
    %1152 = vmatprep.subr.mxu0 0.0
    %1153 = vmatpush1.msra.mxu0 0.0
    %1154 = vmatprep.subr.mxu0 0.0
    %1155 = vmatpush1.msra.mxu0 0.0
    %1156 = vmatprep.subr.mxu0 0.0
    %1157 = vmatpush1.msra.mxu0 0.0
    %1158 = vmatprep.subr.mxu0 0.0
    %1159 = vmatpush1.msra.mxu0 0.0
    %1160 = vmatprep.subr.mxu0 0.0
    %1161 = vmatpush1.msra.mxu0 0.0
    %1162 = vmatprep.subr.mxu0 0.0
    %1163 = vmatpush1.msra.mxu0 0.0
    %1164 = vmatprep.subr.mxu0 0.0
    %1165 = vmatpush1.msra.mxu0 0.0
    %1166 = vmatprep.subr.mxu0 0.0
    %1167 = vmatpush1.msra.mxu0 0.0
    %1168 = vmatprep.subr.mxu0 0.0
    %1169 = vmatpush1.msra.mxu0 0.0
    %1170 = vmatprep.mubr.f32.mxu0 0.0
    %1171 = vmatmul.mubr.f32.gmra.mrb[0].mxu0 0.0
    %v1172 = vpop.f32.mrb[0].mxu0
    %v1173 = vadd.f32 %v1094, %v1172
    %v1174 = vpop.f32.mrb[0].mxu0
    %v1175 = vadd.f32 %v1098, %v1174
    %1176 = vdwg.mxu0
    %1177 = vmatprep.subr.mxu0 0.0
    %1178 = vmatpush1.msra.mxu0 %v864
    %1179 = vmatprep.subr.mxu0 0.0
    %1180 = vmatpush1.msra.mxu0 %v867
    %1181 = vmatprep.subr.mxu0 0.0
    %1182 = vmatpush1.msra.mxu0 %v870
    %1183 = vmatprep.subr.mxu0 0.0
    %1184 = vmatpush1.msra.mxu0 %v873
    %1185 = vmatprep.subr.mxu0 0.0
    %1186 = vmatpush1.msra.mxu0 %v876
    %1187 = vmatprep.subr.mxu0 0.0
    %1188 = vmatpush1.msra.mxu0 %v879
    %1189 = vmatprep.subr.mxu0 0.0
    %1190 = vmatpush1.msra.mxu0 %v882
    %1191 = vmatprep.subr.mxu0 0.0
    %1192 = vmatpush1.msra.mxu0 %v885
    %1193 = vmatprep.subr.mxu0 0.0
    %1194 = vmatpush1.msra.mxu0 %v888
    %1195 = vmatprep.subr.mxu0 0.0
    %1196 = vmatpush1.msra.mxu0 %v891
    %1197 = vmatprep.subr.mxu0 0.0
    %1198 = vmatpush1.msra.mxu0 %v894
    %1199 = vmatprep.subr.mxu0 0.0
    %1200 = vmatpush1.msra.mxu0 %v897
    %1201 = vmatprep.subr.mxu0 0.0
    %1202 = vmatpush1.msra.mxu0 %v900
    %1203 = vmatprep.subr.mxu0 0.0
    %1204 = vmatpush1.msra.mxu0 %v903
    %1205 = vmatprep.subr.mxu0 0.0
    %1206 = vmatpush1.msra.mxu0 %v906
    %1207 = vmatprep.subr.mxu0 0.0
    %1208 = vmatpush1.msra.mxu0 %v909
    %1209 = vmatprep.subr.mxu0 0.0
    %1210 = vmatpush1.msra.mxu0 0.0
    %1211 = vmatprep.subr.mxu0 0.0
    %1212 = vmatpush1.msra.mxu0 0.0
    %1213 = vmatprep.subr.mxu0 0.0
    %1214 = vmatpush1.msra.mxu0 0.0
    %1215 = vmatprep.subr.mxu0 0.0
    %1216 = vmatpush1.msra.mxu0 0.0
    %1217 = vmatprep.subr.mxu0 0.0
    %1218 = vmatpush1.msra.mxu0 0.0
    %1219 = vmatprep.subr.mxu0 0.0
    %1220 = vmatpush1.msra.mxu0 0.0
    %1221 = vmatprep.subr.mxu0 0.0
    %1222 = vmatpush1.msra.mxu0 0.0
    %1223 = vmatprep.subr.mxu0 0.0
    %1224 = vmatpush1.msra.mxu0 0.0
    %1225 = vmatprep.subr.mxu0 0.0
    %1226 = vmatpush1.msra.mxu0 0.0
    %1227 = vmatprep.subr.mxu0 0.0
    %1228 = vmatpush1.msra.mxu0 0.0
    %1229 = vmatprep.subr.mxu0 0.0
    %1230 = vmatpush1.msra.mxu0 0.0
    %1231 = vmatprep.subr.mxu0 0.0
    %1232 = vmatpush1.msra.mxu0 0.0
    %1233 = vmatprep.subr.mxu0 0.0
    %1234 = vmatpush1.msra.mxu0 0.0
    %1235 = vmatprep.subr.mxu0 0.0
    %1236 = vmatpush1.msra.mxu0 0.0
    %1237 = vmatprep.subr.mxu0 0.0
    %1238 = vmatpush1.msra.mxu0 0.0
    %1239 = vmatprep.subr.mxu0 0.0
    %1240 = vmatpush1.msra.mxu0 0.0
    %1241 = vmatprep.mubr.f32.mxu0 0.0
    %1242 = vmatmul.mubr.f32.gmra.mrb[0].mxu0 0.0
    %v1243 = vpop.f32.mrb[0].mxu0
    %v1244 = vadd.f32 %v1102, %v1243
    %v1245 = vpop.f32.mrb[0].mxu0
    %1246 = vdwg.mxu0
    %v1247 = vadd.f32 %v663, %v1173
    %v1248 = vadd.f32 %v665, %v1175
    %v1249 = vxor.u32 %v1247, 2147483648
    %v1250 = vxor.u32 %v1248, 2147483648
    %v1251 = vmul.f32 %v1249, 1.442695
    %v1252 = vpow.pop %v1251
    %v1253 = vmul.f32 %v1250, 1.442695
    %v1254 = vpow.pop %v1253
    %v1255 = vadd.f32 %v1252, 1.0
    %v1256 = vadd.f32 %v1254, 1.0
    %v1257 = vrcp.pop %v1255
    %v1258 = vmul.f32 1.0, %v1257
    %v1259 = vrcp.pop %v1256
    %v1260 = vmul.f32 1.0, %v1259
    %v1261 = vmul.f32 %v1258, %v1244
    %v1262 = vadd.f32 %v809, %v1261
    %v1263 = vtanh.pop %v1262
    %v1264 = vsub.f32 1.0, %v1260
    %v1265 = vmul.f32 %v1264, %v1263
    %v1266 = vmul.f32 %v1260, 0.0
    %v1267 = vadd.f32 %v1265, %v1266
    %1268 = vst [vmem:[%s5] sm:$0xff] %v1089
    %s1269 = scalar_lea.vmem %s5, 240
    %1270 = vst [vmem:[%s1269 + $0x8] sm:$0xff] %v1267
    %1271 = vmatprep.subr.mxu0 %v813
    %1272 = vmatpush1.msra.mxu0 %v812
    %1273 = vmatprep.subr.mxu0 %v816
    %1274 = vmatpush1.msra.mxu0 %v815
    %1275 = vmatprep.subr.mxu0 %v819
    %1276 = vmatpush1.msra.mxu0 %v818
    %1277 = vmatprep.subr.mxu0 %v822
    %1278 = vmatpush1.msra.mxu0 %v821
    %1279 = vmatprep.subr.mxu0 %v825
    %1280 = vmatpush1.msra.mxu0 %v824
    %1281 = vmatprep.subr.mxu0 %v828
    %1282 = vmatpush1.msra.mxu0 %v827
    %1283 = vmatprep.subr.mxu0 %v831
    %1284 = vmatpush1.msra.mxu0 %v830
    %1285 = vmatprep.subr.mxu0 %v834
    %1286 = vmatpush1.msra.mxu0 %v833
    %1287 = vmatprep.subr.mxu0 %v837
    %1288 = vmatpush1.msra.mxu0 %v836
    %1289 = vmatprep.subr.mxu0 %v840
    %1290 = vmatpush1.msra.mxu0 %v839
    %1291 = vmatprep.subr.mxu0 %v843
    %1292 = vmatpush1.msra.mxu0 %v842
    %1293 = vmatprep.subr.mxu0 %v846
    %1294 = vmatpush1.msra.mxu0 %v845
    %1295 = vmatprep.subr.mxu0 %v849
    %1296 = vmatpush1.msra.mxu0 %v848
    %1297 = vmatprep.subr.mxu0 %v852
    %1298 = vmatpush1.msra.mxu0 %v851
    %1299 = vmatprep.subr.mxu0 %v855
    %1300 = vmatpush1.msra.mxu0 %v854
    %1301 = vmatprep.subr.mxu0 %v858
    %1302 = vmatpush1.msra.mxu0 %v857
    %1303 = vmatprep.subr.mxu0 0.0
    %1304 = vmatpush1.msra.mxu0 0.0
    %1305 = vmatprep.subr.mxu0 0.0
    %1306 = vmatpush1.msra.mxu0 0.0
    %1307 = vmatprep.subr.mxu0 0.0
    %1308 = vmatpush1.msra.mxu0 0.0
    %1309 = vmatprep.subr.mxu0 0.0
    %1310 = vmatpush1.msra.mxu0 0.0
    %1311 = vmatprep.subr.mxu0 0.0
    %1312 = vmatpush1.msra.mxu0 0.0
    %1313 = vmatprep.subr.mxu0 0.0
    %1314 = vmatpush1.msra.mxu0 0.0
    %1315 = vmatprep.subr.mxu0 0.0
    %1316 = vmatpush1.msra.mxu0 0.0
    %1317 = vmatprep.subr.mxu0 0.0
    %1318 = vmatpush1.msra.mxu0 0.0
    %1319 = vmatprep.subr.mxu0 0.0
    %1320 = vmatpush1.msra.mxu0 0.0
    %1321 = vmatprep.subr.mxu0 0.0
    %1322 = vmatpush1.msra.mxu0 0.0
    %1323 = vmatprep.subr.mxu0 0.0
    %1324 = vmatpush1.msra.mxu0 0.0
    %1325 = vmatprep.subr.mxu0 0.0
    %1326 = vmatpush1.msra.mxu0 0.0
    %1327 = vmatprep.subr.mxu0 0.0
    %1328 = vmatpush1.msra.mxu0 0.0
    %1329 = vmatprep.subr.mxu0 0.0
    %1330 = vmatpush1.msra.mxu0 0.0
    %1331 = vmatprep.subr.mxu0 0.0
    %1332 = vmatpush1.msra.mxu0 0.0
    %1333 = vmatprep.subr.mxu0 0.0
    %1334 = vmatpush1.msra.mxu0 0.0
    %1335 = vmatprep.mubr.f32.mxu0 0.0
    %1336 = vmatmul.mubr.f32.gmra.mrb[0].mxu0 %v1089
    %v1337 = vpop.f32.mrb[0].mxu0
    %v1338 = vadd.f32 %v916, %v1337
    %v1339 = vpop.f32.mrb[0].mxu0
    %v1340 = vadd.f32 %v920, %v1339
    %1341 = vdwg.mxu0
    %1342 = vmatprep.subr.mxu0 0.0
    %1343 = vmatpush1.msra.mxu0 %v814
    %1344 = vmatprep.subr.mxu0 0.0
    %1345 = vmatpush1.msra.mxu0 %v817
    %1346 = vmatprep.subr.mxu0 0.0
    %1347 = vmatpush1.msra.mxu0 %v820
    %1348 = vmatprep.subr.mxu0 0.0
    %1349 = vmatpush1.msra.mxu0 %v823
    %1350 = vmatprep.subr.mxu0 0.0
    %1351 = vmatpush1.msra.mxu0 %v826
    %1352 = vmatprep.subr.mxu0 0.0
    %1353 = vmatpush1.msra.mxu0 %v829
    %1354 = vmatprep.subr.mxu0 0.0
    %1355 = vmatpush1.msra.mxu0 %v832
    %1356 = vmatprep.subr.mxu0 0.0
    %1357 = vmatpush1.msra.mxu0 %v835
    %1358 = vmatprep.subr.mxu0 0.0
    %1359 = vmatpush1.msra.mxu0 %v838
    %1360 = vmatprep.subr.mxu0 0.0
    %1361 = vmatpush1.msra.mxu0 %v841
    %1362 = vmatprep.subr.mxu0 0.0
    %1363 = vmatpush1.msra.mxu0 %v844
    %1364 = vmatprep.subr.mxu0 0.0
    %1365 = vmatpush1.msra.mxu0 %v847
    %1366 = vmatprep.subr.mxu0 0.0
    %1367 = vmatpush1.msra.mxu0 %v850
    %1368 = vmatprep.subr.mxu0 0.0
    %1369 = vmatpush1.msra.mxu0 %v853
    %1370 = vmatprep.subr.mxu0 0.0
    %1371 = vmatpush1.msra.mxu0 %v856
    %1372 = vmatprep.subr.mxu0 0.0
    %1373 = vmatpush1.msra.mxu0 %v859
    %1374 = vmatprep.subr.mxu0 0.0
    %1375 = vmatpush1.msra.mxu0 0.0
    %1376 = vmatprep.subr.mxu0 0.0
    %1377 = vmatpush1.msra.mxu0 0.0
    %1378 = vmatprep.subr.mxu0 0.0
    %1379 = vmatpush1.msra.mxu0 0.0
    %1380 = vmatprep.subr.mxu0 0.0
    %1381 = vmatpush1.msra.mxu0 0.0
    %1382 = vmatprep.subr.mxu0 0.0
    %1383 = vmatpush1.msra.mxu0 0.0
    %1384 = vmatprep.subr.mxu0 0.0
    %1385 = vmatpush1.msra.mxu0 0.0
    %1386 = vmatprep.subr.mxu0 0.0
    %1387 = vmatpush1.msra.mxu0 0.0
    %1388 = vmatprep.subr.mxu0 0.0
    %1389 = vmatpush1.msra.mxu0 0.0
    %1390 = vmatprep.subr.mxu0 0.0
    %1391 = vmatpush1.msra.mxu0 0.0
    %1392 = vmatprep.subr.mxu0 0.0
    %1393 = vmatpush1.msra.mxu0 0.0
    %1394 = vmatprep.subr.mxu0 0.0
    %1395 = vmatpush1.msra.mxu0 0.0
    %1396 = vmatprep.subr.mxu0 0.0
    %1397 = vmatpush1.msra.mxu0 0.0
    %1398 = vmatprep.subr.mxu0 0.0
    %1399 = vmatpush1.msra.mxu0 0.0
    %1400 = vmatprep.subr.mxu0 0.0
    %1401 = vmatpush1.msra.mxu0 0.0
    %1402 = vmatprep.subr.mxu0 0.0
    %1403 = vmatpush1.msra.mxu0 0.0
    %1404 = vmatprep.subr.mxu0 0.0
    %1405 = vmatpush1.msra.mxu0 0.0
    %1406 = vmatprep.mubr.f32.mxu0 0.0
    %1407 = vmatmul.mubr.f32.gmra.mrb[0].mxu0 %v1089
    %v1408 = vpop.f32.mrb[0].mxu0
    %v1409 = vadd.f32 %v924, %v1408
    %v1410 = vpop.f32.mrb[0].mxu0
    %1411 = vdwg.mxu0
    %v1412 = vadd.f32 %v242, %v1338
    %v1413 = vadd.f32 %v244, %v1340
    %v1414 = vxor.u32 %v1412, 2147483648
    %v1415 = vxor.u32 %v1413, 2147483648
    %v1416 = vmul.f32 %v1414, 1.442695
    %v1417 = vpow.pop %v1416
    %v1418 = vmul.f32 %v1415, 1.442695
    %v1419 = vpow.pop %v1418
    %v1420 = vadd.f32 %v1417, 1.0
    %v1421 = vadd.f32 %v1419, 1.0
    %v1422 = vrcp.pop %v1420
    %v1423 = vmul.f32 1.0, %v1422
    %v1424 = vrcp.pop %v1421
    %v1425 = vmul.f32 1.0, %v1424
    %v1426 = vmul.f32 %v1423, %v1409
    %v1427 = vadd.f32 %v402, %v1426
    %v1428 = vtanh.pop %v1427
    %v1429 = vsub.f32 1.0, %v1425
    %v1430 = vmul.f32 %v1429, %v1428
    %v1431 = vmul.f32 %v1425, %v1089
    %v1432 = vadd.f32 %v1430, %v1431
    %1433 = vmatprep.subr.mxu0 %v863
    %1434 = vmatpush1.msra.mxu0 %v862
    %1435 = vmatprep.subr.mxu0 %v866
    %1436 = vmatpush1.msra.mxu0 %v865
    %1437 = vmatprep.subr.mxu0 %v869
    %1438 = vmatpush1.msra.mxu0 %v868
    %1439 = vmatprep.subr.mxu0 %v872
    %1440 = vmatpush1.msra.mxu0 %v871
    %1441 = vmatprep.subr.mxu0 %v875
    %1442 = vmatpush1.msra.mxu0 %v874
    %1443 = vmatprep.subr.mxu0 %v878
    %1444 = vmatpush1.msra.mxu0 %v877
    %1445 = vmatprep.subr.mxu0 %v881
    %1446 = vmatpush1.msra.mxu0 %v880
    %1447 = vmatprep.subr.mxu0 %v884
    %1448 = vmatpush1.msra.mxu0 %v883
    %1449 = vmatprep.subr.mxu0 %v887
    %1450 = vmatpush1.msra.mxu0 %v886
    %1451 = vmatprep.subr.mxu0 %v890
    %1452 = vmatpush1.msra.mxu0 %v889
    %1453 = vmatprep.subr.mxu0 %v893
    %1454 = vmatpush1.msra.mxu0 %v892
    %1455 = vmatprep.subr.mxu0 %v896
    %1456 = vmatpush1.msra.mxu0 %v895
    %1457 = vmatprep.subr.mxu0 %v899
    %1458 = vmatpush1.msra.mxu0 %v898
    %1459 = vmatprep.subr.mxu0 %v902
    %1460 = vmatpush1.msra.mxu0 %v901
    %1461 = vmatprep.subr.mxu0 %v905
    %1462 = vmatpush1.msra.mxu0 %v904
    %1463 = vmatprep.subr.mxu0 %v908
    %1464 = vmatpush1.msra.mxu0 %v907
    %1465 = vmatprep.subr.mxu0 0.0
    %1466 = vmatpush1.msra.mxu0 0.0
    %1467 = vmatprep.subr.mxu0 0.0
    %1468 = vmatpush1.msra.mxu0 0.0
    %1469 = vmatprep.subr.mxu0 0.0
    %1470 = vmatpush1.msra.mxu0 0.0
    %1471 = vmatprep.subr.mxu0 0.0
    %1472 = vmatpush1.msra.mxu0 0.0
    %1473 = vmatprep.subr.mxu0 0.0
    %1474 = vmatpush1.msra.mxu0 0.0
    %1475 = vmatprep.subr.mxu0 0.0
    %1476 = vmatpush1.msra.mxu0 0.0
    %1477 = vmatprep.subr.mxu0 0.0
    %1478 = vmatpush1.msra.mxu0 0.0
    %1479 = vmatprep.subr.mxu0 0.0
    %1480 = vmatpush1.msra.mxu0 0.0
    %1481 = vmatprep.subr.mxu0 0.0
    %1482 = vmatpush1.msra.mxu0 0.0
    %1483 = vmatprep.subr.mxu0 0.0
    %1484 = vmatpush1.msra.mxu0 0.0
    %1485 = vmatprep.subr.mxu0 0.0
    %1486 = vmatpush1.msra.mxu0 0.0
    %1487 = vmatprep.subr.mxu0 0.0
    %1488 = vmatpush1.msra.mxu0 0.0
    %1489 = vmatprep.subr.mxu0 0.0
    %1490 = vmatpush1.msra.mxu0 0.0
    %1491 = vmatprep.subr.mxu0 0.0
    %1492 = vmatpush1.msra.mxu0 0.0
    %1493 = vmatprep.subr.mxu0 0.0
    %1494 = vmatpush1.msra.mxu0 0.0
    %1495 = vmatprep.subr.mxu0 0.0
    %1496 = vmatpush1.msra.mxu0 0.0
    %1497 = vmatprep.mubr.f32.mxu0 0.0
    %1498 = vmatmul.mubr.f32.gmra.mrb[0].mxu0 %v1267
    %v1499 = vpop.f32.mrb[0].mxu0
    %v1500 = vadd.f32 %v1094, %v1499
    %v1501 = vpop.f32.mrb[0].mxu0
    %v1502 = vadd.f32 %v1098, %v1501
    %1503 = vdwg.mxu0
    %1504 = vmatprep.subr.mxu0 0.0
    %1505 = vmatpush1.msra.mxu0 %v864
    %1506 = vmatprep.subr.mxu0 0.0
    %1507 = vmatpush1.msra.mxu0 %v867
    %1508 = vmatprep.subr.mxu0 0.0
    %1509 = vmatpush1.msra.mxu0 %v870
    %1510 = vmatprep.subr.mxu0 0.0
    %1511 = vmatpush1.msra.mxu0 %v873
    %1512 = vmatprep.subr.mxu0 0.0
    %1513 = vmatpush1.msra.mxu0 %v876
    %1514 = vmatprep.subr.mxu0 0.0
    %1515 = vmatpush1.msra.mxu0 %v879
    %1516 = vmatprep.subr.mxu0 0.0
    %1517 = vmatpush1.msra.mxu0 %v882
    %1518 = vmatprep.subr.mxu0 0.0
    %1519 = vmatpush1.msra.mxu0 %v885
    %1520 = vmatprep.subr.mxu0 0.0
    %1521 = vmatpush1.msra.mxu0 %v888
    %1522 = vmatprep.subr.mxu0 0.0
    %1523 = vmatpush1.msra.mxu0 %v891
    %1524 = vmatprep.subr.mxu0 0.0
    %1525 = vmatpush1.msra.mxu0 %v894
    %1526 = vmatprep.subr.mxu0 0.0
    %1527 = vmatpush1.msra.mxu0 %v897
    %1528 = vmatprep.subr.mxu0 0.0
    %1529 = vmatpush1.msra.mxu0 %v900
    %1530 = vmatprep.subr.mxu0 0.0
    %1531 = vmatpush1.msra.mxu0 %v903
    %1532 = vmatprep.subr.mxu0 0.0
    %1533 = vmatpush1.msra.mxu0 %v906
    %1534 = vmatprep.subr.mxu0 0.0
    %1535 = vmatpush1.msra.mxu0 %v909
    %1536 = vmatprep.subr.mxu0 0.0
    %1537 = vmatpush1.msra.mxu0 0.0
    %1538 = vmatprep.subr.mxu0 0.0
    %1539 = vmatpush1.msra.mxu0 0.0
    %1540 = vmatprep.subr.mxu0 0.0
    %1541 = vmatpush1.msra.mxu0 0.0
    %1542 = vmatprep.subr.mxu0 0.0
    %1543 = vmatpush1.msra.mxu0 0.0
    %1544 = vmatprep.subr.mxu0 0.0
    %1545 = vmatpush1.msra.mxu0 0.0
    %1546 = vmatprep.subr.mxu0 0.0
    %1547 = vmatpush1.msra.mxu0 0.0
    %1548 = vmatprep.subr.mxu0 0.0
    %1549 = vmatpush1.msra.mxu0 0.0
    %1550 = vmatprep.subr.mxu0 0.0
    %1551 = vmatpush1.msra.mxu0 0.0
    %1552 = vmatprep.subr.mxu0 0.0
    %1553 = vmatpush1.msra.mxu0 0.0
    %1554 = vmatprep.subr.mxu0 0.0
    %1555 = vmatpush1.msra.mxu0 0.0
    %1556 = vmatprep.subr.mxu0 0.0
    %1557 = vmatpush1.msra.mxu0 0.0
    %1558 = vmatprep.subr.mxu0 0.0
    %1559 = vmatpush1.msra.mxu0 0.0
    %1560 = vmatprep.subr.mxu0 0.0
    %1561 = vmatpush1.msra.mxu0 0.0
    %1562 = vmatprep.subr.mxu0 0.0
    %1563 = vmatpush1.msra.mxu0 0.0
    %1564 = vmatprep.subr.mxu0 0.0
    %1565 = vmatpush1.msra.mxu0 0.0
    %1566 = vmatprep.subr.mxu0 0.0
    %1567 = vmatpush1.msra.mxu0 0.0
    %1568 = vmatprep.mubr.f32.mxu0 0.0
    %1569 = vmatmul.mubr.f32.gmra.mrb[0].mxu0 %v1267
    %v1570 = vpop.f32.mrb[0].mxu0
    %v1571 = vadd.f32 %v1102, %v1570
    %v1572 = vpop.f32.mrb[0].mxu0
    %1573 = vdwg.mxu0
    %v1574 = vadd.f32 %v657, %v1500
    %v1575 = vadd.f32 %v659, %v1502
    %v1576 = vxor.u32 %v1574, 2147483648
    %v1577 = vxor.u32 %v1575, 2147483648
    %v1578 = vmul.f32 %v1576, 1.442695
    %v1579 = vpow.pop %v1578
    %v1580 = vmul.f32 %v1577, 1.442695
    %v1581 = vpow.pop %v1580
    %v1582 = vadd.f32 %v1579, 1.0
    %v1583 = vadd.f32 %v1581, 1.0
    %v1584 = vrcp.pop %v1582
    %v1585 = vmul.f32 1.0, %v1584
    %v1586 = vrcp.pop %v1583
    %v1587 = vmul.f32 1.0, %v1586
    %v1588 = vmul.f32 %v1585, %v1571
    %v1589 = vadd.f32 %v804, %v1588
    %v1590 = vtanh.pop %v1589
    %v1591 = vsub.f32 1.0, %v1587
    %v1592 = vmul.f32 %v1591, %v1590
    %v1593 = vmul.f32 %v1587, %v1267
    %v1594 = vadd.f32 %v1592, %v1593
    %s1595 = scalar_lea.vmem %s5, 16
    %1596 = vst [vmem:[%s1595] sm:$0xff] %v1432
    %s1597 = scalar_lea.vmem %s5, 224
    %1598 = vst [vmem:[%s1597 + $0x8] sm:$0xff] %v1594
    %1599 = vmatprep.subr.mxu0 %v813
    %1600 = vmatpush1.msra.mxu0 %v812
    %1601 = vmatprep.subr.mxu0 %v816
    %1602 = vmatpush1.msra.mxu0 %v815
    %1603 = vmatprep.subr.mxu0 %v819
    %1604 = vmatpush1.msra.mxu0 %v818
    %1605 = vmatprep.subr.mxu0 %v822
    %1606 = vmatpush1.msra.mxu0 %v821
    %1607 = vmatprep.subr.mxu0 %v825
    %1608 = vmatpush1.msra.mxu0 %v824
    %1609 = vmatprep.subr.mxu0 %v828
    %1610 = vmatpush1.msra.mxu0 %v827
    %1611 = vmatprep.subr.mxu0 %v831
    %1612 = vmatpush1.msra.mxu0 %v830
    %1613 = vmatprep.subr.mxu0 %v834
    %1614 = vmatpush1.msra.mxu0 %v833
    %1615 = vmatprep.subr.mxu0 %v837
    %1616 = vmatpush1.msra.mxu0 %v836
    %1617 = vmatprep.subr.mxu0 %v840
    %1618 = vmatpush1.msra.mxu0 %v839
    %1619 = vmatprep.subr.mxu0 %v843
    %1620 = vmatpush1.msra.mxu0 %v842
    %1621 = vmatprep.subr.mxu0 %v846
    %1622 = vmatpush1.msra.mxu0 %v845
    %1623 = vmatprep.subr.mxu0 %v849
    %1624 = vmatpush1.msra.mxu0 %v848
    %1625 = vmatprep.subr.mxu0 %v852
    %1626 = vmatpush1.msra.mxu0 %v851
    %1627 = vmatprep.subr.mxu0 %v855
    %1628 = vmatpush1.msra.mxu0 %v854
    %1629 = vmatprep.subr.mxu0 %v858
    %1630 = vmatpush1.msra.mxu0 %v857
    %1631 = vmatprep.subr.mxu0 0.0
    %1632 = vmatpush1.msra.mxu0 0.0
    %1633 = vmatprep.subr.mxu0 0.0
    %1634 = vmatpush1.msra.mxu0 0.0
    %1635 = vmatprep.subr.mxu0 0.0
    %1636 = vmatpush1.msra.mxu0 0.0
    %1637 = vmatprep.subr.mxu0 0.0
    %1638 = vmatpush1.msra.mxu0 0.0
    %1639 = vmatprep.subr.mxu0 0.0
    %1640 = vmatpush1.msra.mxu0 0.0
    %1641 = vmatprep.subr.mxu0 0.0
    %1642 = vmatpush1.msra.mxu0 0.0
    %1643 = vmatprep.subr.mxu0 0.0
    %1644 = vmatpush1.msra.mxu0 0.0
    %1645 = vmatprep.subr.mxu0 0.0
    %1646 = vmatpush1.msra.mxu0 0.0
    %1647 = vmatprep.subr.mxu0 0.0
    %1648 = vmatpush1.msra.mxu0 0.0
    %1649 = vmatprep.subr.mxu0 0.0
    %1650 = vmatpush1.msra.mxu0 0.0
    %1651 = vmatprep.subr.mxu0 0.0
    %1652 = vmatpush1.msra.mxu0 0.0
    %1653 = vmatprep.subr.mxu0 0.0
    %1654 = vmatpush1.msra.mxu0 0.0
    %1655 = vmatprep.subr.mxu0 0.0
    %1656 = vmatpush1.msra.mxu0 0.0
    %1657 = vmatprep.subr.mxu0 0.0
    %1658 = vmatpush1.msra.mxu0 0.0
    %1659 = vmatprep.subr.mxu0 0.0
    %1660 = vmatpush1.msra.mxu0 0.0
    %1661 = vmatprep.subr.mxu0 0.0
    %1662 = vmatpush1.msra.mxu0 0.0
    %1663 = vmatprep.mubr.f32.mxu0 0.0
    %1664 = vmatmul.mubr.f32.gmra.mrb[0].mxu0 %v1432
    %v1665 = vpop.f32.mrb[0].mxu0
    %v1666 = vadd.f32 %v916, %v1665
    %v1667 = vpop.f32.mrb[0].mxu0
    %v1668 = vadd.f32 %v920, %v1667
    %1669 = vdwg.mxu0
    %1670 = vmatprep.subr.mxu0 0.0
    %1671 = vmatpush1.msra.mxu0 %v814
    %1672 = vmatprep.subr.mxu0 0.0
    %1673 = vmatpush1.msra.mxu0 %v817
    %1674 = vmatprep.subr.mxu0 0.0
    %1675 = vmatpush1.msra.mxu0 %v820
    %1676 = vmatprep.subr.mxu0 0.0
    %1677 = vmatpush1.msra.mxu0 %v823
    %1678 = vmatprep.subr.mxu0 0.0
    %1679 = vmatpush1.msra.mxu0 %v826
    %1680 = vmatprep.subr.mxu0 0.0
    %1681 = vmatpush1.msra.mxu0 %v829
    %1682 = vmatprep.subr.mxu0 0.0
    %1683 = vmatpush1.msra.mxu0 %v832
    %1684 = vmatprep.subr.mxu0 0.0
    %1685 = vmatpush1.msra.mxu0 %v835
    %1686 = vmatprep.subr.mxu0 0.0
    %1687 = vmatpush1.msra.mxu0 %v838
    %1688 = vmatprep.subr.mxu0 0.0
    %1689 = vmatpush1.msra.mxu0 %v841
    %1690 = vmatprep.subr.mxu0 0.0
    %1691 = vmatpush1.msra.mxu0 %v844
    %1692 = vmatprep.subr.mxu0 0.0
    %1693 = vmatpush1.msra.mxu0 %v847
    %1694 = vmatprep.subr.mxu0 0.0
    %1695 = vmatpush1.msra.mxu0 %v850
    %1696 = vmatprep.subr.mxu0 0.0
    %1697 = vmatpush1.msra.mxu0 %v853
    %1698 = vmatprep.subr.mxu0 0.0
    %1699 = vmatpush1.msra.mxu0 %v856
    %1700 = vmatprep.subr.mxu0 0.0
    %1701 = vmatpush1.msra.mxu0 %v859
    %1702 = vmatprep.subr.mxu0 0.0
    %1703 = vmatpush1.msra.mxu0 0.0
    %1704 = vmatprep.subr.mxu0 0.0
    %1705 = vmatpush1.msra.mxu0 0.0
    %1706 = vmatprep.subr.mxu0 0.0
    %1707 = vmatpush1.msra.mxu0 0.0
    %1708 = vmatprep.subr.mxu0 0.0
    %1709 = vmatpush1.msra.mxu0 0.0
    %1710 = vmatprep.subr.mxu0 0.0
    %1711 = vmatpush1.msra.mxu0 0.0
    %1712 = vmatprep.subr.mxu0 0.0
    %1713 = vmatpush1.msra.mxu0 0.0
    %1714 = vmatprep.subr.mxu0 0.0
    %1715 = vmatpush1.msra.mxu0 0.0
    %1716 = vmatprep.subr.mxu0 0.0
    %1717 = vmatpush1.msra.mxu0 0.0
    %1718 = vmatprep.subr.mxu0 0.0
    %1719 = vmatpush1.msra.mxu0 0.0
    %1720 = vmatprep.subr.mxu0 0.0
    %1721 = vmatpush1.msra.mxu0 0.0
    %1722 = vmatprep.subr.mxu0 0.0
    %1723 = vmatpush1.msra.mxu0 0.0
    %1724 = vmatprep.subr.mxu0 0.0
    %1725 = vmatpush1.msra.mxu0 0.0
    %1726 = vmatprep.subr.mxu0 0.0
    %1727 = vmatpush1.msra.mxu0 0.0
    %1728 = vmatprep.subr.mxu0 0.0
    %1729 = vmatpush1.msra.mxu0 0.0
    %1730 = vmatprep.subr.mxu0 0.0
    %1731 = vmatpush1.msra.mxu0 0.0
    %1732 = vmatprep.subr.mxu0 0.0
    %1733 = vmatpush1.msra.mxu0 0.0
    %1734 = vmatprep.mubr.f32.mxu0 0.0
    %1735 = vmatmul.mubr.f32.gmra.mrb[0].mxu0 %v1432
    %v1736 = vpop.f32.mrb[0].mxu0
    %v1737 = vadd.f32 %v924, %v1736
    %v1738 = vpop.f32.mrb[0].mxu0
    %1739 = vdwg.mxu0
    %v1740 = vadd.f32 %v248, %v1666
    %v1741 = vadd.f32 %v250, %v1668
    %v1742 = vxor.u32 %v1740, 2147483648
    %v1743 = vxor.u32 %v1741, 2147483648
    %v1744 = vmul.f32 %v1742, 1.442695
    %v1745 = vpow.pop %v1744
    %v1746 = vmul.f32 %v1743, 1.442695
    %v1747 = vpow.pop %v1746
    %v1748 = vadd.f32 %v1745, 1.0
    %v1749 = vadd.f32 %v1747, 1.0
    %v1750 = vrcp.pop %v1748
    %v1751 = vmul.f32 1.0, %v1750
    %v1752 = vrcp.pop %v1749
    %v1753 = vmul.f32 1.0, %v1752
    %v1754 = vmul.f32 %v1751, %v1737
    %v1755 = vadd.f32 %v407, %v1754
    %v1756 = vtanh.pop %v1755
    %v1757 = vsub.f32 1.0, %v1753
    %v1758 = vmul.f32 %v1757, %v1756
    %v1759 = vmul.f32 %v1753, %v1432
    %v1760 = vadd.f32 %v1758, %v1759
    %1761 = vmatprep.subr.mxu0 %v863
    %1762 = vmatpush1.msra.mxu0 %v862
    %1763 = vmatprep.subr.mxu0 %v866
    %1764 = vmatpush1.msra.mxu0 %v865
    %1765 = vmatprep.subr.mxu0 %v869
    %1766 = vmatpush1.msra.mxu0 %v868
    %1767 = vmatprep.subr.mxu0 %v872
    %1768 = vmatpush1.msra.mxu0 %v871
    %1769 = vmatprep.subr.mxu0 %v875
    %1770 = vmatpush1.msra.mxu0 %v874
    %1771 = vmatprep.subr.mxu0 %v878
    %1772 = vmatpush1.msra.mxu0 %v877
    %1773 = vmatprep.subr.mxu0 %v881
    %1774 = vmatpush1.msra.mxu0 %v880
    %1775 = vmatprep.subr.mxu0 %v884
    %1776 = vmatpush1.msra.mxu0 %v883
    %1777 = vmatprep.subr.mxu0 %v887
    %1778 = vmatpush1.msra.mxu0 %v886
    %1779 = vmatprep.subr.mxu0 %v890
    %1780 = vmatpush1.msra.mxu0 %v889
    %1781 = vmatprep.subr.mxu0 %v893
    %1782 = vmatpush1.msra.mxu0 %v892
    %1783 = vmatprep.subr.mxu0 %v896
    %1784 = vmatpush1.msra.mxu0 %v895
    %1785 = vmatprep.subr.mxu0 %v899
    %1786 = vmatpush1.msra.mxu0 %v898
    %1787 = vmatprep.subr.mxu0 %v902
    %1788 = vmatpush1.msra.mxu0 %v901
    %1789 = vmatprep.subr.mxu0 %v905
    %1790 = vmatpush1.msra.mxu0 %v904
    %1791 = vmatprep.subr.mxu0 %v908
    %1792 = vmatpush1.msra.mxu0 %v907
    %1793 = vmatprep.subr.mxu0 0.0
    %1794 = vmatpush1.msra.mxu0 0.0
    %1795 = vmatprep.subr.mxu0 0.0
    %1796 = vmatpush1.msra.mxu0 0.0
    %1797 = vmatprep.subr.mxu0 0.0
    %1798 = vmatpush1.msra.mxu0 0.0
    %1799 = vmatprep.subr.mxu0 0.0
    %1800 = vmatpush1.msra.mxu0 0.0
    %1801 = vmatprep.subr.mxu0 0.0
    %1802 = vmatpush1.msra.mxu0 0.0
    %1803 = vmatprep.subr.mxu0 0.0
    %1804 = vmatpush1.msra.mxu0 0.0
    %1805 = vmatprep.subr.mxu0 0.0
    %1806 = vmatpush1.msra.mxu0 0.0
    %1807 = vmatprep.subr.mxu0 0.0
    %1808 = vmatpush1.msra.mxu0 0.0
    %1809 = vmatprep.subr.mxu0 0.0
    %1810 = vmatpush1.msra.mxu0 0.0
    %1811 = vmatprep.subr.mxu0 0.0
    %1812 = vmatpush1.msra.mxu0 0.0
    %1813 = vmatprep.subr.mxu0 0.0
    %1814 = vmatpush1.msra.mxu0 0.0
    %1815 = vmatprep.subr.mxu0 0.0
    %1816 = vmatpush1.msra.mxu0 0.0
    %1817 = vmatprep.subr.mxu0 0.0
    %1818 = vmatpush1.msra.mxu0 0.0
    %1819 = vmatprep.subr.mxu0 0.0
    %1820 = vmatpush1.msra.mxu0 0.0
    %1821 = vmatprep.subr.mxu0 0.0
    %1822 = vmatpush1.msra.mxu0 0.0
    %1823 = vmatprep.subr.mxu0 0.0
    %1824 = vmatpush1.msra.mxu0 0.0
    %1825 = vmatprep.mubr.f32.mxu0 0.0
    %1826 = vmatmul.mubr.f32.gmra.mrb[0].mxu0 %v1594
    %v1827 = vpop.f32.mrb[0].mxu0
    %v1828 = vadd.f32 %v1094, %v1827
    %v1829 = vpop.f32.mrb[0].mxu0
    %v1830 = vadd.f32 %v1098, %v1829
    %1831 = vdwg.mxu0
    %1832 = vmatprep.subr.mxu0 0.0
    %1833 = vmatpush1.msra.mxu0 %v864
    %1834 = vmatprep.subr.mxu0 0.0
    %1835 = vmatpush1.msra.mxu0 %v867
    %1836 = vmatprep.subr.mxu0 0.0
    %1837 = vmatpush1.msra.mxu0 %v870
    %1838 = vmatprep.subr.mxu0 0.0
    %1839 = vmatpush1.msra.mxu0 %v873
    %1840 = vmatprep.subr.mxu0 0.0
    %1841 = vmatpush1.msra.mxu0 %v876
    %1842 = vmatprep.subr.mxu0 0.0
    %1843 = vmatpush1.msra.mxu0 %v879
    %1844 = vmatprep.subr.mxu0 0.0
    %1845 = vmatpush1.msra.mxu0 %v882
    %1846 = vmatprep.subr.mxu0 0.0
    %1847 = vmatpush1.msra.mxu0 %v885
    %1848 = vmatprep.subr.mxu0 0.0
    %1849 = vmatpush1.msra.mxu0 %v888
    %1850 = vmatprep.subr.mxu0 0.0
    %1851 = vmatpush1.msra.mxu0 %v891
    %1852 = vmatprep.subr.mxu0 0.0
    %1853 = vmatpush1.msra.mxu0 %v894
    %1854 = vmatprep.subr.mxu0 0.0
    %1855 = vmatpush1.msra.mxu0 %v897
    %1856 = vmatprep.subr.mxu0 0.0
    %1857 = vmatpush1.msra.mxu0 %v900
    %1858 = vmatprep.subr.mxu0 0.0
    %1859 = vmatpush1.msra.mxu0 %v903
    %1860 = vmatprep.subr.mxu0 0.0
    %1861 = vmatpush1.msra.mxu0 %v906
    %1862 = vmatprep.subr.mxu0 0.0
    %1863 = vmatpush1.msra.mxu0 %v909
    %1864 = vmatprep.subr.mxu0 0.0
    %1865 = vmatpush1.msra.mxu0 0.0
    %1866 = vmatprep.subr.mxu0 0.0
    %1867 = vmatpush1.msra.mxu0 0.0
    %1868 = vmatprep.subr.mxu0 0.0
    %1869 = vmatpush1.msra.mxu0 0.0
    %1870 = vmatprep.subr.mxu0 0.0
    %1871 = vmatpush1.msra.mxu0 0.0
    %1872 = vmatprep.subr.mxu0 0.0
    %1873 = vmatpush1.msra.mxu0 0.0
    %1874 = vmatprep.subr.mxu0 0.0
    %1875 = vmatpush1.msra.mxu0 0.0
    %1876 = vmatprep.subr.mxu0 0.0
    %1877 = vmatpush1.msra.mxu0 0.0
    %1878 = vmatprep.subr.mxu0 0.0
    %1879 = vmatpush1.msra.mxu0 0.0
    %1880 = vmatprep.subr.mxu0 0.0
    %1881 = vmatpush1.msra.mxu0 0.0
    %1882 = vmatprep.subr.mxu0 0.0
    %1883 = vmatpush1.msra.mxu0 0.0
    %1884 = vmatprep.subr.mxu0 0.0
    %1885 = vmatpush1.msra.mxu0 0.0
    %1886 = vmatprep.subr.mxu0 0.0
    %1887 = vmatpush1.msra.mxu0 0.0
    %1888 = vmatprep.subr.mxu0 0.0
    %1889 = vmatpush1.msra.mxu0 0.0
    %1890 = vmatprep.subr.mxu0 0.0
    %1891 = vmatpush1.msra.mxu0 0.0
    %1892 = vmatprep.subr.mxu0 0.0
    %1893 = vmatpush1.msra.mxu0 0.0
    %1894 = vmatprep.subr.mxu0 0.0
    %1895 = vmatpush1.msra.mxu0 0.0
    %1896 = vmatprep.mubr.f32.mxu0 0.0
    %1897 = vmatmul.mubr.f32.gmra.mrb[0].mxu0 %v1594
    %v1898 = vpop.f32.mrb[0].mxu0
    %v1899 = vadd.f32 %v1102, %v1898
    %v1900 = vpop.f32.mrb[0].mxu0
    %1901 = vdwg.mxu0
    %v1902 = vadd.f32 %v651, %v1828
    %v1903 = vadd.f32 %v653, %v1830
    %v1904 = vxor.u32 %v1902, 2147483648
    %v1905 = vxor.u32 %v1903, 2147483648
    %v1906 = vmul.f32 %v1904, 1.442695
    %v1907 = vpow.pop %v1906
    %v1908 = vmul.f32 %v1905, 1.442695
    %v1909 = vpow.pop %v1908
    %v1910 = vadd.f32 %v1907, 1.0
    %v1911 = vadd.f32 %v1909, 1.0
    %v1912 = vrcp.pop %v1910
    %v1913 = vmul.f32 1.0, %v1912
    %v1914 = vrcp.pop %v1911
    %v1915 = vmul.f32 1.0, %v1914
    %v1916 = vmul.f32 %v1913, %v1899
    %v1917 = vadd.f32 %v799, %v1916
    %v1918 = vtanh.pop %v1917
    %v1919 = vsub.f32 1.0, %v1915
    %v1920 = vmul.f32 %v1919, %v1918
    %v1921 = vmul.f32 %v1915, %v1594
    %v1922 = vadd.f32 %v1920, %v1921
    %s1923 = scalar_lea.vmem %s5, 32
    %1924 = vst [vmem:[%s1923] sm:$0xff] %v1760
    %s1925 = scalar_lea.vmem %s5, 208
    %1926 = vst [vmem:[%s1925 + $0x8] sm:$0xff] %v1922
    %1927 = vmatprep.subr.mxu0 %v813
    %1928 = vmatpush1.msra.mxu0 %v812
    %1929 = vmatprep.subr.mxu0 %v816
    %1930 = vmatpush1.msra.mxu0 %v815
    %1931 = vmatprep.subr.mxu0 %v819
    %1932 = vmatpush1.msra.mxu0 %v818
    %1933 = vmatprep.subr.mxu0 %v822
    %1934 = vmatpush1.msra.mxu0 %v821
    %1935 = vmatprep.subr.mxu0 %v825
    %1936 = vmatpush1.msra.mxu0 %v824
    %1937 = vmatprep.subr.mxu0 %v828
    %1938 = vmatpush1.msra.mxu0 %v827
    %1939 = vmatprep.subr.mxu0 %v831
    %1940 = vmatpush1.msra.mxu0 %v830
    %1941 = vmatprep.subr.mxu0 %v834
    %1942 = vmatpush1.msra.mxu0 %v833
    %1943 = vmatprep.subr.mxu0 %v837
    %1944 = vmatpush1.msra.mxu0 %v836
    %1945 = vmatprep.subr.mxu0 %v840
    %1946 = vmatpush1.msra.mxu0 %v839
    %1947 = vmatprep.subr.mxu0 %v843
    %1948 = vmatpush1.msra.mxu0 %v842
    %1949 = vmatprep.subr.mxu0 %v846
    %1950 = vmatpush1.msra.mxu0 %v845
    %1951 = vmatprep.subr.mxu0 %v849
    %1952 = vmatpush1.msra.mxu0 %v848
    %1953 = vmatprep.subr.mxu0 %v852
    %1954 = vmatpush1.msra.mxu0 %v851
    %1955 = vmatprep.subr.mxu0 %v855
    %1956 = vmatpush1.msra.mxu0 %v854
    %1957 = vmatprep.subr.mxu0 %v858
    %1958 = vmatpush1.msra.mxu0 %v857
    %1959 = vmatprep.subr.mxu0 0.0
    %1960 = vmatpush1.msra.mxu0 0.0
    %1961 = vmatprep.subr.mxu0 0.0
    %1962 = vmatpush1.msra.mxu0 0.0
    %1963 = vmatprep.subr.mxu0 0.0
    %1964 = vmatpush1.msra.mxu0 0.0
    %1965 = vmatprep.subr.mxu0 0.0
    %1966 = vmatpush1.msra.mxu0 0.0
    %1967 = vmatprep.subr.mxu0 0.0
    %1968 = vmatpush1.msra.mxu0 0.0
    %1969 = vmatprep.subr.mxu0 0.0
    %1970 = vmatpush1.msra.mxu0 0.0
    %1971 = vmatprep.subr.mxu0 0.0
    %1972 = vmatpush1.msra.mxu0 0.0
    %1973 = vmatprep.subr.mxu0 0.0
    %1974 = vmatpush1.msra.mxu0 0.0
    %1975 = vmatprep.subr.mxu0 0.0
    %1976 = vmatpush1.msra.mxu0 0.0
    %1977 = vmatprep.subr.mxu0 0.0
    %1978 = vmatpush1.msra.mxu0 0.0
    %1979 = vmatprep.subr.mxu0 0.0
    %1980 = vmatpush1.msra.mxu0 0.0
    %1981 = vmatprep.subr.mxu0 0.0
    %1982 = vmatpush1.msra.mxu0 0.0
    %1983 = vmatprep.subr.mxu0 0.0
    %1984 = vmatpush1.msra.mxu0 0.0
    %1985 = vmatprep.subr.mxu0 0.0
    %1986 = vmatpush1.msra.mxu0 0.0
    %1987 = vmatprep.subr.mxu0 0.0
    %1988 = vmatpush1.msra.mxu0 0.0
    %1989 = vmatprep.subr.mxu0 0.0
    %1990 = vmatpush1.msra.mxu0 0.0
    %1991 = vmatprep.mubr.f32.mxu0 0.0
    %1992 = vmatmul.mubr.f32.gmra.mrb[0].mxu0 %v1760
    %v1993 = vpop.f32.mrb[0].mxu0
    %v1994 = vadd.f32 %v916, %v1993
    %v1995 = vpop.f32.mrb[0].mxu0
    %v1996 = vadd.f32 %v920, %v1995
    %1997 = vdwg.mxu0
    %1998 = vmatprep.subr.mxu0 0.0
    %1999 = vmatpush1.msra.mxu0 %v814
    %2000 = vmatprep.subr.mxu0 0.0
    %2001 = vmatpush1.msra.mxu0 %v817
    %2002 = vmatprep.subr.mxu0 0.0
    %2003 = vmatpush1.msra.mxu0 %v820
    %2004 = vmatprep.subr.mxu0 0.0
    %2005 = vmatpush1.msra.mxu0 %v823
    %2006 = vmatprep.subr.mxu0 0.0
    %2007 = vmatpush1.msra.mxu0 %v826
    %2008 = vmatprep.subr.mxu0 0.0
    %2009 = vmatpush1.msra.mxu0 %v829
    %2010 = vmatprep.subr.mxu0 0.0
    %2011 = vmatpush1.msra.mxu0 %v832
    %2012 = vmatprep.subr.mxu0 0.0
    %2013 = vmatpush1.msra.mxu0 %v835
    %2014 = vmatprep.subr.mxu0 0.0
    %2015 = vmatpush1.msra.mxu0 %v838
    %2016 = vmatprep.subr.mxu0 0.0
    %2017 = vmatpush1.msra.mxu0 %v841
    %2018 = vmatprep.subr.mxu0 0.0
    %2019 = vmatpush1.msra.mxu0 %v844
    %2020 = vmatprep.subr.mxu0 0.0
    %2021 = vmatpush1.msra.mxu0 %v847
    %2022 = vmatprep.subr.mxu0 0.0
    %2023 = vmatpush1.msra.mxu0 %v850
    %2024 = vmatprep.subr.mxu0 0.0
    %2025 = vmatpush1.msra.mxu0 %v853
    %2026 = vmatprep.subr.mxu0 0.0
    %2027 = vmatpush1.msra.mxu0 %v856
    %2028 = vmatprep.subr.mxu0 0.0
    %2029 = vmatpush1.msra.mxu0 %v859
    %2030 = vmatprep.subr.mxu0 0.0
    %2031 = vmatpush1.msra.mxu0 0.0
    %2032 = vmatprep.subr.mxu0 0.0
    %2033 = vmatpush1.msra.mxu0 0.0
    %2034 = vmatprep.subr.mxu0 0.0
    %2035 = vmatpush1.msra.mxu0 0.0
    %2036 = vmatprep.subr.mxu0 0.0
    %2037 = vmatpush1.msra.mxu0 0.0
    %2038 = vmatprep.subr.mxu0 0.0
    %2039 = vmatpush1.msra.mxu0 0.0
    %2040 = vmatprep.subr.mxu0 0.0
    %2041 = vmatpush1.msra.mxu0 0.0
    %2042 = vmatprep.subr.mxu0 0.0
    %2043 = vmatpush1.msra.mxu0 0.0
    %2044 = vmatprep.subr.mxu0 0.0
    %2045 = vmatpush1.msra.mxu0 0.0
    %2046 = vmatprep.subr.mxu0 0.0
    %2047 = vmatpush1.msra.mxu0 0.0
    %2048 = vmatprep.subr.mxu0 0.0
    %2049 = vmatpush1.msra.mxu0 0.0
    %2050 = vmatprep.subr.mxu0 0.0
    %2051 = vmatpush1.msra.mxu0 0.0
    %2052 = vmatprep.subr.mxu0 0.0
    %2053 = vmatpush1.msra.mxu0 0.0
    %2054 = vmatprep.subr.mxu0 0.0
    %2055 = vmatpush1.msra.mxu0 0.0
    %2056 = vmatprep.subr.mxu0 0.0
    %2057 = vmatpush1.msra.mxu0 0.0
    %2058 = vmatprep.subr.mxu0 0.0
    %2059 = vmatpush1.msra.mxu0 0.0
    %2060 = vmatprep.subr.mxu0 0.0
    %2061 = vmatpush1.msra.mxu0 0.0
    %2062 = vmatprep.mubr.f32.mxu0 0.0
    %2063 = vmatmul.mubr.f32.gmra.mrb[0].mxu0 %v1760
    %v2064 = vpop.f32.mrb[0].mxu0
    %v2065 = vadd.f32 %v924, %v2064
    %v2066 = vpop.f32.mrb[0].mxu0
    %2067 = vdwg.mxu0
    %v2068 = vadd.f32 %v254, %v1994
    %v2069 = vadd.f32 %v256, %v1996
    %v2070 = vxor.u32 %v2068, 2147483648
    %v2071 = vxor.u32 %v2069, 2147483648
    %v2072 = vmul.f32 %v2070, 1.442695
    %v2073 = vpow.pop %v2072
    %v2074 = vmul.f32 %v2071, 1.442695
    %v2075 = vpow.pop %v2074
    %v2076 = vadd.f32 %v2073, 1.0
    %v2077 = vadd.f32 %v2075, 1.0
    %v2078 = vrcp.pop %v2076
    %v2079 = vmul.f32 1.0, %v2078
    %v2080 = vrcp.pop %v2077
    %v2081 = vmul.f32 1.0, %v2080
    %v2082 = vmul.f32 %v2079, %v2065
    %v2083 = vadd.f32 %v412, %v2082
    %v2084 = vtanh.pop %v2083
    %v2085 = vsub.f32 1.0, %v2081
    %v2086 = vmul.f32 %v2085, %v2084
    %v2087 = vmul.f32 %v2081, %v1760
    %v2088 = vadd.f32 %v2086, %v2087
    %2089 = vmatprep.subr.mxu0 %v863
    %2090 = vmatpush1.msra.mxu0 %v862
    %2091 = vmatprep.subr.mxu0 %v866
    %2092 = vmatpush1.msra.mxu0 %v865
    %2093 = vmatprep.subr.mxu0 %v869
    %2094 = vmatpush1.msra.mxu0 %v868
    %2095 = vmatprep.subr.mxu0 %v872
    %2096 = vmatpush1.msra.mxu0 %v871
    %2097 = vmatprep.subr.mxu0 %v875
    %2098 = vmatpush1.msra.mxu0 %v874
    %2099 = vmatprep.subr.mxu0 %v878
    %2100 = vmatpush1.msra.mxu0 %v877
    %2101 = vmatprep.subr.mxu0 %v881
    %2102 = vmatpush1.msra.mxu0 %v880
    %2103 = vmatprep.subr.mxu0 %v884
    %2104 = vmatpush1.msra.mxu0 %v883
    %2105 = vmatprep.subr.mxu0 %v887
    %2106 = vmatpush1.msra.mxu0 %v886
    %2107 = vmatprep.subr.mxu0 %v890
    %2108 = vmatpush1.msra.mxu0 %v889
    %2109 = vmatprep.subr.mxu0 %v893
    %2110 = vmatpush1.msra.mxu0 %v892
    %2111 = vmatprep.subr.mxu0 %v896
    %2112 = vmatpush1.msra.mxu0 %v895
    %2113 = vmatprep.subr.mxu0 %v899
    %2114 = vmatpush1.msra.mxu0 %v898
    %2115 = vmatprep.subr.mxu0 %v902
    %2116 = vmatpush1.msra.mxu0 %v901
    %2117 = vmatprep.subr.mxu0 %v905
    %2118 = vmatpush1.msra.mxu0 %v904
    %2119 = vmatprep.subr.mxu0 %v908
    %2120 = vmatpush1.msra.mxu0 %v907
    %2121 = vmatprep.subr.mxu0 0.0
    %2122 = vmatpush1.msra.mxu0 0.0
    %2123 = vmatprep.subr.mxu0 0.0
    %2124 = vmatpush1.msra.mxu0 0.0
    %2125 = vmatprep.subr.mxu0 0.0
    %2126 = vmatpush1.msra.mxu0 0.0
    %2127 = vmatprep.subr.mxu0 0.0
    %2128 = vmatpush1.msra.mxu0 0.0
    %2129 = vmatprep.subr.mxu0 0.0
    %2130 = vmatpush1.msra.mxu0 0.0
    %2131 = vmatprep.subr.mxu0 0.0
    %2132 = vmatpush1.msra.mxu0 0.0
    %2133 = vmatprep.subr.mxu0 0.0
    %2134 = vmatpush1.msra.mxu0 0.0
    %2135 = vmatprep.subr.mxu0 0.0
    %2136 = vmatpush1.msra.mxu0 0.0
    %2137 = vmatprep.subr.mxu0 0.0
    %2138 = vmatpush1.msra.mxu0 0.0
    %2139 = vmatprep.subr.mxu0 0.0
    %2140 = vmatpush1.msra.mxu0 0.0
    %2141 = vmatprep.subr.mxu0 0.0
    %2142 = vmatpush1.msra.mxu0 0.0
    %2143 = vmatprep.subr.mxu0 0.0
    %2144 = vmatpush1.msra.mxu0 0.0
    %2145 = vmatprep.subr.mxu0 0.0
    %2146 = vmatpush1.msra.mxu0 0.0
    %2147 = vmatprep.subr.mxu0 0.0
    %2148 = vmatpush1.msra.mxu0 0.0
    %2149 = vmatprep.subr.mxu0 0.0
    %2150 = vmatpush1.msra.mxu0 0.0
    %2151 = vmatprep.subr.mxu0 0.0
    %2152 = vmatpush1.msra.mxu0 0.0
    %2153 = vmatprep.mubr.f32.mxu0 0.0
    %2154 = vmatmul.mubr.f32.gmra.mrb[0].mxu0 %v1922
    %v2155 = vpop.f32.mrb[0].mxu0
    %v2156 = vadd.f32 %v1094, %v2155
    %v2157 = vpop.f32.mrb[0].mxu0
    %v2158 = vadd.f32 %v1098, %v2157
    %2159 = vdwg.mxu0
    %2160 = vmatprep.subr.mxu0 0.0
    %2161 = vmatpush1.msra.mxu0 %v864
    %2162 = vmatprep.subr.mxu0 0.0
    %2163 = vmatpush1.msra.mxu0 %v867
    %2164 = vmatprep.subr.mxu0 0.0
    %2165 = vmatpush1.msra.mxu0 %v870
    %2166 = vmatprep.subr.mxu0 0.0
    %2167 = vmatpush1.msra.mxu0 %v873
    %2168 = vmatprep.subr.mxu0 0.0
    %2169 = vmatpush1.msra.mxu0 %v876
    %2170 = vmatprep.subr.mxu0 0.0
    %2171 = vmatpush1.msra.mxu0 %v879
    %2172 = vmatprep.subr.mxu0 0.0
    %2173 = vmatpush1.msra.mxu0 %v882
    %2174 = vmatprep.subr.mxu0 0.0
    %2175 = vmatpush1.msra.mxu0 %v885
    %2176 = vmatprep.subr.mxu0 0.0
    %2177 = vmatpush1.msra.mxu0 %v888
    %2178 = vmatprep.subr.mxu0 0.0
    %2179 = vmatpush1.msra.mxu0 %v891
    %2180 = vmatprep.subr.mxu0 0.0
    %2181 = vmatpush1.msra.mxu0 %v894
    %2182 = vmatprep.subr.mxu0 0.0
    %2183 = vmatpush1.msra.mxu0 %v897
    %2184 = vmatprep.subr.mxu0 0.0
    %2185 = vmatpush1.msra.mxu0 %v900
    %2186 = vmatprep.subr.mxu0 0.0
    %2187 = vmatpush1.msra.mxu0 %v903
    %2188 = vmatprep.subr.mxu0 0.0
    %2189 = vmatpush1.msra.mxu0 %v906
    %2190 = vmatprep.subr.mxu0 0.0
    %2191 = vmatpush1.msra.mxu0 %v909
    %2192 = vmatprep.subr.mxu0 0.0
    %2193 = vmatpush1.msra.mxu0 0.0
    %2194 = vmatprep.subr.mxu0 0.0
    %2195 = vmatpush1.msra.mxu0 0.0
    %2196 = vmatprep.subr.mxu0 0.0
    %2197 = vmatpush1.msra.mxu0 0.0
    %2198 = vmatprep.subr.mxu0 0.0
    %2199 = vmatpush1.msra.mxu0 0.0
    %2200 = vmatprep.subr.mxu0 0.0
    %2201 = vmatpush1.msra.mxu0 0.0
    %2202 = vmatprep.subr.mxu0 0.0
    %2203 = vmatpush1.msra.mxu0 0.0
    %2204 = vmatprep.subr.mxu0 0.0
    %2205 = vmatpush1.msra.mxu0 0.0
    %2206 = vmatprep.subr.mxu0 0.0
    %2207 = vmatpush1.msra.mxu0 0.0
    %2208 = vmatprep.subr.mxu0 0.0
    %2209 = vmatpush1.msra.mxu0 0.0
    %2210 = vmatprep.subr.mxu0 0.0
    %2211 = vmatpush1.msra.mxu0 0.0
    %2212 = vmatprep.subr.mxu0 0.0
    %2213 = vmatpush1.msra.mxu0 0.0
    %2214 = vmatprep.subr.mxu0 0.0
    %2215 = vmatpush1.msra.mxu0 0.0
    %2216 = vmatprep.subr.mxu0 0.0
    %2217 = vmatpush1.msra.mxu0 0.0
    %2218 = vmatprep.subr.mxu0 0.0
    %2219 = vmatpush1.msra.mxu0 0.0
    %2220 = vmatprep.subr.mxu0 0.0
    %2221 = vmatpush1.msra.mxu0 0.0
    %2222 = vmatprep.subr.mxu0 0.0
    %2223 = vmatpush1.msra.mxu0 0.0
    %2224 = vmatprep.mubr.f32.mxu0 0.0
    %2225 = vmatmul.mubr.f32.gmra.mrb[0].mxu0 %v1922
    %v2226 = vpop.f32.mrb[0].mxu0
    %v2227 = vadd.f32 %v1102, %v2226
    %v2228 = vpop.f32.mrb[0].mxu0
    %2229 = vdwg.mxu0
    %v2230 = vadd.f32 %v645, %v2156
    %v2231 = vadd.f32 %v647, %v2158
    %v2232 = vxor.u32 %v2230, 2147483648
    %v2233 = vxor.u32 %v2231, 2147483648
    %v2234 = vmul.f32 %v2232, 1.442695
    %v2235 = vpow.pop %v2234
    %v2236 = vmul.f32 %v2233, 1.442695
    %v2237 = vpow.pop %v2236
    %v2238 = vadd.f32 %v2235, 1.0
    %v2239 = vadd.f32 %v2237, 1.0
    %v2240 = vrcp.pop %v2238
    %v2241 = vmul.f32 1.0, %v2240
    %v2242 = vrcp.pop %v2239
    %v2243 = vmul.f32 1.0, %v2242
    %v2244 = vmul.f32 %v2241, %v2227
    %v2245 = vadd.f32 %v794, %v2244
    %v2246 = vtanh.pop %v2245
    %v2247 = vsub.f32 1.0, %v2243
    %v2248 = vmul.f32 %v2247, %v2246
    %v2249 = vmul.f32 %v2243, %v1922
    %v2250 = vadd.f32 %v2248, %v2249
    %s2251 = scalar_lea.vmem %s5, 48
    %2252 = vst [vmem:[%s2251] sm:$0xff] %v2088
    %s2253 = scalar_lea.vmem %s5, 192
    %2254 = vst [vmem:[%s2253 + $0x8] sm:$0xff] %v2250
    %2255 = vmatprep.subr.mxu0 %v813
    %2256 = vmatpush1.msra.mxu0 %v812
    %2257 = vmatprep.subr.mxu0 %v816
    %2258 = vmatpush1.msra.mxu0 %v815
    %2259 = vmatprep.subr.mxu0 %v819
    %2260 = vmatpush1.msra.mxu0 %v818
    %2261 = vmatprep.subr.mxu0 %v822
    %2262 = vmatpush1.msra.mxu0 %v821
    %2263 = vmatprep.subr.mxu0 %v825
    %2264 = vmatpush1.msra.mxu0 %v824
    %2265 = vmatprep.subr.mxu0 %v828
    %2266 = vmatpush1.msra.mxu0 %v827
    %2267 = vmatprep.subr.mxu0 %v831
    %2268 = vmatpush1.msra.mxu0 %v830
    %2269 = vmatprep.subr.mxu0 %v834
    %2270 = vmatpush1.msra.mxu0 %v833
    %2271 = vmatprep.subr.mxu0 %v837
    %2272 = vmatpush1.msra.mxu0 %v836
    %2273 = vmatprep.subr.mxu0 %v840
    %2274 = vmatpush1.msra.mxu0 %v839
    %2275 = vmatprep.subr.mxu0 %v843
    %2276 = vmatpush1.msra.mxu0 %v842
    %2277 = vmatprep.subr.mxu0 %v846
    %2278 = vmatpush1.msra.mxu0 %v845
    %2279 = vmatprep.subr.mxu0 %v849
    %2280 = vmatpush1.msra.mxu0 %v848
    %2281 = vmatprep.subr.mxu0 %v852
    %2282 = vmatpush1.msra.mxu0 %v851
    %2283 = vmatprep.subr.mxu0 %v855
    %2284 = vmatpush1.msra.mxu0 %v854
    %2285 = vmatprep.subr.mxu0 %v858
    %2286 = vmatpush1.msra.mxu0 %v857
    %2287 = vmatprep.subr.mxu0 0.0
    %2288 = vmatpush1.msra.mxu0 0.0
    %2289 = vmatprep.subr.mxu0 0.0
    %2290 = vmatpush1.msra.mxu0 0.0
    %2291 = vmatprep.subr.mxu0 0.0
    %2292 = vmatpush1.msra.mxu0 0.0
    %2293 = vmatprep.subr.mxu0 0.0
    %2294 = vmatpush1.msra.mxu0 0.0
    %2295 = vmatprep.subr.mxu0 0.0
    %2296 = vmatpush1.msra.mxu0 0.0
    %2297 = vmatprep.subr.mxu0 0.0
    %2298 = vmatpush1.msra.mxu0 0.0
    %2299 = vmatprep.subr.mxu0 0.0
    %2300 = vmatpush1.msra.mxu0 0.0
    %2301 = vmatprep.subr.mxu0 0.0
    %2302 = vmatpush1.msra.mxu0 0.0
    %2303 = vmatprep.subr.mxu0 0.0
    %2304 = vmatpush1.msra.mxu0 0.0
    %2305 = vmatprep.subr.mxu0 0.0
    %2306 = vmatpush1.msra.mxu0 0.0
    %2307 = vmatprep.subr.mxu0 0.0
    %2308 = vmatpush1.msra.mxu0 0.0
    %2309 = vmatprep.subr.mxu0 0.0
    %2310 = vmatpush1.msra.mxu0 0.0
    %2311 = vmatprep.subr.mxu0 0.0
    %2312 = vmatpush1.msra.mxu0 0.0
    %2313 = vmatprep.subr.mxu0 0.0
    %2314 = vmatpush1.msra.mxu0 0.0
    %2315 = vmatprep.subr.mxu0 0.0
    %2316 = vmatpush1.msra.mxu0 0.0
    %2317 = vmatprep.subr.mxu0 0.0
    %2318 = vmatpush1.msra.mxu0 0.0
    %2319 = vmatprep.mubr.f32.mxu0 0.0
    %2320 = vmatmul.mubr.f32.gmra.mrb[0].mxu0 %v2088
    %v2321 = vpop.f32.mrb[0].mxu0
    %v2322 = vadd.f32 %v916, %v2321
    %v2323 = vpop.f32.mrb[0].mxu0
    %v2324 = vadd.f32 %v920, %v2323
    %2325 = vdwg.mxu0
    %2326 = vmatprep.subr.mxu0 0.0
    %2327 = vmatpush1.msra.mxu0 %v814
    %2328 = vmatprep.subr.mxu0 0.0
    %2329 = vmatpush1.msra.mxu0 %v817
    %2330 = vmatprep.subr.mxu0 0.0
    %2331 = vmatpush1.msra.mxu0 %v820
    %2332 = vmatprep.subr.mxu0 0.0
    %2333 = vmatpush1.msra.mxu0 %v823
    %2334 = vmatprep.subr.mxu0 0.0
    %2335 = vmatpush1.msra.mxu0 %v826
    %2336 = vmatprep.subr.mxu0 0.0
    %2337 = vmatpush1.msra.mxu0 %v829
    %2338 = vmatprep.subr.mxu0 0.0
    %2339 = vmatpush1.msra.mxu0 %v832
    %2340 = vmatprep.subr.mxu0 0.0
    %2341 = vmatpush1.msra.mxu0 %v835
    %2342 = vmatprep.subr.mxu0 0.0
    %2343 = vmatpush1.msra.mxu0 %v838
    %2344 = vmatprep.subr.mxu0 0.0
    %2345 = vmatpush1.msra.mxu0 %v841
    %2346 = vmatprep.subr.mxu0 0.0
    %2347 = vmatpush1.msra.mxu0 %v844
    %2348 = vmatprep.subr.mxu0 0.0
    %2349 = vmatpush1.msra.mxu0 %v847
    %2350 = vmatprep.subr.mxu0 0.0
    %2351 = vmatpush1.msra.mxu0 %v850
    %2352 = vmatprep.subr.mxu0 0.0
    %2353 = vmatpush1.msra.mxu0 %v853
    %2354 = vmatprep.subr.mxu0 0.0
    %2355 = vmatpush1.msra.mxu0 %v856
    %2356 = vmatprep.subr.mxu0 0.0
    %2357 = vmatpush1.msra.mxu0 %v859
    %2358 = vmatprep.subr.mxu0 0.0
    %2359 = vmatpush1.msra.mxu0 0.0
    %2360 = vmatprep.subr.mxu0 0.0
    %2361 = vmatpush1.msra.mxu0 0.0
    %2362 = vmatprep.subr.mxu0 0.0
    %2363 = vmatpush1.msra.mxu0 0.0
    %2364 = vmatprep.subr.mxu0 0.0
    %2365 = vmatpush1.msra.mxu0 0.0
    %2366 = vmatprep.subr.mxu0 0.0
    %2367 = vmatpush1.msra.mxu0 0.0
    %2368 = vmatprep.subr.mxu0 0.0
    %2369 = vmatpush1.msra.mxu0 0.0
    %2370 = vmatprep.subr.mxu0 0.0
    %2371 = vmatpush1.msra.mxu0 0.0
    %2372 = vmatprep.subr.mxu0 0.0
    %2373 = vmatpush1.msra.mxu0 0.0
    %2374 = vmatprep.subr.mxu0 0.0
    %2375 = vmatpush1.msra.mxu0 0.0
    %2376 = vmatprep.subr.mxu0 0.0
    %2377 = vmatpush1.msra.mxu0 0.0
    %2378 = vmatprep.subr.mxu0 0.0
    %2379 = vmatpush1.msra.mxu0 0.0
    %2380 = vmatprep.subr.mxu0 0.0
    %2381 = vmatpush1.msra.mxu0 0.0
    %2382 = vmatprep.subr.mxu0 0.0
    %2383 = vmatpush1.msra.mxu0 0.0
    %2384 = vmatprep.subr.mxu0 0.0
    %2385 = vmatpush1.msra.mxu0 0.0
    %2386 = vmatprep.subr.mxu0 0.0
    %2387 = vmatpush1.msra.mxu0 0.0
    %2388 = vmatprep.subr.mxu0 0.0
    %2389 = vmatpush1.msra.mxu0 0.0
    %2390 = vmatprep.mubr.f32.mxu0 0.0
    %2391 = vmatmul.mubr.f32.gmra.mrb[0].mxu0 %v2088
    %v2392 = vpop.f32.mrb[0].mxu0
    %v2393 = vadd.f32 %v924, %v2392
    %v2394 = vpop.f32.mrb[0].mxu0
    %2395 = vdwg.mxu0
    %v2396 = vadd.f32 %v260, %v2322
    %v2397 = vadd.f32 %v262, %v2324
    %v2398 = vxor.u32 %v2396, 2147483648
    %v2399 = vxor.u32 %v2397, 2147483648
    %v2400 = vmul.f32 %v2398, 1.442695
    %v2401 = vpow.pop %v2400
    %v2402 = vmul.f32 %v2399, 1.442695
    %v2403 = vpow.pop %v2402
    %v2404 = vadd.f32 %v2401, 1.0
    %v2405 = vadd.f32 %v2403, 1.0
    %v2406 = vrcp.pop %v2404
    %v2407 = vmul.f32 1.0, %v2406
    %v2408 = vrcp.pop %v2405
    %v2409 = vmul.f32 1.0, %v2408
    %v2410 = vmul.f32 %v2407, %v2393
    %v2411 = vadd.f32 %v417, %v2410
    %v2412 = vtanh.pop %v2411
    %v2413 = vsub.f32 1.0, %v2409
    %v2414 = vmul.f32 %v2413, %v2412
    %v2415 = vmul.f32 %v2409, %v2088
    %v2416 = vadd.f32 %v2414, %v2415
    %2417 = vmatprep.subr.mxu0 %v863
    %2418 = vmatpush1.msra.mxu0 %v862
    %2419 = vmatprep.subr.mxu0 %v866
    %2420 = vmatpush1.msra.mxu0 %v865
    %2421 = vmatprep.subr.mxu0 %v869
    %2422 = vmatpush1.msra.mxu0 %v868
    %2423 = vmatprep.subr.mxu0 %v872
    %2424 = vmatpush1.msra.mxu0 %v871
    %2425 = vmatprep.subr.mxu0 %v875
    %2426 = vmatpush1.msra.mxu0 %v874
    %2427 = vmatprep.subr.mxu0 %v878
    %2428 = vmatpush1.msra.mxu0 %v877
    %2429 = vmatprep.subr.mxu0 %v881
    %2430 = vmatpush1.msra.mxu0 %v880
    %2431 = vmatprep.subr.mxu0 %v884
    %2432 = vmatpush1.msra.mxu0 %v883
    %2433 = vmatprep.subr.mxu0 %v887
    %2434 = vmatpush1.msra.mxu0 %v886
    %2435 = vmatprep.subr.mxu0 %v890
    %2436 = vmatpush1.msra.mxu0 %v889
    %2437 = vmatprep.subr.mxu0 %v893
    %2438 = vmatpush1.msra.mxu0 %v892
    %2439 = vmatprep.subr.mxu0 %v896
    %2440 = vmatpush1.msra.mxu0 %v895
    %2441 = vmatprep.subr.mxu0 %v899
    %2442 = vmatpush1.msra.mxu0 %v898
    %2443 = vmatprep.subr.mxu0 %v902
    %2444 = vmatpush1.msra.mxu0 %v901
    %2445 = vmatprep.subr.mxu0 %v905
    %2446 = vmatpush1.msra.mxu0 %v904
    %2447 = vmatprep.subr.mxu0 %v908
    %2448 = vmatpush1.msra.mxu0 %v907
    %2449 = vmatprep.subr.mxu0 0.0
    %2450 = vmatpush1.msra.mxu0 0.0
    %2451 = vmatprep.subr.mxu0 0.0
    %2452 = vmatpush1.msra.mxu0 0.0
    %2453 = vmatprep.subr.mxu0 0.0
    %2454 = vmatpush1.msra.mxu0 0.0
    %2455 = vmatprep.subr.mxu0 0.0
    %2456 = vmatpush1.msra.mxu0 0.0
    %2457 = vmatprep.subr.mxu0 0.0
    %2458 = vmatpush1.msra.mxu0 0.0
    %2459 = vmatprep.subr.mxu0 0.0
    %2460 = vmatpush1.msra.mxu0 0.0
    %2461 = vmatprep.subr.mxu0 0.0
    %2462 = vmatpush1.msra.mxu0 0.0
    %2463 = vmatprep.subr.mxu0 0.0
    %2464 = vmatpush1.msra.mxu0 0.0
    %2465 = vmatprep.subr.mxu0 0.0
    %2466 = vmatpush1.msra.mxu0 0.0
    %2467 = vmatprep.subr.mxu0 0.0
    %2468 = vmatpush1.msra.mxu0 0.0
    %2469 = vmatprep.subr.mxu0 0.0
    %2470 = vmatpush1.msra.mxu0 0.0
    %2471 = vmatprep.subr.mxu0 0.0
    %2472 = vmatpush1.msra.mxu0 0.0
    %2473 = vmatprep.subr.mxu0 0.0
    %2474 = vmatpush1.msra.mxu0 0.0
    %2475 = vmatprep.subr.mxu0 0.0
    %2476 = vmatpush1.msra.mxu0 0.0
    %2477 = vmatprep.subr.mxu0 0.0
    %2478 = vmatpush1.msra.mxu0 0.0
    %2479 = vmatprep.subr.mxu0 0.0
    %2480 = vmatpush1.msra.mxu0 0.0
    %2481 = vmatprep.mubr.f32.mxu0 0.0
    %2482 = vmatmul.mubr.f32.gmra.mrb[0].mxu0 %v2250
    %v2483 = vpop.f32.mrb[0].mxu0
    %v2484 = vadd.f32 %v1094, %v2483
    %v2485 = vpop.f32.mrb[0].mxu0
    %v2486 = vadd.f32 %v1098, %v2485
    %2487 = vdwg.mxu0
    %2488 = vmatprep.subr.mxu0 0.0
    %2489 = vmatpush1.msra.mxu0 %v864
    %2490 = vmatprep.subr.mxu0 0.0
    %2491 = vmatpush1.msra.mxu0 %v867
    %2492 = vmatprep.subr.mxu0 0.0
    %2493 = vmatpush1.msra.mxu0 %v870
    %2494 = vmatprep.subr.mxu0 0.0
    %2495 = vmatpush1.msra.mxu0 %v873
    %2496 = vmatprep.subr.mxu0 0.0
    %2497 = vmatpush1.msra.mxu0 %v876
    %2498 = vmatprep.subr.mxu0 0.0
    %2499 = vmatpush1.msra.mxu0 %v879
    %2500 = vmatprep.subr.mxu0 0.0
    %2501 = vmatpush1.msra.mxu0 %v882
    %2502 = vmatprep.subr.mxu0 0.0
    %2503 = vmatpush1.msra.mxu0 %v885
    %2504 = vmatprep.subr.mxu0 0.0
    %2505 = vmatpush1.msra.mxu0 %v888
    %2506 = vmatprep.subr.mxu0 0.0
    %2507 = vmatpush1.msra.mxu0 %v891
    %2508 = vmatprep.subr.mxu0 0.0
    %2509 = vmatpush1.msra.mxu0 %v894
    %2510 = vmatprep.subr.mxu0 0.0
    %2511 = vmatpush1.msra.mxu0 %v897
    %2512 = vmatprep.subr.mxu0 0.0
    %2513 = vmatpush1.msra.mxu0 %v900
    %2514 = vmatprep.subr.mxu0 0.0
    %2515 = vmatpush1.msra.mxu0 %v903
    %2516 = vmatprep.subr.mxu0 0.0
    %2517 = vmatpush1.msra.mxu0 %v906
    %2518 = vmatprep.subr.mxu0 0.0
    %2519 = vmatpush1.msra.mxu0 %v909
    %2520 = vmatprep.subr.mxu0 0.0
    %2521 = vmatpush1.msra.mxu0 0.0
    %2522 = vmatprep.subr.mxu0 0.0
    %2523 = vmatpush1.msra.mxu0 0.0
    %2524 = vmatprep.subr.mxu0 0.0
    %2525 = vmatpush1.msra.mxu0 0.0
    %2526 = vmatprep.subr.mxu0 0.0
    %2527 = vmatpush1.msra.mxu0 0.0
    %2528 = vmatprep.subr.mxu0 0.0
    %2529 = vmatpush1.msra.mxu0 0.0
    %2530 = vmatprep.subr.mxu0 0.0
    %2531 = vmatpush1.msra.mxu0 0.0
    %2532 = vmatprep.subr.mxu0 0.0
    %2533 = vmatpush1.msra.mxu0 0.0
    %2534 = vmatprep.subr.mxu0 0.0
    %2535 = vmatpush1.msra.mxu0 0.0
    %2536 = vmatprep.subr.mxu0 0.0
    %2537 = vmatpush1.msra.mxu0 0.0
    %2538 = vmatprep.subr.mxu0 0.0
    %2539 = vmatpush1.msra.mxu0 0.0
    %2540 = vmatprep.subr.mxu0 0.0
    %2541 = vmatpush1.msra.mxu0 0.0
    %2542 = vmatprep.subr.mxu0 0.0
    %2543 = vmatpush1.msra.mxu0 0.0
    %2544 = vmatprep.subr.mxu0 0.0
    %2545 = vmatpush1.msra.mxu0 0.0
    %2546 = vmatprep.subr.mxu0 0.0
    %2547 = vmatpush1.msra.mxu0 0.0
    %2548 = vmatprep.subr.mxu0 0.0
    %2549 = vmatpush1.msra.mxu0 0.0
    %2550 = vmatprep.subr.mxu0 0.0
    %2551 = vmatpush1.msra.mxu0 0.0
    %2552 = vmatprep.mubr.f32.mxu0 0.0
    %2553 = vmatmul.mubr.f32.gmra.mrb[0].mxu0 %v2250
    %v2554 = vpop.f32.mrb[0].mxu0
    %v2555 = vadd.f32 %v1102, %v2554
    %v2556 = vpop.f32.mrb[0].mxu0
    %2557 = vdwg.mxu0
    %v2558 = vadd.f32 %v639, %v2484
    %v2559 = vadd.f32 %v641, %v2486
    %v2560 = vxor.u32 %v2558, 2147483648
    %v2561 = vxor.u32 %v2559, 2147483648
    %v2562 = vmul.f32 %v2560, 1.442695
    %v2563 = vpow.pop %v2562
    %v2564 = vmul.f32 %v2561, 1.442695
    %v2565 = vpow.pop %v2564
    %v2566 = vadd.f32 %v2563, 1.0
    %v2567 = vadd.f32 %v2565, 1.0
    %v2568 = vrcp.pop %v2566
    %v2569 = vmul.f32 1.0, %v2568
    %v2570 = vrcp.pop %v2567
    %v2571 = vmul.f32 1.0, %v2570
    %v2572 = vmul.f32 %v2569, %v2555
    %v2573 = vadd.f32 %v789, %v2572
    %v2574 = vtanh.pop %v2573
    %v2575 = vsub.f32 1.0, %v2571
    %v2576 = vmul.f32 %v2575, %v2574
    %v2577 = vmul.f32 %v2571, %v2250
    %v2578 = vadd.f32 %v2576, %v2577
    %s2579 = scalar_lea.vmem %s5, 64
    %2580 = vst [vmem:[%s2579] sm:$0xff] %v2416
    %s2581 = scalar_lea.vmem %s5, 176
    %2582 = vst [vmem:[%s2581 + $0x8] sm:$0xff] %v2578
    %2583 = vmatprep.subr.mxu0 %v813
    %2584 = vmatpush1.msra.mxu0 %v812
    %2585 = vmatprep.subr.mxu0 %v816
    %2586 = vmatpush1.msra.mxu0 %v815
    %2587 = vmatprep.subr.mxu0 %v819
    %2588 = vmatpush1.msra.mxu0 %v818
    %2589 = vmatprep.subr.mxu0 %v822
    %2590 = vmatpush1.msra.mxu0 %v821
    %2591 = vmatprep.subr.mxu0 %v825
    %2592 = vmatpush1.msra.mxu0 %v824
    %2593 = vmatprep.subr.mxu0 %v828
    %2594 = vmatpush1.msra.mxu0 %v827
    %2595 = vmatprep.subr.mxu0 %v831
    %2596 = vmatpush1.msra.mxu0 %v830
    %2597 = vmatprep.subr.mxu0 %v834
    %2598 = vmatpush1.msra.mxu0 %v833
    %2599 = vmatprep.subr.mxu0 %v837
    %2600 = vmatpush1.msra.mxu0 %v836
    %2601 = vmatprep.subr.mxu0 %v840
    %2602 = vmatpush1.msra.mxu0 %v839
    %2603 = vmatprep.subr.mxu0 %v843
    %2604 = vmatpush1.msra.mxu0 %v842
    %2605 = vmatprep.subr.mxu0 %v846
    %2606 = vmatpush1.msra.mxu0 %v845
    %2607 = vmatprep.subr.mxu0 %v849
    %2608 = vmatpush1.msra.mxu0 %v848
    %2609 = vmatprep.subr.mxu0 %v852
    %2610 = vmatpush1.msra.mxu0 %v851
    %2611 = vmatprep.subr.mxu0 %v855
    %2612 = vmatpush1.msra.mxu0 %v854
    %2613 = vmatprep.subr.mxu0 %v858
    %2614 = vmatpush1.msra.mxu0 %v857
    %2615 = vmatprep.subr.mxu0 0.0
    %2616 = vmatpush1.msra.mxu0 0.0
    %2617 = vmatprep.subr.mxu0 0.0
    %2618 = vmatpush1.msra.mxu0 0.0
    %2619 = vmatprep.subr.mxu0 0.0
    %2620 = vmatpush1.msra.mxu0 0.0
    %2621 = vmatprep.subr.mxu0 0.0
    %2622 = vmatpush1.msra.mxu0 0.0
    %2623 = vmatprep.subr.mxu0 0.0
    %2624 = vmatpush1.msra.mxu0 0.0
    %2625 = vmatprep.subr.mxu0 0.0
    %2626 = vmatpush1.msra.mxu0 0.0
    %2627 = vmatprep.subr.mxu0 0.0
    %2628 = vmatpush1.msra.mxu0 0.0
    %2629 = vmatprep.subr.mxu0 0.0
    %2630 = vmatpush1.msra.mxu0 0.0
    %2631 = vmatprep.subr.mxu0 0.0
    %2632 = vmatpush1.msra.mxu0 0.0
    %2633 = vmatprep.subr.mxu0 0.0
    %2634 = vmatpush1.msra.mxu0 0.0
    %2635 = vmatprep.subr.mxu0 0.0
    %2636 = vmatpush1.msra.mxu0 0.0
    %2637 = vmatprep.subr.mxu0 0.0
    %2638 = vmatpush1.msra.mxu0 0.0
    %2639 = vmatprep.subr.mxu0 0.0
    %2640 = vmatpush1.msra.mxu0 0.0
    %2641 = vmatprep.subr.mxu0 0.0
    %2642 = vmatpush1.msra.mxu0 0.0
    %2643 = vmatprep.subr.mxu0 0.0
    %2644 = vmatpush1.msra.mxu0 0.0
    %2645 = vmatprep.subr.mxu0 0.0
    %2646 = vmatpush1.msra.mxu0 0.0
    %2647 = vmatprep.mubr.f32.mxu0 0.0
    %2648 = vmatmul.mubr.f32.gmra.mrb[0].mxu0 %v2416
    %v2649 = vpop.f32.mrb[0].mxu0
    %v2650 = vadd.f32 %v916, %v2649
    %v2651 = vpop.f32.mrb[0].mxu0
    %v2652 = vadd.f32 %v920, %v2651
    %2653 = vdwg.mxu0
    %2654 = vmatprep.subr.mxu0 0.0
    %2655 = vmatpush1.msra.mxu0 %v814
    %2656 = vmatprep.subr.mxu0 0.0
    %2657 = vmatpush1.msra.mxu0 %v817
    %2658 = vmatprep.subr.mxu0 0.0
    %2659 = vmatpush1.msra.mxu0 %v820
    %2660 = vmatprep.subr.mxu0 0.0
    %2661 = vmatpush1.msra.mxu0 %v823
    %2662 = vmatprep.subr.mxu0 0.0
    %2663 = vmatpush1.msra.mxu0 %v826
    %2664 = vmatprep.subr.mxu0 0.0
    %2665 = vmatpush1.msra.mxu0 %v829
    %2666 = vmatprep.subr.mxu0 0.0
    %2667 = vmatpush1.msra.mxu0 %v832
    %2668 = vmatprep.subr.mxu0 0.0
    %2669 = vmatpush1.msra.mxu0 %v835
    %2670 = vmatprep.subr.mxu0 0.0
    %2671 = vmatpush1.msra.mxu0 %v838
    %2672 = vmatprep.subr.mxu0 0.0
    %2673 = vmatpush1.msra.mxu0 %v841
    %2674 = vmatprep.subr.mxu0 0.0
    %2675 = vmatpush1.msra.mxu0 %v844
    %2676 = vmatprep.subr.mxu0 0.0
    %2677 = vmatpush1.msra.mxu0 %v847
    %2678 = vmatprep.subr.mxu0 0.0
    %2679 = vmatpush1.msra.mxu0 %v850
    %2680 = vmatprep.subr.mxu0 0.0
    %2681 = vmatpush1.msra.mxu0 %v853
    %2682 = vmatprep.subr.mxu0 0.0
    %2683 = vmatpush1.msra.mxu0 %v856
    %2684 = vmatprep.subr.mxu0 0.0
    %2685 = vmatpush1.msra.mxu0 %v859
    %2686 = vmatprep.subr.mxu0 0.0
    %2687 = vmatpush1.msra.mxu0 0.0
    %2688 = vmatprep.subr.mxu0 0.0
    %2689 = vmatpush1.msra.mxu0 0.0
    %2690 = vmatprep.subr.mxu0 0.0
    %2691 = vmatpush1.msra.mxu0 0.0
    %2692 = vmatprep.subr.mxu0 0.0
    %2693 = vmatpush1.msra.mxu0 0.0
    %2694 = vmatprep.subr.mxu0 0.0
    %2695 = vmatpush1.msra.mxu0 0.0
    %2696 = vmatprep.subr.mxu0 0.0
    %2697 = vmatpush1.msra.mxu0 0.0
    %2698 = vmatprep.subr.mxu0 0.0
    %2699 = vmatpush1.msra.mxu0 0.0
    %2700 = vmatprep.subr.mxu0 0.0
    %2701 = vmatpush1.msra.mxu0 0.0
    %2702 = vmatprep.subr.mxu0 0.0
    %2703 = vmatpush1.msra.mxu0 0.0
    %2704 = vmatprep.subr.mxu0 0.0
    %2705 = vmatpush1.msra.mxu0 0.0
    %2706 = vmatprep.subr.mxu0 0.0
    %2707 = vmatpush1.msra.mxu0 0.0
    %2708 = vmatprep.subr.mxu0 0.0
    %2709 = vmatpush1.msra.mxu0 0.0
    %2710 = vmatprep.subr.mxu0 0.0
    %2711 = vmatpush1.msra.mxu0 0.0
    %2712 = vmatprep.subr.mxu0 0.0
    %2713 = vmatpush1.msra.mxu0 0.0
    %2714 = vmatprep.subr.mxu0 0.0
    %2715 = vmatpush1.msra.mxu0 0.0
    %2716 = vmatprep.subr.mxu0 0.0
    %2717 = vmatpush1.msra.mxu0 0.0
    %2718 = vmatprep.mubr.f32.mxu0 0.0
    %2719 = vmatmul.mubr.f32.gmra.mrb[0].mxu0 %v2416
    %v2720 = vpop.f32.mrb[0].mxu0
    %v2721 = vadd.f32 %v924, %v2720
    %v2722 = vpop.f32.mrb[0].mxu0
    %2723 = vdwg.mxu0
    %v2724 = vadd.f32 %v266, %v2650
    %v2725 = vadd.f32 %v268, %v2652
    %v2726 = vxor.u32 %v2724, 2147483648
    %v2727 = vxor.u32 %v2725, 2147483648
    %v2728 = vmul.f32 %v2726, 1.442695
    %v2729 = vpow.pop %v2728
    %v2730 = vmul.f32 %v2727, 1.442695
    %v2731 = vpow.pop %v2730
    %v2732 = vadd.f32 %v2729, 1.0
    %v2733 = vadd.f32 %v2731, 1.0
    %v2734 = vrcp.pop %v2732
    %v2735 = vmul.f32 1.0, %v2734
    %v2736 = vrcp.pop %v2733
    %v2737 = vmul.f32 1.0, %v2736
    %v2738 = vmul.f32 %v2735, %v2721
    %v2739 = vadd.f32 %v422, %v2738
    %v2740 = vtanh.pop %v2739
    %v2741 = vsub.f32 1.0, %v2737
    %v2742 = vmul.f32 %v2741, %v2740
    %v2743 = vmul.f32 %v2737, %v2416
    %v2744 = vadd.f32 %v2742, %v2743
    %2745 = vmatprep.subr.mxu0 %v863
    %2746 = vmatpush1.msra.mxu0 %v862
    %2747 = vmatprep.subr.mxu0 %v866
    %2748 = vmatpush1.msra.mxu0 %v865
    %2749 = vmatprep.subr.mxu0 %v869
    %2750 = vmatpush1.msra.mxu0 %v868
    %2751 = vmatprep.subr.mxu0 %v872
    %2752 = vmatpush1.msra.mxu0 %v871
    %2753 = vmatprep.subr.mxu0 %v875
    %2754 = vmatpush1.msra.mxu0 %v874
    %2755 = vmatprep.subr.mxu0 %v878
    %2756 = vmatpush1.msra.mxu0 %v877
    %2757 = vmatprep.subr.mxu0 %v881
    %2758 = vmatpush1.msra.mxu0 %v880
    %2759 = vmatprep.subr.mxu0 %v884
    %2760 = vmatpush1.msra.mxu0 %v883
    %2761 = vmatprep.subr.mxu0 %v887
    %2762 = vmatpush1.msra.mxu0 %v886
    %2763 = vmatprep.subr.mxu0 %v890
    %2764 = vmatpush1.msra.mxu0 %v889
    %2765 = vmatprep.subr.mxu0 %v893
    %2766 = vmatpush1.msra.mxu0 %v892
    %2767 = vmatprep.subr.mxu0 %v896
    %2768 = vmatpush1.msra.mxu0 %v895
    %2769 = vmatprep.subr.mxu0 %v899
    %2770 = vmatpush1.msra.mxu0 %v898
    %2771 = vmatprep.subr.mxu0 %v902
    %2772 = vmatpush1.msra.mxu0 %v901
    %2773 = vmatprep.subr.mxu0 %v905
    %2774 = vmatpush1.msra.mxu0 %v904
    %2775 = vmatprep.subr.mxu0 %v908
    %2776 = vmatpush1.msra.mxu0 %v907
    %2777 = vmatprep.subr.mxu0 0.0
    %2778 = vmatpush1.msra.mxu0 0.0
    %2779 = vmatprep.subr.mxu0 0.0
    %2780 = vmatpush1.msra.mxu0 0.0
    %2781 = vmatprep.subr.mxu0 0.0
    %2782 = vmatpush1.msra.mxu0 0.0
    %2783 = vmatprep.subr.mxu0 0.0
    %2784 = vmatpush1.msra.mxu0 0.0
    %2785 = vmatprep.subr.mxu0 0.0
    %2786 = vmatpush1.msra.mxu0 0.0
    %2787 = vmatprep.subr.mxu0 0.0
    %2788 = vmatpush1.msra.mxu0 0.0
    %2789 = vmatprep.subr.mxu0 0.0
    %2790 = vmatpush1.msra.mxu0 0.0
    %2791 = vmatprep.subr.mxu0 0.0
    %2792 = vmatpush1.msra.mxu0 0.0
    %2793 = vmatprep.subr.mxu0 0.0
    %2794 = vmatpush1.msra.mxu0 0.0
    %2795 = vmatprep.subr.mxu0 0.0
    %2796 = vmatpush1.msra.mxu0 0.0
    %2797 = vmatprep.subr.mxu0 0.0
    %2798 = vmatpush1.msra.mxu0 0.0
    %2799 = vmatprep.subr.mxu0 0.0
    %2800 = vmatpush1.msra.mxu0 0.0
    %2801 = vmatprep.subr.mxu0 0.0
    %2802 = vmatpush1.msra.mxu0 0.0
    %2803 = vmatprep.subr.mxu0 0.0
    %2804 = vmatpush1.msra.mxu0 0.0
    %2805 = vmatprep.subr.mxu0 0.0
    %2806 = vmatpush1.msra.mxu0 0.0
    %2807 = vmatprep.subr.mxu0 0.0
    %2808 = vmatpush1.msra.mxu0 0.0
    %2809 = vmatprep.mubr.f32.mxu0 0.0
    %2810 = vmatmul.mubr.f32.gmra.mrb[0].mxu0 %v2578
    %v2811 = vpop.f32.mrb[0].mxu0
    %v2812 = vadd.f32 %v1094, %v2811
    %v2813 = vpop.f32.mrb[0].mxu0
    %v2814 = vadd.f32 %v1098, %v2813
    %2815 = vdwg.mxu0
    %2816 = vmatprep.subr.mxu0 0.0
    %2817 = vmatpush1.msra.mxu0 %v864
    %2818 = vmatprep.subr.mxu0 0.0
    %2819 = vmatpush1.msra.mxu0 %v867
    %2820 = vmatprep.subr.mxu0 0.0
    %2821 = vmatpush1.msra.mxu0 %v870
    %2822 = vmatprep.subr.mxu0 0.0
    %2823 = vmatpush1.msra.mxu0 %v873
    %2824 = vmatprep.subr.mxu0 0.0
    %2825 = vmatpush1.msra.mxu0 %v876
    %2826 = vmatprep.subr.mxu0 0.0
    %2827 = vmatpush1.msra.mxu0 %v879
    %2828 = vmatprep.subr.mxu0 0.0
    %2829 = vmatpush1.msra.mxu0 %v882
    %2830 = vmatprep.subr.mxu0 0.0
    %2831 = vmatpush1.msra.mxu0 %v885
    %2832 = vmatprep.subr.mxu0 0.0
    %2833 = vmatpush1.msra.mxu0 %v888
    %2834 = vmatprep.subr.mxu0 0.0
    %2835 = vmatpush1.msra.mxu0 %v891
    %2836 = vmatprep.subr.mxu0 0.0
    %2837 = vmatpush1.msra.mxu0 %v894
    %2838 = vmatprep.subr.mxu0 0.0
    %2839 = vmatpush1.msra.mxu0 %v897
    %2840 = vmatprep.subr.mxu0 0.0
    %2841 = vmatpush1.msra.mxu0 %v900
    %2842 = vmatprep.subr.mxu0 0.0
    %2843 = vmatpush1.msra.mxu0 %v903
    %2844 = vmatprep.subr.mxu0 0.0
    %2845 = vmatpush1.msra.mxu0 %v906
    %2846 = vmatprep.subr.mxu0 0.0
    %2847 = vmatpush1.msra.mxu0 %v909
    %2848 = vmatprep.subr.mxu0 0.0
    %2849 = vmatpush1.msra.mxu0 0.0
    %2850 = vmatprep.subr.mxu0 0.0
    %2851 = vmatpush1.msra.mxu0 0.0
    %2852 = vmatprep.subr.mxu0 0.0
    %2853 = vmatpush1.msra.mxu0 0.0
    %2854 = vmatprep.subr.mxu0 0.0
    %2855 = vmatpush1.msra.mxu0 0.0
    %2856 = vmatprep.subr.mxu0 0.0
    %2857 = vmatpush1.msra.mxu0 0.0
    %2858 = vmatprep.subr.mxu0 0.0
    %2859 = vmatpush1.msra.mxu0 0.0
    %2860 = vmatprep.subr.mxu0 0.0
    %2861 = vmatpush1.msra.mxu0 0.0
    %2862 = vmatprep.subr.mxu0 0.0
    %2863 = vmatpush1.msra.mxu0 0.0
    %2864 = vmatprep.subr.mxu0 0.0
    %2865 = vmatpush1.msra.mxu0 0.0
    %2866 = vmatprep.subr.mxu0 0.0
    %2867 = vmatpush1.msra.mxu0 0.0
    %2868 = vmatprep.subr.mxu0 0.0
    %2869 = vmatpush1.msra.mxu0 0.0
    %2870 = vmatprep.subr.mxu0 0.0
    %2871 = vmatpush1.msra.mxu0 0.0
    %2872 = vmatprep.subr.mxu0 0.0
    %2873 = vmatpush1.msra.mxu0 0.0
    %2874 = vmatprep.subr.mxu0 0.0
    %2875 = vmatpush1.msra.mxu0 0.0
    %2876 = vmatprep.subr.mxu0 0.0
    %2877 = vmatpush1.msra.mxu0 0.0
    %2878 = vmatprep.subr.mxu0 0.0
    %2879 = vmatpush1.msra.mxu0 0.0
    %2880 = vmatprep.mubr.f32.mxu0 0.0
    %2881 = vmatmul.mubr.f32.gmra.mrb[0].mxu0 %v2578
    %v2882 = vpop.f32.mrb[0].mxu0
    %v2883 = vadd.f32 %v1102, %v2882
    %v2884 = vpop.f32.mrb[0].mxu0
    %2885 = vdwg.mxu0
    %v2886 = vadd.f32 %v633, %v2812
    %v2887 = vadd.f32 %v635, %v2814
    %v2888 = vxor.u32 %v2886, 2147483648
    %v2889 = vxor.u32 %v2887, 2147483648
    %v2890 = vmul.f32 %v2888, 1.442695
    %v2891 = vpow.pop %v2890
    %v2892 = vmul.f32 %v2889, 1.442695
    %v2893 = vpow.pop %v2892
    %v2894 = vadd.f32 %v2891, 1.0
    %v2895 = vadd.f32 %v2893, 1.0
    %v2896 = vrcp.pop %v2894
    %v2897 = vmul.f32 1.0, %v2896
    %v2898 = vrcp.pop %v2895
    %v2899 = vmul.f32 1.0, %v2898
    %v2900 = vmul.f32 %v2897, %v2883
    %v2901 = vadd.f32 %v784, %v2900
    %v2902 = vtanh.pop %v2901
    %v2903 = vsub.f32 1.0, %v2899
    %v2904 = vmul.f32 %v2903, %v2902
    %v2905 = vmul.f32 %v2899, %v2578
    %v2906 = vadd.f32 %v2904, %v2905
    %s2907 = scalar_lea.vmem %s5, 80
    %2908 = vst [vmem:[%s2907] sm:$0xff] %v2744
    %s2909 = scalar_lea.vmem %s5, 160
    %2910 = vst [vmem:[%s2909 + $0x8] sm:$0xff] %v2906
    %2911 = vmatprep.subr.mxu0 %v813
    %2912 = vmatpush1.msra.mxu0 %v812
    %2913 = vmatprep.subr.mxu0 %v816
    %2914 = vmatpush1.msra.mxu0 %v815
    %2915 = vmatprep.subr.mxu0 %v819
    %2916 = vmatpush1.msra.mxu0 %v818
    %2917 = vmatprep.subr.mxu0 %v822
    %2918 = vmatpush1.msra.mxu0 %v821
    %2919 = vmatprep.subr.mxu0 %v825
    %2920 = vmatpush1.msra.mxu0 %v824
    %2921 = vmatprep.subr.mxu0 %v828
    %2922 = vmatpush1.msra.mxu0 %v827
    %2923 = vmatprep.subr.mxu0 %v831
    %2924 = vmatpush1.msra.mxu0 %v830
    %2925 = vmatprep.subr.mxu0 %v834
    %2926 = vmatpush1.msra.mxu0 %v833
    %2927 = vmatprep.subr.mxu0 %v837
    %2928 = vmatpush1.msra.mxu0 %v836
    %2929 = vmatprep.subr.mxu0 %v840
    %2930 = vmatpush1.msra.mxu0 %v839
    %2931 = vmatprep.subr.mxu0 %v843
    %2932 = vmatpush1.msra.mxu0 %v842
    %2933 = vmatprep.subr.mxu0 %v846
    %2934 = vmatpush1.msra.mxu0 %v845
    %2935 = vmatprep.subr.mxu0 %v849
    %2936 = vmatpush1.msra.mxu0 %v848
    %2937 = vmatprep.subr.mxu0 %v852
    %2938 = vmatpush1.msra.mxu0 %v851
    %2939 = vmatprep.subr.mxu0 %v855
    %2940 = vmatpush1.msra.mxu0 %v854
    %2941 = vmatprep.subr.mxu0 %v858
    %2942 = vmatpush1.msra.mxu0 %v857
    %2943 = vmatprep.subr.mxu0 0.0
    %2944 = vmatpush1.msra.mxu0 0.0
    %2945 = vmatprep.subr.mxu0 0.0
    %2946 = vmatpush1.msra.mxu0 0.0
    %2947 = vmatprep.subr.mxu0 0.0
    %2948 = vmatpush1.msra.mxu0 0.0
    %2949 = vmatprep.subr.mxu0 0.0
    %2950 = vmatpush1.msra.mxu0 0.0
    %2951 = vmatprep.subr.mxu0 0.0
    %2952 = vmatpush1.msra.mxu0 0.0
    %2953 = vmatprep.subr.mxu0 0.0
    %2954 = vmatpush1.msra.mxu0 0.0
    %2955 = vmatprep.subr.mxu0 0.0
    %2956 = vmatpush1.msra.mxu0 0.0
    %2957 = vmatprep.subr.mxu0 0.0
    %2958 = vmatpush1.msra.mxu0 0.0
    %2959 = vmatprep.subr.mxu0 0.0
    %2960 = vmatpush1.msra.mxu0 0.0
    %2961 = vmatprep.subr.mxu0 0.0
    %2962 = vmatpush1.msra.mxu0 0.0
    %2963 = vmatprep.subr.mxu0 0.0
    %2964 = vmatpush1.msra.mxu0 0.0
    %2965 = vmatprep.subr.mxu0 0.0
    %2966 = vmatpush1.msra.mxu0 0.0
    %2967 = vmatprep.subr.mxu0 0.0
    %2968 = vmatpush1.msra.mxu0 0.0
    %2969 = vmatprep.subr.mxu0 0.0
    %2970 = vmatpush1.msra.mxu0 0.0
    %2971 = vmatprep.subr.mxu0 0.0
    %2972 = vmatpush1.msra.mxu0 0.0
    %2973 = vmatprep.subr.mxu0 0.0
    %2974 = vmatpush1.msra.mxu0 0.0
    %2975 = vmatprep.mubr.f32.mxu0 0.0
    %2976 = vmatmul.mubr.f32.gmra.mrb[0].mxu0 %v2744
    %v2977 = vpop.f32.mrb[0].mxu0
    %v2978 = vadd.f32 %v916, %v2977
    %v2979 = vpop.f32.mrb[0].mxu0
    %v2980 = vadd.f32 %v920, %v2979
    %2981 = vdwg.mxu0
    %2982 = vmatprep.subr.mxu0 0.0
    %2983 = vmatpush1.msra.mxu0 %v814
    %2984 = vmatprep.subr.mxu0 0.0
    %2985 = vmatpush1.msra.mxu0 %v817
    %2986 = vmatprep.subr.mxu0 0.0
    %2987 = vmatpush1.msra.mxu0 %v820
    %2988 = vmatprep.subr.mxu0 0.0
    %2989 = vmatpush1.msra.mxu0 %v823
    %2990 = vmatprep.subr.mxu0 0.0
    %2991 = vmatpush1.msra.mxu0 %v826
    %2992 = vmatprep.subr.mxu0 0.0
    %2993 = vmatpush1.msra.mxu0 %v829
    %2994 = vmatprep.subr.mxu0 0.0
    %2995 = vmatpush1.msra.mxu0 %v832
    %2996 = vmatprep.subr.mxu0 0.0
    %2997 = vmatpush1.msra.mxu0 %v835
    %2998 = vmatprep.subr.mxu0 0.0
    %2999 = vmatpush1.msra.mxu0 %v838
    %3000 = vmatprep.subr.mxu0 0.0
    %3001 = vmatpush1.msra.mxu0 %v841
    %3002 = vmatprep.subr.mxu0 0.0
    %3003 = vmatpush1.msra.mxu0 %v844
    %3004 = vmatprep.subr.mxu0 0.0
    %3005 = vmatpush1.msra.mxu0 %v847
    %3006 = vmatprep.subr.mxu0 0.0
    %3007 = vmatpush1.msra.mxu0 %v850
    %3008 = vmatprep.subr.mxu0 0.0
    %3009 = vmatpush1.msra.mxu0 %v853
    %3010 = vmatprep.subr.mxu0 0.0
    %3011 = vmatpush1.msra.mxu0 %v856
    %3012 = vmatprep.subr.mxu0 0.0
    %3013 = vmatpush1.msra.mxu0 %v859
    %3014 = vmatprep.subr.mxu0 0.0
    %3015 = vmatpush1.msra.mxu0 0.0
    %3016 = vmatprep.subr.mxu0 0.0
    %3017 = vmatpush1.msra.mxu0 0.0
    %3018 = vmatprep.subr.mxu0 0.0
    %3019 = vmatpush1.msra.mxu0 0.0
    %3020 = vmatprep.subr.mxu0 0.0
    %3021 = vmatpush1.msra.mxu0 0.0
    %3022 = vmatprep.subr.mxu0 0.0
    %3023 = vmatpush1.msra.mxu0 0.0
    %3024 = vmatprep.subr.mxu0 0.0
    %3025 = vmatpush1.msra.mxu0 0.0
    %3026 = vmatprep.subr.mxu0 0.0
    %3027 = vmatpush1.msra.mxu0 0.0
    %3028 = vmatprep.subr.mxu0 0.0
    %3029 = vmatpush1.msra.mxu0 0.0
    %3030 = vmatprep.subr.mxu0 0.0
    %3031 = vmatpush1.msra.mxu0 0.0
    %3032 = vmatprep.subr.mxu0 0.0
    %3033 = vmatpush1.msra.mxu0 0.0
    %3034 = vmatprep.subr.mxu0 0.0
    %3035 = vmatpush1.msra.mxu0 0.0
    %3036 = vmatprep.subr.mxu0 0.0
    %3037 = vmatpush1.msra.mxu0 0.0
    %3038 = vmatprep.subr.mxu0 0.0
    %3039 = vmatpush1.msra.mxu0 0.0
    %3040 = vmatprep.subr.mxu0 0.0
    %3041 = vmatpush1.msra.mxu0 0.0
    %3042 = vmatprep.subr.mxu0 0.0
    %3043 = vmatpush1.msra.mxu0 0.0
    %3044 = vmatprep.subr.mxu0 0.0
    %3045 = vmatpush1.msra.mxu0 0.0
    %3046 = vmatprep.mubr.f32.mxu0 0.0
    %3047 = vmatmul.mubr.f32.gmra.mrb[0].mxu0 %v2744
    %v3048 = vpop.f32.mrb[0].mxu0
    %v3049 = vadd.f32 %v924, %v3048
    %v3050 = vpop.f32.mrb[0].mxu0
    %3051 = vdwg.mxu0
    %v3052 = vadd.f32 %v272, %v2978
    %v3053 = vadd.f32 %v274, %v2980
    %v3054 = vxor.u32 %v3052, 2147483648
    %v3055 = vxor.u32 %v3053, 2147483648
    %v3056 = vmul.f32 %v3054, 1.442695
    %v3057 = vpow.pop %v3056
    %v3058 = vmul.f32 %v3055, 1.442695
    %v3059 = vpow.pop %v3058
    %v3060 = vadd.f32 %v3057, 1.0
    %v3061 = vadd.f32 %v3059, 1.0
    %v3062 = vrcp.pop %v3060
    %v3063 = vmul.f32 1.0, %v3062
    %v3064 = vrcp.pop %v3061
    %v3065 = vmul.f32 1.0, %v3064
    %v3066 = vmul.f32 %v3063, %v3049
    %v3067 = vadd.f32 %v427, %v3066
    %v3068 = vtanh.pop %v3067
    %v3069 = vsub.f32 1.0, %v3065
    %v3070 = vmul.f32 %v3069, %v3068
    %v3071 = vmul.f32 %v3065, %v2744
    %v3072 = vadd.f32 %v3070, %v3071
    %3073 = vmatprep.subr.mxu0 %v863
    %3074 = vmatpush1.msra.mxu0 %v862
    %3075 = vmatprep.subr.mxu0 %v866
    %3076 = vmatpush1.msra.mxu0 %v865
    %3077 = vmatprep.subr.mxu0 %v869
    %3078 = vmatpush1.msra.mxu0 %v868
    %3079 = vmatprep.subr.mxu0 %v872
    %3080 = vmatpush1.msra.mxu0 %v871
    %3081 = vmatprep.subr.mxu0 %v875
    %3082 = vmatpush1.msra.mxu0 %v874
    %3083 = vmatprep.subr.mxu0 %v878
    %3084 = vmatpush1.msra.mxu0 %v877
    %3085 = vmatprep.subr.mxu0 %v881
    %3086 = vmatpush1.msra.mxu0 %v880
    %3087 = vmatprep.subr.mxu0 %v884
    %3088 = vmatpush1.msra.mxu0 %v883
    %3089 = vmatprep.subr.mxu0 %v887
    %3090 = vmatpush1.msra.mxu0 %v886
    %3091 = vmatprep.subr.mxu0 %v890
    %3092 = vmatpush1.msra.mxu0 %v889
    %3093 = vmatprep.subr.mxu0 %v893
    %3094 = vmatpush1.msra.mxu0 %v892
    %3095 = vmatprep.subr.mxu0 %v896
    %3096 = vmatpush1.msra.mxu0 %v895
    %3097 = vmatprep.subr.mxu0 %v899
    %3098 = vmatpush1.msra.mxu0 %v898
    %3099 = vmatprep.subr.mxu0 %v902
    %3100 = vmatpush1.msra.mxu0 %v901
    %3101 = vmatprep.subr.mxu0 %v905
    %3102 = vmatpush1.msra.mxu0 %v904
    %3103 = vmatprep.subr.mxu0 %v908
    %3104 = vmatpush1.msra.mxu0 %v907
    %3105 = vmatprep.subr.mxu0 0.0
    %3106 = vmatpush1.msra.mxu0 0.0
    %3107 = vmatprep.subr.mxu0 0.0
    %3108 = vmatpush1.msra.mxu0 0.0
    %3109 = vmatprep.subr.mxu0 0.0
    %3110 = vmatpush1.msra.mxu0 0.0
    %3111 = vmatprep.subr.mxu0 0.0
    %3112 = vmatpush1.msra.mxu0 0.0
    %3113 = vmatprep.subr.mxu0 0.0
    %3114 = vmatpush1.msra.mxu0 0.0
    %3115 = vmatprep.subr.mxu0 0.0
    %3116 = vmatpush1.msra.mxu0 0.0
    %3117 = vmatprep.subr.mxu0 0.0
    %3118 = vmatpush1.msra.mxu0 0.0
    %3119 = vmatprep.subr.mxu0 0.0
    %3120 = vmatpush1.msra.mxu0 0.0
    %3121 = vmatprep.subr.mxu0 0.0
    %3122 = vmatpush1.msra.mxu0 0.0
    %3123 = vmatprep.subr.mxu0 0.0
    %3124 = vmatpush1.msra.mxu0 0.0
    %3125 = vmatprep.subr.mxu0 0.0
    %3126 = vmatpush1.msra.mxu0 0.0
    %3127 = vmatprep.subr.mxu0 0.0
    %3128 = vmatpush1.msra.mxu0 0.0
    %3129 = vmatprep.subr.mxu0 0.0
    %3130 = vmatpush1.msra.mxu0 0.0
    %3131 = vmatprep.subr.mxu0 0.0
    %3132 = vmatpush1.msra.mxu0 0.0
    %3133 = vmatprep.subr.mxu0 0.0
    %3134 = vmatpush1.msra.mxu0 0.0
    %3135 = vmatprep.subr.mxu0 0.0
    %3136 = vmatpush1.msra.mxu0 0.0
    %3137 = vmatprep.mubr.f32.mxu0 0.0
    %3138 = vmatmul.mubr.f32.gmra.mrb[0].mxu0 %v2906
    %v3139 = vpop.f32.mrb[0].mxu0
    %v3140 = vadd.f32 %v1094, %v3139
    %v3141 = vpop.f32.mrb[0].mxu0
    %v3142 = vadd.f32 %v1098, %v3141
    %3143 = vdwg.mxu0
    %3144 = vmatprep.subr.mxu0 0.0
    %3145 = vmatpush1.msra.mxu0 %v864
    %3146 = vmatprep.subr.mxu0 0.0
    %3147 = vmatpush1.msra.mxu0 %v867
    %3148 = vmatprep.subr.mxu0 0.0
    %3149 = vmatpush1.msra.mxu0 %v870
    %3150 = vmatprep.subr.mxu0 0.0
    %3151 = vmatpush1.msra.mxu0 %v873
    %3152 = vmatprep.subr.mxu0 0.0
    %3153 = vmatpush1.msra.mxu0 %v876
    %3154 = vmatprep.subr.mxu0 0.0
    %3155 = vmatpush1.msra.mxu0 %v879
    %3156 = vmatprep.subr.mxu0 0.0
    %3157 = vmatpush1.msra.mxu0 %v882
    %3158 = vmatprep.subr.mxu0 0.0
    %3159 = vmatpush1.msra.mxu0 %v885
    %3160 = vmatprep.subr.mxu0 0.0
    %3161 = vmatpush1.msra.mxu0 %v888
    %3162 = vmatprep.subr.mxu0 0.0
    %3163 = vmatpush1.msra.mxu0 %v891
    %3164 = vmatprep.subr.mxu0 0.0
    %3165 = vmatpush1.msra.mxu0 %v894
    %3166 = vmatprep.subr.mxu0 0.0
    %3167 = vmatpush1.msra.mxu0 %v897
    %3168 = vmatprep.subr.mxu0 0.0
    %3169 = vmatpush1.msra.mxu0 %v900
    %3170 = vmatprep.subr.mxu0 0.0
    %3171 = vmatpush1.msra.mxu0 %v903
    %3172 = vmatprep.subr.mxu0 0.0
    %3173 = vmatpush1.msra.mxu0 %v906
    %3174 = vmatprep.subr.mxu0 0.0
    %3175 = vmatpush1.msra.mxu0 %v909
    %3176 = vmatprep.subr.mxu0 0.0
    %3177 = vmatpush1.msra.mxu0 0.0
    %3178 = vmatprep.subr.mxu0 0.0
    %3179 = vmatpush1.msra.mxu0 0.0
    %3180 = vmatprep.subr.mxu0 0.0
    %3181 = vmatpush1.msra.mxu0 0.0
    %3182 = vmatprep.subr.mxu0 0.0
    %3183 = vmatpush1.msra.mxu0 0.0
    %3184 = vmatprep.subr.mxu0 0.0
    %3185 = vmatpush1.msra.mxu0 0.0
    %3186 = vmatprep.subr.mxu0 0.0
    %3187 = vmatpush1.msra.mxu0 0.0
    %3188 = vmatprep.subr.mxu0 0.0
    %3189 = vmatpush1.msra.mxu0 0.0
    %3190 = vmatprep.subr.mxu0 0.0
    %3191 = vmatpush1.msra.mxu0 0.0
    %3192 = vmatprep.subr.mxu0 0.0
    %3193 = vmatpush1.msra.mxu0 0.0
    %3194 = vmatprep.subr.mxu0 0.0
    %3195 = vmatpush1.msra.mxu0 0.0
    %3196 = vmatprep.subr.mxu0 0.0
    %3197 = vmatpush1.msra.mxu0 0.0
    %3198 = vmatprep.subr.mxu0 0.0
    %3199 = vmatpush1.msra.mxu0 0.0
    %3200 = vmatprep.subr.mxu0 0.0
    %3201 = vmatpush1.msra.mxu0 0.0
    %3202 = vmatprep.subr.mxu0 0.0
    %3203 = vmatpush1.msra.mxu0 0.0
    %3204 = vmatprep.subr.mxu0 0.0
    %3205 = vmatpush1.msra.mxu0 0.0
    %3206 = vmatprep.subr.mxu0 0.0
    %3207 = vmatpush1.msra.mxu0 0.0
    %3208 = vmatprep.mubr.f32.mxu0 0.0
    %3209 = vmatmul.mubr.f32.gmra.mrb[0].mxu0 %v2906
    %v3210 = vpop.f32.mrb[0].mxu0
    %v3211 = vadd.f32 %v1102, %v3210
    %v3212 = vpop.f32.mrb[0].mxu0
    %3213 = vdwg.mxu0
    %v3214 = vadd.f32 %v627, %v3140
    %v3215 = vadd.f32 %v629, %v3142
    %v3216 = vxor.u32 %v3214, 2147483648
    %v3217 = vxor.u32 %v3215, 2147483648
    %v3218 = vmul.f32 %v3216, 1.442695
    %v3219 = vpow.pop %v3218
    %v3220 = vmul.f32 %v3217, 1.442695
    %v3221 = vpow.pop %v3220
    %v3222 = vadd.f32 %v3219, 1.0
    %v3223 = vadd.f32 %v3221, 1.0
    %v3224 = vrcp.pop %v3222
    %v3225 = vmul.f32 1.0, %v3224
    %v3226 = vrcp.pop %v3223
    %v3227 = vmul.f32 1.0, %v3226
    %v3228 = vmul.f32 %v3225, %v3211
    %v3229 = vadd.f32 %v779, %v3228
    %v3230 = vtanh.pop %v3229
    %v3231 = vsub.f32 1.0, %v3227
    %v3232 = vmul.f32 %v3231, %v3230
    %v3233 = vmul.f32 %v3227, %v2906
    %v3234 = vadd.f32 %v3232, %v3233
    %s3235 = scalar_lea.vmem %s5, 96
    %3236 = vst [vmem:[%s3235] sm:$0xff] %v3072
    %s3237 = scalar_lea.vmem %s5, 144
    %3238 = vst [vmem:[%s3237 + $0x8] sm:$0xff] %v3234
    %3239 = vmatprep.subr.mxu0 %v813
    %3240 = vmatpush1.msra.mxu0 %v812
    %3241 = vmatprep.subr.mxu0 %v816
    %3242 = vmatpush1.msra.mxu0 %v815
    %3243 = vmatprep.subr.mxu0 %v819
    %3244 = vmatpush1.msra.mxu0 %v818
    %3245 = vmatprep.subr.mxu0 %v822
    %3246 = vmatpush1.msra.mxu0 %v821
    %3247 = vmatprep.subr.mxu0 %v825
    %3248 = vmatpush1.msra.mxu0 %v824
    %3249 = vmatprep.subr.mxu0 %v828
    %3250 = vmatpush1.msra.mxu0 %v827
    %3251 = vmatprep.subr.mxu0 %v831
    %3252 = vmatpush1.msra.mxu0 %v830
    %3253 = vmatprep.subr.mxu0 %v834
    %3254 = vmatpush1.msra.mxu0 %v833
    %3255 = vmatprep.subr.mxu0 %v837
    %3256 = vmatpush1.msra.mxu0 %v836
    %3257 = vmatprep.subr.mxu0 %v840
    %3258 = vmatpush1.msra.mxu0 %v839
    %3259 = vmatprep.subr.mxu0 %v843
    %3260 = vmatpush1.msra.mxu0 %v842
    %3261 = vmatprep.subr.mxu0 %v846
    %3262 = vmatpush1.msra.mxu0 %v845
    %3263 = vmatprep.subr.mxu0 %v849
    %3264 = vmatpush1.msra.mxu0 %v848
    %3265 = vmatprep.subr.mxu0 %v852
    %3266 = vmatpush1.msra.mxu0 %v851
    %3267 = vmatprep.subr.mxu0 %v855
    %3268 = vmatpush1.msra.mxu0 %v854
    %3269 = vmatprep.subr.mxu0 %v858
    %3270 = vmatpush1.msra.mxu0 %v857
    %3271 = vmatprep.subr.mxu0 0.0
    %3272 = vmatpush1.msra.mxu0 0.0
    %3273 = vmatprep.subr.mxu0 0.0
    %3274 = vmatpush1.msra.mxu0 0.0
    %3275 = vmatprep.subr.mxu0 0.0
    %3276 = vmatpush1.msra.mxu0 0.0
    %3277 = vmatprep.subr.mxu0 0.0
    %3278 = vmatpush1.msra.mxu0 0.0
    %3279 = vmatprep.subr.mxu0 0.0
    %3280 = vmatpush1.msra.mxu0 0.0
    %3281 = vmatprep.subr.mxu0 0.0
    %3282 = vmatpush1.msra.mxu0 0.0
    %3283 = vmatprep.subr.mxu0 0.0
    %3284 = vmatpush1.msra.mxu0 0.0
    %3285 = vmatprep.subr.mxu0 0.0
    %3286 = vmatpush1.msra.mxu0 0.0
    %3287 = vmatprep.subr.mxu0 0.0
    %3288 = vmatpush1.msra.mxu0 0.0
    %3289 = vmatprep.subr.mxu0 0.0
    %3290 = vmatpush1.msra.mxu0 0.0
    %3291 = vmatprep.subr.mxu0 0.0
    %3292 = vmatpush1.msra.mxu0 0.0
    %3293 = vmatprep.subr.mxu0 0.0
    %3294 = vmatpush1.msra.mxu0 0.0
    %3295 = vmatprep.subr.mxu0 0.0
    %3296 = vmatpush1.msra.mxu0 0.0
    %3297 = vmatprep.subr.mxu0 0.0
    %3298 = vmatpush1.msra.mxu0 0.0
    %3299 = vmatprep.subr.mxu0 0.0
    %3300 = vmatpush1.msra.mxu0 0.0
    %3301 = vmatprep.subr.mxu0 0.0
    %3302 = vmatpush1.msra.mxu0 0.0
    %3303 = vmatprep.mubr.f32.mxu0 0.0
    %3304 = vmatmul.mubr.f32.gmra.mrb[0].mxu0 %v3072
    %v3305 = vpop.f32.mrb[0].mxu0
    %v3306 = vadd.f32 %v916, %v3305
    %v3307 = vpop.f32.mrb[0].mxu0
    %v3308 = vadd.f32 %v920, %v3307
    %3309 = vdwg.mxu0
    %3310 = vmatprep.subr.mxu0 0.0
    %3311 = vmatpush1.msra.mxu0 %v814
    %3312 = vmatprep.subr.mxu0 0.0
    %3313 = vmatpush1.msra.mxu0 %v817
    %3314 = vmatprep.subr.mxu0 0.0
    %3315 = vmatpush1.msra.mxu0 %v820
    %3316 = vmatprep.subr.mxu0 0.0
    %3317 = vmatpush1.msra.mxu0 %v823
    %3318 = vmatprep.subr.mxu0 0.0
    %3319 = vmatpush1.msra.mxu0 %v826
    %3320 = vmatprep.subr.mxu0 0.0
    %3321 = vmatpush1.msra.mxu0 %v829
    %3322 = vmatprep.subr.mxu0 0.0
    %3323 = vmatpush1.msra.mxu0 %v832
    %3324 = vmatprep.subr.mxu0 0.0
    %3325 = vmatpush1.msra.mxu0 %v835
    %3326 = vmatprep.subr.mxu0 0.0
    %3327 = vmatpush1.msra.mxu0 %v838
    %3328 = vmatprep.subr.mxu0 0.0
    %3329 = vmatpush1.msra.mxu0 %v841
    %3330 = vmatprep.subr.mxu0 0.0
    %3331 = vmatpush1.msra.mxu0 %v844
    %3332 = vmatprep.subr.mxu0 0.0
    %3333 = vmatpush1.msra.mxu0 %v847
    %3334 = vmatprep.subr.mxu0 0.0
    %3335 = vmatpush1.msra.mxu0 %v850
    %3336 = vmatprep.subr.mxu0 0.0
    %3337 = vmatpush1.msra.mxu0 %v853
    %3338 = vmatprep.subr.mxu0 0.0
    %3339 = vmatpush1.msra.mxu0 %v856
    %3340 = vmatprep.subr.mxu0 0.0
    %3341 = vmatpush1.msra.mxu0 %v859
    %3342 = vmatprep.subr.mxu0 0.0
    %3343 = vmatpush1.msra.mxu0 0.0
    %3344 = vmatprep.subr.mxu0 0.0
    %3345 = vmatpush1.msra.mxu0 0.0
    %3346 = vmatprep.subr.mxu0 0.0
    %3347 = vmatpush1.msra.mxu0 0.0
    %3348 = vmatprep.subr.mxu0 0.0
    %3349 = vmatpush1.msra.mxu0 0.0
    %3350 = vmatprep.subr.mxu0 0.0
    %3351 = vmatpush1.msra.mxu0 0.0
    %3352 = vmatprep.subr.mxu0 0.0
    %3353 = vmatpush1.msra.mxu0 0.0
    %3354 = vmatprep.subr.mxu0 0.0
    %3355 = vmatpush1.msra.mxu0 0.0
    %3356 = vmatprep.subr.mxu0 0.0
    %3357 = vmatpush1.msra.mxu0 0.0
    %3358 = vmatprep.subr.mxu0 0.0
    %3359 = vmatpush1.msra.mxu0 0.0
    %3360 = vmatprep.subr.mxu0 0.0
    %3361 = vmatpush1.msra.mxu0 0.0
    %3362 = vmatprep.subr.mxu0 0.0
    %3363 = vmatpush1.msra.mxu0 0.0
    %3364 = vmatprep.subr.mxu0 0.0
    %3365 = vmatpush1.msra.mxu0 0.0
    %3366 = vmatprep.subr.mxu0 0.0
    %3367 = vmatpush1.msra.mxu0 0.0
    %3368 = vmatprep.subr.mxu0 0.0
    %3369 = vmatpush1.msra.mxu0 0.0
    %3370 = vmatprep.subr.mxu0 0.0
    %3371 = vmatpush1.msra.mxu0 0.0
    %3372 = vmatprep.subr.mxu0 0.0
    %3373 = vmatpush1.msra.mxu0 0.0
    %3374 = vmatprep.mubr.f32.mxu0 0.0
    %3375 = vmatmul.mubr.f32.gmra.mrb[0].mxu0 %v3072
    %v3376 = vpop.f32.mrb[0].mxu0
    %v3377 = vadd.f32 %v924, %v3376
    %v3378 = vpop.f32.mrb[0].mxu0
    %3379 = vdwg.mxu0
    %v3380 = vadd.f32 %v278, %v3306
    %v3381 = vadd.f32 %v280, %v3308
    %v3382 = vxor.u32 %v3380, 2147483648
    %v3383 = vxor.u32 %v3381, 2147483648
    %v3384 = vmul.f32 %v3382, 1.442695
    %v3385 = vpow.pop %v3384
    %v3386 = vmul.f32 %v3383, 1.442695
    %v3387 = vpow.pop %v3386
    %v3388 = vadd.f32 %v3385, 1.0
    %v3389 = vadd.f32 %v3387, 1.0
    %v3390 = vrcp.pop %v3388
    %v3391 = vmul.f32 1.0, %v3390
    %v3392 = vrcp.pop %v3389
    %v3393 = vmul.f32 1.0, %v3392
    %v3394 = vmul.f32 %v3391, %v3377
    %v3395 = vadd.f32 %v432, %v3394
    %v3396 = vtanh.pop %v3395
    %v3397 = vsub.f32 1.0, %v3393
    %v3398 = vmul.f32 %v3397, %v3396
    %v3399 = vmul.f32 %v3393, %v3072
    %v3400 = vadd.f32 %v3398, %v3399
    %3401 = vmatprep.subr.mxu0 %v863
    %3402 = vmatpush1.msra.mxu0 %v862
    %3403 = vmatprep.subr.mxu0 %v866
    %3404 = vmatpush1.msra.mxu0 %v865
    %3405 = vmatprep.subr.mxu0 %v869
    %3406 = vmatpush1.msra.mxu0 %v868
    %3407 = vmatprep.subr.mxu0 %v872
    %3408 = vmatpush1.msra.mxu0 %v871
    %3409 = vmatprep.subr.mxu0 %v875
    %3410 = vmatpush1.msra.mxu0 %v874
    %3411 = vmatprep.subr.mxu0 %v878
    %3412 = vmatpush1.msra.mxu0 %v877
    %3413 = vmatprep.subr.mxu0 %v881
    %3414 = vmatpush1.msra.mxu0 %v880
    %3415 = vmatprep.subr.mxu0 %v884
    %3416 = vmatpush1.msra.mxu0 %v883
    %3417 = vmatprep.subr.mxu0 %v887
    %3418 = vmatpush1.msra.mxu0 %v886
    %3419 = vmatprep.subr.mxu0 %v890
    %3420 = vmatpush1.msra.mxu0 %v889
    %3421 = vmatprep.subr.mxu0 %v893
    %3422 = vmatpush1.msra.mxu0 %v892
    %3423 = vmatprep.subr.mxu0 %v896
    %3424 = vmatpush1.msra.mxu0 %v895
    %3425 = vmatprep.subr.mxu0 %v899
    %3426 = vmatpush1.msra.mxu0 %v898
    %3427 = vmatprep.subr.mxu0 %v902
    %3428 = vmatpush1.msra.mxu0 %v901
    %3429 = vmatprep.subr.mxu0 %v905
    %3430 = vmatpush1.msra.mxu0 %v904
    %3431 = vmatprep.subr.mxu0 %v908
    %3432 = vmatpush1.msra.mxu0 %v907
    %3433 = vmatprep.subr.mxu0 0.0
    %3434 = vmatpush1.msra.mxu0 0.0
    %3435 = vmatprep.subr.mxu0 0.0
    %3436 = vmatpush1.msra.mxu0 0.0
    %3437 = vmatprep.subr.mxu0 0.0
    %3438 = vmatpush1.msra.mxu0 0.0
    %3439 = vmatprep.subr.mxu0 0.0
    %3440 = vmatpush1.msra.mxu0 0.0
    %3441 = vmatprep.subr.mxu0 0.0
    %3442 = vmatpush1.msra.mxu0 0.0
    %3443 = vmatprep.subr.mxu0 0.0
    %3444 = vmatpush1.msra.mxu0 0.0
    %3445 = vmatprep.subr.mxu0 0.0
    %3446 = vmatpush1.msra.mxu0 0.0
    %3447 = vmatprep.subr.mxu0 0.0
    %3448 = vmatpush1.msra.mxu0 0.0
    %3449 = vmatprep.subr.mxu0 0.0
    %3450 = vmatpush1.msra.mxu0 0.0
    %3451 = vmatprep.subr.mxu0 0.0
    %3452 = vmatpush1.msra.mxu0 0.0
    %3453 = vmatprep.subr.mxu0 0.0
    %3454 = vmatpush1.msra.mxu0 0.0
    %3455 = vmatprep.subr.mxu0 0.0
    %3456 = vmatpush1.msra.mxu0 0.0
    %3457 = vmatprep.subr.mxu0 0.0
    %3458 = vmatpush1.msra.mxu0 0.0
    %3459 = vmatprep.subr.mxu0 0.0
    %3460 = vmatpush1.msra.mxu0 0.0
    %3461 = vmatprep.subr.mxu0 0.0
    %3462 = vmatpush1.msra.mxu0 0.0
    %3463 = vmatprep.subr.mxu0 0.0
    %3464 = vmatpush1.msra.mxu0 0.0
    %3465 = vmatprep.mubr.f32.mxu0 0.0
    %3466 = vmatmul.mubr.f32.gmra.mrb[0].mxu0 %v3234
    %v3467 = vpop.f32.mrb[0].mxu0
    %v3468 = vadd.f32 %v1094, %v3467
    %v3469 = vpop.f32.mrb[0].mxu0
    %v3470 = vadd.f32 %v1098, %v3469
    %3471 = vdwg.mxu0
    %3472 = vmatprep.subr.mxu0 0.0
    %3473 = vmatpush1.msra.mxu0 %v864
    %3474 = vmatprep.subr.mxu0 0.0
    %3475 = vmatpush1.msra.mxu0 %v867
    %3476 = vmatprep.subr.mxu0 0.0
    %3477 = vmatpush1.msra.mxu0 %v870
    %3478 = vmatprep.subr.mxu0 0.0
    %3479 = vmatpush1.msra.mxu0 %v873
    %3480 = vmatprep.subr.mxu0 0.0
    %3481 = vmatpush1.msra.mxu0 %v876
    %3482 = vmatprep.subr.mxu0 0.0
    %3483 = vmatpush1.msra.mxu0 %v879
    %3484 = vmatprep.subr.mxu0 0.0
    %3485 = vmatpush1.msra.mxu0 %v882
    %3486 = vmatprep.subr.mxu0 0.0
    %3487 = vmatpush1.msra.mxu0 %v885
    %3488 = vmatprep.subr.mxu0 0.0
    %3489 = vmatpush1.msra.mxu0 %v888
    %3490 = vmatprep.subr.mxu0 0.0
    %3491 = vmatpush1.msra.mxu0 %v891
    %3492 = vmatprep.subr.mxu0 0.0
    %3493 = vmatpush1.msra.mxu0 %v894
    %3494 = vmatprep.subr.mxu0 0.0
    %3495 = vmatpush1.msra.mxu0 %v897
    %3496 = vmatprep.subr.mxu0 0.0
    %3497 = vmatpush1.msra.mxu0 %v900
    %3498 = vmatprep.subr.mxu0 0.0
    %3499 = vmatpush1.msra.mxu0 %v903
    %3500 = vmatprep.subr.mxu0 0.0
    %3501 = vmatpush1.msra.mxu0 %v906
    %3502 = vmatprep.subr.mxu0 0.0
    %3503 = vmatpush1.msra.mxu0 %v909
    %3504 = vmatprep.subr.mxu0 0.0
    %3505 = vmatpush1.msra.mxu0 0.0
    %3506 = vmatprep.subr.mxu0 0.0
    %3507 = vmatpush1.msra.mxu0 0.0
    %3508 = vmatprep.subr.mxu0 0.0
    %3509 = vmatpush1.msra.mxu0 0.0
    %3510 = vmatprep.subr.mxu0 0.0
    %3511 = vmatpush1.msra.mxu0 0.0
    %3512 = vmatprep.subr.mxu0 0.0
    %3513 = vmatpush1.msra.mxu0 0.0
    %3514 = vmatprep.subr.mxu0 0.0
    %3515 = vmatpush1.msra.mxu0 0.0
    %3516 = vmatprep.subr.mxu0 0.0
    %3517 = vmatpush1.msra.mxu0 0.0
    %3518 = vmatprep.subr.mxu0 0.0
    %3519 = vmatpush1.msra.mxu0 0.0
    %3520 = vmatprep.subr.mxu0 0.0
    %3521 = vmatpush1.msra.mxu0 0.0
    %3522 = vmatprep.subr.mxu0 0.0
    %3523 = vmatpush1.msra.mxu0 0.0
    %3524 = vmatprep.subr.mxu0 0.0
    %3525 = vmatpush1.msra.mxu0 0.0
    %3526 = vmatprep.subr.mxu0 0.0
    %3527 = vmatpush1.msra.mxu0 0.0
    %3528 = vmatprep.subr.mxu0 0.0
    %3529 = vmatpush1.msra.mxu0 0.0
    %3530 = vmatprep.subr.mxu0 0.0
    %3531 = vmatpush1.msra.mxu0 0.0
    %3532 = vmatprep.subr.mxu0 0.0
    %3533 = vmatpush1.msra.mxu0 0.0
    %3534 = vmatprep.subr.mxu0 0.0
    %3535 = vmatpush1.msra.mxu0 0.0
    %3536 = vmatprep.mubr.f32.mxu0 0.0
    %3537 = vmatmul.mubr.f32.gmra.mrb[0].mxu0 %v3234
    %v3538 = vpop.f32.mrb[0].mxu0
    %v3539 = vadd.f32 %v1102, %v3538
    %v3540 = vpop.f32.mrb[0].mxu0
    %3541 = vdwg.mxu0
    %v3542 = vadd.f32 %v621, %v3468
    %v3543 = vadd.f32 %v623, %v3470
    %v3544 = vxor.u32 %v3542, 2147483648
    %v3545 = vxor.u32 %v3543, 2147483648
    %v3546 = vmul.f32 %v3544, 1.442695
    %v3547 = vpow.pop %v3546
    %v3548 = vmul.f32 %v3545, 1.442695
    %v3549 = vpow.pop %v3548
    %v3550 = vadd.f32 %v3547, 1.0
    %v3551 = vadd.f32 %v3549, 1.0
    %v3552 = vrcp.pop %v3550
    %v3553 = vmul.f32 1.0, %v3552
    %v3554 = vrcp.pop %v3551
    %v3555 = vmul.f32 1.0, %v3554
    %v3556 = vmul.f32 %v3553, %v3539
    %v3557 = vadd.f32 %v774, %v3556
    %v3558 = vtanh.pop %v3557
    %v3559 = vsub.f32 1.0, %v3555
    %v3560 = vmul.f32 %v3559, %v3558
    %v3561 = vmul.f32 %v3555, %v3234
    %v3562 = vadd.f32 %v3560, %v3561
    %s3563 = scalar_lea.vmem %s5, 112
    %3564 = vst [vmem:[%s3563] sm:$0xff] %v3400
    %s3565 = scalar_lea.vmem %s5, 128
    %3566 = vst [vmem:[%s3565 + $0x8] sm:$0xff] %v3562
    %3567 = vmatprep.subr.mxu0 %v813
    %3568 = vmatpush1.msra.mxu0 %v812
    %3569 = vmatprep.subr.mxu0 %v816
    %3570 = vmatpush1.msra.mxu0 %v815
    %3571 = vmatprep.subr.mxu0 %v819
    %3572 = vmatpush1.msra.mxu0 %v818
    %3573 = vmatprep.subr.mxu0 %v822
    %3574 = vmatpush1.msra.mxu0 %v821
    %3575 = vmatprep.subr.mxu0 %v825
    %3576 = vmatpush1.msra.mxu0 %v824
    %3577 = vmatprep.subr.mxu0 %v828
    %3578 = vmatpush1.msra.mxu0 %v827
    %3579 = vmatprep.subr.mxu0 %v831
    %3580 = vmatpush1.msra.mxu0 %v830
    %3581 = vmatprep.subr.mxu0 %v834
    %3582 = vmatpush1.msra.mxu0 %v833
    %3583 = vmatprep.subr.mxu0 %v837
    %3584 = vmatpush1.msra.mxu0 %v836
    %3585 = vmatprep.subr.mxu0 %v840
    %3586 = vmatpush1.msra.mxu0 %v839
    %3587 = vmatprep.subr.mxu0 %v843
    %3588 = vmatpush1.msra.mxu0 %v842
    %3589 = vmatprep.subr.mxu0 %v846
    %3590 = vmatpush1.msra.mxu0 %v845
    %3591 = vmatprep.subr.mxu0 %v849
    %3592 = vmatpush1.msra.mxu0 %v848
    %3593 = vmatprep.subr.mxu0 %v852
    %3594 = vmatpush1.msra.mxu0 %v851
    %3595 = vmatprep.subr.mxu0 %v855
    %3596 = vmatpush1.msra.mxu0 %v854
    %3597 = vmatprep.subr.mxu0 %v858
    %3598 = vmatpush1.msra.mxu0 %v857
    %3599 = vmatprep.subr.mxu0 0.0
    %3600 = vmatpush1.msra.mxu0 0.0
    %3601 = vmatprep.subr.mxu0 0.0
    %3602 = vmatpush1.msra.mxu0 0.0
    %3603 = vmatprep.subr.mxu0 0.0
    %3604 = vmatpush1.msra.mxu0 0.0
    %3605 = vmatprep.subr.mxu0 0.0
    %3606 = vmatpush1.msra.mxu0 0.0
    %3607 = vmatprep.subr.mxu0 0.0
    %3608 = vmatpush1.msra.mxu0 0.0
    %3609 = vmatprep.subr.mxu0 0.0
    %3610 = vmatpush1.msra.mxu0 0.0
    %3611 = vmatprep.subr.mxu0 0.0
    %3612 = vmatpush1.msra.mxu0 0.0
    %3613 = vmatprep.subr.mxu0 0.0
    %3614 = vmatpush1.msra.mxu0 0.0
    %3615 = vmatprep.subr.mxu0 0.0
    %3616 = vmatpush1.msra.mxu0 0.0
    %3617 = vmatprep.subr.mxu0 0.0
    %3618 = vmatpush1.msra.mxu0 0.0
    %3619 = vmatprep.subr.mxu0 0.0
    %3620 = vmatpush1.msra.mxu0 0.0
    %3621 = vmatprep.subr.mxu0 0.0
    %3622 = vmatpush1.msra.mxu0 0.0
    %3623 = vmatprep.subr.mxu0 0.0
    %3624 = vmatpush1.msra.mxu0 0.0
    %3625 = vmatprep.subr.mxu0 0.0
    %3626 = vmatpush1.msra.mxu0 0.0
    %3627 = vmatprep.subr.mxu0 0.0
    %3628 = vmatpush1.msra.mxu0 0.0
    %3629 = vmatprep.subr.mxu0 0.0
    %3630 = vmatpush1.msra.mxu0 0.0
    %3631 = vmatprep.mubr.f32.mxu0 0.0
    %3632 = vmatmul.mubr.f32.gmra.mrb[0].mxu0 %v3400
    %v3633 = vpop.f32.mrb[0].mxu0
    %v3634 = vadd.f32 %v916, %v3633
    %v3635 = vpop.f32.mrb[0].mxu0
    %v3636 = vadd.f32 %v920, %v3635
    %3637 = vdwg.mxu0
    %3638 = vmatprep.subr.mxu0 0.0
    %3639 = vmatpush1.msra.mxu0 %v814
    %3640 = vmatprep.subr.mxu0 0.0
    %3641 = vmatpush1.msra.mxu0 %v817
    %3642 = vmatprep.subr.mxu0 0.0
    %3643 = vmatpush1.msra.mxu0 %v820
    %3644 = vmatprep.subr.mxu0 0.0
    %3645 = vmatpush1.msra.mxu0 %v823
    %3646 = vmatprep.subr.mxu0 0.0
    %3647 = vmatpush1.msra.mxu0 %v826
    %3648 = vmatprep.subr.mxu0 0.0
    %3649 = vmatpush1.msra.mxu0 %v829
    %3650 = vmatprep.subr.mxu0 0.0
    %3651 = vmatpush1.msra.mxu0 %v832
    %3652 = vmatprep.subr.mxu0 0.0
    %3653 = vmatpush1.msra.mxu0 %v835
    %3654 = vmatprep.subr.mxu0 0.0
    %3655 = vmatpush1.msra.mxu0 %v838
    %3656 = vmatprep.subr.mxu0 0.0
    %3657 = vmatpush1.msra.mxu0 %v841
    %3658 = vmatprep.subr.mxu0 0.0
    %3659 = vmatpush1.msra.mxu0 %v844
    %3660 = vmatprep.subr.mxu0 0.0
    %3661 = vmatpush1.msra.mxu0 %v847
    %3662 = vmatprep.subr.mxu0 0.0
    %3663 = vmatpush1.msra.mxu0 %v850
    %3664 = vmatprep.subr.mxu0 0.0
    %3665 = vmatpush1.msra.mxu0 %v853
    %3666 = vmatprep.subr.mxu0 0.0
    %3667 = vmatpush1.msra.mxu0 %v856
    %3668 = vmatprep.subr.mxu0 0.0
    %3669 = vmatpush1.msra.mxu0 %v859
    %3670 = vmatprep.subr.mxu0 0.0
    %3671 = vmatpush1.msra.mxu0 0.0
    %3672 = vmatprep.subr.mxu0 0.0
    %3673 = vmatpush1.msra.mxu0 0.0
    %3674 = vmatprep.subr.mxu0 0.0
    %3675 = vmatpush1.msra.mxu0 0.0
    %3676 = vmatprep.subr.mxu0 0.0
    %3677 = vmatpush1.msra.mxu0 0.0
    %3678 = vmatprep.subr.mxu0 0.0
    %3679 = vmatpush1.msra.mxu0 0.0
    %3680 = vmatprep.subr.mxu0 0.0
    %3681 = vmatpush1.msra.mxu0 0.0
    %3682 = vmatprep.subr.mxu0 0.0
    %3683 = vmatpush1.msra.mxu0 0.0
    %3684 = vmatprep.subr.mxu0 0.0
    %3685 = vmatpush1.msra.mxu0 0.0
    %3686 = vmatprep.subr.mxu0 0.0
    %3687 = vmatpush1.msra.mxu0 0.0
    %3688 = vmatprep.subr.mxu0 0.0
    %3689 = vmatpush1.msra.mxu0 0.0
    %3690 = vmatprep.subr.mxu0 0.0
    %3691 = vmatpush1.msra.mxu0 0.0
    %3692 = vmatprep.subr.mxu0 0.0
    %3693 = vmatpush1.msra.mxu0 0.0
    %3694 = vmatprep.subr.mxu0 0.0
    %3695 = vmatpush1.msra.mxu0 0.0
    %3696 = vmatprep.subr.mxu0 0.0
    %3697 = vmatpush1.msra.mxu0 0.0
    %3698 = vmatprep.subr.mxu0 0.0
    %3699 = vmatpush1.msra.mxu0 0.0
    %3700 = vmatprep.subr.mxu0 0.0
    %3701 = vmatpush1.msra.mxu0 0.0
    %3702 = vmatprep.mubr.f32.mxu0 0.0
    %3703 = vmatmul.mubr.f32.gmra.mrb[0].mxu0 %v3400
    %v3704 = vpop.f32.mrb[0].mxu0
    %v3705 = vadd.f32 %v924, %v3704
    %v3706 = vpop.f32.mrb[0].mxu0
    %3707 = vdwg.mxu0
    %v3708 = vadd.f32 %v284, %v3634
    %v3709 = vadd.f32 %v286, %v3636
    %v3710 = vxor.u32 %v3708, 2147483648
    %v3711 = vxor.u32 %v3709, 2147483648
    %v3712 = vmul.f32 %v3710, 1.442695
    %v3713 = vpow.pop %v3712
    %v3714 = vmul.f32 %v3711, 1.442695
    %v3715 = vpow.pop %v3714
    %v3716 = vadd.f32 %v3713, 1.0
    %v3717 = vadd.f32 %v3715, 1.0
    %v3718 = vrcp.pop %v3716
    %v3719 = vmul.f32 1.0, %v3718
    %v3720 = vrcp.pop %v3717
    %v3721 = vmul.f32 1.0, %v3720
    %v3722 = vmul.f32 %v3719, %v3705
    %v3723 = vadd.f32 %v437, %v3722
    %v3724 = vtanh.pop %v3723
    %v3725 = vsub.f32 1.0, %v3721
    %v3726 = vmul.f32 %v3725, %v3724
    %v3727 = vmul.f32 %v3721, %v3400
    %v3728 = vadd.f32 %v3726, %v3727
    %3729 = vmatprep.subr.mxu0 %v863
    %3730 = vmatpush1.msra.mxu0 %v862
    %3731 = vmatprep.subr.mxu0 %v866
    %3732 = vmatpush1.msra.mxu0 %v865
    %3733 = vmatprep.subr.mxu0 %v869
    %3734 = vmatpush1.msra.mxu0 %v868
    %3735 = vmatprep.subr.mxu0 %v872
    %3736 = vmatpush1.msra.mxu0 %v871
    %3737 = vmatprep.subr.mxu0 %v875
    %3738 = vmatpush1.msra.mxu0 %v874
    %3739 = vmatprep.subr.mxu0 %v878
    %3740 = vmatpush1.msra.mxu0 %v877
    %3741 = vmatprep.subr.mxu0 %v881
    %3742 = vmatpush1.msra.mxu0 %v880
    %3743 = vmatprep.subr.mxu0 %v884
    %3744 = vmatpush1.msra.mxu0 %v883
    %3745 = vmatprep.subr.mxu0 %v887
    %3746 = vmatpush1.msra.mxu0 %v886
    %3747 = vmatprep.subr.mxu0 %v890
    %3748 = vmatpush1.msra.mxu0 %v889
    %3749 = vmatprep.subr.mxu0 %v893
    %3750 = vmatpush1.msra.mxu0 %v892
    %3751 = vmatprep.subr.mxu0 %v896
    %3752 = vmatpush1.msra.mxu0 %v895
    %3753 = vmatprep.subr.mxu0 %v899
    %3754 = vmatpush1.msra.mxu0 %v898
    %3755 = vmatprep.subr.mxu0 %v902
    %3756 = vmatpush1.msra.mxu0 %v901
    %3757 = vmatprep.subr.mxu0 %v905
    %3758 = vmatpush1.msra.mxu0 %v904
    %3759 = vmatprep.subr.mxu0 %v908
    %3760 = vmatpush1.msra.mxu0 %v907
    %3761 = vmatprep.subr.mxu0 0.0
    %3762 = vmatpush1.msra.mxu0 0.0
    %3763 = vmatprep.subr.mxu0 0.0
    %3764 = vmatpush1.msra.mxu0 0.0
    %3765 = vmatprep.subr.mxu0 0.0
    %3766 = vmatpush1.msra.mxu0 0.0
    %3767 = vmatprep.subr.mxu0 0.0
    %3768 = vmatpush1.msra.mxu0 0.0
    %3769 = vmatprep.subr.mxu0 0.0
    %3770 = vmatpush1.msra.mxu0 0.0
    %3771 = vmatprep.subr.mxu0 0.0
    %3772 = vmatpush1.msra.mxu0 0.0
    %3773 = vmatprep.subr.mxu0 0.0
    %3774 = vmatpush1.msra.mxu0 0.0
    %3775 = vmatprep.subr.mxu0 0.0
    %3776 = vmatpush1.msra.mxu0 0.0
    %3777 = vmatprep.subr.mxu0 0.0
    %3778 = vmatpush1.msra.mxu0 0.0
    %3779 = vmatprep.subr.mxu0 0.0
    %3780 = vmatpush1.msra.mxu0 0.0
    %3781 = vmatprep.subr.mxu0 0.0
    %3782 = vmatpush1.msra.mxu0 0.0
    %3783 = vmatprep.subr.mxu0 0.0
    %3784 = vmatpush1.msra.mxu0 0.0
    %3785 = vmatprep.subr.mxu0 0.0
    %3786 = vmatpush1.msra.mxu0 0.0
    %3787 = vmatprep.subr.mxu0 0.0
    %3788 = vmatpush1.msra.mxu0 0.0
    %3789 = vmatprep.subr.mxu0 0.0
    %3790 = vmatpush1.msra.mxu0 0.0
    %3791 = vmatprep.subr.mxu0 0.0
    %3792 = vmatpush1.msra.mxu0 0.0
    %3793 = vmatprep.mubr.f32.mxu0 0.0
    %3794 = vmatmul.mubr.f32.gmra.mrb[0].mxu0 %v3562
    %v3795 = vpop.f32.mrb[0].mxu0
    %v3796 = vadd.f32 %v1094, %v3795
    %v3797 = vpop.f32.mrb[0].mxu0
    %v3798 = vadd.f32 %v1098, %v3797
    %3799 = vdwg.mxu0
    %3800 = vmatprep.subr.mxu0 0.0
    %3801 = vmatpush1.msra.mxu0 %v864
    %3802 = vmatprep.subr.mxu0 0.0
    %3803 = vmatpush1.msra.mxu0 %v867
    %3804 = vmatprep.subr.mxu0 0.0
    %3805 = vmatpush1.msra.mxu0 %v870
    %3806 = vmatprep.subr.mxu0 0.0
    %3807 = vmatpush1.msra.mxu0 %v873
    %3808 = vmatprep.subr.mxu0 0.0
    %3809 = vmatpush1.msra.mxu0 %v876
    %3810 = vmatprep.subr.mxu0 0.0
    %3811 = vmatpush1.msra.mxu0 %v879
    %3812 = vmatprep.subr.mxu0 0.0
    %3813 = vmatpush1.msra.mxu0 %v882
    %3814 = vmatprep.subr.mxu0 0.0
    %3815 = vmatpush1.msra.mxu0 %v885
    %3816 = vmatprep.subr.mxu0 0.0
    %3817 = vmatpush1.msra.mxu0 %v888
    %3818 = vmatprep.subr.mxu0 0.0
    %3819 = vmatpush1.msra.mxu0 %v891
    %3820 = vmatprep.subr.mxu0 0.0
    %3821 = vmatpush1.msra.mxu0 %v894
    %3822 = vmatprep.subr.mxu0 0.0
    %3823 = vmatpush1.msra.mxu0 %v897
    %3824 = vmatprep.subr.mxu0 0.0
    %3825 = vmatpush1.msra.mxu0 %v900
    %3826 = vmatprep.subr.mxu0 0.0
    %3827 = vmatpush1.msra.mxu0 %v903
    %3828 = vmatprep.subr.mxu0 0.0
    %3829 = vmatpush1.msra.mxu0 %v906
    %3830 = vmatprep.subr.mxu0 0.0
    %3831 = vmatpush1.msra.mxu0 %v909
    %3832 = vmatprep.subr.mxu0 0.0
    %3833 = vmatpush1.msra.mxu0 0.0
    %3834 = vmatprep.subr.mxu0 0.0
    %3835 = vmatpush1.msra.mxu0 0.0
    %3836 = vmatprep.subr.mxu0 0.0
    %3837 = vmatpush1.msra.mxu0 0.0
    %3838 = vmatprep.subr.mxu0 0.0
    %3839 = vmatpush1.msra.mxu0 0.0
    %3840 = vmatprep.subr.mxu0 0.0
    %3841 = vmatpush1.msra.mxu0 0.0
    %3842 = vmatprep.subr.mxu0 0.0
    %3843 = vmatpush1.msra.mxu0 0.0
    %3844 = vmatprep.subr.mxu0 0.0
    %3845 = vmatpush1.msra.mxu0 0.0
    %3846 = vmatprep.subr.mxu0 0.0
    %3847 = vmatpush1.msra.mxu0 0.0
    %3848 = vmatprep.subr.mxu0 0.0
    %3849 = vmatpush1.msra.mxu0 0.0
    %3850 = vmatprep.subr.mxu0 0.0
    %3851 = vmatpush1.msra.mxu0 0.0
    %3852 = vmatprep.subr.mxu0 0.0
    %3853 = vmatpush1.msra.mxu0 0.0
    %3854 = vmatprep.subr.mxu0 0.0
    %3855 = vmatpush1.msra.mxu0 0.0
    %3856 = vmatprep.subr.mxu0 0.0
    %3857 = vmatpush1.msra.mxu0 0.0
    %3858 = vmatprep.subr.mxu0 0.0
    %3859 = vmatpush1.msra.mxu0 0.0
    %3860 = vmatprep.subr.mxu0 0.0
    %3861 = vmatpush1.msra.mxu0 0.0
    %3862 = vmatprep.subr.mxu0 0.0
    %3863 = vmatpush1.msra.mxu0 0.0
    %3864 = vmatprep.mubr.f32.mxu0 0.0
    %3865 = vmatmul.mubr.f32.gmra.mrb[0].mxu0 %v3562
    %v3866 = vpop.f32.mrb[0].mxu0
    %v3867 = vadd.f32 %v1102, %v3866
    %v3868 = vpop.f32.mrb[0].mxu0
    %3869 = vdwg.mxu0
    %v3870 = vadd.f32 %v615, %v3796
    %v3871 = vadd.f32 %v617, %v3798
    %v3872 = vxor.u32 %v3870, 2147483648
    %v3873 = vxor.u32 %v3871, 2147483648
    %v3874 = vmul.f32 %v3872, 1.442695
    %v3875 = vpow.pop %v3874
    %v3876 = vmul.f32 %v3873, 1.442695
    %v3877 = vpow.pop %v3876
    %v3878 = vadd.f32 %v3875, 1.0
    %v3879 = vadd.f32 %v3877, 1.0
    %v3880 = vrcp.pop %v3878
    %v3881 = vmul.f32 1.0, %v3880
    %v3882 = vrcp.pop %v3879
    %v3883 = vmul.f32 1.0, %v3882
    %v3884 = vmul.f32 %v3881, %v3867
    %v3885 = vadd.f32 %v769, %v3884
    %v3886 = vtanh.pop %v3885
    %v3887 = vsub.f32 1.0, %v3883
    %v3888 = vmul.f32 %v3887, %v3886
    %v3889 = vmul.f32 %v3883, %v3562
    %v3890 = vadd.f32 %v3888, %v3889
    %3891 = vst [vmem:[%s3565] sm:$0xff] %v3728
    %3892 = vst [vmem:[%s3563 + $0x8] sm:$0xff] %v3890
    %3893 = vmatprep.subr.mxu0 %v813
    %3894 = vmatpush1.msra.mxu0 %v812
    %3895 = vmatprep.subr.mxu0 %v816
    %3896 = vmatpush1.msra.mxu0 %v815
    %3897 = vmatprep.subr.mxu0 %v819
    %3898 = vmatpush1.msra.mxu0 %v818
    %3899 = vmatprep.subr.mxu0 %v822
    %3900 = vmatpush1.msra.mxu0 %v821
    %3901 = vmatprep.subr.mxu0 %v825
    %3902 = vmatpush1.msra.mxu0 %v824
    %3903 = vmatprep.subr.mxu0 %v828
    %3904 = vmatpush1.msra.mxu0 %v827
    %3905 = vmatprep.subr.mxu0 %v831
    %3906 = vmatpush1.msra.mxu0 %v830
    %3907 = vmatprep.subr.mxu0 %v834
    %3908 = vmatpush1.msra.mxu0 %v833
    %3909 = vmatprep.subr.mxu0 %v837
    %3910 = vmatpush1.msra.mxu0 %v836
    %3911 = vmatprep.subr.mxu0 %v840
    %3912 = vmatpush1.msra.mxu0 %v839
    %3913 = vmatprep.subr.mxu0 %v843
    %3914 = vmatpush1.msra.mxu0 %v842
    %3915 = vmatprep.subr.mxu0 %v846
    %3916 = vmatpush1.msra.mxu0 %v845
    %3917 = vmatprep.subr.mxu0 %v849
    %3918 = vmatpush1.msra.mxu0 %v848
    %3919 = vmatprep.subr.mxu0 %v852
    %3920 = vmatpush1.msra.mxu0 %v851
    %3921 = vmatprep.subr.mxu0 %v855
    %3922 = vmatpush1.msra.mxu0 %v854
    %3923 = vmatprep.subr.mxu0 %v858
    %3924 = vmatpush1.msra.mxu0 %v857
    %3925 = vmatprep.subr.mxu0 0.0
    %3926 = vmatpush1.msra.mxu0 0.0
    %3927 = vmatprep.subr.mxu0 0.0
    %3928 = vmatpush1.msra.mxu0 0.0
    %3929 = vmatprep.subr.mxu0 0.0
    %3930 = vmatpush1.msra.mxu0 0.0
    %3931 = vmatprep.subr.mxu0 0.0
    %3932 = vmatpush1.msra.mxu0 0.0
    %3933 = vmatprep.subr.mxu0 0.0
    %3934 = vmatpush1.msra.mxu0 0.0
    %3935 = vmatprep.subr.mxu0 0.0
    %3936 = vmatpush1.msra.mxu0 0.0
    %3937 = vmatprep.subr.mxu0 0.0
    %3938 = vmatpush1.msra.mxu0 0.0
    %3939 = vmatprep.subr.mxu0 0.0
    %3940 = vmatpush1.msra.mxu0 0.0
    %3941 = vmatprep.subr.mxu0 0.0
    %3942 = vmatpush1.msra.mxu0 0.0
    %3943 = vmatprep.subr.mxu0 0.0
    %3944 = vmatpush1.msra.mxu0 0.0
    %3945 = vmatprep.subr.mxu0 0.0
    %3946 = vmatpush1.msra.mxu0 0.0
    %3947 = vmatprep.subr.mxu0 0.0
    %3948 = vmatpush1.msra.mxu0 0.0
    %3949 = vmatprep.subr.mxu0 0.0
    %3950 = vmatpush1.msra.mxu0 0.0
    %3951 = vmatprep.subr.mxu0 0.0
    %3952 = vmatpush1.msra.mxu0 0.0
    %3953 = vmatprep.subr.mxu0 0.0
    %3954 = vmatpush1.msra.mxu0 0.0
    %3955 = vmatprep.subr.mxu0 0.0
    %3956 = vmatpush1.msra.mxu0 0.0
    %3957 = vmatprep.mubr.f32.mxu0 0.0
    %3958 = vmatmul.mubr.f32.gmra.mrb[0].mxu0 %v3728
    %v3959 = vpop.f32.mrb[0].mxu0
    %v3960 = vadd.f32 %v916, %v3959
    %v3961 = vpop.f32.mrb[0].mxu0
    %v3962 = vadd.f32 %v920, %v3961
    %3963 = vdwg.mxu0
    %3964 = vmatprep.subr.mxu0 0.0
    %3965 = vmatpush1.msra.mxu0 %v814
    %3966 = vmatprep.subr.mxu0 0.0
    %3967 = vmatpush1.msra.mxu0 %v817
    %3968 = vmatprep.subr.mxu0 0.0
    %3969 = vmatpush1.msra.mxu0 %v820
    %3970 = vmatprep.subr.mxu0 0.0
    %3971 = vmatpush1.msra.mxu0 %v823
    %3972 = vmatprep.subr.mxu0 0.0
    %3973 = vmatpush1.msra.mxu0 %v826
    %3974 = vmatprep.subr.mxu0 0.0
    %3975 = vmatpush1.msra.mxu0 %v829
    %3976 = vmatprep.subr.mxu0 0.0
    %3977 = vmatpush1.msra.mxu0 %v832
    %3978 = vmatprep.subr.mxu0 0.0
    %3979 = vmatpush1.msra.mxu0 %v835
    %3980 = vmatprep.subr.mxu0 0.0
    %3981 = vmatpush1.msra.mxu0 %v838
    %3982 = vmatprep.subr.mxu0 0.0
    %3983 = vmatpush1.msra.mxu0 %v841
    %3984 = vmatprep.subr.mxu0 0.0
    %3985 = vmatpush1.msra.mxu0 %v844
    %3986 = vmatprep.subr.mxu0 0.0
    %3987 = vmatpush1.msra.mxu0 %v847
    %3988 = vmatprep.subr.mxu0 0.0
    %3989 = vmatpush1.msra.mxu0 %v850
    %3990 = vmatprep.subr.mxu0 0.0
    %3991 = vmatpush1.msra.mxu0 %v853
    %3992 = vmatprep.subr.mxu0 0.0
    %3993 = vmatpush1.msra.mxu0 %v856
    %3994 = vmatprep.subr.mxu0 0.0
    %3995 = vmatpush1.msra.mxu0 %v859
    %3996 = vmatprep.subr.mxu0 0.0
    %3997 = vmatpush1.msra.mxu0 0.0
    %3998 = vmatprep.subr.mxu0 0.0
    %3999 = vmatpush1.msra.mxu0 0.0
    %4000 = vmatprep.subr.mxu0 0.0
    %4001 = vmatpush1.msra.mxu0 0.0
    %4002 = vmatprep.subr.mxu0 0.0
    %4003 = vmatpush1.msra.mxu0 0.0
    %4004 = vmatprep.subr.mxu0 0.0
    %4005 = vmatpush1.msra.mxu0 0.0
    %4006 = vmatprep.subr.mxu0 0.0
    %4007 = vmatpush1.msra.mxu0 0.0
    %4008 = vmatprep.subr.mxu0 0.0
    %4009 = vmatpush1.msra.mxu0 0.0
    %4010 = vmatprep.subr.mxu0 0.0
    %4011 = vmatpush1.msra.mxu0 0.0
    %4012 = vmatprep.subr.mxu0 0.0
    %4013 = vmatpush1.msra.mxu0 0.0
    %4014 = vmatprep.subr.mxu0 0.0
    %4015 = vmatpush1.msra.mxu0 0.0
    %4016 = vmatprep.subr.mxu0 0.0
    %4017 = vmatpush1.msra.mxu0 0.0
    %4018 = vmatprep.subr.mxu0 0.0
    %4019 = vmatpush1.msra.mxu0 0.0
    %4020 = vmatprep.subr.mxu0 0.0
    %4021 = vmatpush1.msra.mxu0 0.0
    %4022 = vmatprep.subr.mxu0 0.0
    %4023 = vmatpush1.msra.mxu0 0.0
    %4024 = vmatprep.subr.mxu0 0.0
    %4025 = vmatpush1.msra.mxu0 0.0
    %4026 = vmatprep.subr.mxu0 0.0
    %4027 = vmatpush1.msra.mxu0 0.0
    %4028 = vmatprep.mubr.f32.mxu0 0.0
    %4029 = vmatmul.mubr.f32.gmra.mrb[0].mxu0 %v3728
    %v4030 = vpop.f32.mrb[0].mxu0
    %v4031 = vadd.f32 %v924, %v4030
    %v4032 = vpop.f32.mrb[0].mxu0
    %4033 = vdwg.mxu0
    %v4034 = vadd.f32 %v290, %v3960
    %v4035 = vadd.f32 %v292, %v3962
    %v4036 = vxor.u32 %v4034, 2147483648
    %v4037 = vxor.u32 %v4035, 2147483648
    %v4038 = vmul.f32 %v4036, 1.442695
    %v4039 = vpow.pop %v4038
    %v4040 = vmul.f32 %v4037, 1.442695
    %v4041 = vpow.pop %v4040
    %v4042 = vadd.f32 %v4039, 1.0
    %v4043 = vadd.f32 %v4041, 1.0
    %v4044 = vrcp.pop %v4042
    %v4045 = vmul.f32 1.0, %v4044
    %v4046 = vrcp.pop %v4043
    %v4047 = vmul.f32 1.0, %v4046
    %v4048 = vmul.f32 %v4045, %v4031
    %v4049 = vadd.f32 %v442, %v4048
    %v4050 = vtanh.pop %v4049
    %v4051 = vsub.f32 1.0, %v4047
    %v4052 = vmul.f32 %v4051, %v4050
    %v4053 = vmul.f32 %v4047, %v3728
    %v4054 = vadd.f32 %v4052, %v4053
    %4055 = vmatprep.subr.mxu0 %v863
    %4056 = vmatpush1.msra.mxu0 %v862
    %4057 = vmatprep.subr.mxu0 %v866
    %4058 = vmatpush1.msra.mxu0 %v865
    %4059 = vmatprep.subr.mxu0 %v869
    %4060 = vmatpush1.msra.mxu0 %v868
    %4061 = vmatprep.subr.mxu0 %v872
    %4062 = vmatpush1.msra.mxu0 %v871
    %4063 = vmatprep.subr.mxu0 %v875
    %4064 = vmatpush1.msra.mxu0 %v874
    %4065 = vmatprep.subr.mxu0 %v878
    %4066 = vmatpush1.msra.mxu0 %v877
    %4067 = vmatprep.subr.mxu0 %v881
    %4068 = vmatpush1.msra.mxu0 %v880
    %4069 = vmatprep.subr.mxu0 %v884
    %4070 = vmatpush1.msra.mxu0 %v883
    %4071 = vmatprep.subr.mxu0 %v887
    %4072 = vmatpush1.msra.mxu0 %v886
    %4073 = vmatprep.subr.mxu0 %v890
    %4074 = vmatpush1.msra.mxu0 %v889
    %4075 = vmatprep.subr.mxu0 %v893
    %4076 = vmatpush1.msra.mxu0 %v892
    %4077 = vmatprep.subr.mxu0 %v896
    %4078 = vmatpush1.msra.mxu0 %v895
    %4079 = vmatprep.subr.mxu0 %v899
    %4080 = vmatpush1.msra.mxu0 %v898
    %4081 = vmatprep.subr.mxu0 %v902
    %4082 = vmatpush1.msra.mxu0 %v901
    %4083 = vmatprep.subr.mxu0 %v905
    %4084 = vmatpush1.msra.mxu0 %v904
    %4085 = vmatprep.subr.mxu0 %v908
    %4086 = vmatpush1.msra.mxu0 %v907
    %4087 = vmatprep.subr.mxu0 0.0
    %4088 = vmatpush1.msra.mxu0 0.0
    %4089 = vmatprep.subr.mxu0 0.0
    %4090 = vmatpush1.msra.mxu0 0.0
    %4091 = vmatprep.subr.mxu0 0.0
    %4092 = vmatpush1.msra.mxu0 0.0
    %4093 = vmatprep.subr.mxu0 0.0
    %4094 = vmatpush1.msra.mxu0 0.0
    %4095 = vmatprep.subr.mxu0 0.0
    %4096 = vmatpush1.msra.mxu0 0.0
    %4097 = vmatprep.subr.mxu0 0.0
    %4098 = vmatpush1.msra.mxu0 0.0
    %4099 = vmatprep.subr.mxu0 0.0
    %4100 = vmatpush1.msra.mxu0 0.0
    %4101 = vmatprep.subr.mxu0 0.0
    %4102 = vmatpush1.msra.mxu0 0.0
    %4103 = vmatprep.subr.mxu0 0.0
    %4104 = vmatpush1.msra.mxu0 0.0
    %4105 = vmatprep.subr.mxu0 0.0
    %4106 = vmatpush1.msra.mxu0 0.0
    %4107 = vmatprep.subr.mxu0 0.0
    %4108 = vmatpush1.msra.mxu0 0.0
    %4109 = vmatprep.subr.mxu0 0.0
    %4110 = vmatpush1.msra.mxu0 0.0
    %4111 = vmatprep.subr.mxu0 0.0
    %4112 = vmatpush1.msra.mxu0 0.0
    %4113 = vmatprep.subr.mxu0 0.0
    %4114 = vmatpush1.msra.mxu0 0.0
    %4115 = vmatprep.subr.mxu0 0.0
    %4116 = vmatpush1.msra.mxu0 0.0
    %4117 = vmatprep.subr.mxu0 0.0
    %4118 = vmatpush1.msra.mxu0 0.0
    %4119 = vmatprep.mubr.f32.mxu0 0.0
    %4120 = vmatmul.mubr.f32.gmra.mrb[0].mxu0 %v3890
    %v4121 = vpop.f32.mrb[0].mxu0
    %v4122 = vadd.f32 %v1094, %v4121
    %v4123 = vpop.f32.mrb[0].mxu0
    %v4124 = vadd.f32 %v1098, %v4123
    %4125 = vdwg.mxu0
    %4126 = vmatprep.subr.mxu0 0.0
    %4127 = vmatpush1.msra.mxu0 %v864
    %4128 = vmatprep.subr.mxu0 0.0
    %4129 = vmatpush1.msra.mxu0 %v867
    %4130 = vmatprep.subr.mxu0 0.0
    %4131 = vmatpush1.msra.mxu0 %v870
    %4132 = vmatprep.subr.mxu0 0.0
    %4133 = vmatpush1.msra.mxu0 %v873
    %4134 = vmatprep.subr.mxu0 0.0
    %4135 = vmatpush1.msra.mxu0 %v876
    %4136 = vmatprep.subr.mxu0 0.0
    %4137 = vmatpush1.msra.mxu0 %v879
    %4138 = vmatprep.subr.mxu0 0.0
    %4139 = vmatpush1.msra.mxu0 %v882
    %4140 = vmatprep.subr.mxu0 0.0
    %4141 = vmatpush1.msra.mxu0 %v885
    %4142 = vmatprep.subr.mxu0 0.0
    %4143 = vmatpush1.msra.mxu0 %v888
    %4144 = vmatprep.subr.mxu0 0.0
    %4145 = vmatpush1.msra.mxu0 %v891
    %4146 = vmatprep.subr.mxu0 0.0
    %4147 = vmatpush1.msra.mxu0 %v894
    %4148 = vmatprep.subr.mxu0 0.0
    %4149 = vmatpush1.msra.mxu0 %v897
    %4150 = vmatprep.subr.mxu0 0.0
    %4151 = vmatpush1.msra.mxu0 %v900
    %4152 = vmatprep.subr.mxu0 0.0
    %4153 = vmatpush1.msra.mxu0 %v903
    %4154 = vmatprep.subr.mxu0 0.0
    %4155 = vmatpush1.msra.mxu0 %v906
    %4156 = vmatprep.subr.mxu0 0.0
    %4157 = vmatpush1.msra.mxu0 %v909
    %4158 = vmatprep.subr.mxu0 0.0
    %4159 = vmatpush1.msra.mxu0 0.0
    %4160 = vmatprep.subr.mxu0 0.0
    %4161 = vmatpush1.msra.mxu0 0.0
    %4162 = vmatprep.subr.mxu0 0.0
    %4163 = vmatpush1.msra.mxu0 0.0
    %4164 = vmatprep.subr.mxu0 0.0
    %4165 = vmatpush1.msra.mxu0 0.0
    %4166 = vmatprep.subr.mxu0 0.0
    %4167 = vmatpush1.msra.mxu0 0.0
    %4168 = vmatprep.subr.mxu0 0.0
    %4169 = vmatpush1.msra.mxu0 0.0
    %4170 = vmatprep.subr.mxu0 0.0
    %4171 = vmatpush1.msra.mxu0 0.0
    %4172 = vmatprep.subr.mxu0 0.0
    %4173 = vmatpush1.msra.mxu0 0.0
    %4174 = vmatprep.subr.mxu0 0.0
    %4175 = vmatpush1.msra.mxu0 0.0
    %4176 = vmatprep.subr.mxu0 0.0
    %4177 = vmatpush1.msra.mxu0 0.0
    %4178 = vmatprep.subr.mxu0 0.0
    %4179 = vmatpush1.msra.mxu0 0.0
    %4180 = vmatprep.subr.mxu0 0.0
    %4181 = vmatpush1.msra.mxu0 0.0
    %4182 = vmatprep.subr.mxu0 0.0
    %4183 = vmatpush1.msra.mxu0 0.0
    %4184 = vmatprep.subr.mxu0 0.0
    %4185 = vmatpush1.msra.mxu0 0.0
    %4186 = vmatprep.subr.mxu0 0.0
    %4187 = vmatpush1.msra.mxu0 0.0
    %4188 = vmatprep.subr.mxu0 0.0
    %4189 = vmatpush1.msra.mxu0 0.0
    %4190 = vmatprep.mubr.f32.mxu0 0.0
    %4191 = vmatmul.mubr.f32.gmra.mrb[0].mxu0 %v3890
    %v4192 = vpop.f32.mrb[0].mxu0
    %v4193 = vadd.f32 %v1102, %v4192
    %v4194 = vpop.f32.mrb[0].mxu0
    %4195 = vdwg.mxu0
    %v4196 = vadd.f32 %v609, %v4122
    %v4197 = vadd.f32 %v611, %v4124
    %v4198 = vxor.u32 %v4196, 2147483648
    %v4199 = vxor.u32 %v4197, 2147483648
    %v4200 = vmul.f32 %v4198, 1.442695
    %v4201 = vpow.pop %v4200
    %v4202 = vmul.f32 %v4199, 1.442695
    %v4203 = vpow.pop %v4202
    %v4204 = vadd.f32 %v4201, 1.0
    %v4205 = vadd.f32 %v4203, 1.0
    %v4206 = vrcp.pop %v4204
    %v4207 = vmul.f32 1.0, %v4206
    %v4208 = vrcp.pop %v4205
    %v4209 = vmul.f32 1.0, %v4208
    %v4210 = vmul.f32 %v4207, %v4193
    %v4211 = vadd.f32 %v764, %v4210
    %v4212 = vtanh.pop %v4211
    %v4213 = vsub.f32 1.0, %v4209
    %v4214 = vmul.f32 %v4213, %v4212
    %v4215 = vmul.f32 %v4209, %v3890
    %v4216 = vadd.f32 %v4214, %v4215
    %4217 = vst [vmem:[%s3237] sm:$0xff] %v4054
    %4218 = vst [vmem:[%s3235 + $0x8] sm:$0xff] %v4216
    %4219 = vmatprep.subr.mxu0 %v813
    %4220 = vmatpush1.msra.mxu0 %v812
    %4221 = vmatprep.subr.mxu0 %v816
    %4222 = vmatpush1.msra.mxu0 %v815
    %4223 = vmatprep.subr.mxu0 %v819
    %4224 = vmatpush1.msra.mxu0 %v818
    %4225 = vmatprep.subr.mxu0 %v822
    %4226 = vmatpush1.msra.mxu0 %v821
    %4227 = vmatprep.subr.mxu0 %v825
    %4228 = vmatpush1.msra.mxu0 %v824
    %4229 = vmatprep.subr.mxu0 %v828
    %4230 = vmatpush1.msra.mxu0 %v827
    %4231 = vmatprep.subr.mxu0 %v831
    %4232 = vmatpush1.msra.mxu0 %v830
    %4233 = vmatprep.subr.mxu0 %v834
    %4234 = vmatpush1.msra.mxu0 %v833
    %4235 = vmatprep.subr.mxu0 %v837
    %4236 = vmatpush1.msra.mxu0 %v836
    %4237 = vmatprep.subr.mxu0 %v840
    %4238 = vmatpush1.msra.mxu0 %v839
    %4239 = vmatprep.subr.mxu0 %v843
    %4240 = vmatpush1.msra.mxu0 %v842
    %4241 = vmatprep.subr.mxu0 %v846
    %4242 = vmatpush1.msra.mxu0 %v845
    %4243 = vmatprep.subr.mxu0 %v849
    %4244 = vmatpush1.msra.mxu0 %v848
    %4245 = vmatprep.subr.mxu0 %v852
    %4246 = vmatpush1.msra.mxu0 %v851
    %4247 = vmatprep.subr.mxu0 %v855
    %4248 = vmatpush1.msra.mxu0 %v854
    %4249 = vmatprep.subr.mxu0 %v858
    %4250 = vmatpush1.msra.mxu0 %v857
    %4251 = vmatprep.subr.mxu0 0.0
    %4252 = vmatpush1.msra.mxu0 0.0
    %4253 = vmatprep.subr.mxu0 0.0
    %4254 = vmatpush1.msra.mxu0 0.0
    %4255 = vmatprep.subr.mxu0 0.0
    %4256 = vmatpush1.msra.mxu0 0.0
    %4257 = vmatprep.subr.mxu0 0.0
    %4258 = vmatpush1.msra.mxu0 0.0
    %4259 = vmatprep.subr.mxu0 0.0
    %4260 = vmatpush1.msra.mxu0 0.0
    %4261 = vmatprep.subr.mxu0 0.0
    %4262 = vmatpush1.msra.mxu0 0.0
    %4263 = vmatprep.subr.mxu0 0.0
    %4264 = vmatpush1.msra.mxu0 0.0
    %4265 = vmatprep.subr.mxu0 0.0
    %4266 = vmatpush1.msra.mxu0 0.0
    %4267 = vmatprep.subr.mxu0 0.0
    %4268 = vmatpush1.msra.mxu0 0.0
    %4269 = vmatprep.subr.mxu0 0.0
    %4270 = vmatpush1.msra.mxu0 0.0
    %4271 = vmatprep.subr.mxu0 0.0
    %4272 = vmatpush1.msra.mxu0 0.0
    %4273 = vmatprep.subr.mxu0 0.0
    %4274 = vmatpush1.msra.mxu0 0.0
    %4275 = vmatprep.subr.mxu0 0.0
    %4276 = vmatpush1.msra.mxu0 0.0
    %4277 = vmatprep.subr.mxu0 0.0
    %4278 = vmatpush1.msra.mxu0 0.0
    %4279 = vmatprep.subr.mxu0 0.0
    %4280 = vmatpush1.msra.mxu0 0.0
    %4281 = vmatprep.subr.mxu0 0.0
    %4282 = vmatpush1.msra.mxu0 0.0
    %4283 = vmatprep.mubr.f32.mxu0 0.0
    %4284 = vmatmul.mubr.f32.gmra.mrb[0].mxu0 %v4054
    %v4285 = vpop.f32.mrb[0].mxu0
    %v4286 = vadd.f32 %v916, %v4285
    %v4287 = vpop.f32.mrb[0].mxu0
    %v4288 = vadd.f32 %v920, %v4287
    %4289 = vdwg.mxu0
    %4290 = vmatprep.subr.mxu0 0.0
    %4291 = vmatpush1.msra.mxu0 %v814
    %4292 = vmatprep.subr.mxu0 0.0
    %4293 = vmatpush1.msra.mxu0 %v817
    %4294 = vmatprep.subr.mxu0 0.0
    %4295 = vmatpush1.msra.mxu0 %v820
    %4296 = vmatprep.subr.mxu0 0.0
    %4297 = vmatpush1.msra.mxu0 %v823
    %4298 = vmatprep.subr.mxu0 0.0
    %4299 = vmatpush1.msra.mxu0 %v826
    %4300 = vmatprep.subr.mxu0 0.0
    %4301 = vmatpush1.msra.mxu0 %v829
    %4302 = vmatprep.subr.mxu0 0.0
    %4303 = vmatpush1.msra.mxu0 %v832
    %4304 = vmatprep.subr.mxu0 0.0
    %4305 = vmatpush1.msra.mxu0 %v835
    %4306 = vmatprep.subr.mxu0 0.0
    %4307 = vmatpush1.msra.mxu0 %v838
    %4308 = vmatprep.subr.mxu0 0.0
    %4309 = vmatpush1.msra.mxu0 %v841
    %4310 = vmatprep.subr.mxu0 0.0
    %4311 = vmatpush1.msra.mxu0 %v844
    %4312 = vmatprep.subr.mxu0 0.0
    %4313 = vmatpush1.msra.mxu0 %v847
    %4314 = vmatprep.subr.mxu0 0.0
    %4315 = vmatpush1.msra.mxu0 %v850
    %4316 = vmatprep.subr.mxu0 0.0
    %4317 = vmatpush1.msra.mxu0 %v853
    %4318 = vmatprep.subr.mxu0 0.0
    %4319 = vmatpush1.msra.mxu0 %v856
    %4320 = vmatprep.subr.mxu0 0.0
    %4321 = vmatpush1.msra.mxu0 %v859
    %4322 = vmatprep.subr.mxu0 0.0
    %4323 = vmatpush1.msra.mxu0 0.0
    %4324 = vmatprep.subr.mxu0 0.0
    %4325 = vmatpush1.msra.mxu0 0.0
    %4326 = vmatprep.subr.mxu0 0.0
    %4327 = vmatpush1.msra.mxu0 0.0
    %4328 = vmatprep.subr.mxu0 0.0
    %4329 = vmatpush1.msra.mxu0 0.0
    %4330 = vmatprep.subr.mxu0 0.0
    %4331 = vmatpush1.msra.mxu0 0.0
    %4332 = vmatprep.subr.mxu0 0.0
    %4333 = vmatpush1.msra.mxu0 0.0
    %4334 = vmatprep.subr.mxu0 0.0
    %4335 = vmatpush1.msra.mxu0 0.0
    %4336 = vmatprep.subr.mxu0 0.0
    %4337 = vmatpush1.msra.mxu0 0.0
    %4338 = vmatprep.subr.mxu0 0.0
    %4339 = vmatpush1.msra.mxu0 0.0
    %4340 = vmatprep.subr.mxu0 0.0
    %4341 = vmatpush1.msra.mxu0 0.0
    %4342 = vmatprep.subr.mxu0 0.0
    %4343 = vmatpush1.msra.mxu0 0.0
    %4344 = vmatprep.subr.mxu0 0.0
    %4345 = vmatpush1.msra.mxu0 0.0
    %4346 = vmatprep.subr.mxu0 0.0
    %4347 = vmatpush1.msra.mxu0 0.0
    %4348 = vmatprep.subr.mxu0 0.0
    %4349 = vmatpush1.msra.mxu0 0.0
    %4350 = vmatprep.subr.mxu0 0.0
    %4351 = vmatpush1.msra.mxu0 0.0
    %4352 = vmatprep.subr.mxu0 0.0
    %4353 = vmatpush1.msra.mxu0 0.0
    %4354 = vmatprep.mubr.f32.mxu0 0.0
    %4355 = vmatmul.mubr.f32.gmra.mrb[0].mxu0 %v4054
    %v4356 = vpop.f32.mrb[0].mxu0
    %v4357 = vadd.f32 %v924, %v4356
    %v4358 = vpop.f32.mrb[0].mxu0
    %4359 = vdwg.mxu0
    %v4360 = vadd.f32 %v296, %v4286
    %v4361 = vadd.f32 %v298, %v4288
    %v4362 = vxor.u32 %v4360, 2147483648
    %v4363 = vxor.u32 %v4361, 2147483648
    %v4364 = vmul.f32 %v4362, 1.442695
    %v4365 = vpow.pop %v4364
    %v4366 = vmul.f32 %v4363, 1.442695
    %v4367 = vpow.pop %v4366
    %v4368 = vadd.f32 %v4365, 1.0
    %v4369 = vadd.f32 %v4367, 1.0
    %v4370 = vrcp.pop %v4368
    %v4371 = vmul.f32 1.0, %v4370
    %v4372 = vrcp.pop %v4369
    %v4373 = vmul.f32 1.0, %v4372
    %v4374 = vmul.f32 %v4371, %v4357
    %v4375 = vadd.f32 %v447, %v4374
    %v4376 = vtanh.pop %v4375
    %v4377 = vsub.f32 1.0, %v4373
    %v4378 = vmul.f32 %v4377, %v4376
    %v4379 = vmul.f32 %v4373, %v4054
    %v4380 = vadd.f32 %v4378, %v4379
    %4381 = vmatprep.subr.mxu0 %v863
    %4382 = vmatpush1.msra.mxu0 %v862
    %4383 = vmatprep.subr.mxu0 %v866
    %4384 = vmatpush1.msra.mxu0 %v865
    %4385 = vmatprep.subr.mxu0 %v869
    %4386 = vmatpush1.msra.mxu0 %v868
    %4387 = vmatprep.subr.mxu0 %v872
    %4388 = vmatpush1.msra.mxu0 %v871
    %4389 = vmatprep.subr.mxu0 %v875
    %4390 = vmatpush1.msra.mxu0 %v874
    %4391 = vmatprep.subr.mxu0 %v878
    %4392 = vmatpush1.msra.mxu0 %v877
    %4393 = vmatprep.subr.mxu0 %v881
    %4394 = vmatpush1.msra.mxu0 %v880
    %4395 = vmatprep.subr.mxu0 %v884
    %4396 = vmatpush1.msra.mxu0 %v883
    %4397 = vmatprep.subr.mxu0 %v887
    %4398 = vmatpush1.msra.mxu0 %v886
    %4399 = vmatprep.subr.mxu0 %v890
    %4400 = vmatpush1.msra.mxu0 %v889
    %4401 = vmatprep.subr.mxu0 %v893
    %4402 = vmatpush1.msra.mxu0 %v892
    %4403 = vmatprep.subr.mxu0 %v896
    %4404 = vmatpush1.msra.mxu0 %v895
    %4405 = vmatprep.subr.mxu0 %v899
    %4406 = vmatpush1.msra.mxu0 %v898
    %4407 = vmatprep.subr.mxu0 %v902
    %4408 = vmatpush1.msra.mxu0 %v901
    %4409 = vmatprep.subr.mxu0 %v905
    %4410 = vmatpush1.msra.mxu0 %v904
    %4411 = vmatprep.subr.mxu0 %v908
    %4412 = vmatpush1.msra.mxu0 %v907
    %4413 = vmatprep.subr.mxu0 0.0
    %4414 = vmatpush1.msra.mxu0 0.0
    %4415 = vmatprep.subr.mxu0 0.0
    %4416 = vmatpush1.msra.mxu0 0.0
    %4417 = vmatprep.subr.mxu0 0.0
    %4418 = vmatpush1.msra.mxu0 0.0
    %4419 = vmatprep.subr.mxu0 0.0
    %4420 = vmatpush1.msra.mxu0 0.0
    %4421 = vmatprep.subr.mxu0 0.0
    %4422 = vmatpush1.msra.mxu0 0.0
    %4423 = vmatprep.subr.mxu0 0.0
    %4424 = vmatpush1.msra.mxu0 0.0
    %4425 = vmatprep.subr.mxu0 0.0
    %4426 = vmatpush1.msra.mxu0 0.0
    %4427 = vmatprep.subr.mxu0 0.0
    %4428 = vmatpush1.msra.mxu0 0.0
    %4429 = vmatprep.subr.mxu0 0.0
    %4430 = vmatpush1.msra.mxu0 0.0
    %4431 = vmatprep.subr.mxu0 0.0
    %4432 = vmatpush1.msra.mxu0 0.0
    %4433 = vmatprep.subr.mxu0 0.0
    %4434 = vmatpush1.msra.mxu0 0.0
    %4435 = vmatprep.subr.mxu0 0.0
    %4436 = vmatpush1.msra.mxu0 0.0
    %4437 = vmatprep.subr.mxu0 0.0
    %4438 = vmatpush1.msra.mxu0 0.0
    %4439 = vmatprep.subr.mxu0 0.0
    %4440 = vmatpush1.msra.mxu0 0.0
    %4441 = vmatprep.subr.mxu0 0.0
    %4442 = vmatpush1.msra.mxu0 0.0
    %4443 = vmatprep.subr.mxu0 0.0
    %4444 = vmatpush1.msra.mxu0 0.0
    %4445 = vmatprep.mubr.f32.mxu0 0.0
    %4446 = vmatmul.mubr.f32.gmra.mrb[0].mxu0 %v4216
    %v4447 = vpop.f32.mrb[0].mxu0
    %v4448 = vadd.f32 %v1094, %v4447
    %v4449 = vpop.f32.mrb[0].mxu0
    %v4450 = vadd.f32 %v1098, %v4449
    %4451 = vdwg.mxu0
    %4452 = vmatprep.subr.mxu0 0.0
    %4453 = vmatpush1.msra.mxu0 %v864
    %4454 = vmatprep.subr.mxu0 0.0
    %4455 = vmatpush1.msra.mxu0 %v867
    %4456 = vmatprep.subr.mxu0 0.0
    %4457 = vmatpush1.msra.mxu0 %v870
    %4458 = vmatprep.subr.mxu0 0.0
    %4459 = vmatpush1.msra.mxu0 %v873
    %4460 = vmatprep.subr.mxu0 0.0
    %4461 = vmatpush1.msra.mxu0 %v876
    %4462 = vmatprep.subr.mxu0 0.0
    %4463 = vmatpush1.msra.mxu0 %v879
    %4464 = vmatprep.subr.mxu0 0.0
    %4465 = vmatpush1.msra.mxu0 %v882
    %4466 = vmatprep.subr.mxu0 0.0
    %4467 = vmatpush1.msra.mxu0 %v885
    %4468 = vmatprep.subr.mxu0 0.0
    %4469 = vmatpush1.msra.mxu0 %v888
    %4470 = vmatprep.subr.mxu0 0.0
    %4471 = vmatpush1.msra.mxu0 %v891
    %4472 = vmatprep.subr.mxu0 0.0
    %4473 = vmatpush1.msra.mxu0 %v894
    %4474 = vmatprep.subr.mxu0 0.0
    %4475 = vmatpush1.msra.mxu0 %v897
    %4476 = vmatprep.subr.mxu0 0.0
    %4477 = vmatpush1.msra.mxu0 %v900
    %4478 = vmatprep.subr.mxu0 0.0
    %4479 = vmatpush1.msra.mxu0 %v903
    %4480 = vmatprep.subr.mxu0 0.0
    %4481 = vmatpush1.msra.mxu0 %v906
    %4482 = vmatprep.subr.mxu0 0.0
    %4483 = vmatpush1.msra.mxu0 %v909
    %4484 = vmatprep.subr.mxu0 0.0
    %4485 = vmatpush1.msra.mxu0 0.0
    %4486 = vmatprep.subr.mxu0 0.0
    %4487 = vmatpush1.msra.mxu0 0.0
    %4488 = vmatprep.subr.mxu0 0.0
    %4489 = vmatpush1.msra.mxu0 0.0
    %4490 = vmatprep.subr.mxu0 0.0
    %4491 = vmatpush1.msra.mxu0 0.0
    %4492 = vmatprep.subr.mxu0 0.0
    %4493 = vmatpush1.msra.mxu0 0.0
    %4494 = vmatprep.subr.mxu0 0.0
    %4495 = vmatpush1.msra.mxu0 0.0
    %4496 = vmatprep.subr.mxu0 0.0
    %4497 = vmatpush1.msra.mxu0 0.0
    %4498 = vmatprep.subr.mxu0 0.0
    %4499 = vmatpush1.msra.mxu0 0.0
    %4500 = vmatprep.subr.mxu0 0.0
    %4501 = vmatpush1.msra.mxu0 0.0
    %4502 = vmatprep.subr.mxu0 0.0
    %4503 = vmatpush1.msra.mxu0 0.0
    %4504 = vmatprep.subr.mxu0 0.0
    %4505 = vmatpush1.msra.mxu0 0.0
    %4506 = vmatprep.subr.mxu0 0.0
    %4507 = vmatpush1.msra.mxu0 0.0
    %4508 = vmatprep.subr.mxu0 0.0
    %4509 = vmatpush1.msra.mxu0 0.0
    %4510 = vmatprep.subr.mxu0 0.0
    %4511 = vmatpush1.msra.mxu0 0.0
    %4512 = vmatprep.subr.mxu0 0.0
    %4513 = vmatpush1.msra.mxu0 0.0
    %4514 = vmatprep.subr.mxu0 0.0
    %4515 = vmatpush1.msra.mxu0 0.0
    %4516 = vmatprep.mubr.f32.mxu0 0.0
    %4517 = vmatmul.mubr.f32.gmra.mrb[0].mxu0 %v4216
    %v4518 = vpop.f32.mrb[0].mxu0
    %v4519 = vadd.f32 %v1102, %v4518
    %v4520 = vpop.f32.mrb[0].mxu0
    %4521 = vdwg.mxu0
    %v4522 = vadd.f32 %v603, %v4448
    %v4523 = vadd.f32 %v605, %v4450
    %v4524 = vxor.u32 %v4522, 2147483648
    %v4525 = vxor.u32 %v4523, 2147483648
    %v4526 = vmul.f32 %v4524, 1.442695
    %v4527 = vpow.pop %v4526
    %v4528 = vmul.f32 %v4525, 1.442695
    %v4529 = vpow.pop %v4528
    %v4530 = vadd.f32 %v4527, 1.0
    %v4531 = vadd.f32 %v4529, 1.0
    %v4532 = vrcp.pop %v4530
    %v4533 = vmul.f32 1.0, %v4532
    %v4534 = vrcp.pop %v4531
    %v4535 = vmul.f32 1.0, %v4534
    %v4536 = vmul.f32 %v4533, %v4519
    %v4537 = vadd.f32 %v759, %v4536
    %v4538 = vtanh.pop %v4537
    %v4539 = vsub.f32 1.0, %v4535
    %v4540 = vmul.f32 %v4539, %v4538
    %v4541 = vmul.f32 %v4535, %v4216
    %v4542 = vadd.f32 %v4540, %v4541
    %4543 = vst [vmem:[%s2909] sm:$0xff] %v4380
    %4544 = vst [vmem:[%s2907 + $0x8] sm:$0xff] %v4542
    %4545 = vmatprep.subr.mxu0 %v813
    %4546 = vmatpush1.msra.mxu0 %v812
    %4547 = vmatprep.subr.mxu0 %v816
    %4548 = vmatpush1.msra.mxu0 %v815
    %4549 = vmatprep.subr.mxu0 %v819
    %4550 = vmatpush1.msra.mxu0 %v818
    %4551 = vmatprep.subr.mxu0 %v822
    %4552 = vmatpush1.msra.mxu0 %v821
    %4553 = vmatprep.subr.mxu0 %v825
    %4554 = vmatpush1.msra.mxu0 %v824
    %4555 = vmatprep.subr.mxu0 %v828
    %4556 = vmatpush1.msra.mxu0 %v827
    %4557 = vmatprep.subr.mxu0 %v831
    %4558 = vmatpush1.msra.mxu0 %v830
    %4559 = vmatprep.subr.mxu0 %v834
    %4560 = vmatpush1.msra.mxu0 %v833
    %4561 = vmatprep.subr.mxu0 %v837
    %4562 = vmatpush1.msra.mxu0 %v836
    %4563 = vmatprep.subr.mxu0 %v840
    %4564 = vmatpush1.msra.mxu0 %v839
    %4565 = vmatprep.subr.mxu0 %v843
    %4566 = vmatpush1.msra.mxu0 %v842
    %4567 = vmatprep.subr.mxu0 %v846
    %4568 = vmatpush1.msra.mxu0 %v845
    %4569 = vmatprep.subr.mxu0 %v849
    %4570 = vmatpush1.msra.mxu0 %v848
    %4571 = vmatprep.subr.mxu0 %v852
    %4572 = vmatpush1.msra.mxu0 %v851
    %4573 = vmatprep.subr.mxu0 %v855
    %4574 = vmatpush1.msra.mxu0 %v854
    %4575 = vmatprep.subr.mxu0 %v858
    %4576 = vmatpush1.msra.mxu0 %v857
    %4577 = vmatprep.subr.mxu0 0.0
    %4578 = vmatpush1.msra.mxu0 0.0
    %4579 = vmatprep.subr.mxu0 0.0
    %4580 = vmatpush1.msra.mxu0 0.0
    %4581 = vmatprep.subr.mxu0 0.0
    %4582 = vmatpush1.msra.mxu0 0.0
    %4583 = vmatprep.subr.mxu0 0.0
    %4584 = vmatpush1.msra.mxu0 0.0
    %4585 = vmatprep.subr.mxu0 0.0
    %4586 = vmatpush1.msra.mxu0 0.0
    %4587 = vmatprep.subr.mxu0 0.0
    %4588 = vmatpush1.msra.mxu0 0.0
    %4589 = vmatprep.subr.mxu0 0.0
    %4590 = vmatpush1.msra.mxu0 0.0
    %4591 = vmatprep.subr.mxu0 0.0
    %4592 = vmatpush1.msra.mxu0 0.0
    %4593 = vmatprep.subr.mxu0 0.0
    %4594 = vmatpush1.msra.mxu0 0.0
    %4595 = vmatprep.subr.mxu0 0.0
    %4596 = vmatpush1.msra.mxu0 0.0
    %4597 = vmatprep.subr.mxu0 0.0
    %4598 = vmatpush1.msra.mxu0 0.0
    %4599 = vmatprep.subr.mxu0 0.0
    %4600 = vmatpush1.msra.mxu0 0.0
    %4601 = vmatprep.subr.mxu0 0.0
    %4602 = vmatpush1.msra.mxu0 0.0
    %4603 = vmatprep.subr.mxu0 0.0
    %4604 = vmatpush1.msra.mxu0 0.0
    %4605 = vmatprep.subr.mxu0 0.0
    %4606 = vmatpush1.msra.mxu0 0.0
    %4607 = vmatprep.subr.mxu0 0.0
    %4608 = vmatpush1.msra.mxu0 0.0
    %4609 = vmatprep.mubr.f32.mxu0 0.0
    %4610 = vmatmul.mubr.f32.gmra.mrb[0].mxu0 %v4380
    %v4611 = vpop.f32.mrb[0].mxu0
    %v4612 = vadd.f32 %v916, %v4611
    %v4613 = vpop.f32.mrb[0].mxu0
    %v4614 = vadd.f32 %v920, %v4613
    %4615 = vdwg.mxu0
    %4616 = vmatprep.subr.mxu0 0.0
    %4617 = vmatpush1.msra.mxu0 %v814
    %4618 = vmatprep.subr.mxu0 0.0
    %4619 = vmatpush1.msra.mxu0 %v817
    %4620 = vmatprep.subr.mxu0 0.0
    %4621 = vmatpush1.msra.mxu0 %v820
    %4622 = vmatprep.subr.mxu0 0.0
    %4623 = vmatpush1.msra.mxu0 %v823
    %4624 = vmatprep.subr.mxu0 0.0
    %4625 = vmatpush1.msra.mxu0 %v826
    %4626 = vmatprep.subr.mxu0 0.0
    %4627 = vmatpush1.msra.mxu0 %v829
    %4628 = vmatprep.subr.mxu0 0.0
    %4629 = vmatpush1.msra.mxu0 %v832
    %4630 = vmatprep.subr.mxu0 0.0
    %4631 = vmatpush1.msra.mxu0 %v835
    %4632 = vmatprep.subr.mxu0 0.0
    %4633 = vmatpush1.msra.mxu0 %v838
    %4634 = vmatprep.subr.mxu0 0.0
    %4635 = vmatpush1.msra.mxu0 %v841
    %4636 = vmatprep.subr.mxu0 0.0
    %4637 = vmatpush1.msra.mxu0 %v844
    %4638 = vmatprep.subr.mxu0 0.0
    %4639 = vmatpush1.msra.mxu0 %v847
    %4640 = vmatprep.subr.mxu0 0.0
    %4641 = vmatpush1.msra.mxu0 %v850
    %4642 = vmatprep.subr.mxu0 0.0
    %4643 = vmatpush1.msra.mxu0 %v853
    %4644 = vmatprep.subr.mxu0 0.0
    %4645 = vmatpush1.msra.mxu0 %v856
    %4646 = vmatprep.subr.mxu0 0.0
    %4647 = vmatpush1.msra.mxu0 %v859
    %4648 = vmatprep.subr.mxu0 0.0
    %4649 = vmatpush1.msra.mxu0 0.0
    %4650 = vmatprep.subr.mxu0 0.0
    %4651 = vmatpush1.msra.mxu0 0.0
    %4652 = vmatprep.subr.mxu0 0.0
    %4653 = vmatpush1.msra.mxu0 0.0
    %4654 = vmatprep.subr.mxu0 0.0
    %4655 = vmatpush1.msra.mxu0 0.0
    %4656 = vmatprep.subr.mxu0 0.0
    %4657 = vmatpush1.msra.mxu0 0.0
    %4658 = vmatprep.subr.mxu0 0.0
    %4659 = vmatpush1.msra.mxu0 0.0
    %4660 = vmatprep.subr.mxu0 0.0
    %4661 = vmatpush1.msra.mxu0 0.0
    %4662 = vmatprep.subr.mxu0 0.0
    %4663 = vmatpush1.msra.mxu0 0.0
    %4664 = vmatprep.subr.mxu0 0.0
    %4665 = vmatpush1.msra.mxu0 0.0
    %4666 = vmatprep.subr.mxu0 0.0
    %4667 = vmatpush1.msra.mxu0 0.0
    %4668 = vmatprep.subr.mxu0 0.0
    %4669 = vmatpush1.msra.mxu0 0.0
    %4670 = vmatprep.subr.mxu0 0.0
    %4671 = vmatpush1.msra.mxu0 0.0
    %4672 = vmatprep.subr.mxu0 0.0
    %4673 = vmatpush1.msra.mxu0 0.0
    %4674 = vmatprep.subr.mxu0 0.0
    %4675 = vmatpush1.msra.mxu0 0.0
    %4676 = vmatprep.subr.mxu0 0.0
    %4677 = vmatpush1.msra.mxu0 0.0
    %4678 = vmatprep.subr.mxu0 0.0
    %4679 = vmatpush1.msra.mxu0 0.0
    %4680 = vmatprep.mubr.f32.mxu0 0.0
    %4681 = vmatmul.mubr.f32.gmra.mrb[0].mxu0 %v4380
    %v4682 = vpop.f32.mrb[0].mxu0
    %v4683 = vadd.f32 %v924, %v4682
    %v4684 = vpop.f32.mrb[0].mxu0
    %4685 = vdwg.mxu0
    %v4686 = vadd.f32 %v302, %v4612
    %v4687 = vadd.f32 %v304, %v4614
    %v4688 = vxor.u32 %v4686, 2147483648
    %v4689 = vxor.u32 %v4687, 2147483648
    %v4690 = vmul.f32 %v4688, 1.442695
    %v4691 = vpow.pop %v4690
    %v4692 = vmul.f32 %v4689, 1.442695
    %v4693 = vpow.pop %v4692
    %v4694 = vadd.f32 %v4691, 1.0
    %v4695 = vadd.f32 %v4693, 1.0
    %v4696 = vrcp.pop %v4694
    %v4697 = vmul.f32 1.0, %v4696
    %v4698 = vrcp.pop %v4695
    %v4699 = vmul.f32 1.0, %v4698
    %v4700 = vmul.f32 %v4697, %v4683
    %v4701 = vadd.f32 %v452, %v4700
    %v4702 = vtanh.pop %v4701
    %v4703 = vsub.f32 1.0, %v4699
    %v4704 = vmul.f32 %v4703, %v4702
    %v4705 = vmul.f32 %v4699, %v4380
    %v4706 = vadd.f32 %v4704, %v4705
    %4707 = vmatprep.subr.mxu0 %v863
    %4708 = vmatpush1.msra.mxu0 %v862
    %4709 = vmatprep.subr.mxu0 %v866
    %4710 = vmatpush1.msra.mxu0 %v865
    %4711 = vmatprep.subr.mxu0 %v869
    %4712 = vmatpush1.msra.mxu0 %v868
    %4713 = vmatprep.subr.mxu0 %v872
    %4714 = vmatpush1.msra.mxu0 %v871
    %4715 = vmatprep.subr.mxu0 %v875
    %4716 = vmatpush1.msra.mxu0 %v874
    %4717 = vmatprep.subr.mxu0 %v878
    %4718 = vmatpush1.msra.mxu0 %v877
    %4719 = vmatprep.subr.mxu0 %v881
    %4720 = vmatpush1.msra.mxu0 %v880
    %4721 = vmatprep.subr.mxu0 %v884
    %4722 = vmatpush1.msra.mxu0 %v883
    %4723 = vmatprep.subr.mxu0 %v887
    %4724 = vmatpush1.msra.mxu0 %v886
    %4725 = vmatprep.subr.mxu0 %v890
    %4726 = vmatpush1.msra.mxu0 %v889
    %4727 = vmatprep.subr.mxu0 %v893
    %4728 = vmatpush1.msra.mxu0 %v892
    %4729 = vmatprep.subr.mxu0 %v896
    %4730 = vmatpush1.msra.mxu0 %v895
    %4731 = vmatprep.subr.mxu0 %v899
    %4732 = vmatpush1.msra.mxu0 %v898
    %4733 = vmatprep.subr.mxu0 %v902
    %4734 = vmatpush1.msra.mxu0 %v901
    %4735 = vmatprep.subr.mxu0 %v905
    %4736 = vmatpush1.msra.mxu0 %v904
    %4737 = vmatprep.subr.mxu0 %v908
    %4738 = vmatpush1.msra.mxu0 %v907
    %4739 = vmatprep.subr.mxu0 0.0
    %4740 = vmatpush1.msra.mxu0 0.0
    %4741 = vmatprep.subr.mxu0 0.0
    %4742 = vmatpush1.msra.mxu0 0.0
    %4743 = vmatprep.subr.mxu0 0.0
    %4744 = vmatpush1.msra.mxu0 0.0
    %4745 = vmatprep.subr.mxu0 0.0
    %4746 = vmatpush1.msra.mxu0 0.0
    %4747 = vmatprep.subr.mxu0 0.0
    %4748 = vmatpush1.msra.mxu0 0.0
    %4749 = vmatprep.subr.mxu0 0.0
    %4750 = vmatpush1.msra.mxu0 0.0
    %4751 = vmatprep.subr.mxu0 0.0
    %4752 = vmatpush1.msra.mxu0 0.0
    %4753 = vmatprep.subr.mxu0 0.0
    %4754 = vmatpush1.msra.mxu0 0.0
    %4755 = vmatprep.subr.mxu0 0.0
    %4756 = vmatpush1.msra.mxu0 0.0
    %4757 = vmatprep.subr.mxu0 0.0
    %4758 = vmatpush1.msra.mxu0 0.0
    %4759 = vmatprep.subr.mxu0 0.0
    %4760 = vmatpush1.msra.mxu0 0.0
    %4761 = vmatprep.subr.mxu0 0.0
    %4762 = vmatpush1.msra.mxu0 0.0
    %4763 = vmatprep.subr.mxu0 0.0
    %4764 = vmatpush1.msra.mxu0 0.0
    %4765 = vmatprep.subr.mxu0 0.0
    %4766 = vmatpush1.msra.mxu0 0.0
    %4767 = vmatprep.subr.mxu0 0.0
    %4768 = vmatpush1.msra.mxu0 0.0
    %4769 = vmatprep.subr.mxu0 0.0
    %4770 = vmatpush1.msra.mxu0 0.0
    %4771 = vmatprep.mubr.f32.mxu0 0.0
    %4772 = vmatmul.mubr.f32.gmra.mrb[0].mxu0 %v4542
    %v4773 = vpop.f32.mrb[0].mxu0
    %v4774 = vadd.f32 %v1094, %v4773
    %v4775 = vpop.f32.mrb[0].mxu0
    %v4776 = vadd.f32 %v1098, %v4775
    %4777 = vdwg.mxu0
    %4778 = vmatprep.subr.mxu0 0.0
    %4779 = vmatpush1.msra.mxu0 %v864
    %4780 = vmatprep.subr.mxu0 0.0
    %4781 = vmatpush1.msra.mxu0 %v867
    %4782 = vmatprep.subr.mxu0 0.0
    %4783 = vmatpush1.msra.mxu0 %v870
    %4784 = vmatprep.subr.mxu0 0.0
    %4785 = vmatpush1.msra.mxu0 %v873
    %4786 = vmatprep.subr.mxu0 0.0
    %4787 = vmatpush1.msra.mxu0 %v876
    %4788 = vmatprep.subr.mxu0 0.0
    %4789 = vmatpush1.msra.mxu0 %v879
    %4790 = vmatprep.subr.mxu0 0.0
    %4791 = vmatpush1.msra.mxu0 %v882
    %4792 = vmatprep.subr.mxu0 0.0
    %4793 = vmatpush1.msra.mxu0 %v885
    %4794 = vmatprep.subr.mxu0 0.0
    %4795 = vmatpush1.msra.mxu0 %v888
    %4796 = vmatprep.subr.mxu0 0.0
    %4797 = vmatpush1.msra.mxu0 %v891
    %4798 = vmatprep.subr.mxu0 0.0
    %4799 = vmatpush1.msra.mxu0 %v894
    %4800 = vmatprep.subr.mxu0 0.0
    %4801 = vmatpush1.msra.mxu0 %v897
    %4802 = vmatprep.subr.mxu0 0.0
    %4803 = vmatpush1.msra.mxu0 %v900
    %4804 = vmatprep.subr.mxu0 0.0
    %4805 = vmatpush1.msra.mxu0 %v903
    %4806 = vmatprep.subr.mxu0 0.0
    %4807 = vmatpush1.msra.mxu0 %v906
    %4808 = vmatprep.subr.mxu0 0.0
    %4809 = vmatpush1.msra.mxu0 %v909
    %4810 = vmatprep.subr.mxu0 0.0
    %4811 = vmatpush1.msra.mxu0 0.0
    %4812 = vmatprep.subr.mxu0 0.0
    %4813 = vmatpush1.msra.mxu0 0.0
    %4814 = vmatprep.subr.mxu0 0.0
    %4815 = vmatpush1.msra.mxu0 0.0
    %4816 = vmatprep.subr.mxu0 0.0
    %4817 = vmatpush1.msra.mxu0 0.0
    %4818 = vmatprep.subr.mxu0 0.0
    %4819 = vmatpush1.msra.mxu0 0.0
    %4820 = vmatprep.subr.mxu0 0.0
    %4821 = vmatpush1.msra.mxu0 0.0
    %4822 = vmatprep.subr.mxu0 0.0
    %4823 = vmatpush1.msra.mxu0 0.0
    %4824 = vmatprep.subr.mxu0 0.0
    %4825 = vmatpush1.msra.mxu0 0.0
    %4826 = vmatprep.subr.mxu0 0.0
    %4827 = vmatpush1.msra.mxu0 0.0
    %4828 = vmatprep.subr.mxu0 0.0
    %4829 = vmatpush1.msra.mxu0 0.0
    %4830 = vmatprep.subr.mxu0 0.0
    %4831 = vmatpush1.msra.mxu0 0.0
    %4832 = vmatprep.subr.mxu0 0.0
    %4833 = vmatpush1.msra.mxu0 0.0
    %4834 = vmatprep.subr.mxu0 0.0
    %4835 = vmatpush1.msra.mxu0 0.0
    %4836 = vmatprep.subr.mxu0 0.0
    %4837 = vmatpush1.msra.mxu0 0.0
    %4838 = vmatprep.subr.mxu0 0.0
    %4839 = vmatpush1.msra.mxu0 0.0
    %4840 = vmatprep.subr.mxu0 0.0
    %4841 = vmatpush1.msra.mxu0 0.0
    %4842 = vmatprep.mubr.f32.mxu0 0.0
    %4843 = vmatmul.mubr.f32.gmra.mrb[0].mxu0 %v4542
    %v4844 = vpop.f32.mrb[0].mxu0
    %v4845 = vadd.f32 %v1102, %v4844
    %v4846 = vpop.f32.mrb[0].mxu0
    %4847 = vdwg.mxu0
    %v4848 = vadd.f32 %v597, %v4774
    %v4849 = vadd.f32 %v599, %v4776
    %v4850 = vxor.u32 %v4848, 2147483648
    %v4851 = vxor.u32 %v4849, 2147483648
    %v4852 = vmul.f32 %v4850, 1.442695
    %v4853 = vpow.pop %v4852
    %v4854 = vmul.f32 %v4851, 1.442695
    %v4855 = vpow.pop %v4854
    %v4856 = vadd.f32 %v4853, 1.0
    %v4857 = vadd.f32 %v4855, 1.0
    %v4858 = vrcp.pop %v4856
    %v4859 = vmul.f32 1.0, %v4858
    %v4860 = vrcp.pop %v4857
    %v4861 = vmul.f32 1.0, %v4860
    %v4862 = vmul.f32 %v4859, %v4845
    %v4863 = vadd.f32 %v754, %v4862
    %v4864 = vtanh.pop %v4863
    %v4865 = vsub.f32 1.0, %v4861
    %v4866 = vmul.f32 %v4865, %v4864
    %v4867 = vmul.f32 %v4861, %v4542
    %v4868 = vadd.f32 %v4866, %v4867
    %4869 = vst [vmem:[%s2581] sm:$0xff] %v4706
    %4870 = vst [vmem:[%s2579 + $0x8] sm:$0xff] %v4868
    %4871 = vmatprep.subr.mxu0 %v813
    %4872 = vmatpush1.msra.mxu0 %v812
    %4873 = vmatprep.subr.mxu0 %v816
    %4874 = vmatpush1.msra.mxu0 %v815
    %4875 = vmatprep.subr.mxu0 %v819
    %4876 = vmatpush1.msra.mxu0 %v818
    %4877 = vmatprep.subr.mxu0 %v822
    %4878 = vmatpush1.msra.mxu0 %v821
    %4879 = vmatprep.subr.mxu0 %v825
    %4880 = vmatpush1.msra.mxu0 %v824
    %4881 = vmatprep.subr.mxu0 %v828
    %4882 = vmatpush1.msra.mxu0 %v827
    %4883 = vmatprep.subr.mxu0 %v831
    %4884 = vmatpush1.msra.mxu0 %v830
    %4885 = vmatprep.subr.mxu0 %v834
    %4886 = vmatpush1.msra.mxu0 %v833
    %4887 = vmatprep.subr.mxu0 %v837
    %4888 = vmatpush1.msra.mxu0 %v836
    %4889 = vmatprep.subr.mxu0 %v840
    %4890 = vmatpush1.msra.mxu0 %v839
    %4891 = vmatprep.subr.mxu0 %v843
    %4892 = vmatpush1.msra.mxu0 %v842
    %4893 = vmatprep.subr.mxu0 %v846
    %4894 = vmatpush1.msra.mxu0 %v845
    %4895 = vmatprep.subr.mxu0 %v849
    %4896 = vmatpush1.msra.mxu0 %v848
    %4897 = vmatprep.subr.mxu0 %v852
    %4898 = vmatpush1.msra.mxu0 %v851
    %4899 = vmatprep.subr.mxu0 %v855
    %4900 = vmatpush1.msra.mxu0 %v854
    %4901 = vmatprep.subr.mxu0 %v858
    %4902 = vmatpush1.msra.mxu0 %v857
    %4903 = vmatprep.subr.mxu0 0.0
    %4904 = vmatpush1.msra.mxu0 0.0
    %4905 = vmatprep.subr.mxu0 0.0
    %4906 = vmatpush1.msra.mxu0 0.0
    %4907 = vmatprep.subr.mxu0 0.0
    %4908 = vmatpush1.msra.mxu0 0.0
    %4909 = vmatprep.subr.mxu0 0.0
    %4910 = vmatpush1.msra.mxu0 0.0
    %4911 = vmatprep.subr.mxu0 0.0
    %4912 = vmatpush1.msra.mxu0 0.0
    %4913 = vmatprep.subr.mxu0 0.0
    %4914 = vmatpush1.msra.mxu0 0.0
    %4915 = vmatprep.subr.mxu0 0.0
    %4916 = vmatpush1.msra.mxu0 0.0
    %4917 = vmatprep.subr.mxu0 0.0
    %4918 = vmatpush1.msra.mxu0 0.0
    %4919 = vmatprep.subr.mxu0 0.0
    %4920 = vmatpush1.msra.mxu0 0.0
    %4921 = vmatprep.subr.mxu0 0.0
    %4922 = vmatpush1.msra.mxu0 0.0
    %4923 = vmatprep.subr.mxu0 0.0
    %4924 = vmatpush1.msra.mxu0 0.0
    %4925 = vmatprep.subr.mxu0 0.0
    %4926 = vmatpush1.msra.mxu0 0.0
    %4927 = vmatprep.subr.mxu0 0.0
    %4928 = vmatpush1.msra.mxu0 0.0
    %4929 = vmatprep.subr.mxu0 0.0
    %4930 = vmatpush1.msra.mxu0 0.0
    %4931 = vmatprep.subr.mxu0 0.0
    %4932 = vmatpush1.msra.mxu0 0.0
    %4933 = vmatprep.subr.mxu0 0.0
    %4934 = vmatpush1.msra.mxu0 0.0
    %4935 = vmatprep.mubr.f32.mxu0 0.0
    %4936 = vmatmul.mubr.f32.gmra.mrb[0].mxu0 %v4706
    %v4937 = vpop.f32.mrb[0].mxu0
    %v4938 = vadd.f32 %v916, %v4937
    %v4939 = vpop.f32.mrb[0].mxu0
    %v4940 = vadd.f32 %v920, %v4939
    %4941 = vdwg.mxu0
    %4942 = vmatprep.subr.mxu0 0.0
    %4943 = vmatpush1.msra.mxu0 %v814
    %4944 = vmatprep.subr.mxu0 0.0
    %4945 = vmatpush1.msra.mxu0 %v817
    %4946 = vmatprep.subr.mxu0 0.0
    %4947 = vmatpush1.msra.mxu0 %v820
    %4948 = vmatprep.subr.mxu0 0.0
    %4949 = vmatpush1.msra.mxu0 %v823
    %4950 = vmatprep.subr.mxu0 0.0
    %4951 = vmatpush1.msra.mxu0 %v826
    %4952 = vmatprep.subr.mxu0 0.0
    %4953 = vmatpush1.msra.mxu0 %v829
    %4954 = vmatprep.subr.mxu0 0.0
    %4955 = vmatpush1.msra.mxu0 %v832
    %4956 = vmatprep.subr.mxu0 0.0
    %4957 = vmatpush1.msra.mxu0 %v835
    %4958 = vmatprep.subr.mxu0 0.0
    %4959 = vmatpush1.msra.mxu0 %v838
    %4960 = vmatprep.subr.mxu0 0.0
    %4961 = vmatpush1.msra.mxu0 %v841
    %4962 = vmatprep.subr.mxu0 0.0
    %4963 = vmatpush1.msra.mxu0 %v844
    %4964 = vmatprep.subr.mxu0 0.0
    %4965 = vmatpush1.msra.mxu0 %v847
    %4966 = vmatprep.subr.mxu0 0.0
    %4967 = vmatpush1.msra.mxu0 %v850
    %4968 = vmatprep.subr.mxu0 0.0
    %4969 = vmatpush1.msra.mxu0 %v853
    %4970 = vmatprep.subr.mxu0 0.0
    %4971 = vmatpush1.msra.mxu0 %v856
    %4972 = vmatprep.subr.mxu0 0.0
    %4973 = vmatpush1.msra.mxu0 %v859
    %4974 = vmatprep.subr.mxu0 0.0
    %4975 = vmatpush1.msra.mxu0 0.0
    %4976 = vmatprep.subr.mxu0 0.0
    %4977 = vmatpush1.msra.mxu0 0.0
    %4978 = vmatprep.subr.mxu0 0.0
    %4979 = vmatpush1.msra.mxu0 0.0
    %4980 = vmatprep.subr.mxu0 0.0
    %4981 = vmatpush1.msra.mxu0 0.0
    %4982 = vmatprep.subr.mxu0 0.0
    %4983 = vmatpush1.msra.mxu0 0.0
    %4984 = vmatprep.subr.mxu0 0.0
    %4985 = vmatpush1.msra.mxu0 0.0
    %4986 = vmatprep.subr.mxu0 0.0
    %4987 = vmatpush1.msra.mxu0 0.0
    %4988 = vmatprep.subr.mxu0 0.0
    %4989 = vmatpush1.msra.mxu0 0.0
    %4990 = vmatprep.subr.mxu0 0.0
    %4991 = vmatpush1.msra.mxu0 0.0
    %4992 = vmatprep.subr.mxu0 0.0
    %4993 = vmatpush1.msra.mxu0 0.0
    %4994 = vmatprep.subr.mxu0 0.0
    %4995 = vmatpush1.msra.mxu0 0.0
    %4996 = vmatprep.subr.mxu0 0.0
    %4997 = vmatpush1.msra.mxu0 0.0
    %4998 = vmatprep.subr.mxu0 0.0
    %4999 = vmatpush1.msra.mxu0 0.0
    %5000 = vmatprep.subr.mxu0 0.0
    %5001 = vmatpush1.msra.mxu0 0.0
    %5002 = vmatprep.subr.mxu0 0.0
    %5003 = vmatpush1.msra.mxu0 0.0
    %5004 = vmatprep.subr.mxu0 0.0
    %5005 = vmatpush1.msra.mxu0 0.0
    %5006 = vmatprep.mubr.f32.mxu0 0.0
    %5007 = vmatmul.mubr.f32.gmra.mrb[0].mxu0 %v4706
    %v5008 = vpop.f32.mrb[0].mxu0
    %v5009 = vadd.f32 %v924, %v5008
    %v5010 = vpop.f32.mrb[0].mxu0
    %5011 = vdwg.mxu0
    %v5012 = vadd.f32 %v308, %v4938
    %v5013 = vadd.f32 %v310, %v4940
    %v5014 = vxor.u32 %v5012, 2147483648
    %v5015 = vxor.u32 %v5013, 2147483648
    %v5016 = vmul.f32 %v5014, 1.442695
    %v5017 = vpow.pop %v5016
    %v5018 = vmul.f32 %v5015, 1.442695
    %v5019 = vpow.pop %v5018
    %v5020 = vadd.f32 %v5017, 1.0
    %v5021 = vadd.f32 %v5019, 1.0
    %v5022 = vrcp.pop %v5020
    %v5023 = vmul.f32 1.0, %v5022
    %v5024 = vrcp.pop %v5021
    %v5025 = vmul.f32 1.0, %v5024
    %v5026 = vmul.f32 %v5023, %v5009
    %v5027 = vadd.f32 %v457, %v5026
    %v5028 = vtanh.pop %v5027
    %v5029 = vsub.f32 1.0, %v5025
    %v5030 = vmul.f32 %v5029, %v5028
    %v5031 = vmul.f32 %v5025, %v4706
    %v5032 = vadd.f32 %v5030, %v5031
    %5033 = vmatprep.subr.mxu0 %v863
    %5034 = vmatpush1.msra.mxu0 %v862
    %5035 = vmatprep.subr.mxu0 %v866
    %5036 = vmatpush1.msra.mxu0 %v865
    %5037 = vmatprep.subr.mxu0 %v869
    %5038 = vmatpush1.msra.mxu0 %v868
    %5039 = vmatprep.subr.mxu0 %v872
    %5040 = vmatpush1.msra.mxu0 %v871
    %5041 = vmatprep.subr.mxu0 %v875
    %5042 = vmatpush1.msra.mxu0 %v874
    %5043 = vmatprep.subr.mxu0 %v878
    %5044 = vmatpush1.msra.mxu0 %v877
    %5045 = vmatprep.subr.mxu0 %v881
    %5046 = vmatpush1.msra.mxu0 %v880
    %5047 = vmatprep.subr.mxu0 %v884
    %5048 = vmatpush1.msra.mxu0 %v883
    %5049 = vmatprep.subr.mxu0 %v887
    %5050 = vmatpush1.msra.mxu0 %v886
    %5051 = vmatprep.subr.mxu0 %v890
    %5052 = vmatpush1.msra.mxu0 %v889
    %5053 = vmatprep.subr.mxu0 %v893
    %5054 = vmatpush1.msra.mxu0 %v892
    %5055 = vmatprep.subr.mxu0 %v896
    %5056 = vmatpush1.msra.mxu0 %v895
    %5057 = vmatprep.subr.mxu0 %v899
    %5058 = vmatpush1.msra.mxu0 %v898
    %5059 = vmatprep.subr.mxu0 %v902
    %5060 = vmatpush1.msra.mxu0 %v901
    %5061 = vmatprep.subr.mxu0 %v905
    %5062 = vmatpush1.msra.mxu0 %v904
    %5063 = vmatprep.subr.mxu0 %v908
    %5064 = vmatpush1.msra.mxu0 %v907
    %5065 = vmatprep.subr.mxu0 0.0
    %5066 = vmatpush1.msra.mxu0 0.0
    %5067 = vmatprep.subr.mxu0 0.0
    %5068 = vmatpush1.msra.mxu0 0.0
    %5069 = vmatprep.subr.mxu0 0.0
    %5070 = vmatpush1.msra.mxu0 0.0
    %5071 = vmatprep.subr.mxu0 0.0
    %5072 = vmatpush1.msra.mxu0 0.0
    %5073 = vmatprep.subr.mxu0 0.0
    %5074 = vmatpush1.msra.mxu0 0.0
    %5075 = vmatprep.subr.mxu0 0.0
    %5076 = vmatpush1.msra.mxu0 0.0
    %5077 = vmatprep.subr.mxu0 0.0
    %5078 = vmatpush1.msra.mxu0 0.0
    %5079 = vmatprep.subr.mxu0 0.0
    %5080 = vmatpush1.msra.mxu0 0.0
    %5081 = vmatprep.subr.mxu0 0.0
    %5082 = vmatpush1.msra.mxu0 0.0
    %5083 = vmatprep.subr.mxu0 0.0
    %5084 = vmatpush1.msra.mxu0 0.0
    %5085 = vmatprep.subr.mxu0 0.0
    %5086 = vmatpush1.msra.mxu0 0.0
    %5087 = vmatprep.subr.mxu0 0.0
    %5088 = vmatpush1.msra.mxu0 0.0
    %5089 = vmatprep.subr.mxu0 0.0
    %5090 = vmatpush1.msra.mxu0 0.0
    %5091 = vmatprep.subr.mxu0 0.0
    %5092 = vmatpush1.msra.mxu0 0.0
    %5093 = vmatprep.subr.mxu0 0.0
    %5094 = vmatpush1.msra.mxu0 0.0
    %5095 = vmatprep.subr.mxu0 0.0
    %5096 = vmatpush1.msra.mxu0 0.0
    %5097 = vmatprep.mubr.f32.mxu0 0.0
    %5098 = vmatmul.mubr.f32.gmra.mrb[0].mxu0 %v4868
    %v5099 = vpop.f32.mrb[0].mxu0
    %v5100 = vadd.f32 %v1094, %v5099
    %v5101 = vpop.f32.mrb[0].mxu0
    %v5102 = vadd.f32 %v1098, %v5101
    %5103 = vdwg.mxu0
    %5104 = vmatprep.subr.mxu0 0.0
    %5105 = vmatpush1.msra.mxu0 %v864
    %5106 = vmatprep.subr.mxu0 0.0
    %5107 = vmatpush1.msra.mxu0 %v867
    %5108 = vmatprep.subr.mxu0 0.0
    %5109 = vmatpush1.msra.mxu0 %v870
    %5110 = vmatprep.subr.mxu0 0.0
    %5111 = vmatpush1.msra.mxu0 %v873
    %5112 = vmatprep.subr.mxu0 0.0
    %5113 = vmatpush1.msra.mxu0 %v876
    %5114 = vmatprep.subr.mxu0 0.0
    %5115 = vmatpush1.msra.mxu0 %v879
    %5116 = vmatprep.subr.mxu0 0.0
    %5117 = vmatpush1.msra.mxu0 %v882
    %5118 = vmatprep.subr.mxu0 0.0
    %5119 = vmatpush1.msra.mxu0 %v885
    %5120 = vmatprep.subr.mxu0 0.0
    %5121 = vmatpush1.msra.mxu0 %v888
    %5122 = vmatprep.subr.mxu0 0.0
    %5123 = vmatpush1.msra.mxu0 %v891
    %5124 = vmatprep.subr.mxu0 0.0
    %5125 = vmatpush1.msra.mxu0 %v894
    %5126 = vmatprep.subr.mxu0 0.0
    %5127 = vmatpush1.msra.mxu0 %v897
    %5128 = vmatprep.subr.mxu0 0.0
    %5129 = vmatpush1.msra.mxu0 %v900
    %5130 = vmatprep.subr.mxu0 0.0
    %5131 = vmatpush1.msra.mxu0 %v903
    %5132 = vmatprep.subr.mxu0 0.0
    %5133 = vmatpush1.msra.mxu0 %v906
    %5134 = vmatprep.subr.mxu0 0.0
    %5135 = vmatpush1.msra.mxu0 %v909
    %5136 = vmatprep.subr.mxu0 0.0
    %5137 = vmatpush1.msra.mxu0 0.0
    %5138 = vmatprep.subr.mxu0 0.0
    %5139 = vmatpush1.msra.mxu0 0.0
    %5140 = vmatprep.subr.mxu0 0.0
    %5141 = vmatpush1.msra.mxu0 0.0
    %5142 = vmatprep.subr.mxu0 0.0
    %5143 = vmatpush1.msra.mxu0 0.0
    %5144 = vmatprep.subr.mxu0 0.0
    %5145 = vmatpush1.msra.mxu0 0.0
    %5146 = vmatprep.subr.mxu0 0.0
    %5147 = vmatpush1.msra.mxu0 0.0
    %5148 = vmatprep.subr.mxu0 0.0
    %5149 = vmatpush1.msra.mxu0 0.0
    %5150 = vmatprep.subr.mxu0 0.0
    %5151 = vmatpush1.msra.mxu0 0.0
    %5152 = vmatprep.subr.mxu0 0.0
    %5153 = vmatpush1.msra.mxu0 0.0
    %5154 = vmatprep.subr.mxu0 0.0
    %5155 = vmatpush1.msra.mxu0 0.0
    %5156 = vmatprep.subr.mxu0 0.0
    %5157 = vmatpush1.msra.mxu0 0.0
    %5158 = vmatprep.subr.mxu0 0.0
    %5159 = vmatpush1.msra.mxu0 0.0
    %5160 = vmatprep.subr.mxu0 0.0
    %5161 = vmatpush1.msra.mxu0 0.0
    %5162 = vmatprep.subr.mxu0 0.0
    %5163 = vmatpush1.msra.mxu0 0.0
    %5164 = vmatprep.subr.mxu0 0.0
    %5165 = vmatpush1.msra.mxu0 0.0
    %5166 = vmatprep.subr.mxu0 0.0
    %5167 = vmatpush1.msra.mxu0 0.0
    %5168 = vmatprep.mubr.f32.mxu0 0.0
    %5169 = vmatmul.mubr.f32.gmra.mrb[0].mxu0 %v4868
    %v5170 = vpop.f32.mrb[0].mxu0
    %v5171 = vadd.f32 %v1102, %v5170
    %v5172 = vpop.f32.mrb[0].mxu0
    %5173 = vdwg.mxu0
    %v5174 = vadd.f32 %v591, %v5100
    %v5175 = vadd.f32 %v593, %v5102
    %v5176 = vxor.u32 %v5174, 2147483648
    %v5177 = vxor.u32 %v5175, 2147483648
    %v5178 = vmul.f32 %v5176, 1.442695
    %v5179 = vpow.pop %v5178
    %v5180 = vmul.f32 %v5177, 1.442695
    %v5181 = vpow.pop %v5180
    %v5182 = vadd.f32 %v5179, 1.0
    %v5183 = vadd.f32 %v5181, 1.0
    %v5184 = vrcp.pop %v5182
    %v5185 = vmul.f32 1.0, %v5184
    %v5186 = vrcp.pop %v5183
    %v5187 = vmul.f32 1.0, %v5186
    %v5188 = vmul.f32 %v5185, %v5171
    %v5189 = vadd.f32 %v749, %v5188
    %v5190 = vtanh.pop %v5189
    %v5191 = vsub.f32 1.0, %v5187
    %v5192 = vmul.f32 %v5191, %v5190
    %v5193 = vmul.f32 %v5187, %v4868
    %v5194 = vadd.f32 %v5192, %v5193
    %5195 = vst [vmem:[%s2253] sm:$0xff] %v5032
    %5196 = vst [vmem:[%s2251 + $0x8] sm:$0xff] %v5194
    %5197 = vmatprep.subr.mxu0 %v813
    %5198 = vmatpush1.msra.mxu0 %v812
    %5199 = vmatprep.subr.mxu0 %v816
    %5200 = vmatpush1.msra.mxu0 %v815
    %5201 = vmatprep.subr.mxu0 %v819
    %5202 = vmatpush1.msra.mxu0 %v818
    %5203 = vmatprep.subr.mxu0 %v822
    %5204 = vmatpush1.msra.mxu0 %v821
    %5205 = vmatprep.subr.mxu0 %v825
    %5206 = vmatpush1.msra.mxu0 %v824
    %5207 = vmatprep.subr.mxu0 %v828
    %5208 = vmatpush1.msra.mxu0 %v827
    %5209 = vmatprep.subr.mxu0 %v831
    %5210 = vmatpush1.msra.mxu0 %v830
    %5211 = vmatprep.subr.mxu0 %v834
    %5212 = vmatpush1.msra.mxu0 %v833
    %5213 = vmatprep.subr.mxu0 %v837
    %5214 = vmatpush1.msra.mxu0 %v836
    %5215 = vmatprep.subr.mxu0 %v840
    %5216 = vmatpush1.msra.mxu0 %v839
    %5217 = vmatprep.subr.mxu0 %v843
    %5218 = vmatpush1.msra.mxu0 %v842
    %5219 = vmatprep.subr.mxu0 %v846
    %5220 = vmatpush1.msra.mxu0 %v845
    %5221 = vmatprep.subr.mxu0 %v849
    %5222 = vmatpush1.msra.mxu0 %v848
    %5223 = vmatprep.subr.mxu0 %v852
    %5224 = vmatpush1.msra.mxu0 %v851
    %5225 = vmatprep.subr.mxu0 %v855
    %5226 = vmatpush1.msra.mxu0 %v854
    %5227 = vmatprep.subr.mxu0 %v858
    %5228 = vmatpush1.msra.mxu0 %v857
    %5229 = vmatprep.subr.mxu0 0.0
    %5230 = vmatpush1.msra.mxu0 0.0
    %5231 = vmatprep.subr.mxu0 0.0
    %5232 = vmatpush1.msra.mxu0 0.0
    %5233 = vmatprep.subr.mxu0 0.0
    %5234 = vmatpush1.msra.mxu0 0.0
    %5235 = vmatprep.subr.mxu0 0.0
    %5236 = vmatpush1.msra.mxu0 0.0
    %5237 = vmatprep.subr.mxu0 0.0
    %5238 = vmatpush1.msra.mxu0 0.0
    %5239 = vmatprep.subr.mxu0 0.0
    %5240 = vmatpush1.msra.mxu0 0.0
    %5241 = vmatprep.subr.mxu0 0.0
    %5242 = vmatpush1.msra.mxu0 0.0
    %5243 = vmatprep.subr.mxu0 0.0
    %5244 = vmatpush1.msra.mxu0 0.0
    %5245 = vmatprep.subr.mxu0 0.0
    %5246 = vmatpush1.msra.mxu0 0.0
    %5247 = vmatprep.subr.mxu0 0.0
    %5248 = vmatpush1.msra.mxu0 0.0
    %5249 = vmatprep.subr.mxu0 0.0
    %5250 = vmatpush1.msra.mxu0 0.0
    %5251 = vmatprep.subr.mxu0 0.0
    %5252 = vmatpush1.msra.mxu0 0.0
    %5253 = vmatprep.subr.mxu0 0.0
    %5254 = vmatpush1.msra.mxu0 0.0
    %5255 = vmatprep.subr.mxu0 0.0
    %5256 = vmatpush1.msra.mxu0 0.0
    %5257 = vmatprep.subr.mxu0 0.0
    %5258 = vmatpush1.msra.mxu0 0.0
    %5259 = vmatprep.subr.mxu0 0.0
    %5260 = vmatpush1.msra.mxu0 0.0
    %5261 = vmatprep.mubr.f32.mxu0 0.0
    %5262 = vmatmul.mubr.f32.gmra.mrb[0].mxu0 %v5032
    %v5263 = vpop.f32.mrb[0].mxu0
    %v5264 = vadd.f32 %v916, %v5263
    %v5265 = vpop.f32.mrb[0].mxu0
    %v5266 = vadd.f32 %v920, %v5265
    %5267 = vdwg.mxu0
    %5268 = vmatprep.subr.mxu0 0.0
    %5269 = vmatpush1.msra.mxu0 %v814
    %5270 = vmatprep.subr.mxu0 0.0
    %5271 = vmatpush1.msra.mxu0 %v817
    %5272 = vmatprep.subr.mxu0 0.0
    %5273 = vmatpush1.msra.mxu0 %v820
    %5274 = vmatprep.subr.mxu0 0.0
    %5275 = vmatpush1.msra.mxu0 %v823
    %5276 = vmatprep.subr.mxu0 0.0
    %5277 = vmatpush1.msra.mxu0 %v826
    %5278 = vmatprep.subr.mxu0 0.0
    %5279 = vmatpush1.msra.mxu0 %v829
    %5280 = vmatprep.subr.mxu0 0.0
    %5281 = vmatpush1.msra.mxu0 %v832
    %5282 = vmatprep.subr.mxu0 0.0
    %5283 = vmatpush1.msra.mxu0 %v835
    %5284 = vmatprep.subr.mxu0 0.0
    %5285 = vmatpush1.msra.mxu0 %v838
    %5286 = vmatprep.subr.mxu0 0.0
    %5287 = vmatpush1.msra.mxu0 %v841
    %5288 = vmatprep.subr.mxu0 0.0
    %5289 = vmatpush1.msra.mxu0 %v844
    %5290 = vmatprep.subr.mxu0 0.0
    %5291 = vmatpush1.msra.mxu0 %v847
    %5292 = vmatprep.subr.mxu0 0.0
    %5293 = vmatpush1.msra.mxu0 %v850
    %5294 = vmatprep.subr.mxu0 0.0
    %5295 = vmatpush1.msra.mxu0 %v853
    %5296 = vmatprep.subr.mxu0 0.0
    %5297 = vmatpush1.msra.mxu0 %v856
    %5298 = vmatprep.subr.mxu0 0.0
    %5299 = vmatpush1.msra.mxu0 %v859
    %5300 = vmatprep.subr.mxu0 0.0
    %5301 = vmatpush1.msra.mxu0 0.0
    %5302 = vmatprep.subr.mxu0 0.0
    %5303 = vmatpush1.msra.mxu0 0.0
    %5304 = vmatprep.subr.mxu0 0.0
    %5305 = vmatpush1.msra.mxu0 0.0
    %5306 = vmatprep.subr.mxu0 0.0
    %5307 = vmatpush1.msra.mxu0 0.0
    %5308 = vmatprep.subr.mxu0 0.0
    %5309 = vmatpush1.msra.mxu0 0.0
    %5310 = vmatprep.subr.mxu0 0.0
    %5311 = vmatpush1.msra.mxu0 0.0
    %5312 = vmatprep.subr.mxu0 0.0
    %5313 = vmatpush1.msra.mxu0 0.0
    %5314 = vmatprep.subr.mxu0 0.0
    %5315 = vmatpush1.msra.mxu0 0.0
    %5316 = vmatprep.subr.mxu0 0.0
    %5317 = vmatpush1.msra.mxu0 0.0
    %5318 = vmatprep.subr.mxu0 0.0
    %5319 = vmatpush1.msra.mxu0 0.0
    %5320 = vmatprep.subr.mxu0 0.0
    %5321 = vmatpush1.msra.mxu0 0.0
    %5322 = vmatprep.subr.mxu0 0.0
    %5323 = vmatpush1.msra.mxu0 0.0
    %5324 = vmatprep.subr.mxu0 0.0
    %5325 = vmatpush1.msra.mxu0 0.0
    %5326 = vmatprep.subr.mxu0 0.0
    %5327 = vmatpush1.msra.mxu0 0.0
    %5328 = vmatprep.subr.mxu0 0.0
    %5329 = vmatpush1.msra.mxu0 0.0
    %5330 = vmatprep.subr.mxu0 0.0
    %5331 = vmatpush1.msra.mxu0 0.0
    %5332 = vmatprep.mubr.f32.mxu0 0.0
    %5333 = vmatmul.mubr.f32.gmra.mrb[0].mxu0 %v5032
    %v5334 = vpop.f32.mrb[0].mxu0
    %v5335 = vadd.f32 %v924, %v5334
    %v5336 = vpop.f32.mrb[0].mxu0
    %5337 = vdwg.mxu0
    %v5338 = vadd.f32 %v314, %v5264
    %v5339 = vadd.f32 %v316, %v5266
    %v5340 = vxor.u32 %v5338, 2147483648
    %v5341 = vxor.u32 %v5339, 2147483648
    %v5342 = vmul.f32 %v5340, 1.442695
    %v5343 = vpow.pop %v5342
    %v5344 = vmul.f32 %v5341, 1.442695
    %v5345 = vpow.pop %v5344
    %v5346 = vadd.f32 %v5343, 1.0
    %v5347 = vadd.f32 %v5345, 1.0
    %v5348 = vrcp.pop %v5346
    %v5349 = vmul.f32 1.0, %v5348
    %v5350 = vrcp.pop %v5347
    %v5351 = vmul.f32 1.0, %v5350
    %v5352 = vmul.f32 %v5349, %v5335
    %v5353 = vadd.f32 %v462, %v5352
    %v5354 = vtanh.pop %v5353
    %v5355 = vsub.f32 1.0, %v5351
    %v5356 = vmul.f32 %v5355, %v5354
    %v5357 = vmul.f32 %v5351, %v5032
    %v5358 = vadd.f32 %v5356, %v5357
    %5359 = vmatprep.subr.mxu0 %v863
    %5360 = vmatpush1.msra.mxu0 %v862
    %5361 = vmatprep.subr.mxu0 %v866
    %5362 = vmatpush1.msra.mxu0 %v865
    %5363 = vmatprep.subr.mxu0 %v869
    %5364 = vmatpush1.msra.mxu0 %v868
    %5365 = vmatprep.subr.mxu0 %v872
    %5366 = vmatpush1.msra.mxu0 %v871
    %5367 = vmatprep.subr.mxu0 %v875
    %5368 = vmatpush1.msra.mxu0 %v874
    %5369 = vmatprep.subr.mxu0 %v878
    %5370 = vmatpush1.msra.mxu0 %v877
    %5371 = vmatprep.subr.mxu0 %v881
    %5372 = vmatpush1.msra.mxu0 %v880
    %5373 = vmatprep.subr.mxu0 %v884
    %5374 = vmatpush1.msra.mxu0 %v883
    %5375 = vmatprep.subr.mxu0 %v887
    %5376 = vmatpush1.msra.mxu0 %v886
    %5377 = vmatprep.subr.mxu0 %v890
    %5378 = vmatpush1.msra.mxu0 %v889
    %5379 = vmatprep.subr.mxu0 %v893
    %5380 = vmatpush1.msra.mxu0 %v892
    %5381 = vmatprep.subr.mxu0 %v896
    %5382 = vmatpush1.msra.mxu0 %v895
    %5383 = vmatprep.subr.mxu0 %v899
    %5384 = vmatpush1.msra.mxu0 %v898
    %5385 = vmatprep.subr.mxu0 %v902
    %5386 = vmatpush1.msra.mxu0 %v901
    %5387 = vmatprep.subr.mxu0 %v905
    %5388 = vmatpush1.msra.mxu0 %v904
    %5389 = vmatprep.subr.mxu0 %v908
    %5390 = vmatpush1.msra.mxu0 %v907
    %5391 = vmatprep.subr.mxu0 0.0
    %5392 = vmatpush1.msra.mxu0 0.0
    %5393 = vmatprep.subr.mxu0 0.0
    %5394 = vmatpush1.msra.mxu0 0.0
    %5395 = vmatprep.subr.mxu0 0.0
    %5396 = vmatpush1.msra.mxu0 0.0
    %5397 = vmatprep.subr.mxu0 0.0
    %5398 = vmatpush1.msra.mxu0 0.0
    %5399 = vmatprep.subr.mxu0 0.0
    %5400 = vmatpush1.msra.mxu0 0.0
    %5401 = vmatprep.subr.mxu0 0.0
    %5402 = vmatpush1.msra.mxu0 0.0
    %5403 = vmatprep.subr.mxu0 0.0
    %5404 = vmatpush1.msra.mxu0 0.0
    %5405 = vmatprep.subr.mxu0 0.0
    %5406 = vmatpush1.msra.mxu0 0.0
    %5407 = vmatprep.subr.mxu0 0.0
    %5408 = vmatpush1.msra.mxu0 0.0
    %5409 = vmatprep.subr.mxu0 0.0
    %5410 = vmatpush1.msra.mxu0 0.0
    %5411 = vmatprep.subr.mxu0 0.0
    %5412 = vmatpush1.msra.mxu0 0.0
    %5413 = vmatprep.subr.mxu0 0.0
    %5414 = vmatpush1.msra.mxu0 0.0
    %5415 = vmatprep.subr.mxu0 0.0
    %5416 = vmatpush1.msra.mxu0 0.0
    %5417 = vmatprep.subr.mxu0 0.0
    %5418 = vmatpush1.msra.mxu0 0.0
    %5419 = vmatprep.subr.mxu0 0.0
    %5420 = vmatpush1.msra.mxu0 0.0
    %5421 = vmatprep.subr.mxu0 0.0
    %5422 = vmatpush1.msra.mxu0 0.0
    %5423 = vmatprep.mubr.f32.mxu0 0.0
    %5424 = vmatmul.mubr.f32.gmra.mrb[0].mxu0 %v5194
    %v5425 = vpop.f32.mrb[0].mxu0
    %v5426 = vadd.f32 %v1094, %v5425
    %v5427 = vpop.f32.mrb[0].mxu0
    %v5428 = vadd.f32 %v1098, %v5427
    %5429 = vdwg.mxu0
    %5430 = vmatprep.subr.mxu0 0.0
    %5431 = vmatpush1.msra.mxu0 %v864
    %5432 = vmatprep.subr.mxu0 0.0
    %5433 = vmatpush1.msra.mxu0 %v867
    %5434 = vmatprep.subr.mxu0 0.0
    %5435 = vmatpush1.msra.mxu0 %v870
    %5436 = vmatprep.subr.mxu0 0.0
    %5437 = vmatpush1.msra.mxu0 %v873
    %5438 = vmatprep.subr.mxu0 0.0
    %5439 = vmatpush1.msra.mxu0 %v876
    %5440 = vmatprep.subr.mxu0 0.0
    %5441 = vmatpush1.msra.mxu0 %v879
    %5442 = vmatprep.subr.mxu0 0.0
    %5443 = vmatpush1.msra.mxu0 %v882
    %5444 = vmatprep.subr.mxu0 0.0
    %5445 = vmatpush1.msra.mxu0 %v885
    %5446 = vmatprep.subr.mxu0 0.0
    %5447 = vmatpush1.msra.mxu0 %v888
    %5448 = vmatprep.subr.mxu0 0.0
    %5449 = vmatpush1.msra.mxu0 %v891
    %5450 = vmatprep.subr.mxu0 0.0
    %5451 = vmatpush1.msra.mxu0 %v894
    %5452 = vmatprep.subr.mxu0 0.0
    %5453 = vmatpush1.msra.mxu0 %v897
    %5454 = vmatprep.subr.mxu0 0.0
    %5455 = vmatpush1.msra.mxu0 %v900
    %5456 = vmatprep.subr.mxu0 0.0
    %5457 = vmatpush1.msra.mxu0 %v903
    %5458 = vmatprep.subr.mxu0 0.0
    %5459 = vmatpush1.msra.mxu0 %v906
    %5460 = vmatprep.subr.mxu0 0.0
    %5461 = vmatpush1.msra.mxu0 %v909
    %5462 = vmatprep.subr.mxu0 0.0
    %5463 = vmatpush1.msra.mxu0 0.0
    %5464 = vmatprep.subr.mxu0 0.0
    %5465 = vmatpush1.msra.mxu0 0.0
    %5466 = vmatprep.subr.mxu0 0.0
    %5467 = vmatpush1.msra.mxu0 0.0
    %5468 = vmatprep.subr.mxu0 0.0
    %5469 = vmatpush1.msra.mxu0 0.0
    %5470 = vmatprep.subr.mxu0 0.0
    %5471 = vmatpush1.msra.mxu0 0.0
    %5472 = vmatprep.subr.mxu0 0.0
    %5473 = vmatpush1.msra.mxu0 0.0
    %5474 = vmatprep.subr.mxu0 0.0
    %5475 = vmatpush1.msra.mxu0 0.0
    %5476 = vmatprep.subr.mxu0 0.0
    %5477 = vmatpush1.msra.mxu0 0.0
    %5478 = vmatprep.subr.mxu0 0.0
    %5479 = vmatpush1.msra.mxu0 0.0
    %5480 = vmatprep.subr.mxu0 0.0
    %5481 = vmatpush1.msra.mxu0 0.0
    %5482 = vmatprep.subr.mxu0 0.0
    %5483 = vmatpush1.msra.mxu0 0.0
    %5484 = vmatprep.subr.mxu0 0.0
    %5485 = vmatpush1.msra.mxu0 0.0
    %5486 = vmatprep.subr.mxu0 0.0
    %5487 = vmatpush1.msra.mxu0 0.0
    %5488 = vmatprep.subr.mxu0 0.0
    %5489 = vmatpush1.msra.mxu0 0.0
    %5490 = vmatprep.subr.mxu0 0.0
    %5491 = vmatpush1.msra.mxu0 0.0
    %5492 = vmatprep.subr.mxu0 0.0
    %5493 = vmatpush1.msra.mxu0 0.0
    %5494 = vmatprep.mubr.f32.mxu0 0.0
    %5495 = vmatmul.mubr.f32.gmra.mrb[0].mxu0 %v5194
    %v5496 = vpop.f32.mrb[0].mxu0
    %v5497 = vadd.f32 %v1102, %v5496
    %v5498 = vpop.f32.mrb[0].mxu0
    %5499 = vdwg.mxu0
    %v5500 = vadd.f32 %v585, %v5426
    %v5501 = vadd.f32 %v587, %v5428
    %v5502 = vxor.u32 %v5500, 2147483648
    %v5503 = vxor.u32 %v5501, 2147483648
    %v5504 = vmul.f32 %v5502, 1.442695
    %v5505 = vpow.pop %v5504
    %v5506 = vmul.f32 %v5503, 1.442695
    %v5507 = vpow.pop %v5506
    %v5508 = vadd.f32 %v5505, 1.0
    %v5509 = vadd.f32 %v5507, 1.0
    %v5510 = vrcp.pop %v5508
    %v5511 = vmul.f32 1.0, %v5510
    %v5512 = vrcp.pop %v5509
    %v5513 = vmul.f32 1.0, %v5512
    %v5514 = vmul.f32 %v5511, %v5497
    %v5515 = vadd.f32 %v744, %v5514
    %v5516 = vtanh.pop %v5515
    %v5517 = vsub.f32 1.0, %v5513
    %v5518 = vmul.f32 %v5517, %v5516
    %v5519 = vmul.f32 %v5513, %v5194
    %v5520 = vadd.f32 %v5518, %v5519
    %5521 = vst [vmem:[%s1925] sm:$0xff] %v5358
    %5522 = vst [vmem:[%s1923 + $0x8] sm:$0xff] %v5520
    %5523 = vmatprep.subr.mxu0 %v813
    %5524 = vmatpush1.msra.mxu0 %v812
    %5525 = vmatprep.subr.mxu0 %v816
    %5526 = vmatpush1.msra.mxu0 %v815
    %5527 = vmatprep.subr.mxu0 %v819
    %5528 = vmatpush1.msra.mxu0 %v818
    %5529 = vmatprep.subr.mxu0 %v822
    %5530 = vmatpush1.msra.mxu0 %v821
    %5531 = vmatprep.subr.mxu0 %v825
    %5532 = vmatpush1.msra.mxu0 %v824
    %5533 = vmatprep.subr.mxu0 %v828
    %5534 = vmatpush1.msra.mxu0 %v827
    %5535 = vmatprep.subr.mxu0 %v831
    %5536 = vmatpush1.msra.mxu0 %v830
    %5537 = vmatprep.subr.mxu0 %v834
    %5538 = vmatpush1.msra.mxu0 %v833
    %5539 = vmatprep.subr.mxu0 %v837
    %5540 = vmatpush1.msra.mxu0 %v836
    %5541 = vmatprep.subr.mxu0 %v840
    %5542 = vmatpush1.msra.mxu0 %v839
    %5543 = vmatprep.subr.mxu0 %v843
    %5544 = vmatpush1.msra.mxu0 %v842
    %5545 = vmatprep.subr.mxu0 %v846
    %5546 = vmatpush1.msra.mxu0 %v845
    %5547 = vmatprep.subr.mxu0 %v849
    %5548 = vmatpush1.msra.mxu0 %v848
    %5549 = vmatprep.subr.mxu0 %v852
    %5550 = vmatpush1.msra.mxu0 %v851
    %5551 = vmatprep.subr.mxu0 %v855
    %5552 = vmatpush1.msra.mxu0 %v854
    %5553 = vmatprep.subr.mxu0 %v858
    %5554 = vmatpush1.msra.mxu0 %v857
    %5555 = vmatprep.subr.mxu0 0.0
    %5556 = vmatpush1.msra.mxu0 0.0
    %5557 = vmatprep.subr.mxu0 0.0
    %5558 = vmatpush1.msra.mxu0 0.0
    %5559 = vmatprep.subr.mxu0 0.0
    %5560 = vmatpush1.msra.mxu0 0.0
    %5561 = vmatprep.subr.mxu0 0.0
    %5562 = vmatpush1.msra.mxu0 0.0
    %5563 = vmatprep.subr.mxu0 0.0
    %5564 = vmatpush1.msra.mxu0 0.0
    %5565 = vmatprep.subr.mxu0 0.0
    %5566 = vmatpush1.msra.mxu0 0.0
    %5567 = vmatprep.subr.mxu0 0.0
    %5568 = vmatpush1.msra.mxu0 0.0
    %5569 = vmatprep.subr.mxu0 0.0
    %5570 = vmatpush1.msra.mxu0 0.0
    %5571 = vmatprep.subr.mxu0 0.0
    %5572 = vmatpush1.msra.mxu0 0.0
    %5573 = vmatprep.subr.mxu0 0.0
    %5574 = vmatpush1.msra.mxu0 0.0
    %5575 = vmatprep.subr.mxu0 0.0
    %5576 = vmatpush1.msra.mxu0 0.0
    %5577 = vmatprep.subr.mxu0 0.0
    %5578 = vmatpush1.msra.mxu0 0.0
    %5579 = vmatprep.subr.mxu0 0.0
    %5580 = vmatpush1.msra.mxu0 0.0
    %5581 = vmatprep.subr.mxu0 0.0
    %5582 = vmatpush1.msra.mxu0 0.0
    %5583 = vmatprep.subr.mxu0 0.0
    %5584 = vmatpush1.msra.mxu0 0.0
    %5585 = vmatprep.subr.mxu0 0.0
    %5586 = vmatpush1.msra.mxu0 0.0
    %5587 = vmatprep.mubr.f32.mxu0 0.0
    %5588 = vmatmul.mubr.f32.gmra.mrb[0].mxu0 %v5358
    %v5589 = vpop.f32.mrb[0].mxu0
    %v5590 = vadd.f32 %v916, %v5589
    %v5591 = vpop.f32.mrb[0].mxu0
    %v5592 = vadd.f32 %v920, %v5591
    %5593 = vdwg.mxu0
    %5594 = vmatprep.subr.mxu0 0.0
    %5595 = vmatpush1.msra.mxu0 %v814
    %5596 = vmatprep.subr.mxu0 0.0
    %5597 = vmatpush1.msra.mxu0 %v817
    %5598 = vmatprep.subr.mxu0 0.0
    %5599 = vmatpush1.msra.mxu0 %v820
    %5600 = vmatprep.subr.mxu0 0.0
    %5601 = vmatpush1.msra.mxu0 %v823
    %5602 = vmatprep.subr.mxu0 0.0
    %5603 = vmatpush1.msra.mxu0 %v826
    %5604 = vmatprep.subr.mxu0 0.0
    %5605 = vmatpush1.msra.mxu0 %v829
    %5606 = vmatprep.subr.mxu0 0.0
    %5607 = vmatpush1.msra.mxu0 %v832
    %5608 = vmatprep.subr.mxu0 0.0
    %5609 = vmatpush1.msra.mxu0 %v835
    %5610 = vmatprep.subr.mxu0 0.0
    %5611 = vmatpush1.msra.mxu0 %v838
    %5612 = vmatprep.subr.mxu0 0.0
    %5613 = vmatpush1.msra.mxu0 %v841
    %5614 = vmatprep.subr.mxu0 0.0
    %5615 = vmatpush1.msra.mxu0 %v844
    %5616 = vmatprep.subr.mxu0 0.0
    %5617 = vmatpush1.msra.mxu0 %v847
    %5618 = vmatprep.subr.mxu0 0.0
    %5619 = vmatpush1.msra.mxu0 %v850
    %5620 = vmatprep.subr.mxu0 0.0
    %5621 = vmatpush1.msra.mxu0 %v853
    %5622 = vmatprep.subr.mxu0 0.0
    %5623 = vmatpush1.msra.mxu0 %v856
    %5624 = vmatprep.subr.mxu0 0.0
    %5625 = vmatpush1.msra.mxu0 %v859
    %5626 = vmatprep.subr.mxu0 0.0
    %5627 = vmatpush1.msra.mxu0 0.0
    %5628 = vmatprep.subr.mxu0 0.0
    %5629 = vmatpush1.msra.mxu0 0.0
    %5630 = vmatprep.subr.mxu0 0.0
    %5631 = vmatpush1.msra.mxu0 0.0
    %5632 = vmatprep.subr.mxu0 0.0
    %5633 = vmatpush1.msra.mxu0 0.0
    %5634 = vmatprep.subr.mxu0 0.0
    %5635 = vmatpush1.msra.mxu0 0.0
    %5636 = vmatprep.subr.mxu0 0.0
    %5637 = vmatpush1.msra.mxu0 0.0
    %5638 = vmatprep.subr.mxu0 0.0
    %5639 = vmatpush1.msra.mxu0 0.0
    %5640 = vmatprep.subr.mxu0 0.0
    %5641 = vmatpush1.msra.mxu0 0.0
    %5642 = vmatprep.subr.mxu0 0.0
    %5643 = vmatpush1.msra.mxu0 0.0
    %5644 = vmatprep.subr.mxu0 0.0
    %5645 = vmatpush1.msra.mxu0 0.0
    %5646 = vmatprep.subr.mxu0 0.0
    %5647 = vmatpush1.msra.mxu0 0.0
    %5648 = vmatprep.subr.mxu0 0.0
    %5649 = vmatpush1.msra.mxu0 0.0
    %5650 = vmatprep.subr.mxu0 0.0
    %5651 = vmatpush1.msra.mxu0 0.0
    %5652 = vmatprep.subr.mxu0 0.0
    %5653 = vmatpush1.msra.mxu0 0.0
    %5654 = vmatprep.subr.mxu0 0.0
    %5655 = vmatpush1.msra.mxu0 0.0
    %5656 = vmatprep.subr.mxu0 0.0
    %5657 = vmatpush1.msra.mxu0 0.0
    %5658 = vmatprep.mubr.f32.mxu0 0.0
    %5659 = vmatmul.mubr.f32.gmra.mrb[0].mxu0 %v5358
    %v5660 = vpop.f32.mrb[0].mxu0
    %v5661 = vadd.f32 %v924, %v5660
    %v5662 = vpop.f32.mrb[0].mxu0
    %5663 = vdwg.mxu0
    %v5664 = vadd.f32 %v320, %v5590
    %v5665 = vadd.f32 %v322, %v5592
    %v5666 = vxor.u32 %v5664, 2147483648
    %v5667 = vxor.u32 %v5665, 2147483648
    %v5668 = vmul.f32 %v5666, 1.442695
    %v5669 = vpow.pop %v5668
    %v5670 = vmul.f32 %v5667, 1.442695
    %v5671 = vpow.pop %v5670
    %v5672 = vadd.f32 %v5669, 1.0
    %v5673 = vadd.f32 %v5671, 1.0
    %v5674 = vrcp.pop %v5672
    %v5675 = vmul.f32 1.0, %v5674
    %v5676 = vrcp.pop %v5673
    %v5677 = vmul.f32 1.0, %v5676
    %v5678 = vmul.f32 %v5675, %v5661
    %v5679 = vadd.f32 %v467, %v5678
    %v5680 = vtanh.pop %v5679
    %v5681 = vsub.f32 1.0, %v5677
    %v5682 = vmul.f32 %v5681, %v5680
    %v5683 = vmul.f32 %v5677, %v5358
    %v5684 = vadd.f32 %v5682, %v5683
    %5685 = vmatprep.subr.mxu0 %v863
    %5686 = vmatpush1.msra.mxu0 %v862
    %5687 = vmatprep.subr.mxu0 %v866
    %5688 = vmatpush1.msra.mxu0 %v865
    %5689 = vmatprep.subr.mxu0 %v869
    %5690 = vmatpush1.msra.mxu0 %v868
    %5691 = vmatprep.subr.mxu0 %v872
    %5692 = vmatpush1.msra.mxu0 %v871
    %5693 = vmatprep.subr.mxu0 %v875
    %5694 = vmatpush1.msra.mxu0 %v874
    %5695 = vmatprep.subr.mxu0 %v878
    %5696 = vmatpush1.msra.mxu0 %v877
    %5697 = vmatprep.subr.mxu0 %v881
    %5698 = vmatpush1.msra.mxu0 %v880
    %5699 = vmatprep.subr.mxu0 %v884
    %5700 = vmatpush1.msra.mxu0 %v883
    %5701 = vmatprep.subr.mxu0 %v887
    %5702 = vmatpush1.msra.mxu0 %v886
    %5703 = vmatprep.subr.mxu0 %v890
    %5704 = vmatpush1.msra.mxu0 %v889
    %5705 = vmatprep.subr.mxu0 %v893
    %5706 = vmatpush1.msra.mxu0 %v892
    %5707 = vmatprep.subr.mxu0 %v896
    %5708 = vmatpush1.msra.mxu0 %v895
    %5709 = vmatprep.subr.mxu0 %v899
    %5710 = vmatpush1.msra.mxu0 %v898
    %5711 = vmatprep.subr.mxu0 %v902
    %5712 = vmatpush1.msra.mxu0 %v901
    %5713 = vmatprep.subr.mxu0 %v905
    %5714 = vmatpush1.msra.mxu0 %v904
    %5715 = vmatprep.subr.mxu0 %v908
    %5716 = vmatpush1.msra.mxu0 %v907
    %5717 = vmatprep.subr.mxu0 0.0
    %5718 = vmatpush1.msra.mxu0 0.0
    %5719 = vmatprep.subr.mxu0 0.0
    %5720 = vmatpush1.msra.mxu0 0.0
    %5721 = vmatprep.subr.mxu0 0.0
    %5722 = vmatpush1.msra.mxu0 0.0
    %5723 = vmatprep.subr.mxu0 0.0
    %5724 = vmatpush1.msra.mxu0 0.0
    %5725 = vmatprep.subr.mxu0 0.0
    %5726 = vmatpush1.msra.mxu0 0.0
    %5727 = vmatprep.subr.mxu0 0.0
    %5728 = vmatpush1.msra.mxu0 0.0
    %5729 = vmatprep.subr.mxu0 0.0
    %5730 = vmatpush1.msra.mxu0 0.0
    %5731 = vmatprep.subr.mxu0 0.0
    %5732 = vmatpush1.msra.mxu0 0.0
    %5733 = vmatprep.subr.mxu0 0.0
    %5734 = vmatpush1.msra.mxu0 0.0
    %5735 = vmatprep.subr.mxu0 0.0
    %5736 = vmatpush1.msra.mxu0 0.0
    %5737 = vmatprep.subr.mxu0 0.0
    %5738 = vmatpush1.msra.mxu0 0.0
    %5739 = vmatprep.subr.mxu0 0.0
    %5740 = vmatpush1.msra.mxu0 0.0
    %5741 = vmatprep.subr.mxu0 0.0
    %5742 = vmatpush1.msra.mxu0 0.0
    %5743 = vmatprep.subr.mxu0 0.0
    %5744 = vmatpush1.msra.mxu0 0.0
    %5745 = vmatprep.subr.mxu0 0.0
    %5746 = vmatpush1.msra.mxu0 0.0
    %5747 = vmatprep.subr.mxu0 0.0
    %5748 = vmatpush1.msra.mxu0 0.0
    %5749 = vmatprep.mubr.f32.mxu0 0.0
    %5750 = vmatmul.mubr.f32.gmra.mrb[0].mxu0 %v5520
    %v5751 = vpop.f32.mrb[0].mxu0
    %v5752 = vadd.f32 %v1094, %v5751
    %v5753 = vpop.f32.mrb[0].mxu0
    %v5754 = vadd.f32 %v1098, %v5753
    %5755 = vdwg.mxu0
    %5756 = vmatprep.subr.mxu0 0.0
    %5757 = vmatpush1.msra.mxu0 %v864
    %5758 = vmatprep.subr.mxu0 0.0
    %5759 = vmatpush1.msra.mxu0 %v867
    %5760 = vmatprep.subr.mxu0 0.0
    %5761 = vmatpush1.msra.mxu0 %v870
    %5762 = vmatprep.subr.mxu0 0.0
    %5763 = vmatpush1.msra.mxu0 %v873
    %5764 = vmatprep.subr.mxu0 0.0
    %5765 = vmatpush1.msra.mxu0 %v876
    %5766 = vmatprep.subr.mxu0 0.0
    %5767 = vmatpush1.msra.mxu0 %v879
    %5768 = vmatprep.subr.mxu0 0.0
    %5769 = vmatpush1.msra.mxu0 %v882
    %5770 = vmatprep.subr.mxu0 0.0
    %5771 = vmatpush1.msra.mxu0 %v885
    %5772 = vmatprep.subr.mxu0 0.0
    %5773 = vmatpush1.msra.mxu0 %v888
    %5774 = vmatprep.subr.mxu0 0.0
    %5775 = vmatpush1.msra.mxu0 %v891
    %5776 = vmatprep.subr.mxu0 0.0
    %5777 = vmatpush1.msra.mxu0 %v894
    %5778 = vmatprep.subr.mxu0 0.0
    %5779 = vmatpush1.msra.mxu0 %v897
    %5780 = vmatprep.subr.mxu0 0.0
    %5781 = vmatpush1.msra.mxu0 %v900
    %5782 = vmatprep.subr.mxu0 0.0
    %5783 = vmatpush1.msra.mxu0 %v903
    %5784 = vmatprep.subr.mxu0 0.0
    %5785 = vmatpush1.msra.mxu0 %v906
    %5786 = vmatprep.subr.mxu0 0.0
    %5787 = vmatpush1.msra.mxu0 %v909
    %5788 = vmatprep.subr.mxu0 0.0
    %5789 = vmatpush1.msra.mxu0 0.0
    %5790 = vmatprep.subr.mxu0 0.0
    %5791 = vmatpush1.msra.mxu0 0.0
    %5792 = vmatprep.subr.mxu0 0.0
    %5793 = vmatpush1.msra.mxu0 0.0
    %5794 = vmatprep.subr.mxu0 0.0
    %5795 = vmatpush1.msra.mxu0 0.0
    %5796 = vmatprep.subr.mxu0 0.0
    %5797 = vmatpush1.msra.mxu0 0.0
    %5798 = vmatprep.subr.mxu0 0.0
    %5799 = vmatpush1.msra.mxu0 0.0
    %5800 = vmatprep.subr.mxu0 0.0
    %5801 = vmatpush1.msra.mxu0 0.0
    %5802 = vmatprep.subr.mxu0 0.0
    %5803 = vmatpush1.msra.mxu0 0.0
    %5804 = vmatprep.subr.mxu0 0.0
    %5805 = vmatpush1.msra.mxu0 0.0
    %5806 = vmatprep.subr.mxu0 0.0
    %5807 = vmatpush1.msra.mxu0 0.0
    %5808 = vmatprep.subr.mxu0 0.0
    %5809 = vmatpush1.msra.mxu0 0.0
    %5810 = vmatprep.subr.mxu0 0.0
    %5811 = vmatpush1.msra.mxu0 0.0
    %5812 = vmatprep.subr.mxu0 0.0
    %5813 = vmatpush1.msra.mxu0 0.0
    %5814 = vmatprep.subr.mxu0 0.0
    %5815 = vmatpush1.msra.mxu0 0.0
    %5816 = vmatprep.subr.mxu0 0.0
    %5817 = vmatpush1.msra.mxu0 0.0
    %5818 = vmatprep.subr.mxu0 0.0
    %5819 = vmatpush1.msra.mxu0 0.0
    %5820 = vmatprep.mubr.f32.mxu0 0.0
    %5821 = vmatmul.mubr.f32.gmra.mrb[0].mxu0 %v5520
    %v5822 = vpop.f32.mrb[0].mxu0
    %v5823 = vadd.f32 %v1102, %v5822
    %v5824 = vpop.f32.mrb[0].mxu0
    %5825 = vdwg.mxu0
    %v5826 = vadd.f32 %v579, %v5752
    %v5827 = vadd.f32 %v581, %v5754
    %v5828 = vxor.u32 %v5826, 2147483648
    %v5829 = vxor.u32 %v5827, 2147483648
    %v5830 = vmul.f32 %v5828, 1.442695
    %v5831 = vpow.pop %v5830
    %v5832 = vmul.f32 %v5829, 1.442695
    %v5833 = vpow.pop %v5832
    %v5834 = vadd.f32 %v5831, 1.0
    %v5835 = vadd.f32 %v5833, 1.0
    %v5836 = vrcp.pop %v5834
    %v5837 = vmul.f32 1.0, %v5836
    %v5838 = vrcp.pop %v5835
    %v5839 = vmul.f32 1.0, %v5838
    %v5840 = vmul.f32 %v5837, %v5823
    %v5841 = vadd.f32 %v739, %v5840
    %v5842 = vtanh.pop %v5841
    %v5843 = vsub.f32 1.0, %v5839
    %v5844 = vmul.f32 %v5843, %v5842
    %v5845 = vmul.f32 %v5839, %v5520
    %v5846 = vadd.f32 %v5844, %v5845
    %5847 = vst [vmem:[%s1597] sm:$0xff] %v5684
    %5848 = vst [vmem:[%s1595 + $0x8] sm:$0xff] %v5846
    %5849 = vmatprep.subr.mxu0 %v813
    %5850 = vmatpush1.msra.mxu0 %v812
    %5851 = vmatprep.subr.mxu0 %v816
    %5852 = vmatpush1.msra.mxu0 %v815
    %5853 = vmatprep.subr.mxu0 %v819
    %5854 = vmatpush1.msra.mxu0 %v818
    %5855 = vmatprep.subr.mxu0 %v822
    %5856 = vmatpush1.msra.mxu0 %v821
    %5857 = vmatprep.subr.mxu0 %v825
    %5858 = vmatpush1.msra.mxu0 %v824
    %5859 = vmatprep.subr.mxu0 %v828
    %5860 = vmatpush1.msra.mxu0 %v827
    %5861 = vmatprep.subr.mxu0 %v831
    %5862 = vmatpush1.msra.mxu0 %v830
    %5863 = vmatprep.subr.mxu0 %v834
    %5864 = vmatpush1.msra.mxu0 %v833
    %5865 = vmatprep.subr.mxu0 %v837
    %5866 = vmatpush1.msra.mxu0 %v836
    %5867 = vmatprep.subr.mxu0 %v840
    %5868 = vmatpush1.msra.mxu0 %v839
    %5869 = vmatprep.subr.mxu0 %v843
    %5870 = vmatpush1.msra.mxu0 %v842
    %5871 = vmatprep.subr.mxu0 %v846
    %5872 = vmatpush1.msra.mxu0 %v845
    %5873 = vmatprep.subr.mxu0 %v849
    %5874 = vmatpush1.msra.mxu0 %v848
    %5875 = vmatprep.subr.mxu0 %v852
    %5876 = vmatpush1.msra.mxu0 %v851
    %5877 = vmatprep.subr.mxu0 %v855
    %5878 = vmatpush1.msra.mxu0 %v854
    %5879 = vmatprep.subr.mxu0 %v858
    %5880 = vmatpush1.msra.mxu0 %v857
    %5881 = vmatprep.subr.mxu0 0.0
    %5882 = vmatpush1.msra.mxu0 0.0
    %5883 = vmatprep.subr.mxu0 0.0
    %5884 = vmatpush1.msra.mxu0 0.0
    %5885 = vmatprep.subr.mxu0 0.0
    %5886 = vmatpush1.msra.mxu0 0.0
    %5887 = vmatprep.subr.mxu0 0.0
    %5888 = vmatpush1.msra.mxu0 0.0
    %5889 = vmatprep.subr.mxu0 0.0
    %5890 = vmatpush1.msra.mxu0 0.0
    %5891 = vmatprep.subr.mxu0 0.0
    %5892 = vmatpush1.msra.mxu0 0.0
    %5893 = vmatprep.subr.mxu0 0.0
    %5894 = vmatpush1.msra.mxu0 0.0
    %5895 = vmatprep.subr.mxu0 0.0
    %5896 = vmatpush1.msra.mxu0 0.0
    %5897 = vmatprep.subr.mxu0 0.0
    %5898 = vmatpush1.msra.mxu0 0.0
    %5899 = vmatprep.subr.mxu0 0.0
    %5900 = vmatpush1.msra.mxu0 0.0
    %5901 = vmatprep.subr.mxu0 0.0
    %5902 = vmatpush1.msra.mxu0 0.0
    %5903 = vmatprep.subr.mxu0 0.0
    %5904 = vmatpush1.msra.mxu0 0.0
    %5905 = vmatprep.subr.mxu0 0.0
    %5906 = vmatpush1.msra.mxu0 0.0
    %5907 = vmatprep.subr.mxu0 0.0
    %5908 = vmatpush1.msra.mxu0 0.0
    %5909 = vmatprep.subr.mxu0 0.0
    %5910 = vmatpush1.msra.mxu0 0.0
    %5911 = vmatprep.subr.mxu0 0.0
    %5912 = vmatpush1.msra.mxu0 0.0
    %5913 = vmatprep.mubr.f32.mxu0 0.0
    %5914 = vmatmul.mubr.f32.gmra.mrb[0].mxu0 %v5684
    %v5915 = vpop.f32.mrb[0].mxu0
    %v5916 = vadd.f32 %v916, %v5915
    %v5917 = vpop.f32.mrb[0].mxu0
    %v5918 = vadd.f32 %v920, %v5917
    %5919 = vdwg.mxu0
    %5920 = vmatprep.subr.mxu0 0.0
    %5921 = vmatpush1.msra.mxu0 %v814
    %5922 = vmatprep.subr.mxu0 0.0
    %5923 = vmatpush1.msra.mxu0 %v817
    %5924 = vmatprep.subr.mxu0 0.0
    %5925 = vmatpush1.msra.mxu0 %v820
    %5926 = vmatprep.subr.mxu0 0.0
    %5927 = vmatpush1.msra.mxu0 %v823
    %5928 = vmatprep.subr.mxu0 0.0
    %5929 = vmatpush1.msra.mxu0 %v826
    %5930 = vmatprep.subr.mxu0 0.0
    %5931 = vmatpush1.msra.mxu0 %v829
    %5932 = vmatprep.subr.mxu0 0.0
    %5933 = vmatpush1.msra.mxu0 %v832
    %5934 = vmatprep.subr.mxu0 0.0
    %5935 = vmatpush1.msra.mxu0 %v835
    %5936 = vmatprep.subr.mxu0 0.0
    %5937 = vmatpush1.msra.mxu0 %v838
    %5938 = vmatprep.subr.mxu0 0.0
    %5939 = vmatpush1.msra.mxu0 %v841
    %5940 = vmatprep.subr.mxu0 0.0
    %5941 = vmatpush1.msra.mxu0 %v844
    %5942 = vmatprep.subr.mxu0 0.0
    %5943 = vmatpush1.msra.mxu0 %v847
    %5944 = vmatprep.subr.mxu0 0.0
    %5945 = vmatpush1.msra.mxu0 %v850
    %5946 = vmatprep.subr.mxu0 0.0
    %5947 = vmatpush1.msra.mxu0 %v853
    %5948 = vmatprep.subr.mxu0 0.0
    %5949 = vmatpush1.msra.mxu0 %v856
    %5950 = vmatprep.subr.mxu0 0.0
    %5951 = vmatpush1.msra.mxu0 %v859
    %5952 = vmatprep.subr.mxu0 0.0
    %5953 = vmatpush1.msra.mxu0 0.0
    %5954 = vmatprep.subr.mxu0 0.0
    %5955 = vmatpush1.msra.mxu0 0.0
    %5956 = vmatprep.subr.mxu0 0.0
    %5957 = vmatpush1.msra.mxu0 0.0
    %5958 = vmatprep.subr.mxu0 0.0
    %5959 = vmatpush1.msra.mxu0 0.0
    %5960 = vmatprep.subr.mxu0 0.0
    %5961 = vmatpush1.msra.mxu0 0.0
    %5962 = vmatprep.subr.mxu0 0.0
    %5963 = vmatpush1.msra.mxu0 0.0
    %5964 = vmatprep.subr.mxu0 0.0
    %5965 = vmatpush1.msra.mxu0 0.0
    %5966 = vmatprep.subr.mxu0 0.0
    %5967 = vmatpush1.msra.mxu0 0.0
    %5968 = vmatprep.subr.mxu0 0.0
    %5969 = vmatpush1.msra.mxu0 0.0
    %5970 = vmatprep.subr.mxu0 0.0
    %5971 = vmatpush1.msra.mxu0 0.0
    %5972 = vmatprep.subr.mxu0 0.0
    %5973 = vmatpush1.msra.mxu0 0.0
    %5974 = vmatprep.subr.mxu0 0.0
    %5975 = vmatpush1.msra.mxu0 0.0
    %5976 = vmatprep.subr.mxu0 0.0
    %5977 = vmatpush1.msra.mxu0 0.0
    %5978 = vmatprep.subr.mxu0 0.0
    %5979 = vmatpush1.msra.mxu0 0.0
    %5980 = vmatprep.subr.mxu0 0.0
    %5981 = vmatpush1.msra.mxu0 0.0
    %5982 = vmatprep.subr.mxu0 0.0
    %5983 = vmatpush1.msra.mxu0 0.0
    %5984 = vmatprep.mubr.f32.mxu0 0.0
    %5985 = vmatmul.mubr.f32.gmra.mrb[0].mxu0 %v5684
    %v5986 = vpop.f32.mrb[0].mxu0
    %v5987 = vadd.f32 %v924, %v5986
    %v5988 = vpop.f32.mrb[0].mxu0
    %5989 = vdwg.mxu0
    %v5990 = vadd.f32 %v326, %v5916
    %v5991 = vadd.f32 %v328, %v5918
    %v5992 = vxor.u32 %v5990, 2147483648
    %v5993 = vxor.u32 %v5991, 2147483648
    %v5994 = vmul.f32 %v5992, 1.442695
    %v5995 = vpow.pop %v5994
    %v5996 = vmul.f32 %v5993, 1.442695
    %v5997 = vpow.pop %v5996
    %v5998 = vadd.f32 %v5995, 1.0
    %v5999 = vadd.f32 %v5997, 1.0
    %v6000 = vrcp.pop %v5998
    %v6001 = vmul.f32 1.0, %v6000
    %v6002 = vrcp.pop %v5999
    %v6003 = vmul.f32 1.0, %v6002
    %v6004 = vmul.f32 %v6001, %v5987
    %v6005 = vadd.f32 %v472, %v6004
    %v6006 = vtanh.pop %v6005
    %v6007 = vsub.f32 1.0, %v6003
    %v6008 = vmul.f32 %v6007, %v6006
    %v6009 = vmul.f32 %v6003, %v5684
    %v6010 = vadd.f32 %v6008, %v6009
    %6011 = vmatprep.subr.mxu0 %v863
    %6012 = vmatpush1.msra.mxu0 %v862
    %6013 = vmatprep.subr.mxu0 %v866
    %6014 = vmatpush1.msra.mxu0 %v865
    %6015 = vmatprep.subr.mxu0 %v869
    %6016 = vmatpush1.msra.mxu0 %v868
    %6017 = vmatprep.subr.mxu0 %v872
    %6018 = vmatpush1.msra.mxu0 %v871
    %6019 = vmatprep.subr.mxu0 %v875
    %6020 = vmatpush1.msra.mxu0 %v874
    %6021 = vmatprep.subr.mxu0 %v878
    %6022 = vmatpush1.msra.mxu0 %v877
    %6023 = vmatprep.subr.mxu0 %v881
    %6024 = vmatpush1.msra.mxu0 %v880
    %6025 = vmatprep.subr.mxu0 %v884
    %6026 = vmatpush1.msra.mxu0 %v883
    %6027 = vmatprep.subr.mxu0 %v887
    %6028 = vmatpush1.msra.mxu0 %v886
    %6029 = vmatprep.subr.mxu0 %v890
    %6030 = vmatpush1.msra.mxu0 %v889
    %6031 = vmatprep.subr.mxu0 %v893
    %6032 = vmatpush1.msra.mxu0 %v892
    %6033 = vmatprep.subr.mxu0 %v896
    %6034 = vmatpush1.msra.mxu0 %v895
    %6035 = vmatprep.subr.mxu0 %v899
    %6036 = vmatpush1.msra.mxu0 %v898
    %6037 = vmatprep.subr.mxu0 %v902
    %6038 = vmatpush1.msra.mxu0 %v901
    %6039 = vmatprep.subr.mxu0 %v905
    %6040 = vmatpush1.msra.mxu0 %v904
    %6041 = vmatprep.subr.mxu0 %v908
    %6042 = vmatpush1.msra.mxu0 %v907
    %6043 = vmatprep.subr.mxu0 0.0
    %6044 = vmatpush1.msra.mxu0 0.0
    %6045 = vmatprep.subr.mxu0 0.0
    %6046 = vmatpush1.msra.mxu0 0.0
    %6047 = vmatprep.subr.mxu0 0.0
    %6048 = vmatpush1.msra.mxu0 0.0
    %6049 = vmatprep.subr.mxu0 0.0
    %6050 = vmatpush1.msra.mxu0 0.0
    %6051 = vmatprep.subr.mxu0 0.0
    %6052 = vmatpush1.msra.mxu0 0.0
    %6053 = vmatprep.subr.mxu0 0.0
    %6054 = vmatpush1.msra.mxu0 0.0
    %6055 = vmatprep.subr.mxu0 0.0
    %6056 = vmatpush1.msra.mxu0 0.0
    %6057 = vmatprep.subr.mxu0 0.0
    %6058 = vmatpush1.msra.mxu0 0.0
    %6059 = vmatprep.subr.mxu0 0.0
    %6060 = vmatpush1.msra.mxu0 0.0
    %6061 = vmatprep.subr.mxu0 0.0
    %6062 = vmatpush1.msra.mxu0 0.0
    %6063 = vmatprep.subr.mxu0 0.0
    %6064 = vmatpush1.msra.mxu0 0.0
    %6065 = vmatprep.subr.mxu0 0.0
    %6066 = vmatpush1.msra.mxu0 0.0
    %6067 = vmatprep.subr.mxu0 0.0
    %6068 = vmatpush1.msra.mxu0 0.0
    %6069 = vmatprep.subr.mxu0 0.0
    %6070 = vmatpush1.msra.mxu0 0.0
    %6071 = vmatprep.subr.mxu0 0.0
    %6072 = vmatpush1.msra.mxu0 0.0
    %6073 = vmatprep.subr.mxu0 0.0
    %6074 = vmatpush1.msra.mxu0 0.0
    %6075 = vmatprep.mubr.f32.mxu0 0.0
    %6076 = vmatmul.mubr.f32.gmra.mrb[0].mxu0 %v5846
    %v6077 = vpop.f32.mrb[0].mxu0
    %v6078 = vadd.f32 %v1094, %v6077
    %v6079 = vpop.f32.mrb[0].mxu0
    %v6080 = vadd.f32 %v1098, %v6079
    %6081 = vdwg.mxu0
    %6082 = vmatprep.subr.mxu0 0.0
    %6083 = vmatpush1.msra.mxu0 %v864
    %6084 = vmatprep.subr.mxu0 0.0
    %6085 = vmatpush1.msra.mxu0 %v867
    %6086 = vmatprep.subr.mxu0 0.0
    %6087 = vmatpush1.msra.mxu0 %v870
    %6088 = vmatprep.subr.mxu0 0.0
    %6089 = vmatpush1.msra.mxu0 %v873
    %6090 = vmatprep.subr.mxu0 0.0
    %6091 = vmatpush1.msra.mxu0 %v876
    %6092 = vmatprep.subr.mxu0 0.0
    %6093 = vmatpush1.msra.mxu0 %v879
    %6094 = vmatprep.subr.mxu0 0.0
    %6095 = vmatpush1.msra.mxu0 %v882
    %6096 = vmatprep.subr.mxu0 0.0
    %6097 = vmatpush1.msra.mxu0 %v885
    %6098 = vmatprep.subr.mxu0 0.0
    %6099 = vmatpush1.msra.mxu0 %v888
    %6100 = vmatprep.subr.mxu0 0.0
    %6101 = vmatpush1.msra.mxu0 %v891
    %6102 = vmatprep.subr.mxu0 0.0
    %6103 = vmatpush1.msra.mxu0 %v894
    %6104 = vmatprep.subr.mxu0 0.0
    %6105 = vmatpush1.msra.mxu0 %v897
    %6106 = vmatprep.subr.mxu0 0.0
    %6107 = vmatpush1.msra.mxu0 %v900
    %6108 = vmatprep.subr.mxu0 0.0
    %6109 = vmatpush1.msra.mxu0 %v903
    %6110 = vmatprep.subr.mxu0 0.0
    %6111 = vmatpush1.msra.mxu0 %v906
    %6112 = vmatprep.subr.mxu0 0.0
    %6113 = vmatpush1.msra.mxu0 %v909
    %6114 = vmatprep.subr.mxu0 0.0
    %6115 = vmatpush1.msra.mxu0 0.0
    %6116 = vmatprep.subr.mxu0 0.0
    %6117 = vmatpush1.msra.mxu0 0.0
    %6118 = vmatprep.subr.mxu0 0.0
    %6119 = vmatpush1.msra.mxu0 0.0
    %6120 = vmatprep.subr.mxu0 0.0
    %6121 = vmatpush1.msra.mxu0 0.0
    %6122 = vmatprep.subr.mxu0 0.0
    %6123 = vmatpush1.msra.mxu0 0.0
    %6124 = vmatprep.subr.mxu0 0.0
    %6125 = vmatpush1.msra.mxu0 0.0
    %6126 = vmatprep.subr.mxu0 0.0
    %6127 = vmatpush1.msra.mxu0 0.0
    %6128 = vmatprep.subr.mxu0 0.0
    %6129 = vmatpush1.msra.mxu0 0.0
    %6130 = vmatprep.subr.mxu0 0.0
    %6131 = vmatpush1.msra.mxu0 0.0
    %6132 = vmatprep.subr.mxu0 0.0
    %6133 = vmatpush1.msra.mxu0 0.0
    %6134 = vmatprep.subr.mxu0 0.0
    %6135 = vmatpush1.msra.mxu0 0.0
    %6136 = vmatprep.subr.mxu0 0.0
    %6137 = vmatpush1.msra.mxu0 0.0
    %6138 = vmatprep.subr.mxu0 0.0
    %6139 = vmatpush1.msra.mxu0 0.0
    %6140 = vmatprep.subr.mxu0 0.0
    %6141 = vmatpush1.msra.mxu0 0.0
    %6142 = vmatprep.subr.mxu0 0.0
    %6143 = vmatpush1.msra.mxu0 0.0
    %6144 = vmatprep.subr.mxu0 0.0
    %6145 = vmatpush1.msra.mxu0 0.0
    %6146 = vmatprep.mubr.f32.mxu0 0.0
    %6147 = vmatmul.mubr.f32.gmra.mrb[0].mxu0 %v5846
    %v6148 = vpop.f32.mrb[0].mxu0
    %v6149 = vadd.f32 %v1102, %v6148
    %v6150 = vpop.f32.mrb[0].mxu0
    %6151 = vdwg.mxu0
    %v6152 = vadd.f32 %v573, %v6078
    %v6153 = vadd.f32 %v575, %v6080
    %v6154 = vxor.u32 %v6152, 2147483648
    %v6155 = vxor.u32 %v6153, 2147483648
    %v6156 = vmul.f32 %v6154, 1.442695
    %v6157 = vpow.pop %v6156
    %v6158 = vmul.f32 %v6155, 1.442695
    %v6159 = vpow.pop %v6158
    %v6160 = vadd.f32 %v6157, 1.0
    %v6161 = vadd.f32 %v6159, 1.0
    %v6162 = vrcp.pop %v6160
    %v6163 = vmul.f32 1.0, %v6162
    %v6164 = vrcp.pop %v6161
    %v6165 = vmul.f32 1.0, %v6164
    %v6166 = vmul.f32 %v6163, %v6149
    %v6167 = vadd.f32 %v734, %v6166
    %v6168 = vtanh.pop %v6167
    %v6169 = vsub.f32 1.0, %v6165
    %v6170 = vmul.f32 %v6169, %v6168
    %v6171 = vmul.f32 %v6165, %v5846
    %v6172 = vadd.f32 %v6170, %v6171
    %6173 = vst [vmem:[%s1269] sm:$0xff] %v6010
    %6174 = vst [vmem:[%s5 + $0x8] sm:$0xff] %v6172
    // Predicated region
    $region38: #{encoder_forward.1} parent=1 // pred_check
      _
    $region39: #{encoder_forward.1} parent=1 // pred_check_branch
      %6176 = sbr.rel (0) target = $region41
    $region40: #{encoder_forward.1} parent=1 // pred_region
      _
    $region41: #{encoder_forward.1} parent=1 // pred_fallthru
      _
    // Predicated region
    $region42: #{encoder_forward.1} parent=1 // pred_check
      _
    $region43: #{encoder_forward.1} parent=1 // pred_check_branch
      %6178 = sbr.rel (0) target = $region45
    $region44: #{encoder_forward.1} parent=1 // pred_region
      _
    $region45: #{encoder_forward.1} parent=1 // pred_fallthru
      _
    %6179 = vsyncpa [#allocation3], 1
    %6180 = vsyncpa [#allocation5], 1
    %6181 = vsyncpa [#allocation8], 1

</llo_original>
